<compile_context>
chip_gen: v6e
topology: v6e:2x2x1
jax: 0.10.0
libtpu: 0.0.40
codegen_flags: <defaults>
</compile_context>

<pallas_src>
import jax
import jax.numpy as jnp
from jax.experimental import pallas as pl
from jax.experimental.pallas import tpu as pltpu

HEADS = 2
OUT_C = 32                  # GATConv out_channels
Z_AUG_W = 64                # per-head augmented z width: 32 feat + 1 ones + 31 zeros
NEG_SLOPE = 0.2             # GATConv default leaky_relu slope
PROJ_TILE = 128             # projection row tile (== node padding granularity)
MASK_VAL = -1e30
MAX_SRC_TILE = 2048         # cap on the reduction (source) tile


def _round_up(n, m):
    return ((n + m - 1) // m) * m


def _pad_size(n):
    """Padded node count: multiple of 128; multiple of 1024 once the src tile caps."""
    p = _round_up(max(int(n), 1), 128)
    if p > MAX_SRC_TILE:
        p = _round_up(p, 1024)
    return p


def _src_tile(p):
    # Whole padded source axis in one step when it fits; otherwise 1024-wide tiles.
    return p if p <= MAX_SRC_TILE else 1024


def _dst_tile(p):
    # >= 2 destination tiles whenever possible (keeps both v7x TensorCores busy);
    # larger tiles once the graph is big enough that grid-step overhead matters.
    if p >= 1024 and p % 256 == 0:
        return 256
    return 128


# ----------------------------- projection kernel ------------------------------

def _project_kernel(x_ref, w_ref, z_ref, a_ref):
    """ELU + fused projection.

    y = elu(x) @ [W_src | W_alpha_src | W_alpha_dst]   (single MXU pass)
    z_ref[h] = [ y_feat_h (32) | 1 | 0...(31) ]  bf16  (the ones column later gives
               the softmax denominator out of the same p @ z matmul)
    a_ref    = [alpha_src_h0, alpha_src_h1, alpha_dst_h0, alpha_dst_h1]  f32
    """
    x = x_ref[...]
    x = jnp.where(x > 0, x, jnp.exp(x) - 1.0)            # ELU(alpha=1)
    y = jnp.dot(x, w_ref[...], preferred_element_type=jnp.float32)
    t = x.shape[0]
    ones = jnp.ones((t, 1), jnp.float32)
    zeros = jnp.zeros((t, Z_AUG_W - OUT_C - 1), jnp.float32)
    for h in range(HEADS):
        z_ref[h] = jnp.concatenate(
            [y[:, h * OUT_C:(h + 1) * OUT_C], ones, zeros], axis=1
        ).astype(z_ref.dtype)
    a_ref[...] = y[:, HEADS * OUT_C:]


def project_pallas(x, w_all, n_pad):
    n, f = x.shape
    xp = jnp.pad(x, ((0, n_pad - n), (0, 0)))            # padded rows: elu(0)=0 -> 0
    w_cols = w_all.shape[1]
    return pl.pallas_call(
        _project_kernel,
        out_shape=(jax.ShapeDtypeStruct((HEADS, n_pad, Z_AUG_W), jnp.bfloat16),
                   jax.ShapeDtypeStruct((n_pad, 2 * HEADS), jnp.float32)),
        grid_spec=pltpu.PrefetchScalarGridSpec(
            num_scalar_prefetch=0,
            grid=(n_pad // PROJ_TILE,),
            in_specs=[pl.BlockSpec((PROJ_TILE, f), lambda i: (i, 0)),
                      pl.BlockSpec((f, w_cols), lambda i: (0, 0))],
            out_specs=[pl.BlockSpec((HEADS, PROJ_TILE, Z_AUG_W), lambda i: (0, i, 0)),
                       pl.BlockSpec((PROJ_TILE, 2 * HEADS), lambda i: (i, 0))]),
        compiler_params=pltpu.CompilerParams(dimension_semantics=("parallel",)),
    )(xp, w_all)


# ------------------------------ attention kernel -------------------------------

def _gat_attn_kernel(zs_ref, asrc_ref, adst_ref, adj_ref, bias_ref,
                     out_ref, m_ref, acc_ref):
    """One bipartite GATConv direction, online softmax over source tiles.

    zs_ref  : [H, ts, 64] bf16  per-head [features | 1 | 0...] of source nodes
    asrc_ref: [H, ts]     f32   per-head source attention logits (lane-dense)
    adst_ref: [td, H]     f32   per-head destination attention logits
    adj_ref : [td, ts]    bf16  0/1 adjacency tile (self-loops already added)
    bias_ref: [1, H*C]    f32
    out_ref : [td, H*C]   f32
    m_ref   : [H, td, 1]  f32   running max (scratch)
    acc_ref : [H, td, 64] f32   running accumulator; column 32 carries the denom
    """
    j = pl.program_id(1)

    @pl.when(j == 0)
    def _init():
        m_ref[...] = jnp.full_like(m_ref, MASK_VAL)
        acc_ref[...] = jnp.zeros_like(acc_ref)

    adj = adj_ref[...]                                   # bf16 0/1, no f32 cast
    a_dst = adst_ref[...]                                # [td, H]
    a_src = asrc_ref[...]                                # [H, ts]

    for h in range(HEADS):                               # static unroll, H == 2
        e = a_dst[:, h:h + 1] + a_src[h:h + 1, :]        # [td, ts]
        e = jnp.maximum(e, NEG_SLOPE * e)                # leaky_relu (slope < 1)
        m_old = m_ref[h]                                 # [td, 1]
        # Unmasked max still upper-bounds every *included* logit, so the online
        # softmax is exact; excluded entries are zeroed by the adjacency multiply.
        m_new = jnp.maximum(m_old, jnp.max(e, axis=1, keepdims=True))
        p = jnp.exp(e - m_new).astype(jnp.bfloat16) * adj            # masked, bf16
        pv = jnp.dot(p, zs_ref[h], preferred_element_type=jnp.float32)  # [td, 64]
        alpha = jnp.exp(m_old - m_new)                   # [td, 1]
        acc_ref[h] = acc_ref[h] * alpha + pv             # denom rides in column 32
        m_ref[h] = m_new

    @pl.when(j == pl.num_programs(1) - 1)
    def _finalize():
        outs = []
        for h in range(HEADS):
            acc = acc_ref[h]                                        # [td, 64]
            denom = jnp.maximum(acc[:, OUT_C:OUT_C + 1], 1e-20)     # zero in-degree
            inv = pl.reciprocal(denom, approx=True)                 # EUP slot
            outs.append(acc[:, :OUT_C] * inv)
        # single lane-dense 64-wide store, bias added once
        out_ref[...] = (jnp.concatenate(outs, axis=1)
                        + bias_ref[...]).astype(out_ref.dtype)


def gat_attention_pallas(zs_aug, a_src_t, a_dst, adj, bias):
    n_heads, ns_p, zw = zs_aug.shape
    nd_p = a_dst.shape[0]
    td = _dst_tile(nd_p)
    ts = _src_tile(ns_p)
    hc = n_heads * OUT_C
    grid = (nd_p // td, ns_p // ts)                      # reduction (src) axis last
    return pl.pallas_call(
        _gat_attn_kernel,
        out_shape=jax.ShapeDtypeStruct((nd_p, hc), jnp.float32),
        grid_spec=pltpu.PrefetchScalarGridSpec(
            num_scalar_prefetch=0,
            grid=grid,
            in_specs=[
                pl.BlockSpec((n_heads, ts, zw), lambda i, j: (0, j, 0)),  # z augmented
                pl.BlockSpec((n_heads, ts), lambda i, j: (0, j)),         # a_src^T
                pl.BlockSpec((td, n_heads), lambda i, j: (i, 0)),         # a_dst
                pl.BlockSpec((td, ts), lambda i, j: (i, j)),              # adj (bf16)
                pl.BlockSpec((1, hc), lambda i, j: (0, 0)),               # bias
            ],
            out_specs=pl.BlockSpec((td, hc), lambda i, j: (i, 0)),
            scratch_shapes=[pltpu.VMEM((n_heads, td, 1), jnp.float32),    # running max
                            pltpu.VMEM((n_heads, td, zw), jnp.float32)]), # acc (+denom)
        compiler_params=pltpu.CompilerParams(
            dimension_semantics=("parallel", "arbitrary")),
    )(zs_aug, a_src_t, a_dst, adj, bias)


# ----------------------------- plain-JAX glue ---------------------------------

def build_adjs(edge_index, n_src, n_dst, n_src_pad, n_dst_pad):
    """Dense bf16 adjacencies for BOTH directions (avoids an HBM transpose of the
    largest array).  Matches PyG GATConv bipartite behavior: remove self-loops,
    then add self-loops for i < min(n_src, n_dst)."""
    src, dst = edge_index[0], edge_index[1]
    keep = (src != dst).astype(jnp.float32)
    fwd = jnp.zeros((n_dst_pad, n_src_pad), jnp.float32).at[dst, src].max(keep)
    rev = jnp.zeros((n_src_pad, n_dst_pad), jnp.float32).at[src, dst].max(keep)
    idx = jnp.arange(min(n_src, n_dst))
    fwd = fwd.at[idx, idx].set(1.0)
    rev = rev.at[idx, idx].set(1.0)
    return fwd.astype(jnp.bfloat16), rev.astype(jnp.bfloat16)


def init_params(key, input_dim, heads=HEADS, out_c=OUT_C):
    def glorot(k, shape):
        limit = (6.0 / (shape[0] + shape[1])) ** 0.5
        return jax.random.uniform(k, shape, jnp.float32, -limit, limit)

    k1, k2, k3, k4 = jax.random.split(key, 4)
    w_src = glorot(k1, (input_dim, heads * out_c))       # lin_src.weight.T
    w_dst = glorot(k2, (input_dim, heads * out_c))       # lin_dst.weight.T
    att_src = glorot(k3, (heads, out_c))
    att_dst = glorot(k4, (heads, out_c))
    # Fold attention vectors into the projections: a_h = elu(x) @ (W[:, hC:(h+1)C] @ att[h]).
    walpha_src = jnp.stack(
        [w_src[:, h * out_c:(h + 1) * out_c] @ att_src[h] for h in range(heads)], axis=1)
    walpha_dst = jnp.stack(
        [w_dst[:, h * out_c:(h + 1) * out_c] @ att_dst[h] for h in range(heads)], axis=1)
    w_all = jnp.concatenate([w_src, walpha_src, walpha_dst], axis=1)   # [F, HC+2H]
    return {
        "w_src": w_src, "w_dst": w_dst,
        "att_src": att_src, "att_dst": att_dst,          # kept for the reference check
        "w_all": w_all,
        "bias": jnp.zeros((1, heads * out_c), jnp.float32),
    }


def inter_graph_attention(h_x, t_x, edge_index, params):
    """Mirrors InterGraphAttention.forward (one shared GATConv, both directions)."""
    n_h, n_t = h_x.shape[0], t_x.shape[0]
    p_h = _pad_size(n_h)
    p_t = _pad_size(n_t)

    # ELU + fused projections computed once per node set, reused by both directions.
    z_h, a_h = project_pallas(h_x, params["w_all"], p_h)   # z: [H, p_h, 64] bf16
    z_t, a_t = project_pallas(t_x, params["w_all"], p_t)

    # Both dense adjacencies built directly (no HBM-materialized transpose).
    adj_ht, adj_th = build_adjs(edge_index, n_h, n_t, p_h, p_t)

    heads = HEADS
    # direction 1: sources = h nodes, destinations = t nodes
    t_rep = gat_attention_pallas(z_h, a_h[:, :heads].T, a_t[:, heads:],
                                 adj_ht, params["bias"])
    # direction 2: sources = t nodes, destinations = h nodes
    h_rep = gat_attention_pallas(z_t, a_t[:, :heads].T, a_h[:, heads:],
                                 adj_th, params["bias"])
    return h_rep[:n_h], t_rep[:n_t]


# ---------------------------- pure-JAX reference -------------------------------

def _gat_reference(x_src, x_dst, adj, params):
    xs = jax.nn.elu(x_src)
    xd = jax.nn.elu(x_dst)
    zs = (xs @ params["w_src"]).reshape(xs.shape[0], HEADS, OUT_C)
    zd = (xd @ params["w_dst"]).reshape(xd.shape[0], HEADS, OUT_C)
    a_s = jnp.einsum("nhc,hc->nh", zs, params["att_src"])
    a_d = jnp.einsum("nhc,hc->nh", zd, params["att_dst"])
    outs = []
    for h in range(HEADS):
        e = a_d[:, h:h + 1] + a_s[:, h][None, :]
        e = jnp.where(e > 0, e, NEG_SLOPE * e)
        e = jnp.where(adj > 0, e, MASK_VAL)
        m = jnp.max(e, axis=1, keepdims=True)
        p = jnp.exp(e - m) * adj
        denom = jnp.sum(p, axis=1, keepdims=True)
        attn = p / jnp.where(denom > 0, denom, 1.0)
        outs.append(attn @ zs[:, h, :])
    return jnp.concatenate(outs, axis=1) + params["bias"]


if __name__ == "__main__":
    INPUT_DIM = 16
    N_H, N_T, N_EDGES = 300, 180, 800   # small, but multi-tile after padding to 128

    key = jax.random.PRNGKey(0)
    k_h, k_t, k_s, k_d, k_p = jax.random.split(key, 5)
    h_x = jax.random.normal(k_h, (N_H, INPUT_DIM), jnp.float32)
    t_x = jax.random.normal(k_t, (N_T, INPUT_DIM), jnp.float32)
    edge_index = jnp.stack([
        jax.random.randint(k_s, (N_EDGES,), 0, N_H, jnp.int32),
        jax.random.randint(k_d, (N_EDGES,), 0, N_T, jnp.int32)])

    params = init_params(k_p, INPUT_DIM)

    h_rep, t_rep = jax.jit(inter_graph_attention)(h_x, t_x, edge_index, params)
    h_rep = jax.block_until_ready(h_rep)
    t_rep = jax.block_until_ready(t_rep)

    assert h_rep.shape == (N_H, HEADS * OUT_C)
    assert t_rep.shape == (N_T, HEADS * OUT_C)
    assert bool(jnp.all(jnp.isfinite(h_rep))) and bool(jnp.all(jnp.isfinite(t_rep)))

    # Check against a dense pure-JAX reference (same adjacency semantics).
    adj_ht_ref, adj_th_ref = build_adjs(edge_index, N_H, N_T, N_H, N_T)
    t_ref = _gat_reference(h_x, t_x, adj_ht_ref.astype(jnp.float32), params)
    h_ref = _gat_reference(t_x, h_x, adj_th_ref.astype(jnp.float32), params)
    err = max(float(jnp.max(jnp.abs(t_rep - t_ref))),
              float(jnp.max(jnp.abs(h_rep - h_ref))))
    assert err < 5e-2, f"mismatch vs reference: {err}"
    print("KERNEL_OK")
</pallas_src>

<mosaic_0001>
module attributes {stable_mosaic.version = 11 : i64} {
  func.func private @main(%arg0: i32) attributes {dimension_semantics = [#tpu.dimension_semantics<core_parallel>], iteration_bounds = array<i64: 2>, tpu.core_type = #tpu.core_type<sc_scalar_subcore>, window_params = []} {
    return
  }
}

module attributes {stable_mosaic.version = 11 : i64} {
  func.func private @main(%arg0: i32) attributes {dimension_semantics = [#tpu.dimension_semantics<core_parallel>], iteration_bounds = array<i64: 2>, tpu.core_type = #tpu.core_type<sc_scalar_subcore>, window_params = []} {
    return
  }
}

module attributes {stable_mosaic.version = 11 : i64} {
  func.func @_project_kernel(%arg0: i32, %arg1: memref<128x16xf32, #tpu.memory_space<vmem>>, %arg2: memref<16x68xf32, #tpu.memory_space<vmem>>, %arg3: memref<2x128x64xbf16, #tpu.memory_space<vmem>>, %arg4: memref<128x4xf32, #tpu.memory_space<vmem>>) attributes {dimension_semantics = [#tpu.dimension_semantics<parallel>], iteration_bounds = array<i64: 3>, scalar_prefetch = 0 : i64, scratch_operands = 0 : i64, tpu.core_type = #tpu.core_type<tc>, window_params = [{transform_indices = @transform_0, window_bounds = array<i64: 128, 16>}, {pipeline_mode = #tpu.pipeline_mode<synchronous>, transform_indices = @transform_1, window_bounds = array<i64: 16, 68>}, {transform_indices = @transform_2, window_bounds = array<i64: 2, 128, 64>}, {transform_indices = @transform_3, window_bounds = array<i64: 128, 4>}]} {
    %c0 = arith.constant 0 : index
    %c0_0 = arith.constant 0 : index
    %0 = vector.load %arg1[%c0, %c0_0] : memref<128x16xf32, #tpu.memory_space<vmem>>, vector<128x16xf32>
    %cst = arith.constant 0.000000e+00 : f32
    %1 = vector.broadcast %cst : f32 to vector<128x16xf32>
    %2 = arith.cmpf ogt, %0, %1 : vector<128x16xf32>
    %3 = math.exp %0 : vector<128x16xf32>
    %cst_1 = arith.constant 1.000000e+00 : f32
    %4 = vector.broadcast %cst_1 : f32 to vector<128x16xf32>
    %5 = arith.subf %3, %4 : vector<128x16xf32>
    %6 = arith.select %2, %0, %5 : vector<128x16xi1>, vector<128x16xf32>
    %c0_2 = arith.constant 0 : index
    %c0_3 = arith.constant 0 : index
    %7 = vector.load %arg2[%c0_2, %c0_3] : memref<16x68xf32, #tpu.memory_space<vmem>>, vector<16x68xf32>
    %cst_4 = arith.constant dense<0.000000e+00> : vector<128x68xf32>
    %8 = tpu.matmul %6, %7, %cst_4 {dimension_numbers = #tpu.dot_dimension_numbers<[1], [0], [0], [1], [0, 0, 1, 1], [], []>} : vector<128x16xf32>, vector<16x68xf32>, vector<128x68xf32> -> vector<128x68xf32>
    %cst_5 = arith.constant 1.000000e+00 : f32
    %9 = vector.broadcast %cst_5 : f32 to vector<128x1xf32>
    %cst_6 = arith.constant 0.000000e+00 : f32
    %10 = vector.broadcast %cst_6 : f32 to vector<128x31xf32>
    %11 = vector.extract_strided_slice %8 {offsets = [0, 0], sizes = [128, 32], strides = [1, 1]} : vector<128x68xf32> to vector<128x32xf32>
    %12 = tpu.concatenate %11, %9, %10 in 1 : vector<128x32xf32>, vector<128x1xf32>, vector<128x31xf32> -> vector<128x64xf32>
    %13 = arith.truncf %12 : vector<128x64xf32> to vector<128x64xbf16>
    %c0_7 = arith.constant 0 : index
    %c0_8 = arith.constant 0 : index
    %c0_9 = arith.constant 0 : index
    %14 = vector.load %arg3[%c0_7, %c0_8, %c0_9] : memref<2x128x64xbf16, #tpu.memory_space<vmem>>, vector<1x128x64xbf16>
    %15 = vector.shape_cast %14 : vector<1x128x64xbf16> to vector<128x64xbf16>
    %16 = vector.shape_cast %13 : vector<128x64xbf16> to vector<1x128x64xbf16>
    tpu.vector_store %arg3[%c0_7, %c0_8, %c0_9], %16 {strides = array<i32>} : memref<2x128x64xbf16, #tpu.memory_space<vmem>>, vector<1x128x64xbf16>,
    %17 = vector.extract_strided_slice %8 {offsets = [0, 32], sizes = [128, 32], strides = [1, 1]} : vector<128x68xf32> to vector<128x32xf32>
    %18 = tpu.concatenate %17, %9, %10 in 1 : vector<128x32xf32>, vector<128x1xf32>, vector<128x31xf32> -> vector<128x64xf32>
    %19 = arith.truncf %18 : vector<128x64xf32> to vector<128x64xbf16>
    %c1 = arith.constant 1 : index
    %c0_10 = arith.constant 0 : index
    %c0_11 = arith.constant 0 : index
    %20 = vector.load %arg3[%c1, %c0_10, %c0_11] : memref<2x128x64xbf16, #tpu.memory_space<vmem>>, vector<1x128x64xbf16>
    %21 = vector.shape_cast %20 : vector<1x128x64xbf16> to vector<128x64xbf16>
    %22 = vector.shape_cast %19 : vector<128x64xbf16> to vector<1x128x64xbf16>
    tpu.vector_store %arg3[%c1, %c0_10, %c0_11], %22 {strides = array<i32>} : memref<2x128x64xbf16, #tpu.memory_space<vmem>>, vector<1x128x64xbf16>,
    %23 = vector.extract_strided_slice %8 {offsets = [0, 64], sizes = [128, 4], strides = [1, 1]} : vector<128x68xf32> to vector<128x4xf32>
    %c0_12 = arith.constant 0 : index
    %c0_13 = arith.constant 0 : index
    %24 = vector.load %arg4[%c0_12, %c0_13] : memref<128x4xf32, #tpu.memory_space<vmem>>, vector<128x4xf32>
    tpu.vector_store %arg4[%c0_12, %c0_13], %23 {strides = array<i32>} : memref<128x4xf32, #tpu.memory_space<vmem>>, vector<128x4xf32>,
    return
  }
  func.func @transform_0(%arg0: i32) -> (i32, i32) {
    %c0_i32 = arith.constant 0 : i32
    %c0_i32_0 = arith.constant 0 : i32
    return %arg0, %c0_i32 : i32, i32
  }
  func.func @transform_1(%arg0: i32) -> (i32, i32) {
    %c0_i32 = arith.constant 0 : i32
    %c0_i32_0 = arith.constant 0 : i32
    %c0_i32_1 = arith.constant 0 : i32
    return %c0_i32, %c0_i32_0 : i32, i32
  }
  func.func @transform_2(%arg0: i32) -> (i32, i32, i32) {
    %c0_i32 = arith.constant 0 : i32
    %c0_i32_0 = arith.constant 0 : i32
    %c0_i32_1 = arith.constant 0 : i32
    return %c0_i32, %arg0, %c0_i32_0 : i32, i32, i32
  }
  func.func @transform_3(%arg0: i32) -> (i32, i32) {
    %c0_i32 = arith.constant 0 : i32
    %c0_i32_0 = arith.constant 0 : i32
    return %arg0, %c0_i32 : i32, i32
  }
}

module attributes {stable_mosaic.version = 11 : i64} {
  func.func @_project_kernel(%arg0: i32, %arg1: memref<128x16xf32, #tpu.memory_space<vmem>>, %arg2: memref<16x68xf32, #tpu.memory_space<vmem>>, %arg3: memref<2x128x64xbf16, #tpu.memory_space<vmem>>, %arg4: memref<128x4xf32, #tpu.memory_space<vmem>>) attributes {dimension_semantics = [#tpu.dimension_semantics<parallel>], iteration_bounds = array<i64: 2>, scalar_prefetch = 0 : i64, scratch_operands = 0 : i64, tpu.core_type = #tpu.core_type<tc>, window_params = [{transform_indices = @transform_0, window_bounds = array<i64: 128, 16>}, {pipeline_mode = #tpu.pipeline_mode<synchronous>, transform_indices = @transform_1, window_bounds = array<i64: 16, 68>}, {transform_indices = @transform_2, window_bounds = array<i64: 2, 128, 64>}, {transform_indices = @transform_3, window_bounds = array<i64: 128, 4>}]} {
    %c0 = arith.constant 0 : index
    %c0_0 = arith.constant 0 : index
    %0 = vector.load %arg1[%c0, %c0_0] : memref<128x16xf32, #tpu.memory_space<vmem>>, vector<128x16xf32>
    %cst = arith.constant 0.000000e+00 : f32
    %1 = vector.broadcast %cst : f32 to vector<128x16xf32>
    %2 = arith.cmpf ogt, %0, %1 : vector<128x16xf32>
    %3 = math.exp %0 : vector<128x16xf32>
    %cst_1 = arith.constant 1.000000e+00 : f32
    %4 = vector.broadcast %cst_1 : f32 to vector<128x16xf32>
    %5 = arith.subf %3, %4 : vector<128x16xf32>
    %6 = arith.select %2, %0, %5 : vector<128x16xi1>, vector<128x16xf32>
    %c0_2 = arith.constant 0 : index
    %c0_3 = arith.constant 0 : index
    %7 = vector.load %arg2[%c0_2, %c0_3] : memref<16x68xf32, #tpu.memory_space<vmem>>, vector<16x68xf32>
    %cst_4 = arith.constant dense<0.000000e+00> : vector<128x68xf32>
    %8 = tpu.matmul %6, %7, %cst_4 {dimension_numbers = #tpu.dot_dimension_numbers<[1], [0], [0], [1], [0, 0, 1, 1], [], []>} : vector<128x16xf32>, vector<16x68xf32>, vector<128x68xf32> -> vector<128x68xf32>
    %cst_5 = arith.constant 1.000000e+00 : f32
    %9 = vector.broadcast %cst_5 : f32 to vector<128x1xf32>
    %cst_6 = arith.constant 0.000000e+00 : f32
    %10 = vector.broadcast %cst_6 : f32 to vector<128x31xf32>
    %11 = vector.extract_strided_slice %8 {offsets = [0, 0], sizes = [128, 32], strides = [1, 1]} : vector<128x68xf32> to vector<128x32xf32>
    %12 = tpu.concatenate %11, %9, %10 in 1 : vector<128x32xf32>, vector<128x1xf32>, vector<128x31xf32> -> vector<128x64xf32>
    %13 = arith.truncf %12 : vector<128x64xf32> to vector<128x64xbf16>
    %c0_7 = arith.constant 0 : index
    %c0_8 = arith.constant 0 : index
    %c0_9 = arith.constant 0 : index
    %14 = vector.load %arg3[%c0_7, %c0_8, %c0_9] : memref<2x128x64xbf16, #tpu.memory_space<vmem>>, vector<1x128x64xbf16>
    %15 = vector.shape_cast %14 : vector<1x128x64xbf16> to vector<128x64xbf16>
    %16 = vector.shape_cast %13 : vector<128x64xbf16> to vector<1x128x64xbf16>
    tpu.vector_store %arg3[%c0_7, %c0_8, %c0_9], %16 {strides = array<i32>} : memref<2x128x64xbf16, #tpu.memory_space<vmem>>, vector<1x128x64xbf16>,
    %17 = vector.extract_strided_slice %8 {offsets = [0, 32], sizes = [128, 32], strides = [1, 1]} : vector<128x68xf32> to vector<128x32xf32>
    %18 = tpu.concatenate %17, %9, %10 in 1 : vector<128x32xf32>, vector<128x1xf32>, vector<128x31xf32> -> vector<128x64xf32>
    %19 = arith.truncf %18 : vector<128x64xf32> to vector<128x64xbf16>
    %c1 = arith.constant 1 : index
    %c0_10 = arith.constant 0 : index
    %c0_11 = arith.constant 0 : index
    %20 = vector.load %arg3[%c1, %c0_10, %c0_11] : memref<2x128x64xbf16, #tpu.memory_space<vmem>>, vector<1x128x64xbf16>
    %21 = vector.shape_cast %20 : vector<1x128x64xbf16> to vector<128x64xbf16>
    %22 = vector.shape_cast %19 : vector<128x64xbf16> to vector<1x128x64xbf16>
    tpu.vector_store %arg3[%c1, %c0_10, %c0_11], %22 {strides = array<i32>} : memref<2x128x64xbf16, #tpu.memory_space<vmem>>, vector<1x128x64xbf16>,
    %23 = vector.extract_strided_slice %8 {offsets = [0, 64], sizes = [128, 4], strides = [1, 1]} : vector<128x68xf32> to vector<128x4xf32>
    %c0_12 = arith.constant 0 : index
    %c0_13 = arith.constant 0 : index
    %24 = vector.load %arg4[%c0_12, %c0_13] : memref<128x4xf32, #tpu.memory_space<vmem>>, vector<128x4xf32>
    tpu.vector_store %arg4[%c0_12, %c0_13], %23 {strides = array<i32>} : memref<128x4xf32, #tpu.memory_space<vmem>>, vector<128x4xf32>,
    return
  }
  func.func @transform_0(%arg0: i32) -> (i32, i32) {
    %c0_i32 = arith.constant 0 : i32
    %c0_i32_0 = arith.constant 0 : i32
    return %arg0, %c0_i32 : i32, i32
  }
  func.func @transform_1(%arg0: i32) -> (i32, i32) {
    %c0_i32 = arith.constant 0 : i32
    %c0_i32_0 = arith.constant 0 : i32
    %c0_i32_1 = arith.constant 0 : i32
    return %c0_i32, %c0_i32_0 : i32, i32
  }
  func.func @transform_2(%arg0: i32) -> (i32, i32, i32) {
    %c0_i32 = arith.constant 0 : i32
    %c0_i32_0 = arith.constant 0 : i32
    %c0_i32_1 = arith.constant 0 : i32
    return %c0_i32, %arg0, %c0_i32_0 : i32, i32, i32
  }
  func.func @transform_3(%arg0: i32) -> (i32, i32) {
    %c0_i32 = arith.constant 0 : i32
    %c0_i32_0 = arith.constant 0 : i32
    return %arg0, %c0_i32 : i32, i32
  }
}

module attributes {stable_mosaic.version = 11 : i64} {
  func.func @_gat_attn_kernel(%arg0: i32, %arg1: i32, %arg2: memref<2x384x64xbf16, #tpu.memory_space<vmem>>, %arg3: memref<2x384xf32, #tpu.memory_space<vmem>>, %arg4: memref<128x2xf32, #tpu.memory_space<vmem>>, %arg5: memref<128x384xbf16, #tpu.memory_space<vmem>>, %arg6: memref<1x64xf32, #tpu.memory_space<vmem>>, %arg7: memref<128x64xf32, #tpu.memory_space<vmem>>, %arg8: memref<2x128x1xf32, #tpu.memory_space<vmem>>, %arg9: memref<2x128x64xf32, #tpu.memory_space<vmem>>) attributes {dimension_semantics = [#tpu.dimension_semantics<parallel>, #tpu.dimension_semantics<arbitrary>], iteration_bounds = array<i64: 2, 1>, scalar_prefetch = 0 : i64, scratch_operands = 2 : i64, tpu.core_type = #tpu.core_type<tc>, window_params = [{transform_indices = @transform_0, window_bounds = array<i64: 2, 384, 64>}, {transform_indices = @transform_1, window_bounds = array<i64: 2, 384>}, {transform_indices = @transform_2, window_bounds = array<i64: 128, 2>}, {transform_indices = @transform_3, window_bounds = array<i64: 128, 384>}, {pipeline_mode = #tpu.pipeline_mode<synchronous>, transform_indices = @transform_4, window_bounds = array<i64: 1, 64>}, {transform_indices = @transform_5, window_bounds = array<i64: 128, 64>}]} {
    %c0_i32 = arith.constant 0 : i32
    %0 = arith.cmpi eq, %arg1, %c0_i32 : i32
    %1 = arith.extui %0 : i1 to i32
    %c0_i32_0 = arith.constant 0 : i32
    %2 = arith.cmpi ne, %1, %c0_i32_0 : i32
    scf.if %2 {
      %cst_42 = arith.constant -1.000000e+30 : f32
      %77 = vector.broadcast %cst_42 : f32 to vector<2x128x1xf32>
      %c0_43 = arith.constant 0 : index
      %c0_44 = arith.constant 0 : index
      %c0_45 = arith.constant 0 : index
      %78 = vector.load %arg8[%c0_43, %c0_44, %c0_45] : memref<2x128x1xf32, #tpu.memory_space<vmem>>, vector<2x128x1xf32>
      tpu.vector_store %arg8[%c0_43, %c0_44, %c0_45], %77 {strides = array<i32>} : memref<2x128x1xf32, #tpu.memory_space<vmem>>, vector<2x128x1xf32>,
      %cst_46 = arith.constant 0.000000e+00 : f32
      %79 = vector.broadcast %cst_46 : f32 to vector<2x128x64xf32>
      %c0_47 = arith.constant 0 : index
      %c0_48 = arith.constant 0 : index
      %c0_49 = arith.constant 0 : index
      %80 = vector.load %arg9[%c0_47, %c0_48, %c0_49] : memref<2x128x64xf32, #tpu.memory_space<vmem>>, vector<2x128x64xf32>
      tpu.vector_store %arg9[%c0_47, %c0_48, %c0_49], %79 {strides = array<i32>} : memref<2x128x64xf32, #tpu.memory_space<vmem>>, vector<2x128x64xf32>,
    } else {
    }
    %c0 = arith.constant 0 : index
    %c0_1 = arith.constant 0 : index
    %3 = vector.load %arg5[%c0, %c0_1] : memref<128x384xbf16, #tpu.memory_space<vmem>>, vector<128x384xbf16>
    %c0_2 = arith.constant 0 : index
    %c0_3 = arith.constant 0 : index
    %4 = vector.load %arg4[%c0_2, %c0_3] : memref<128x2xf32, #tpu.memory_space<vmem>>, vector<128x2xf32>
    %c0_4 = arith.constant 0 : index
    %c0_5 = arith.constant 0 : index
    %5 = vector.load %arg3[%c0_4, %c0_5] : memref<2x384xf32, #tpu.memory_space<vmem>>, vector<2x384xf32>
    %6 = vector.extract_strided_slice %4 {offsets = [0, 0], sizes = [128, 1], strides = [1, 1]} : vector<128x2xf32> to vector<128x1xf32>
    %7 = vector.extract_strided_slice %5 {offsets = [0, 0], sizes = [1, 384], strides = [1, 1]} : vector<2x384xf32> to vector<1x384xf32>
    %8 = vector.broadcast %6 : vector<128x1xf32> to vector<128x384xf32>
    %9 = vector.broadcast %7 : vector<1x384xf32> to vector<128x384xf32>
    %10 = arith.addf %8, %9 : vector<128x384xf32>
    %cst = arith.constant 2.000000e-01 : f32
    %11 = vector.broadcast %cst : f32 to vector<128x384xf32>
    %12 = arith.mulf %11, %10 : vector<128x384xf32>
    %13 = arith.maximumf %10, %12 : vector<128x384xf32>
    %c0_6 = arith.constant 0 : index
    %c0_7 = arith.constant 0 : index
    %c0_8 = arith.constant 0 : index
    %14 = vector.load %arg8[%c0_6, %c0_7, %c0_8] : memref<2x128x1xf32, #tpu.memory_space<vmem>>, vector<1x128x1xf32>
    %15 = vector.shape_cast %14 : vector<1x128x1xf32> to vector<128x1xf32>
    %cst_9 = arith.constant dense<0xFF800000> : vector<128xf32>
    %16 = vector.multi_reduction <maximumf>, %13, %cst_9 [1] : vector<128x384xf32> to vector<128xf32>
    %17 = vector.shape_cast %16 : vector<128xf32> to vector<128x1xf32>
    %18 = arith.maximumf %15, %17 : vector<128x1xf32>
    %19 = vector.broadcast %18 : vector<128x1xf32> to vector<128x384xf32>
    %20 = arith.subf %13, %19 : vector<128x384xf32>
    %21 = math.exp %20 : vector<128x384xf32>
    %22 = arith.truncf %21 : vector<128x384xf32> to vector<128x384xbf16>
    %23 = arith.mulf %22, %3 : vector<128x384xbf16>
    %c0_10 = arith.constant 0 : index
    %c0_11 = arith.constant 0 : index
    %c0_12 = arith.constant 0 : index
    %24 = vector.load %arg2[%c0_10, %c0_11, %c0_12] : memref<2x384x64xbf16, #tpu.memory_space<vmem>>, vector<1x384x64xbf16>
    %25 = vector.shape_cast %24 : vector<1x384x64xbf16> to vector<384x64xbf16>
    %cst_13 = arith.constant dense<0.000000e+00> : vector<128x64xf32>
    %26 = tpu.matmul %23, %25, %cst_13 {dimension_numbers = #tpu.dot_dimension_numbers<[1], [0], [0], [1], [0, 0, 1, 1], [], []>} : vector<128x384xbf16>, vector<384x64xbf16>, vector<128x64xf32> -> vector<128x64xf32>
    %27 = arith.subf %15, %18 : vector<128x1xf32>
    %28 = math.exp %27 : vector<128x1xf32>
    %c0_14 = arith.constant 0 : index
    %c0_15 = arith.constant 0 : index
    %c0_16 = arith.constant 0 : index
    %29 = vector.load %arg9[%c0_14, %c0_15, %c0_16] : memref<2x128x64xf32, #tpu.memory_space<vmem>>, vector<1x128x64xf32>
    %30 = vector.shape_cast %29 : vector<1x128x64xf32> to vector<128x64xf32>
    %31 = vector.broadcast %28 : vector<128x1xf32> to vector<128x64xf32>
    %32 = arith.mulf %30, %31 : vector<128x64xf32>
    %33 = arith.addf %32, %26 : vector<128x64xf32>
    %c0_17 = arith.constant 0 : index
    %c0_18 = arith.constant 0 : index
    %c0_19 = arith.constant 0 : index
    %34 = vector.load %arg9[%c0_17, %c0_18, %c0_19] : memref<2x128x64xf32, #tpu.memory_space<vmem>>, vector<1x128x64xf32>
    %35 = vector.shape_cast %34 : vector<1x128x64xf32> to vector<128x64xf32>
    %36 = vector.shape_cast %33 : vector<128x64xf32> to vector<1x128x64xf32>
    tpu.vector_store %arg9[%c0_17, %c0_18, %c0_19], %36 {strides = array<i32>} : memref<2x128x64xf32, #tpu.memory_space<vmem>>, vector<1x128x64xf32>,
    %c0_20 = arith.constant 0 : index
    %c0_21 = arith.constant 0 : index
    %c0_22 = arith.constant 0 : index
    %37 = vector.load %arg8[%c0_20, %c0_21, %c0_22] : memref<2x128x1xf32, #tpu.memory_space<vmem>>, vector<1x128x1xf32>
    %38 = vector.shape_cast %37 : vector<1x128x1xf32> to vector<128x1xf32>
    %39 = vector.shape_cast %18 : vector<128x1xf32> to vector<1x128x1xf32>
    tpu.vector_store %arg8[%c0_20, %c0_21, %c0_22], %39 {strides = array<i32>} : memref<2x128x1xf32, #tpu.memory_space<vmem>>, vector<1x128x1xf32>,
    %40 = vector.extract_strided_slice %4 {offsets = [0, 1], sizes = [128, 1], strides = [1, 1]} : vector<128x2xf32> to vector<128x1xf32>
    %41 = vector.extract_strided_slice %5 {offsets = [1, 0], sizes = [1, 384], strides = [1, 1]} : vector<2x384xf32> to vector<1x384xf32>
    %42 = vector.broadcast %40 : vector<128x1xf32> to vector<128x384xf32>
    %43 = vector.broadcast %41 : vector<1x384xf32> to vector<128x384xf32>
    %44 = arith.addf %42, %43 : vector<128x384xf32>
    %cst_23 = arith.constant 2.000000e-01 : f32
    %45 = vector.broadcast %cst_23 : f32 to vector<128x384xf32>
    %46 = arith.mulf %45, %44 : vector<128x384xf32>
    %47 = arith.maximumf %44, %46 : vector<128x384xf32>
    %c1 = arith.constant 1 : index
    %c0_24 = arith.constant 0 : index
    %c0_25 = arith.constant 0 : index
    %48 = vector.load %arg8[%c1, %c0_24, %c0_25] : memref<2x128x1xf32, #tpu.memory_space<vmem>>, vector<1x128x1xf32>
    %49 = vector.shape_cast %48 : vector<1x128x1xf32> to vector<128x1xf32>
    %cst_26 = arith.constant dense<0xFF800000> : vector<128xf32>
    %50 = vector.multi_reduction <maximumf>, %47, %cst_26 [1] : vector<128x384xf32> to vector<128xf32>
    %51 = vector.shape_cast %50 : vector<128xf32> to vector<128x1xf32>
    %52 = arith.maximumf %49, %51 : vector<128x1xf32>
    %53 = vector.broadcast %52 : vector<128x1xf32> to vector<128x384xf32>
    %54 = arith.subf %47, %53 : vector<128x384xf32>
    %55 = math.exp %54 : vector<128x384xf32>
    %56 = arith.truncf %55 : vector<128x384xf32> to vector<128x384xbf16>
    %57 = arith.mulf %56, %3 : vector<128x384xbf16>
    %c1_27 = arith.constant 1 : index
    %c0_28 = arith.constant 0 : index
    %c0_29 = arith.constant 0 : index
    %58 = vector.load %arg2[%c1_27, %c0_28, %c0_29] : memref<2x384x64xbf16, #tpu.memory_space<vmem>>, vector<1x384x64xbf16>
    %59 = vector.shape_cast %58 : vector<1x384x64xbf16> to vector<384x64xbf16>
    %cst_30 = arith.constant dense<0.000000e+00> : vector<128x64xf32>
    %60 = tpu.matmul %57, %59, %cst_30 {dimension_numbers = #tpu.dot_dimension_numbers<[1], [0], [0], [1], [0, 0, 1, 1], [], []>} : vector<128x384xbf16>, vector<384x64xbf16>, vector<128x64xf32> -> vector<128x64xf32>
    %61 = arith.subf %49, %52 : vector<128x1xf32>
    %62 = math.exp %61 : vector<128x1xf32>
    %c1_31 = arith.constant 1 : index
    %c0_32 = arith.constant 0 : index
    %c0_33 = arith.constant 0 : index
    %63 = vector.load %arg9[%c1_31, %c0_32, %c0_33] : memref<2x128x64xf32, #tpu.memory_space<vmem>>, vector<1x128x64xf32>
    %64 = vector.shape_cast %63 : vector<1x128x64xf32> to vector<128x64xf32>
    %65 = vector.broadcast %62 : vector<128x1xf32> to vector<128x64xf32>
    %66 = arith.mulf %64, %65 : vector<128x64xf32>
    %67 = arith.addf %66, %60 : vector<128x64xf32>
    %c1_34 = arith.constant 1 : index
    %c0_35 = arith.constant 0 : index
    %c0_36 = arith.constant 0 : index
    %68 = vector.load %arg9[%c1_34, %c0_35, %c0_36] : memref<2x128x64xf32, #tpu.memory_space<vmem>>, vector<1x128x64xf32>
    %69 = vector.shape_cast %68 : vector<1x128x64xf32> to vector<128x64xf32>
    %70 = vector.shape_cast %67 : vector<128x64xf32> to vector<1x128x64xf32>
    tpu.vector_store %arg9[%c1_34, %c0_35, %c0_36], %70 {strides = array<i32>} : memref<2x128x64xf32, #tpu.memory_space<vmem>>, vector<1x128x64xf32>,
    %c1_37 = arith.constant 1 : index
    %c0_38 = arith.constant 0 : index
    %c0_39 = arith.constant 0 : index
    %71 = vector.load %arg8[%c1_37, %c0_38, %c0_39] : memref<2x128x1xf32, #tpu.memory_space<vmem>>, vector<1x128x1xf32>
    %72 = vector.shape_cast %71 : vector<1x128x1xf32> to vector<128x1xf32>
    %73 = vector.shape_cast %52 : vector<128x1xf32> to vector<1x128x1xf32>
    tpu.vector_store %arg8[%c1_37, %c0_38, %c0_39], %73 {strides = array<i32>} : memref<2x128x1xf32, #tpu.memory_space<vmem>>, vector<1x128x1xf32>,
    %c0_i32_40 = arith.constant 0 : i32
    %74 = arith.cmpi eq, %arg1, %c0_i32_40 : i32
    %75 = arith.extui %74 : i1 to i32
    %c0_i32_41 = arith.constant 0 : i32
    %76 = arith.cmpi ne, %75, %c0_i32_41 : i32
    scf.if %76 {
      %c0_42 = arith.constant 0 : index
      %c0_43 = arith.constant 0 : index
      %c0_44 = arith.constant 0 : index
      %77 = vector.load %arg9[%c0_42, %c0_43, %c0_44] : memref<2x128x64xf32, #tpu.memory_space<vmem>>, vector<1x128x64xf32>
      %78 = vector.shape_cast %77 : vector<1x128x64xf32> to vector<128x64xf32>
      %79 = vector.extract_strided_slice %78 {offsets = [0, 32], sizes = [128, 1], strides = [1, 1]} : vector<128x64xf32> to vector<128x1xf32>
      %cst_45 = arith.constant 9.99999968E-21 : f32
      %80 = vector.broadcast %cst_45 : f32 to vector<128x1xf32>
      %81 = arith.maximumf %79, %80 : vector<128x1xf32>
      %82 = tpu.reciprocal %81 {approx = true} : vector<128x1xf32> -> vector<128x1xf32>
      %83 = vector.extract_strided_slice %78 {offsets = [0, 0], sizes = [128, 32], strides = [1, 1]} : vector<128x64xf32> to vector<128x32xf32>
      %84 = vector.broadcast %82 : vector<128x1xf32> to vector<128x32xf32>
      %85 = arith.mulf %83, %84 : vector<128x32xf32>
      %c1_46 = arith.constant 1 : index
      %c0_47 = arith.constant 0 : index
      %c0_48 = arith.constant 0 : index
      %86 = vector.load %arg9[%c1_46, %c0_47, %c0_48] : memref<2x128x64xf32, #tpu.memory_space<vmem>>, vector<1x128x64xf32>
      %87 = vector.shape_cast %86 : vector<1x128x64xf32> to vector<128x64xf32>
      %88 = vector.extract_strided_slice %87 {offsets = [0, 32], sizes = [128, 1], strides = [1, 1]} : vector<128x64xf32> to vector<128x1xf32>
      %cst_49 = arith.constant 9.99999968E-21 : f32
      %89 = vector.broadcast %cst_49 : f32 to vector<128x1xf32>
      %90 = arith.maximumf %88, %89 : vector<128x1xf32>
      %91 = tpu.reciprocal %90 {approx = true} : vector<128x1xf32> -> vector<128x1xf32>
      %92 = vector.extract_strided_slice %87 {offsets = [0, 0], sizes = [128, 32], strides = [1, 1]} : vector<128x64xf32> to vector<128x32xf32>
      %93 = vector.broadcast %91 : vector<128x1xf32> to vector<128x32xf32>
      %94 = arith.mulf %92, %93 : vector<128x32xf32>
      %95 = tpu.concatenate %85, %94 in 1 : vector<128x32xf32>, vector<128x32xf32> -> vector<128x64xf32>
      %c0_50 = arith.constant 0 : index
      %c0_51 = arith.constant 0 : index
      %96 = vector.load %arg6[%c0_50, %c0_51] : memref<1x64xf32, #tpu.memory_space<vmem>>, vector<1x64xf32>
      %97 = vector.broadcast %96 : vector<1x64xf32> to vector<128x64xf32>
      %98 = arith.addf %95, %97 : vector<128x64xf32>
      %c0_52 = arith.constant 0 : index
      %c0_53 = arith.constant 0 : index
      %99 = vector.load %arg7[%c0_52, %c0_53] : memref<128x64xf32, #tpu.memory_space<vmem>>, vector<128x64xf32>
      tpu.vector_store %arg7[%c0_52, %c0_53], %98 {strides = array<i32>} : memref<128x64xf32, #tpu.memory_space<vmem>>, vector<128x64xf32>,
    } else {
    }
    return
  }
  func.func @transform_0(%arg0: i32, %arg1: i32) -> (i32, i32, i32) {
    %c0_i32 = arith.constant 0 : i32
    %c0_i32_0 = arith.constant 0 : i32
    %c0_i32_1 = arith.constant 0 : i32
    return %c0_i32, %arg1, %c0_i32_0 : i32, i32, i32
  }
  func.func @transform_1(%arg0: i32, %arg1: i32) -> (i32, i32) {
    %c0_i32 = arith.constant 0 : i32
    %c0_i32_0 = arith.constant 0 : i32
    return %c0_i32, %arg1 : i32, i32
  }
  func.func @transform_2(%arg0: i32, %arg1: i32) -> (i32, i32) {
    %c0_i32 = arith.constant 0 : i32
    %c0_i32_0 = arith.constant 0 : i32
    return %arg0, %c0_i32 : i32, i32
  }
  func.func @transform_3(%arg0: i32, %arg1: i32) -> (i32, i32) {
    %c0_i32 = arith.constant 0 : i32
    return %arg0, %arg1 : i32, i32
  }
  func.func @transform_4(%arg0: i32, %arg1: i32) -> (i32, i32) {
    %c0_i32 = arith.constant 0 : i32
    %c0_i32_0 = arith.constant 0 : i32
    %c0_i32_1 = arith.constant 0 : i32
    return %c0_i32, %c0_i32_0 : i32, i32
  }
  func.func @transform_5(%arg0: i32, %arg1: i32) -> (i32, i32) {
    %c0_i32 = arith.constant 0 : i32
    %c0_i32_0 = arith.constant 0 : i32
    return %arg0, %c0_i32 : i32, i32
  }
}

module attributes {stable_mosaic.version = 11 : i64} {
  func.func @_gat_attn_kernel(%arg0: i32, %arg1: i32, %arg2: memref<2x256x64xbf16, #tpu.memory_space<vmem>>, %arg3: memref<2x256xf32, #tpu.memory_space<vmem>>, %arg4: memref<128x2xf32, #tpu.memory_space<vmem>>, %arg5: memref<128x256xbf16, #tpu.memory_space<vmem>>, %arg6: memref<1x64xf32, #tpu.memory_space<vmem>>, %arg7: memref<128x64xf32, #tpu.memory_space<vmem>>, %arg8: memref<2x128x1xf32, #tpu.memory_space<vmem>>, %arg9: memref<2x128x64xf32, #tpu.memory_space<vmem>>) attributes {dimension_semantics = [#tpu.dimension_semantics<parallel>, #tpu.dimension_semantics<arbitrary>], iteration_bounds = array<i64: 3, 1>, scalar_prefetch = 0 : i64, scratch_operands = 2 : i64, tpu.core_type = #tpu.core_type<tc>, window_params = [{transform_indices = @transform_0, window_bounds = array<i64: 2, 256, 64>}, {transform_indices = @transform_1, window_bounds = array<i64: 2, 256>}, {transform_indices = @transform_2, window_bounds = array<i64: 128, 2>}, {transform_indices = @transform_3, window_bounds = array<i64: 128, 256>}, {pipeline_mode = #tpu.pipeline_mode<synchronous>, transform_indices = @transform_4, window_bounds = array<i64: 1, 64>}, {transform_indices = @transform_5, window_bounds = array<i64: 128, 64>}]} {
    %c0_i32 = arith.constant 0 : i32
    %0 = arith.cmpi eq, %arg1, %c0_i32 : i32
    %1 = arith.extui %0 : i1 to i32
    %c0_i32_0 = arith.constant 0 : i32
    %2 = arith.cmpi ne, %1, %c0_i32_0 : i32
    scf.if %2 {
      %cst_42 = arith.constant -1.000000e+30 : f32
      %77 = vector.broadcast %cst_42 : f32 to vector<2x128x1xf32>
      %c0_43 = arith.constant 0 : index
      %c0_44 = arith.constant 0 : index
      %c0_45 = arith.constant 0 : index
      %78 = vector.load %arg8[%c0_43, %c0_44, %c0_45] : memref<2x128x1xf32, #tpu.memory_space<vmem>>, vector<2x128x1xf32>
      tpu.vector_store %arg8[%c0_43, %c0_44, %c0_45], %77 {strides = array<i32>} : memref<2x128x1xf32, #tpu.memory_space<vmem>>, vector<2x128x1xf32>,
      %cst_46 = arith.constant 0.000000e+00 : f32
      %79 = vector.broadcast %cst_46 : f32 to vector<2x128x64xf32>
      %c0_47 = arith.constant 0 : index
      %c0_48 = arith.constant 0 : index
      %c0_49 = arith.constant 0 : index
      %80 = vector.load %arg9[%c0_47, %c0_48, %c0_49] : memref<2x128x64xf32, #tpu.memory_space<vmem>>, vector<2x128x64xf32>
      tpu.vector_store %arg9[%c0_47, %c0_48, %c0_49], %79 {strides = array<i32>} : memref<2x128x64xf32, #tpu.memory_space<vmem>>, vector<2x128x64xf32>,
    } else {
    }
    %c0 = arith.constant 0 : index
    %c0_1 = arith.constant 0 : index
    %3 = vector.load %arg5[%c0, %c0_1] : memref<128x256xbf16, #tpu.memory_space<vmem>>, vector<128x256xbf16>
    %c0_2 = arith.constant 0 : index
    %c0_3 = arith.constant 0 : index
    %4 = vector.load %arg4[%c0_2, %c0_3] : memref<128x2xf32, #tpu.memory_space<vmem>>, vector<128x2xf32>
    %c0_4 = arith.constant 0 : index
    %c0_5 = arith.constant 0 : index
    %5 = vector.load %arg3[%c0_4, %c0_5] : memref<2x256xf32, #tpu.memory_space<vmem>>, vector<2x256xf32>
    %6 = vector.extract_strided_slice %4 {offsets = [0, 0], sizes = [128, 1], strides = [1, 1]} : vector<128x2xf32> to vector<128x1xf32>
    %7 = vector.extract_strided_slice %5 {offsets = [0, 0], sizes = [1, 256], strides = [1, 1]} : vector<2x256xf32> to vector<1x256xf32>
    %8 = vector.broadcast %6 : vector<128x1xf32> to vector<128x256xf32>
    %9 = vector.broadcast %7 : vector<1x256xf32> to vector<128x256xf32>
    %10 = arith.addf %8, %9 : vector<128x256xf32>
    %cst = arith.constant 2.000000e-01 : f32
    %11 = vector.broadcast %cst : f32 to vector<128x256xf32>
    %12 = arith.mulf %11, %10 : vector<128x256xf32>
    %13 = arith.maximumf %10, %12 : vector<128x256xf32>
    %c0_6 = arith.constant 0 : index
    %c0_7 = arith.constant 0 : index
    %c0_8 = arith.constant 0 : index
    %14 = vector.load %arg8[%c0_6, %c0_7, %c0_8] : memref<2x128x1xf32, #tpu.memory_space<vmem>>, vector<1x128x1xf32>
    %15 = vector.shape_cast %14 : vector<1x128x1xf32> to vector<128x1xf32>
    %cst_9 = arith.constant dense<0xFF800000> : vector<128xf32>
    %16 = vector.multi_reduction <maximumf>, %13, %cst_9 [1] : vector<128x256xf32> to vector<128xf32>
    %17 = vector.shape_cast %16 : vector<128xf32> to vector<128x1xf32>
    %18 = arith.maximumf %15, %17 : vector<128x1xf32>
    %19 = vector.broadcast %18 : vector<128x1xf32> to vector<128x256xf32>
    %20 = arith.subf %13, %19 : vector<128x256xf32>
    %21 = math.exp %20 : vector<128x256xf32>
    %22 = arith.truncf %21 : vector<128x256xf32> to vector<128x256xbf16>
    %23 = arith.mulf %22, %3 : vector<128x256xbf16>
    %c0_10 = arith.constant 0 : index
    %c0_11 = arith.constant 0 : index
    %c0_12 = arith.constant 0 : index
    %24 = vector.load %arg2[%c0_10, %c0_11, %c0_12] : memref<2x256x64xbf16, #tpu.memory_space<vmem>>, vector<1x256x64xbf16>
    %25 = vector.shape_cast %24 : vector<1x256x64xbf16> to vector<256x64xbf16>
    %cst_13 = arith.constant dense<0.000000e+00> : vector<128x64xf32>
    %26 = tpu.matmul %23, %25, %cst_13 {dimension_numbers = #tpu.dot_dimension_numbers<[1], [0], [0], [1], [0, 0, 1, 1], [], []>} : vector<128x256xbf16>, vector<256x64xbf16>, vector<128x64xf32> -> vector<128x64xf32>
    %27 = arith.subf %15, %18 : vector<128x1xf32>
    %28 = math.exp %27 : vector<128x1xf32>
    %c0_14 = arith.constant 0 : index
    %c0_15 = arith.constant 0 : index
    %c0_16 = arith.constant 0 : index
    %29 = vector.load %arg9[%c0_14, %c0_15, %c0_16] : memref<2x128x64xf32, #tpu.memory_space<vmem>>, vector<1x128x64xf32>
    %30 = vector.shape_cast %29 : vector<1x128x64xf32> to vector<128x64xf32>
    %31 = vector.broadcast %28 : vector<128x1xf32> to vector<128x64xf32>
    %32 = arith.mulf %30, %31 : vector<128x64xf32>
    %33 = arith.addf %32, %26 : vector<128x64xf32>
    %c0_17 = arith.constant 0 : index
    %c0_18 = arith.constant 0 : index
    %c0_19 = arith.constant 0 : index
    %34 = vector.load %arg9[%c0_17, %c0_18, %c0_19] : memref<2x128x64xf32, #tpu.memory_space<vmem>>, vector<1x128x64xf32>
    %35 = vector.shape_cast %34 : vector<1x128x64xf32> to vector<128x64xf32>
    %36 = vector.shape_cast %33 : vector<128x64xf32> to vector<1x128x64xf32>
    tpu.vector_store %arg9[%c0_17, %c0_18, %c0_19], %36 {strides = array<i32>} : memref<2x128x64xf32, #tpu.memory_space<vmem>>, vector<1x128x64xf32>,
    %c0_20 = arith.constant 0 : index
    %c0_21 = arith.constant 0 : index
    %c0_22 = arith.constant 0 : index
    %37 = vector.load %arg8[%c0_20, %c0_21, %c0_22] : memref<2x128x1xf32, #tpu.memory_space<vmem>>, vector<1x128x1xf32>
    %38 = vector.shape_cast %37 : vector<1x128x1xf32> to vector<128x1xf32>
    %39 = vector.shape_cast %18 : vector<128x1xf32> to vector<1x128x1xf32>
    tpu.vector_store %arg8[%c0_20, %c0_21, %c0_22], %39 {strides = array<i32>} : memref<2x128x1xf32, #tpu.memory_space<vmem>>, vector<1x128x1xf32>,
    %40 = vector.extract_strided_slice %4 {offsets = [0, 1], sizes = [128, 1], strides = [1, 1]} : vector<128x2xf32> to vector<128x1xf32>
    %41 = vector.extract_strided_slice %5 {offsets = [1, 0], sizes = [1, 256], strides = [1, 1]} : vector<2x256xf32> to vector<1x256xf32>
    %42 = vector.broadcast %40 : vector<128x1xf32> to vector<128x256xf32>
    %43 = vector.broadcast %41 : vector<1x256xf32> to vector<128x256xf32>
    %44 = arith.addf %42, %43 : vector<128x256xf32>
    %cst_23 = arith.constant 2.000000e-01 : f32
    %45 = vector.broadcast %cst_23 : f32 to vector<128x256xf32>
    %46 = arith.mulf %45, %44 : vector<128x256xf32>
    %47 = arith.maximumf %44, %46 : vector<128x256xf32>
    %c1 = arith.constant 1 : index
    %c0_24 = arith.constant 0 : index
    %c0_25 = arith.constant 0 : index
    %48 = vector.load %arg8[%c1, %c0_24, %c0_25] : memref<2x128x1xf32, #tpu.memory_space<vmem>>, vector<1x128x1xf32>
    %49 = vector.shape_cast %48 : vector<1x128x1xf32> to vector<128x1xf32>
    %cst_26 = arith.constant dense<0xFF800000> : vector<128xf32>
    %50 = vector.multi_reduction <maximumf>, %47, %cst_26 [1] : vector<128x256xf32> to vector<128xf32>
    %51 = vector.shape_cast %50 : vector<128xf32> to vector<128x1xf32>
    %52 = arith.maximumf %49, %51 : vector<128x1xf32>
    %53 = vector.broadcast %52 : vector<128x1xf32> to vector<128x256xf32>
    %54 = arith.subf %47, %53 : vector<128x256xf32>
    %55 = math.exp %54 : vector<128x256xf32>
    %56 = arith.truncf %55 : vector<128x256xf32> to vector<128x256xbf16>
    %57 = arith.mulf %56, %3 : vector<128x256xbf16>
    %c1_27 = arith.constant 1 : index
    %c0_28 = arith.constant 0 : index
    %c0_29 = arith.constant 0 : index
    %58 = vector.load %arg2[%c1_27, %c0_28, %c0_29] : memref<2x256x64xbf16, #tpu.memory_space<vmem>>, vector<1x256x64xbf16>
    %59 = vector.shape_cast %58 : vector<1x256x64xbf16> to vector<256x64xbf16>
    %cst_30 = arith.constant dense<0.000000e+00> : vector<128x64xf32>
    %60 = tpu.matmul %57, %59, %cst_30 {dimension_numbers = #tpu.dot_dimension_numbers<[1], [0], [0], [1], [0, 0, 1, 1], [], []>} : vector<128x256xbf16>, vector<256x64xbf16>, vector<128x64xf32> -> vector<128x64xf32>
    %61 = arith.subf %49, %52 : vector<128x1xf32>
    %62 = math.exp %61 : vector<128x1xf32>
    %c1_31 = arith.constant 1 : index
    %c0_32 = arith.constant 0 : index
    %c0_33 = arith.constant 0 : index
    %63 = vector.load %arg9[%c1_31, %c0_32, %c0_33] : memref<2x128x64xf32, #tpu.memory_space<vmem>>, vector<1x128x64xf32>
    %64 = vector.shape_cast %63 : vector<1x128x64xf32> to vector<128x64xf32>
    %65 = vector.broadcast %62 : vector<128x1xf32> to vector<128x64xf32>
    %66 = arith.mulf %64, %65 : vector<128x64xf32>
    %67 = arith.addf %66, %60 : vector<128x64xf32>
    %c1_34 = arith.constant 1 : index
    %c0_35 = arith.constant 0 : index
    %c0_36 = arith.constant 0 : index
    %68 = vector.load %arg9[%c1_34, %c0_35, %c0_36] : memref<2x128x64xf32, #tpu.memory_space<vmem>>, vector<1x128x64xf32>
    %69 = vector.shape_cast %68 : vector<1x128x64xf32> to vector<128x64xf32>
    %70 = vector.shape_cast %67 : vector<128x64xf32> to vector<1x128x64xf32>
    tpu.vector_store %arg9[%c1_34, %c0_35, %c0_36], %70 {strides = array<i32>} : memref<2x128x64xf32, #tpu.memory_space<vmem>>, vector<1x128x64xf32>,
    %c1_37 = arith.constant 1 : index
    %c0_38 = arith.constant 0 : index
    %c0_39 = arith.constant 0 : index
    %71 = vector.load %arg8[%c1_37, %c0_38, %c0_39] : memref<2x128x1xf32, #tpu.memory_space<vmem>>, vector<1x128x1xf32>
    %72 = vector.shape_cast %71 : vector<1x128x1xf32> to vector<128x1xf32>
    %73 = vector.shape_cast %52 : vector<128x1xf32> to vector<1x128x1xf32>
    tpu.vector_store %arg8[%c1_37, %c0_38, %c0_39], %73 {strides = array<i32>} : memref<2x128x1xf32, #tpu.memory_space<vmem>>, vector<1x128x1xf32>,
    %c0_i32_40 = arith.constant 0 : i32
    %74 = arith.cmpi eq, %arg1, %c0_i32_40 : i32
    %75 = arith.extui %74 : i1 to i32
    %c0_i32_41 = arith.constant 0 : i32
    %76 = arith.cmpi ne, %75, %c0_i32_41 : i32
    scf.if %76 {
      %c0_42 = arith.constant 0 : index
      %c0_43 = arith.constant 0 : index
      %c0_44 = arith.constant 0 : index
      %77 = vector.load %arg9[%c0_42, %c0_43, %c0_44] : memref<2x128x64xf32, #tpu.memory_space<vmem>>, vector<1x128x64xf32>
      %78 = vector.shape_cast %77 : vector<1x128x64xf32> to vector<128x64xf32>
      %79 = vector.extract_strided_slice %78 {offsets = [0, 32], sizes = [128, 1], strides = [1, 1]} : vector<128x64xf32> to vector<128x1xf32>
      %cst_45 = arith.constant 9.99999968E-21 : f32
      %80 = vector.broadcast %cst_45 : f32 to vector<128x1xf32>
      %81 = arith.maximumf %79, %80 : vector<128x1xf32>
      %82 = tpu.reciprocal %81 {approx = true} : vector<128x1xf32> -> vector<128x1xf32>
      %83 = vector.extract_strided_slice %78 {offsets = [0, 0], sizes = [128, 32], strides = [1, 1]} : vector<128x64xf32> to vector<128x32xf32>
      %84 = vector.broadcast %82 : vector<128x1xf32> to vector<128x32xf32>
      %85 = arith.mulf %83, %84 : vector<128x32xf32>
      %c1_46 = arith.constant 1 : index
      %c0_47 = arith.constant 0 : index
      %c0_48 = arith.constant 0 : index
      %86 = vector.load %arg9[%c1_46, %c0_47, %c0_48] : memref<2x128x64xf32, #tpu.memory_space<vmem>>, vector<1x128x64xf32>
      %87 = vector.shape_cast %86 : vector<1x128x64xf32> to vector<128x64xf32>
      %88 = vector.extract_strided_slice %87 {offsets = [0, 32], sizes = [128, 1], strides = [1, 1]} : vector<128x64xf32> to vector<128x1xf32>
      %cst_49 = arith.constant 9.99999968E-21 : f32
      %89 = vector.broadcast %cst_49 : f32 to vector<128x1xf32>
      %90 = arith.maximumf %88, %89 : vector<128x1xf32>
      %91 = tpu.reciprocal %90 {approx = true} : vector<128x1xf32> -> vector<128x1xf32>
      %92 = vector.extract_strided_slice %87 {offsets = [0, 0], sizes = [128, 32], strides = [1, 1]} : vector<128x64xf32> to vector<128x32xf32>
      %93 = vector.broadcast %91 : vector<128x1xf32> to vector<128x32xf32>
      %94 = arith.mulf %92, %93 : vector<128x32xf32>
      %95 = tpu.concatenate %85, %94 in 1 : vector<128x32xf32>, vector<128x32xf32> -> vector<128x64xf32>
      %c0_50 = arith.constant 0 : index
      %c0_51 = arith.constant 0 : index
      %96 = vector.load %arg6[%c0_50, %c0_51] : memref<1x64xf32, #tpu.memory_space<vmem>>, vector<1x64xf32>
      %97 = vector.broadcast %96 : vector<1x64xf32> to vector<128x64xf32>
      %98 = arith.addf %95, %97 : vector<128x64xf32>
      %c0_52 = arith.constant 0 : index
      %c0_53 = arith.constant 0 : index
      %99 = vector.load %arg7[%c0_52, %c0_53] : memref<128x64xf32, #tpu.memory_space<vmem>>, vector<128x64xf32>
      tpu.vector_store %arg7[%c0_52, %c0_53], %98 {strides = array<i32>} : memref<128x64xf32, #tpu.memory_space<vmem>>, vector<128x64xf32>,
    } else {
    }
    return
  }
  func.func @transform_0(%arg0: i32, %arg1: i32) -> (i32, i32, i32) {
    %c0_i32 = arith.constant 0 : i32
    %c0_i32_0 = arith.constant 0 : i32
    %c0_i32_1 = arith.constant 0 : i32
    return %c0_i32, %arg1, %c0_i32_0 : i32, i32, i32
  }
  func.func @transform_1(%arg0: i32, %arg1: i32) -> (i32, i32) {
    %c0_i32 = arith.constant 0 : i32
    %c0_i32_0 = arith.constant 0 : i32
    return %c0_i32, %arg1 : i32, i32
  }
  func.func @transform_2(%arg0: i32, %arg1: i32) -> (i32, i32) {
    %c0_i32 = arith.constant 0 : i32
    %c0_i32_0 = arith.constant 0 : i32
    return %arg0, %c0_i32 : i32, i32
  }
  func.func @transform_3(%arg0: i32, %arg1: i32) -> (i32, i32) {
    %c0_i32 = arith.constant 0 : i32
    return %arg0, %arg1 : i32, i32
  }
  func.func @transform_4(%arg0: i32, %arg1: i32) -> (i32, i32) {
    %c0_i32 = arith.constant 0 : i32
    %c0_i32_0 = arith.constant 0 : i32
    %c0_i32_1 = arith.constant 0 : i32
    return %c0_i32, %c0_i32_0 : i32, i32
  }
  func.func @transform_5(%arg0: i32, %arg1: i32) -> (i32, i32) {
    %c0_i32 = arith.constant 0 : i32
    %c0_i32_0 = arith.constant 0 : i32
    return %arg0, %c0_i32 : i32, i32
  }
}

</mosaic_0001>

<llo_original>
// kernel: inter_graph_attention.4
$region0: #{inter_graph_attention.4}
  #allocation0 [shape = 'u32[]', space=smem, size = 0x4, offset = 0x4, fixed_abs, tag = 'smem constant byte address 0x4 - core index']
  #allocation1 [shape = 'u32[144,128]{1,0:T(1,128)}', space=vmem, size = 0x12000, scoped, tag = 'internal scratch']
  %s0 = inlined_call_operand.vmem [shape: f32[384,16], index: 0, kind: input, shape index: {}]
  %s1 = inlined_call_operand.vmem [shape: f32[16,68], index: 1, kind: input, shape index: {}]
  %s2 = inlined_call_operand.vmem [shape: bf16[2,384,64], index: 2, kind: output, shape index: {0}]
  %s3 = inlined_call_operand.vmem [shape: f32[384,4], index: 3, kind: output, shape index: {1}]
  %4 = xla_tuple %s2, %s3
  %s5 = sld [smem:[#allocation0]]
  $region86: #{inter_graph_attention.4} parent=0
    _
  %s7 = ssub.s32 1, %s5
  %s8 = scalar_select 0, %s7, %s5
  $region1: #{inter_graph_attention.4} parent=0
    #allocation2 [shape = 'u8[131072]{0}', space=vmem, size = 0x20000, scoped, tag = 'output window, operand 0']
    loop: start=0, step=1, limit=5
    $region2: #{inter_graph_attention.4} parent=1 // loop_pre_header
      _
    $region3: #{inter_graph_attention.4} parent=1 // loop_header
      %s10 = sphi 0, %s14
      %p11 = scmp.ge.s32.totalorder %s10, 5
      %s20 = sphi 0, %s22
      %s23 = sphi 0, %s20
      %s24 = sphi 0, %s23
      %s40 = sphi 0, %s24
      %s44 = sphi 0, %s44
      %s46 = sphi 0, %s44
      %s47 = sphi 0, %s46
      %s61 = sphi 0, %s47
      %s67 = sphi 0, %s69
      %s70 = sphi 0, %s67
      %s71 = sphi 0, %s70
      %s87 = sphi 0, %s71
      %s93 = sphi 0, %s95
      %s96 = sphi 0, %s93
      %s97 = sphi 0, %s96
      %s113 = sphi 0, %s97
    $region4: #{inter_graph_attention.4} parent=1 // loop_header_branch
      %13 = sbr.rel (%p11) target = $region8
    $region5: #{inter_graph_attention.4} parent=1 // loop_body
      %s15 = ssub.s32 %s10, 1
      %s16 = ssub.s32 %s10, 2
      %s17 = sadd.s32 %s10, 1
      %s18 = ssub.s32 %s10, %s17
      %p19 = scmp.eq.s32.totalorder %s18, 0
      %s21 = sadd.s32 %s20, 1
      %s22 = scalar_select %p19, %s20, %s21
      %p25 = pneg %p19
      %p26 = scmp.eq.s32.totalorder %s10, 2
      %p27 = por %p25, %p26
      %p28 = scmp.ne.s32.totalorder %s20, %s23
      %p29 = scmp.eq.s32.totalorder %s10, 0
      %p30 = por %p28, %p29
      %p31 = scmp.ne.s32.totalorder %s20, %s23
      %p32 = scmp.eq.s32.totalorder %s15, 2
      %p33 = por %p31, %p32
      %p34 = scmp.ne.s32.totalorder %s23, %s24
      %p35 = scmp.eq.s32.totalorder %s15, 0
      %p36 = por %p34, %p35
      %p37 = scmp.ne.s32.totalorder %s23, %s24
      %p38 = scmp.eq.s32.totalorder %s16, 2
      %p39 = por %p37, %p38
      %p41 = scmp.ne.s32.totalorder %s24, %s40
      %p42 = scmp.eq.s32.totalorder %s16, 0
      %p43 = por %p41, %p42
      %s45 = sadd.s32 %s44, 1
      %p48 = scmp.eq.s32.totalorder %s10, 2
      %p49 = scmp.ne.s32.totalorder %s44, %s46
      %p50 = scmp.eq.s32.totalorder %s10, 0
      %p51 = por %p49, %p50
      %p52 = scmp.ne.s32.totalorder %s44, %s46
      %p53 = scmp.eq.s32.totalorder %s15, 2
      %p54 = por %p52, %p53
      %p55 = scmp.ne.s32.totalorder %s46, %s47
      %p56 = scmp.eq.s32.totalorder %s15, 0
      %p57 = por %p55, %p56
      %p58 = scmp.ne.s32.totalorder %s46, %s47
      %p59 = scmp.eq.s32.totalorder %s16, 2
      %p60 = por %p58, %p59
      %p62 = scmp.ne.s32.totalorder %s47, %s61
      %p63 = scmp.eq.s32.totalorder %s16, 0
      %p64 = por %p62, %p63
      %s65 = ssub.s32 %s10, %s17
      %p66 = scmp.eq.s32.totalorder %s65, 0
      %s68 = sadd.s32 %s67, 1
      %s69 = scalar_select %p66, %s67, %s68
      %p72 = pneg %p66
      %p73 = scmp.eq.s32.totalorder %s10, 2
      %p74 = por %p72, %p73
      %p75 = scmp.ne.s32.totalorder %s67, %s70
      %p76 = scmp.eq.s32.totalorder %s10, 0
      %p77 = por %p75, %p76
      %p78 = scmp.ne.s32.totalorder %s67, %s70
      %p79 = scmp.eq.s32.totalorder %s15, 2
      %p80 = por %p78, %p79
      %p81 = scmp.ne.s32.totalorder %s70, %s71
      %p82 = scmp.eq.s32.totalorder %s15, 0
      %p83 = por %p81, %p82
      %p84 = scmp.ne.s32.totalorder %s70, %s71
      %p85 = scmp.eq.s32.totalorder %s16, 2
      %p86 = por %p84, %p85
      %p88 = scmp.ne.s32.totalorder %s71, %s87
      %p89 = scmp.eq.s32.totalorder %s16, 0
      %p90 = por %p88, %p89
      %s91 = ssub.s32 %s10, %s17
      %p92 = scmp.eq.s32.totalorder %s91, 0
      %s94 = sadd.s32 %s93, 1
      %s95 = scalar_select %p92, %s93, %s94
      %p98 = pneg %p92
      %p99 = scmp.eq.s32.totalorder %s10, 2
      %p100 = por %p98, %p99
      %p101 = scmp.ne.s32.totalorder %s93, %s96
      %p102 = scmp.eq.s32.totalorder %s10, 0
      %p103 = por %p101, %p102
      %p104 = scmp.ne.s32.totalorder %s93, %s96
      %p105 = scmp.eq.s32.totalorder %s15, 2
      %p106 = por %p104, %p105
      %p107 = scmp.ne.s32.totalorder %s96, %s97
      %p108 = scmp.eq.s32.totalorder %s15, 0
      %p109 = por %p107, %p108
      %p110 = scmp.ne.s32.totalorder %s96, %s97
      %p111 = scmp.eq.s32.totalorder %s16, 2
      %p112 = por %p110, %p111
      %p114 = scmp.ne.s32.totalorder %s97, %s113
      %p115 = scmp.eq.s32.totalorder %s16, 0
      %p116 = por %p114, %p115
      %p117 = scmp.le.s32.totalorder 1, %s10
      %p118 = scmp.lt.s32.totalorder %s10, 4
      %p119 = pnand %p117, %p118
      %p120 = pneg %p119
      // Predicated region
      $region9: #{inter_graph_attention.4} parent=5 // pred_check
        _
      $region10: #{inter_graph_attention.4} parent=5 // pred_check_branch
        %122 = sbr.rel (%p119) target = $region12
      $region11: #{inter_graph_attention.4} parent=5 // pred_region
        %s123 = ssub.s32 %s10, 1
        // Predicated region
        $region13: #{inter_graph_attention.4} parent=11 // pred_check
          %p124 = pneg %p57
        $region14: #{inter_graph_attention.4} parent=11 // pred_check_branch
          %126 = sbr.rel (%p124) target = $region16
        $region15: #{inter_graph_attention.4} parent=11 // pred_region
          _
        $region16: #{inter_graph_attention.4} parent=11 // pred_fallthru
          _
      $region12: #{inter_graph_attention.4} parent=5 // pred_fallthru
        _
      %p127 = scmp.lt.s32.totalorder %s10, 3
      // Predicated region
      $region17: #{inter_graph_attention.4} parent=5 // pred_check
        %p128 = pneg %p127
      $region18: #{inter_graph_attention.4} parent=5 // pred_check_branch
        %130 = sbr.rel (%p128) target = $region20
      $region19: #{inter_graph_attention.4} parent=5 // pred_region
        // Predicated region
        $region21: #{inter_graph_attention.4} parent=19 // pred_check
          %p131 = pneg %p30
        $region22: #{inter_graph_attention.4} parent=19 // pred_check_branch
          %133 = sbr.rel (%p131) target = $region24
        $region23: #{inter_graph_attention.4} parent=19 // pred_region
          %s134 = smul.u32 16, %s10
          %p135 = scmp.lt.s32.totalorder %s134, 47
          %s136 = scalar_select %p135, %s134, 47
          %s137 = smul.addr %s136, 8
          %s138 = scalar_lea.vmem %s0, %s137
          %s139 = smul.u32 16, %s10
        $region24: #{inter_graph_attention.4} parent=19 // pred_fallthru
          _
      $region20: #{inter_graph_attention.4} parent=5 // pred_fallthru
        _
      %p140 = scmp.le.s32.totalorder 1, %s10
      %p141 = scmp.lt.s32.totalorder %s10, 4
      %p142 = pnand %p140, %p141
      %p143 = pneg %p142
      // Predicated region
      $region25: #{inter_graph_attention.4} parent=5 // pred_check
        _
      $region26: #{inter_graph_attention.4} parent=5 // pred_check_branch
        %145 = sbr.rel (%p142) target = $region28
      $region27: #{inter_graph_attention.4} parent=5 // pred_region
        %s146 = ssub.s32 %s10, 1
        %s147 = smul.u32 16, %s15
        %p148 = scmp.lt.s32.totalorder %s147, 47
        %s149 = scalar_select %p148, %s147, 47
        %s150 = smul.addr %s149, 8
        %s151 = scalar_lea.vmem %s0, %s150
        %p152 = pneg %p36
        %p153 = pneg %p33
        %p154 = pneg %p57
        %p155 = pneg %p54
        %p156 = pneg %p83
        %p157 = pneg %p80
        %s158 = sand.u32 %s70, 1
        %s159 = sand.u32 %s70, 1
        %s160 = smul.addr %s159, 128
        %s161 = scalar_lea.vmem [#allocation2], %s160
        %p162 = pneg %p109
        %p163 = pneg %p106
        %s164 = smul.u32 16, %s15
        %p165 = scmp.lt.s32.totalorder %s164, 47
        %s166 = scalar_select %p165, %s164, 47
        %s167 = smul.addr %s166, 8
        %s168 = scalar_lea.vmem %s3, %s167
        %s169 = smul.u32 16, %s15
        %p170 = scmp.lt.s32.totalorder %s169, 47
        %s171 = scalar_select %p170, %s169, 47
        %s172 = smul.addr %s171, 8
        %s173 = scalar_lea.vmem %s0, %s172
        %s174 = smul.u32 16, %s15
        %s175 = smul.u32 16, %s15
        %s176 = smul.u32 16, %s15
        %p177 = scmp.lt.s32.totalorder %s176, 47
        %s178 = scalar_select %p177, %s176, 47
        %s179 = smul.addr %s178, 8
        %s180 = scalar_lea.vmem %s3, %s179
        %s181 = smul.u32 16, %s15
        %v182 = vld [vmem:[%s173] sm:$0xff]
        %v183 = vld [vmem:[%s173 + $0x8] sm:$0xff]
        %v184 = vld [vmem:[%s173 + $0x10] sm:$0xff]
        %v185 = vld [vmem:[%s173 + $0x18] sm:$0xff]
        %v186 = vld [vmem:[%s173 + $0x20] sm:$0xff]
        %v187 = vld [vmem:[%s173 + $0x28] sm:$0xff]
        %v188 = vld [vmem:[%s173 + $0x30] sm:$0xff]
        %v189 = vld [vmem:[%s173 + $0x38] sm:$0xff]
        %v190 = vld [vmem:[%s173 + $0x40] sm:$0xff]
        %v191 = vld [vmem:[%s173 + $0x48] sm:$0xff]
        %v192 = vld [vmem:[%s173 + $0x50] sm:$0xff]
        %v193 = vld [vmem:[%s173 + $0x58] sm:$0xff]
        %v194 = vld [vmem:[%s173 + $0x60] sm:$0xff]
        %v195 = vld [vmem:[%s173 + $0x68] sm:$0xff]
        %v196 = vld [vmem:[%s173 + $0x70] sm:$0xff]
        %v197 = vld [vmem:[%s173 + $0x78] sm:$0xff]
        %vm198 = vcmp.gt.f32.partialorder %v182, 0.0
        %vm199 = vcmp.gt.f32.partialorder %v183, 0.0
        %vm200 = vcmp.gt.f32.partialorder %v184, 0.0
        %vm201 = vcmp.gt.f32.partialorder %v185, 0.0
        %vm202 = vcmp.gt.f32.partialorder %v186, 0.0
        %vm203 = vcmp.gt.f32.partialorder %v187, 0.0
        %vm204 = vcmp.gt.f32.partialorder %v188, 0.0
        %vm205 = vcmp.gt.f32.partialorder %v189, 0.0
        %vm206 = vcmp.gt.f32.partialorder %v190, 0.0
        %vm207 = vcmp.gt.f32.partialorder %v191, 0.0
        %vm208 = vcmp.gt.f32.partialorder %v192, 0.0
        %vm209 = vcmp.gt.f32.partialorder %v193, 0.0
        %vm210 = vcmp.gt.f32.partialorder %v194, 0.0
        %vm211 = vcmp.gt.f32.partialorder %v195, 0.0
        %vm212 = vcmp.gt.f32.partialorder %v196, 0.0
        %vm213 = vcmp.gt.f32.partialorder %v197, 0.0
        %v214 = vmul.f32 %v182, 1.442695
        %v215 = vpow.pop %v214
        %v216 = vmul.f32 %v183, 1.442695
        %v217 = vpow.pop %v216
        %v218 = vmul.f32 %v184, 1.442695
        %v219 = vpow.pop %v218
        %v220 = vmul.f32 %v185, 1.442695
        %v221 = vpow.pop %v220
        %v222 = vmul.f32 %v186, 1.442695
        %v223 = vpow.pop %v222
        %v224 = vmul.f32 %v187, 1.442695
        %v225 = vpow.pop %v224
        %v226 = vmul.f32 %v188, 1.442695
        %v227 = vpow.pop %v226
        %v228 = vmul.f32 %v189, 1.442695
        %v229 = vpow.pop %v228
        %v230 = vmul.f32 %v190, 1.442695
        %v231 = vpow.pop %v230
        %v232 = vmul.f32 %v191, 1.442695
        %v233 = vpow.pop %v232
        %v234 = vmul.f32 %v192, 1.442695
        %v235 = vpow.pop %v234
        %v236 = vmul.f32 %v193, 1.442695
        %v237 = vpow.pop %v236
        %v238 = vmul.f32 %v194, 1.442695
        %v239 = vpow.pop %v238
        %v240 = vmul.f32 %v195, 1.442695
        %v241 = vpow.pop %v240
        %v242 = vmul.f32 %v196, 1.442695
        %v243 = vpow.pop %v242
        %v244 = vmul.f32 %v197, 1.442695
        %v245 = vpow.pop %v244
        %v246 = vsub.f32 %v215, 1.0
        %v247 = vsub.f32 %v217, 1.0
        %v248 = vsub.f32 %v219, 1.0
        %v249 = vsub.f32 %v221, 1.0
        %v250 = vsub.f32 %v223, 1.0
        %v251 = vsub.f32 %v225, 1.0
        %v252 = vsub.f32 %v227, 1.0
        %v253 = vsub.f32 %v229, 1.0
        %v254 = vsub.f32 %v231, 1.0
        %v255 = vsub.f32 %v233, 1.0
        %v256 = vsub.f32 %v235, 1.0
        %v257 = vsub.f32 %v237, 1.0
        %v258 = vsub.f32 %v239, 1.0
        %v259 = vsub.f32 %v241, 1.0
        %v260 = vsub.f32 %v243, 1.0
        %v261 = vsub.f32 %v245, 1.0
        %v262 = vsel %vm198, %v182, %v246
        %v263 = vsel %vm199, %v183, %v247
        %v264 = vsel %vm200, %v184, %v248
        %v265 = vsel %vm201, %v185, %v249
        %v266 = vsel %vm202, %v186, %v250
        %v267 = vsel %vm203, %v187, %v251
        %v268 = vsel %vm204, %v188, %v252
        %v269 = vsel %vm205, %v189, %v253
        %v270 = vsel %vm206, %v190, %v254
        %v271 = vsel %vm207, %v191, %v255
        %v272 = vsel %vm208, %v192, %v256
        %v273 = vsel %vm209, %v193, %v257
        %v274 = vsel %vm210, %v194, %v258
        %v275 = vsel %vm211, %v195, %v259
        %v276 = vsel %vm212, %v196, %v260
        %v277 = vsel %vm213, %v197, %v261
        %v278 = vld [vmem:[%s1] sm:$0xff]
        %v279 = vld [vmem:[%s1 + $0x8] sm:$0xff]
        %vm280 = vcmask 130048
        %v282 = vsel %vm280, %v262, 0
        %v285 = vsel %vm280, %v263, 0
        %v288 = vsel %vm280, %v264, 0
        %v291 = vsel %vm280, %v265, 0
        %v294 = vsel %vm280, %v266, 0
        %v297 = vsel %vm280, %v267, 0
        %v300 = vsel %vm280, %v268, 0
        %v303 = vsel %vm280, %v269, 0
        %v306 = vsel %vm280, %v270, 0
        %v309 = vsel %vm280, %v271, 0
        %v312 = vsel %vm280, %v272, 0
        %v315 = vsel %vm280, %v273, 0
        %v318 = vsel %vm280, %v274, 0
        %v321 = vsel %vm280, %v275, 0
        %v324 = vsel %vm280, %v276, 0
        %v327 = vsel %vm280, %v277, 0
        %329 = vmatprep.subr.mxu0 0.0
        %330 = vmatpush1.msra.mxu0 0.0
        %331 = vmatprep.subr.mxu0 0.0
        %332 = vmatpush1.msra.mxu0 0.0
        %333 = vmatprep.subr.mxu0 0.0
        %334 = vmatpush1.msra.mxu0 0.0
        %335 = vmatprep.subr.mxu0 0.0
        %336 = vmatpush1.msra.mxu0 0.0
        %337 = vmatprep.subr.mxu0 0.0
        %338 = vmatpush1.msra.mxu0 0.0
        %339 = vmatprep.subr.mxu0 0.0
        %340 = vmatpush1.msra.mxu0 0.0
        %341 = vmatprep.subr.mxu0 0.0
        %342 = vmatpush1.msra.mxu0 0.0
        %343 = vmatprep.subr.mxu0 0.0
        %344 = vmatpush1.msra.mxu0 0.0
        %345 = vmatprep.subr.mxu0 0.0
        %346 = vmatpush1.msra.mxu0 0.0
        %347 = vmatprep.subr.mxu0 0.0
        %348 = vmatpush1.msra.mxu0 0.0
        %349 = vmatprep.subr.mxu0 0.0
        %350 = vmatpush1.msra.mxu0 0.0
        %351 = vmatprep.subr.mxu0 0.0
        %352 = vmatpush1.msra.mxu0 0.0
        %353 = vmatprep.subr.mxu0 0.0
        %354 = vmatpush1.msra.mxu0 0.0
        %355 = vmatprep.subr.mxu0 0.0
        %356 = vmatpush1.msra.mxu0 0.0
        %357 = vmatprep.subr.mxu0 0.0
        %358 = vmatpush1.msra.mxu0 %v279
        %359 = vmatprep.subr.mxu0 0.0
        %360 = vmatpush1.msra.mxu0 %v278
        %361 = vmatprep.subr.mxu0 0.0
        %362 = vmatpush2.msra.mxu0 0.0
        %363 = vmatprep.subr.mxu0 0.0
        %364 = vmatpush2.msra.mxu0 0.0
        %365 = vmatprep.subr.mxu0 0.0
        %366 = vmatpush2.msra.mxu0 0.0
        %367 = vmatprep.subr.mxu0 0.0
        %368 = vmatpush2.msra.mxu0 0.0
        %369 = vmatprep.subr.mxu0 0.0
        %370 = vmatpush2.msra.mxu0 0.0
        %371 = vmatprep.subr.mxu0 0.0
        %372 = vmatpush2.msra.mxu0 0.0
        %373 = vmatprep.subr.mxu0 0.0
        %374 = vmatpush2.msra.mxu0 0.0
        %375 = vmatprep.subr.mxu0 0.0
        %376 = vmatpush2.msra.mxu0 0.0
        %377 = vmatprep.subr.mxu0 0.0
        %378 = vmatpush2.msra.mxu0 0.0
        %379 = vmatprep.subr.mxu0 0.0
        %380 = vmatpush2.msra.mxu0 0.0
        %381 = vmatprep.subr.mxu0 0.0
        %382 = vmatpush2.msra.mxu0 0.0
        %383 = vmatprep.subr.mxu0 0.0
        %384 = vmatpush2.msra.mxu0 0.0
        %385 = vmatprep.subr.mxu0 0.0
        %386 = vmatpush2.msra.mxu0 0.0
        %387 = vmatprep.subr.mxu0 0.0
        %388 = vmatpush2.msra.mxu0 0.0
        %389 = vmatprep.subr.mxu0 0.0
        %390 = vmatpush2.msra.mxu0 0.0
        %391 = vmatprep.subr.mxu0 0.0
        %392 = vmatpush2.msra.mxu0 0.0
        %393 = vmatprep.mubr.f32.mxu0 0.0
        %394 = vmatmul.mubr.f32.gmra.mxu0 %v282
        %v395 = vpop.f32.mrf.mxu0
        %v396 = vadd.f32 0.0, %v395
        %v397 = vpop.f32.mrf.mxu0
        %398 = vmatprep.mubr.f32.mxu0 0.0
        %399 = vmatmul.mubr.f32.gmra.mxu0 %v285
        %v400 = vpop.f32.mrf.mxu0
        %v401 = vadd.f32 0.0, %v400
        %v402 = vpop.f32.mrf.mxu0
        %403 = vmatprep.mubr.f32.mxu0 0.0
        %404 = vmatmul.mubr.f32.gmra.mxu0 %v288
        %v405 = vpop.f32.mrf.mxu0
        %v406 = vadd.f32 0.0, %v405
        %v407 = vpop.f32.mrf.mxu0
        %408 = vmatprep.mubr.f32.mxu0 0.0
        %409 = vmatmul.mubr.f32.gmra.mxu0 %v291
        %v410 = vpop.f32.mrf.mxu0
        %v411 = vadd.f32 0.0, %v410
        %v412 = vpop.f32.mrf.mxu0
        %413 = vmatprep.mubr.f32.mxu0 0.0
        %414 = vmatmul.mubr.f32.gmra.mxu0 %v294
        %v415 = vpop.f32.mrf.mxu0
        %v416 = vadd.f32 0.0, %v415
        %v417 = vpop.f32.mrf.mxu0
        %418 = vmatprep.mubr.f32.mxu0 0.0
        %419 = vmatmul.mubr.f32.gmra.mxu0 %v297
        %v420 = vpop.f32.mrf.mxu0
        %v421 = vadd.f32 0.0, %v420
        %v422 = vpop.f32.mrf.mxu0
        %423 = vmatprep.mubr.f32.mxu0 0.0
        %424 = vmatmul.mubr.f32.gmra.mxu0 %v300
        %v425 = vpop.f32.mrf.mxu0
        %v426 = vadd.f32 0.0, %v425
        %v427 = vpop.f32.mrf.mxu0
        %428 = vmatprep.mubr.f32.mxu0 0.0
        %429 = vmatmul.mubr.f32.gmra.mxu0 %v303
        %v430 = vpop.f32.mrf.mxu0
        %v431 = vadd.f32 0.0, %v430
        %v432 = vpop.f32.mrf.mxu0
        %433 = vmatprep.mubr.f32.mxu0 0.0
        %434 = vmatmul.mubr.f32.gmra.mxu0 %v306
        %v435 = vpop.f32.mrf.mxu0
        %v436 = vadd.f32 0.0, %v435
        %v437 = vpop.f32.mrf.mxu0
        %438 = vmatprep.mubr.f32.mxu0 0.0
        %439 = vmatmul.mubr.f32.gmra.mxu0 %v309
        %v440 = vpop.f32.mrf.mxu0
        %v441 = vadd.f32 0.0, %v440
        %v442 = vpop.f32.mrf.mxu0
        %443 = vmatprep.mubr.f32.mxu0 0.0
        %444 = vmatmul.mubr.f32.gmra.mxu0 %v312
        %v445 = vpop.f32.mrf.mxu0
        %v446 = vadd.f32 0.0, %v445
        %v447 = vpop.f32.mrf.mxu0
        %448 = vmatprep.mubr.f32.mxu0 0.0
        %449 = vmatmul.mubr.f32.gmra.mxu0 %v315
        %v450 = vpop.f32.mrf.mxu0
        %v451 = vadd.f32 0.0, %v450
        %v452 = vpop.f32.mrf.mxu0
        %453 = vmatprep.mubr.f32.mxu0 0.0
        %454 = vmatmul.mubr.f32.gmra.mxu0 %v318
        %v455 = vpop.f32.mrf.mxu0
        %v456 = vadd.f32 0.0, %v455
        %v457 = vpop.f32.mrf.mxu0
        %458 = vmatprep.mubr.f32.mxu0 0.0
        %459 = vmatmul.mubr.f32.gmra.mxu0 %v321
        %v460 = vpop.f32.mrf.mxu0
        %v461 = vadd.f32 0.0, %v460
        %v462 = vpop.f32.mrf.mxu0
        %463 = vmatprep.mubr.f32.mxu0 0.0
        %464 = vmatmul.mubr.f32.gmra.mxu0 %v324
        %v465 = vpop.f32.mrf.mxu0
        %v466 = vadd.f32 0.0, %v465
        %v467 = vpop.f32.mrf.mxu0
        %468 = vmatprep.mubr.f32.mxu0 0.0
        %469 = vmatmul.mubr.f32.gmra.mxu0 %v327
        %v470 = vpop.f32.mrf.mxu0
        %v471 = vadd.f32 0.0, %v470
        %v472 = vpop.f32.mrf.mxu0
        %473 = vdwg.mxu0
        %vm474 = vcmask 261120
        %v475 = vsel %vm474, %v396, 1.0
        %v476 = vsel %vm474, %v401, 1.0
        %v477 = vsel %vm474, %v406, 1.0
        %v478 = vsel %vm474, %v411, 1.0
        %v479 = vsel %vm474, %v416, 1.0
        %v480 = vsel %vm474, %v421, 1.0
        %v481 = vsel %vm474, %v426, 1.0
        %v482 = vsel %vm474, %v431, 1.0
        %v483 = vsel %vm474, %v436, 1.0
        %v484 = vsel %vm474, %v441, 1.0
        %v485 = vsel %vm474, %v446, 1.0
        %v486 = vsel %vm474, %v451, 1.0
        %v487 = vsel %vm474, %v456, 1.0
        %v488 = vsel %vm474, %v461, 1.0
        %v489 = vsel %vm474, %v466, 1.0
        %v490 = vsel %vm474, %v471, 1.0
        %vm491 = vcmask 269312
        %v492 = vsel %vm491, %v475, 0.0
        %v493 = vsel %vm491, %v476, 0.0
        %v494 = vsel %vm491, %v477, 0.0
        %v495 = vsel %vm491, %v478, 0.0
        %v496 = vsel %vm491, %v479, 0.0
        %v497 = vsel %vm491, %v480, 0.0
        %v498 = vsel %vm491, %v481, 0.0
        %v499 = vsel %vm491, %v482, 0.0
        %v500 = vsel %vm491, %v483, 0.0
        %v501 = vsel %vm491, %v484, 0.0
        %v502 = vsel %vm491, %v485, 0.0
        %v503 = vsel %vm491, %v486, 0.0
        %v504 = vsel %vm491, %v487, 0.0
        %v505 = vsel %vm491, %v488, 0.0
        %v506 = vsel %vm491, %v489, 0.0
        %v507 = vsel %vm491, %v490, 0.0
        %v508 = vpack.c.bf16 %v493, %v492
        %v509 = vpack.c.bf16 %v495, %v494
        %v510 = vpack.c.bf16 %v497, %v496
        %v511 = vpack.c.bf16 %v499, %v498
        %v512 = vpack.c.bf16 %v501, %v500
        %v513 = vpack.c.bf16 %v503, %v502
        %v514 = vpack.c.bf16 %v505, %v504
        %v515 = vpack.c.bf16 %v507, %v506
        %v524 = vunpack.c.l.b16 %v508
        %v525 = vunpack.c.h.b16 %v508
        %v526 = vunpack.c.l.b16 %v509
        %v527 = vunpack.c.h.b16 %v509
        %v528 = vunpack.c.l.b16 %v510
        %v529 = vunpack.c.h.b16 %v510
        %v530 = vunpack.c.l.b16 %v511
        %v531 = vunpack.c.h.b16 %v511
        %v532 = vunpack.c.l.b16 %v512
        %v533 = vunpack.c.h.b16 %v512
        %v534 = vunpack.c.l.b16 %v513
        %v535 = vunpack.c.h.b16 %v513
        %v536 = vunpack.c.l.b16 %v514
        %v537 = vunpack.c.h.b16 %v514
        %v538 = vunpack.c.l.b16 %v515
        %v539 = vunpack.c.h.b16 %v515
        %v540 = vpack.c.b16 %v524, %v524
        %v541 = vpack.c.b16 %v525, %v525
        %v542 = vpack.c.b16 %v526, %v526
        %v543 = vpack.c.b16 %v527, %v527
        %v544 = vpack.c.b16 %v528, %v528
        %v545 = vpack.c.b16 %v529, %v529
        %v546 = vpack.c.b16 %v530, %v530
        %v547 = vpack.c.b16 %v531, %v531
        %v548 = vpack.c.b16 %v532, %v532
        %v549 = vpack.c.b16 %v533, %v533
        %v550 = vpack.c.b16 %v534, %v534
        %v551 = vpack.c.b16 %v535, %v535
        %v552 = vpack.c.b16 %v536, %v536
        %v553 = vpack.c.b16 %v537, %v537
        %v554 = vpack.c.b16 %v538, %v538
        %v555 = vpack.c.b16 %v539, %v539
        %vm572 = vcmask 519168
        %573 = vst.msk [vmem:[%s161] sm:$0xf] %vm572, %v540
        %574 = vst.msk [vmem:[%s161 + $0x4] sm:$0xf] %vm572, %v541
        %575 = vst.msk [vmem:[%s161 + $0x8] sm:$0xf] %vm572, %v542
        %576 = vst.msk [vmem:[%s161 + $0xc] sm:$0xf] %vm572, %v543
        %577 = vst.msk [vmem:[%s161 + $0x10] sm:$0xf] %vm572, %v544
        %578 = vst.msk [vmem:[%s161 + $0x14] sm:$0xf] %vm572, %v545
        %579 = vst.msk [vmem:[%s161 + $0x18] sm:$0xf] %vm572, %v546
        %580 = vst.msk [vmem:[%s161 + $0x1c] sm:$0xf] %vm572, %v547
        %581 = vst.msk [vmem:[%s161 + $0x20] sm:$0xf] %vm572, %v548
        %582 = vst.msk [vmem:[%s161 + $0x24] sm:$0xf] %vm572, %v549
        %583 = vst.msk [vmem:[%s161 + $0x28] sm:$0xf] %vm572, %v550
        %584 = vst.msk [vmem:[%s161 + $0x2c] sm:$0xf] %vm572, %v551
        %585 = vst.msk [vmem:[%s161 + $0x30] sm:$0xf] %vm572, %v552
        %586 = vst.msk [vmem:[%s161 + $0x34] sm:$0xf] %vm572, %v553
        %587 = vst.msk [vmem:[%s161 + $0x38] sm:$0xf] %vm572, %v554
        %588 = vst.msk [vmem:[%s161 + $0x3c] sm:$0xf] %vm572, %v555
        %605 = vrot.lane.b32.xlu0 %v396, 96
        %v606 = vpop.permute.xlu0 %605
        %607 = vrot.lane.b32.xlu0 %v401, 96
        %v608 = vpop.permute.xlu0 %607
        %609 = vrot.lane.b32.xlu0 %v406, 96
        %v610 = vpop.permute.xlu0 %609
        %611 = vrot.lane.b32.xlu0 %v411, 96
        %v612 = vpop.permute.xlu0 %611
        %613 = vrot.lane.b32.xlu0 %v416, 96
        %v614 = vpop.permute.xlu0 %613
        %615 = vrot.lane.b32.xlu0 %v421, 96
        %v616 = vpop.permute.xlu0 %615
        %617 = vrot.lane.b32.xlu0 %v426, 96
        %v618 = vpop.permute.xlu0 %617
        %619 = vrot.lane.b32.xlu0 %v431, 96
        %v620 = vpop.permute.xlu0 %619
        %621 = vrot.lane.b32.xlu0 %v436, 96
        %v622 = vpop.permute.xlu0 %621
        %623 = vrot.lane.b32.xlu0 %v441, 96
        %v624 = vpop.permute.xlu0 %623
        %625 = vrot.lane.b32.xlu0 %v446, 96
        %v626 = vpop.permute.xlu0 %625
        %627 = vrot.lane.b32.xlu0 %v451, 96
        %v628 = vpop.permute.xlu0 %627
        %629 = vrot.lane.b32.xlu0 %v456, 96
        %v630 = vpop.permute.xlu0 %629
        %631 = vrot.lane.b32.xlu0 %v461, 96
        %v632 = vpop.permute.xlu0 %631
        %633 = vrot.lane.b32.xlu0 %v466, 96
        %v634 = vpop.permute.xlu0 %633
        %635 = vrot.lane.b32.xlu0 %v471, 96
        %v636 = vpop.permute.xlu0 %635
        %v653 = vsel %vm474, %v606, 1.0
        %v654 = vsel %vm474, %v608, 1.0
        %v655 = vsel %vm474, %v610, 1.0
        %v656 = vsel %vm474, %v612, 1.0
        %v657 = vsel %vm474, %v614, 1.0
        %v658 = vsel %vm474, %v616, 1.0
        %v659 = vsel %vm474, %v618, 1.0
        %v660 = vsel %vm474, %v620, 1.0
        %v661 = vsel %vm474, %v622, 1.0
        %v662 = vsel %vm474, %v624, 1.0
        %v663 = vsel %vm474, %v626, 1.0
        %v664 = vsel %vm474, %v628, 1.0
        %v665 = vsel %vm474, %v630, 1.0
        %v666 = vsel %vm474, %v632, 1.0
        %v667 = vsel %vm474, %v634, 1.0
        %v668 = vsel %vm474, %v636, 1.0
        %v669 = vsel %vm491, %v653, 0.0
        %v670 = vsel %vm491, %v654, 0.0
        %v671 = vsel %vm491, %v655, 0.0
        %v672 = vsel %vm491, %v656, 0.0
        %v673 = vsel %vm491, %v657, 0.0
        %v674 = vsel %vm491, %v658, 0.0
        %v675 = vsel %vm491, %v659, 0.0
        %v676 = vsel %vm491, %v660, 0.0
        %v677 = vsel %vm491, %v661, 0.0
        %v678 = vsel %vm491, %v662, 0.0
        %v679 = vsel %vm491, %v663, 0.0
        %v680 = vsel %vm491, %v664, 0.0
        %v681 = vsel %vm491, %v665, 0.0
        %v682 = vsel %vm491, %v666, 0.0
        %v683 = vsel %vm491, %v667, 0.0
        %v684 = vsel %vm491, %v668, 0.0
        %v685 = vpack.c.bf16 %v670, %v669
        %v686 = vpack.c.bf16 %v672, %v671
        %v687 = vpack.c.bf16 %v674, %v673
        %v688 = vpack.c.bf16 %v676, %v675
        %v689 = vpack.c.bf16 %v678, %v677
        %v690 = vpack.c.bf16 %v680, %v679
        %v691 = vpack.c.bf16 %v682, %v681
        %v692 = vpack.c.bf16 %v684, %v683
        %v701 = vunpack.c.l.b16 %v685
        %v702 = vunpack.c.h.b16 %v685
        %v703 = vunpack.c.l.b16 %v686
        %v704 = vunpack.c.h.b16 %v686
        %v705 = vunpack.c.l.b16 %v687
        %v706 = vunpack.c.h.b16 %v687
        %v707 = vunpack.c.l.b16 %v688
        %v708 = vunpack.c.h.b16 %v688
        %v709 = vunpack.c.l.b16 %v689
        %v710 = vunpack.c.h.b16 %v689
        %v711 = vunpack.c.l.b16 %v690
        %v712 = vunpack.c.h.b16 %v690
        %v713 = vunpack.c.l.b16 %v691
        %v714 = vunpack.c.h.b16 %v691
        %v715 = vunpack.c.l.b16 %v692
        %v716 = vunpack.c.h.b16 %v692
        %v717 = vpack.c.b16 %v701, %v701
        %v718 = vpack.c.b16 %v702, %v702
        %v719 = vpack.c.b16 %v703, %v703
        %v720 = vpack.c.b16 %v704, %v704
        %v721 = vpack.c.b16 %v705, %v705
        %v722 = vpack.c.b16 %v706, %v706
        %v723 = vpack.c.b16 %v707, %v707
        %v724 = vpack.c.b16 %v708, %v708
        %v725 = vpack.c.b16 %v709, %v709
        %v726 = vpack.c.b16 %v710, %v710
        %v727 = vpack.c.b16 %v711, %v711
        %v728 = vpack.c.b16 %v712, %v712
        %v729 = vpack.c.b16 %v713, %v713
        %v730 = vpack.c.b16 %v714, %v714
        %v731 = vpack.c.b16 %v715, %v715
        %v732 = vpack.c.b16 %v716, %v716
        %s749 = scalar_lea.vmem %s161, 64 [#allocation2]
        %750 = vst.msk [vmem:[%s749] sm:$0xf] %vm572, %v717
        %751 = vst.msk [vmem:[%s749 + $0x4] sm:$0xf] %vm572, %v718
        %752 = vst.msk [vmem:[%s749 + $0x8] sm:$0xf] %vm572, %v719
        %753 = vst.msk [vmem:[%s749 + $0xc] sm:$0xf] %vm572, %v720
        %754 = vst.msk [vmem:[%s749 + $0x10] sm:$0xf] %vm572, %v721
        %755 = vst.msk [vmem:[%s749 + $0x14] sm:$0xf] %vm572, %v722
        %756 = vst.msk [vmem:[%s749 + $0x18] sm:$0xf] %vm572, %v723
        %757 = vst.msk [vmem:[%s749 + $0x1c] sm:$0xf] %vm572, %v724
        %758 = vst.msk [vmem:[%s749 + $0x20] sm:$0xf] %vm572, %v725
        %759 = vst.msk [vmem:[%s749 + $0x24] sm:$0xf] %vm572, %v726
        %760 = vst.msk [vmem:[%s749 + $0x28] sm:$0xf] %vm572, %v727
        %761 = vst.msk [vmem:[%s749 + $0x2c] sm:$0xf] %vm572, %v728
        %762 = vst.msk [vmem:[%s749 + $0x30] sm:$0xf] %vm572, %v729
        %763 = vst.msk [vmem:[%s749 + $0x34] sm:$0xf] %vm572, %v730
        %764 = vst.msk [vmem:[%s749 + $0x38] sm:$0xf] %vm572, %v731
        %765 = vst.msk [vmem:[%s749 + $0x3c] sm:$0xf] %vm572, %v732
        %766 = vrot.lane.b32.xlu0 %v396, 64
        %v767 = vpop.permute.xlu0 %766
        %768 = vrot.lane.b32.xlu0 %v401, 64
        %v769 = vpop.permute.xlu0 %768
        %770 = vrot.lane.b32.xlu0 %v406, 64
        %v771 = vpop.permute.xlu0 %770
        %772 = vrot.lane.b32.xlu0 %v411, 64
        %v773 = vpop.permute.xlu0 %772
        %774 = vrot.lane.b32.xlu0 %v416, 64
        %v775 = vpop.permute.xlu0 %774
        %776 = vrot.lane.b32.xlu0 %v421, 64
        %v777 = vpop.permute.xlu0 %776
        %778 = vrot.lane.b32.xlu0 %v426, 64
        %v779 = vpop.permute.xlu0 %778
        %780 = vrot.lane.b32.xlu0 %v431, 64
        %v781 = vpop.permute.xlu0 %780
        %782 = vrot.lane.b32.xlu0 %v436, 64
        %v783 = vpop.permute.xlu0 %782
        %784 = vrot.lane.b32.xlu0 %v441, 64
        %v785 = vpop.permute.xlu0 %784
        %786 = vrot.lane.b32.xlu0 %v446, 64
        %v787 = vpop.permute.xlu0 %786
        %788 = vrot.lane.b32.xlu0 %v451, 64
        %v789 = vpop.permute.xlu0 %788
        %790 = vrot.lane.b32.xlu0 %v456, 64
        %v791 = vpop.permute.xlu0 %790
        %792 = vrot.lane.b32.xlu0 %v461, 64
        %v793 = vpop.permute.xlu0 %792
        %794 = vrot.lane.b32.xlu0 %v466, 64
        %v795 = vpop.permute.xlu0 %794
        %796 = vrot.lane.b32.xlu0 %v471, 64
        %v797 = vpop.permute.xlu0 %796
        %vm814 = vcmask 31744
        %815 = vst.msk [vmem:[%s180] sm:$0xff] %vm814, %v767
        %816 = vst.msk [vmem:[%s180 + $0x8] sm:$0xff] %vm814, %v769
        %817 = vst.msk [vmem:[%s180 + $0x10] sm:$0xff] %vm814, %v771
        %818 = vst.msk [vmem:[%s180 + $0x18] sm:$0xff] %vm814, %v773
        %819 = vst.msk [vmem:[%s180 + $0x20] sm:$0xff] %vm814, %v775
        %820 = vst.msk [vmem:[%s180 + $0x28] sm:$0xff] %vm814, %v777
        %821 = vst.msk [vmem:[%s180 + $0x30] sm:$0xff] %vm814, %v779
        %822 = vst.msk [vmem:[%s180 + $0x38] sm:$0xff] %vm814, %v781
        %823 = vst.msk [vmem:[%s180 + $0x40] sm:$0xff] %vm814, %v783
        %824 = vst.msk [vmem:[%s180 + $0x48] sm:$0xff] %vm814, %v785
        %825 = vst.msk [vmem:[%s180 + $0x50] sm:$0xff] %vm814, %v787
        %826 = vst.msk [vmem:[%s180 + $0x58] sm:$0xff] %vm814, %v789
        %827 = vst.msk [vmem:[%s180 + $0x60] sm:$0xff] %vm814, %v791
        %828 = vst.msk [vmem:[%s180 + $0x68] sm:$0xff] %vm814, %v793
        %829 = vst.msk [vmem:[%s180 + $0x70] sm:$0xff] %vm814, %v795
        %830 = vst.msk [vmem:[%s180 + $0x78] sm:$0xff] %vm814, %v797
        %s831 = sand.u32 %s70, 1
        %s832 = sand.u32 %s70, 1
        %s833 = smul.addr %s832, 128
        %s834 = scalar_lea.vmem [#allocation2], %s833
        %s835 = smul.u32 16, %s15
        %p836 = scmp.lt.s32.totalorder %s835, 47
        %s837 = scalar_select %p836, %s835, 47
        %s838 = smul.addr %s837, 8
        %s839 = scalar_lea.vmem %s3, %s838
        // Predicated region
        $region29: #{inter_graph_attention.4} parent=27 // pred_check
          %p840 = pneg %p80
        $region30: #{inter_graph_attention.4} parent=27 // pred_check_branch
          %842 = sbr.rel (%p840) target = $region32
        $region31: #{inter_graph_attention.4} parent=27 // pred_region
          %s843 = smul.u32 16, %s15
          %s844 = smul.addr %s843, 4
          %s845 = scalar_lea.vmem %s2, %s844
          // Predicated region
          $region33: #{inter_graph_attention.4} parent=31 // pred_check
            _
          $region34: #{inter_graph_attention.4} parent=31 // pred_check_branch
            %847 = sbr.rel (0) target = $region36
          $region35: #{inter_graph_attention.4} parent=31 // pred_region
            // Predicated region
            $region37: #{inter_graph_attention.4} parent=35 // pred_check
              _
            $region38: #{inter_graph_attention.4} parent=35 // pred_check_branch
              %849 = sbr.rel target = $region40
            $region39: #{inter_graph_attention.4} parent=35 // pred_region
              // Predicated region
              $region52: #{inter_graph_attention.4} parent=39 // pred_check
                _
              $region53: #{inter_graph_attention.4} parent=39 // pred_check_branch
                %927 = sbr.rel (0) target = $region55
              $region54: #{inter_graph_attention.4} parent=39 // pred_region
                loop: start=0, step=1, limit=1
                $region56: #{inter_graph_attention.4} parent=54 // loop_pre_header
                  _
                $region57: #{inter_graph_attention.4} parent=54 // loop_header
                  %s929 = sphi 0, %s933
                  %p930 = scmp.ge.s32.totalorder %s929, 1
                  %s934 = sphi %s834, %s834
                  %s935 = sphi %s845, %s845
                $region58: #{inter_graph_attention.4} parent=54 // loop_header_branch
                  %932 = sbr.rel (%p930) target = $region62
                $region59: #{inter_graph_attention.4} parent=54 // loop_body
                  _
                $region60: #{inter_graph_attention.4} parent=54 // loop_footer
                  %s933 = sadd.s32 1, %s929
                $region61: #{inter_graph_attention.4} parent=54 // loop_footer_branch
                  %928 = sbr.rel target = $region57
                $region62: #{inter_graph_attention.4} parent=54 // loop_exit
                  _
                %s937 = ssub.s32 16, 1
                loop: start=0, step=1, limit=1
                $region63: #{inter_graph_attention.4} parent=54 // loop_pre_header
                  _
                $region64: #{inter_graph_attention.4} parent=54 // loop_header
                  %s939 = sphi 0, %s943
                  %p940 = scmp.ge.s32.totalorder %s939, 1
                  %s944 = sphi %s834, %s834
                  %s945 = sphi %s845, %s845
                $region65: #{inter_graph_attention.4} parent=54 // loop_header_branch
                  %942 = sbr.rel (%p940) target = $region69
                $region66: #{inter_graph_attention.4} parent=54 // loop_body
                  %v946 = vld [vmem:[%s944] sm:%s937]
                  %947 = vst [vmem:[%s945] sm:%s937] %v946
                  %v948 = vld [vmem:[%s944 + $0x4] sm:%s937]
                  %949 = vst [vmem:[%s945 + $0x4] sm:%s937] %v948
                  %v950 = vld [vmem:[%s944 + $0x8] sm:%s937]
                  %951 = vst [vmem:[%s945 + $0x8] sm:%s937] %v950
                  %v952 = vld [vmem:[%s944 + $0xc] sm:%s937]
                  %953 = vst [vmem:[%s945 + $0xc] sm:%s937] %v952
                  %v954 = vld [vmem:[%s944 + $0x10] sm:%s937]
                  %955 = vst [vmem:[%s945 + $0x10] sm:%s937] %v954
                  %v956 = vld [vmem:[%s944 + $0x14] sm:%s937]
                  %957 = vst [vmem:[%s945 + $0x14] sm:%s937] %v956
                  %v958 = vld [vmem:[%s944 + $0x18] sm:%s937]
                  %959 = vst [vmem:[%s945 + $0x18] sm:%s937] %v958
                  %v960 = vld [vmem:[%s944 + $0x1c] sm:%s937]
                  %961 = vst [vmem:[%s945 + $0x1c] sm:%s937] %v960
                  %v962 = vld [vmem:[%s944 + $0x20] sm:%s937]
                  %963 = vst [vmem:[%s945 + $0x20] sm:%s937] %v962
                  %v964 = vld [vmem:[%s944 + $0x24] sm:%s937]
                  %965 = vst [vmem:[%s945 + $0x24] sm:%s937] %v964
                  %v966 = vld [vmem:[%s944 + $0x28] sm:%s937]
                  %967 = vst [vmem:[%s945 + $0x28] sm:%s937] %v966
                  %v968 = vld [vmem:[%s944 + $0x2c] sm:%s937]
                  %969 = vst [vmem:[%s945 + $0x2c] sm:%s937] %v968
                  %v970 = vld [vmem:[%s944 + $0x30] sm:%s937]
                  %971 = vst [vmem:[%s945 + $0x30] sm:%s937] %v970
                  %v972 = vld [vmem:[%s944 + $0x34] sm:%s937]
                  %973 = vst [vmem:[%s945 + $0x34] sm:%s937] %v972
                  %v974 = vld [vmem:[%s944 + $0x38] sm:%s937]
                  %975 = vst [vmem:[%s945 + $0x38] sm:%s937] %v974
                  %v976 = vld [vmem:[%s944 + $0x3c] sm:%s937]
                  %977 = vst [vmem:[%s945 + $0x3c] sm:%s937] %v976
                  %v978 = vld [vmem:[%s944 + $0x40] sm:%s937]
                  %979 = vst [vmem:[%s945 + $0xc0] sm:%s937] %v978
                  %v980 = vld [vmem:[%s944 + $0x44] sm:%s937]
                  %981 = vst [vmem:[%s945 + $0xc4] sm:%s937] %v980
                  %v982 = vld [vmem:[%s944 + $0x48] sm:%s937]
                  %983 = vst [vmem:[%s945 + $0xc8] sm:%s937] %v982
                  %v984 = vld [vmem:[%s944 + $0x4c] sm:%s937]
                  %985 = vst [vmem:[%s945 + $0xcc] sm:%s937] %v984
                  %v986 = vld [vmem:[%s944 + $0x50] sm:%s937]
                  %987 = vst [vmem:[%s945 + $0xd0] sm:%s937] %v986
                  %v988 = vld [vmem:[%s944 + $0x54] sm:%s937]
                  %989 = vst [vmem:[%s945 + $0xd4] sm:%s937] %v988
                  %v990 = vld [vmem:[%s944 + $0x58] sm:%s937]
                  %991 = vst [vmem:[%s945 + $0xd8] sm:%s937] %v990
                  %v992 = vld [vmem:[%s944 + $0x5c] sm:%s937]
                  %993 = vst [vmem:[%s945 + $0xdc] sm:%s937] %v992
                  %v994 = vld [vmem:[%s944 + $0x60] sm:%s937]
                  %995 = vst [vmem:[%s945 + $0xe0] sm:%s937] %v994
                  %v996 = vld [vmem:[%s944 + $0x64] sm:%s937]
                  %997 = vst [vmem:[%s945 + $0xe4] sm:%s937] %v996
                  %v998 = vld [vmem:[%s944 + $0x68] sm:%s937]
                  %999 = vst [vmem:[%s945 + $0xe8] sm:%s937] %v998
                  %v1000 = vld [vmem:[%s944 + $0x6c] sm:%s937]
                  %1001 = vst [vmem:[%s945 + $0xec] sm:%s937] %v1000
                  %v1002 = vld [vmem:[%s944 + $0x70] sm:%s937]
                  %1003 = vst [vmem:[%s945 + $0xf0] sm:%s937] %v1002
                  %v1004 = vld [vmem:[%s944 + $0x74] sm:%s937]
                  %1005 = vst [vmem:[%s945 + $0xf4] sm:%s937] %v1004
                  %v1006 = vld [vmem:[%s944 + $0x78] sm:%s937]
                  %1007 = vst [vmem:[%s945 + $0xf8] sm:%s937] %v1006
                  %v1008 = vld [vmem:[%s944 + $0x7c] sm:%s937]
                  %1009 = vst [vmem:[%s945 + $0xfc] sm:%s937] %v1008
                $region67: #{inter_graph_attention.4} parent=54 // loop_footer
                  %s943 = sadd.s32 1, %s939
                $region68: #{inter_graph_attention.4} parent=54 // loop_footer_branch
                  %938 = sbr.rel target = $region64
                $region69: #{inter_graph_attention.4} parent=54 // loop_exit
                  _
              $region55: #{inter_graph_attention.4} parent=39 // pred_fallthru
                _
            $region40: #{inter_graph_attention.4} parent=35 // pred_fallthru
              _
            // Predicated region
            $region41: #{inter_graph_attention.4} parent=35 // pred_check
              _
            $region42: #{inter_graph_attention.4} parent=35 // pred_check_branch
              %851 = sbr.rel (0) target = $region44
            $region43: #{inter_graph_attention.4} parent=35 // pred_region
              %s853 = ssub.s32 16, 1
              loop: start=0, step=1, limit=1
              $region45: #{inter_graph_attention.4} parent=43 // loop_pre_header
                _
              $region46: #{inter_graph_attention.4} parent=43 // loop_header
                %s855 = sphi 0, %s859
                %p856 = scmp.ge.s32.totalorder %s855, 1
                %s860 = sphi %s834, %s834
                %s861 = sphi %s845, %s845
              $region47: #{inter_graph_attention.4} parent=43 // loop_header_branch
                %858 = sbr.rel (%p856) target = $region51
              $region48: #{inter_graph_attention.4} parent=43 // loop_body
                %v862 = vld [vmem:[%s860] sm:%s853]
                %863 = vst [vmem:[%s861] sm:%s853] %v862
                %v864 = vld [vmem:[%s860 + $0x4] sm:%s853]
                %865 = vst [vmem:[%s861 + $0x4] sm:%s853] %v864
                %v866 = vld [vmem:[%s860 + $0x8] sm:%s853]
                %867 = vst [vmem:[%s861 + $0x8] sm:%s853] %v866
                %v868 = vld [vmem:[%s860 + $0xc] sm:%s853]
                %869 = vst [vmem:[%s861 + $0xc] sm:%s853] %v868
                %v870 = vld [vmem:[%s860 + $0x10] sm:%s853]
                %871 = vst [vmem:[%s861 + $0x10] sm:%s853] %v870
                %v872 = vld [vmem:[%s860 + $0x14] sm:%s853]
                %873 = vst [vmem:[%s861 + $0x14] sm:%s853] %v872
                %v874 = vld [vmem:[%s860 + $0x18] sm:%s853]
                %875 = vst [vmem:[%s861 + $0x18] sm:%s853] %v874
                %v876 = vld [vmem:[%s860 + $0x1c] sm:%s853]
                %877 = vst [vmem:[%s861 + $0x1c] sm:%s853] %v876
                %v878 = vld [vmem:[%s860 + $0x20] sm:%s853]
                %879 = vst [vmem:[%s861 + $0x20] sm:%s853] %v878
                %v880 = vld [vmem:[%s860 + $0x24] sm:%s853]
                %881 = vst [vmem:[%s861 + $0x24] sm:%s853] %v880
                %v882 = vld [vmem:[%s860 + $0x28] sm:%s853]
                %883 = vst [vmem:[%s861 + $0x28] sm:%s853] %v882
                %v884 = vld [vmem:[%s860 + $0x2c] sm:%s853]
                %885 = vst [vmem:[%s861 + $0x2c] sm:%s853] %v884
                %v886 = vld [vmem:[%s860 + $0x30] sm:%s853]
                %887 = vst [vmem:[%s861 + $0x30] sm:%s853] %v886
                %v888 = vld [vmem:[%s860 + $0x34] sm:%s853]
                %889 = vst [vmem:[%s861 + $0x34] sm:%s853] %v888
                %v890 = vld [vmem:[%s860 + $0x38] sm:%s853]
                %891 = vst [vmem:[%s861 + $0x38] sm:%s853] %v890
                %v892 = vld [vmem:[%s860 + $0x3c] sm:%s853]
                %893 = vst [vmem:[%s861 + $0x3c] sm:%s853] %v892
                %v894 = vld [vmem:[%s860 + $0x40] sm:%s853]
                %895 = vst [vmem:[%s861 + $0xc0] sm:%s853] %v894
                %v896 = vld [vmem:[%s860 + $0x44] sm:%s853]
                %897 = vst [vmem:[%s861 + $0xc4] sm:%s853] %v896
                %v898 = vld [vmem:[%s860 + $0x48] sm:%s853]
                %899 = vst [vmem:[%s861 + $0xc8] sm:%s853] %v898
                %v900 = vld [vmem:[%s860 + $0x4c] sm:%s853]
                %901 = vst [vmem:[%s861 + $0xcc] sm:%s853] %v900
                %v902 = vld [vmem:[%s860 + $0x50] sm:%s853]
                %903 = vst [vmem:[%s861 + $0xd0] sm:%s853] %v902
                %v904 = vld [vmem:[%s860 + $0x54] sm:%s853]
                %905 = vst [vmem:[%s861 + $0xd4] sm:%s853] %v904
                %v906 = vld [vmem:[%s860 + $0x58] sm:%s853]
                %907 = vst [vmem:[%s861 + $0xd8] sm:%s853] %v906
                %v908 = vld [vmem:[%s860 + $0x5c] sm:%s853]
                %909 = vst [vmem:[%s861 + $0xdc] sm:%s853] %v908
                %v910 = vld [vmem:[%s860 + $0x60] sm:%s853]
                %911 = vst [vmem:[%s861 + $0xe0] sm:%s853] %v910
                %v912 = vld [vmem:[%s860 + $0x64] sm:%s853]
                %913 = vst [vmem:[%s861 + $0xe4] sm:%s853] %v912
                %v914 = vld [vmem:[%s860 + $0x68] sm:%s853]
                %915 = vst [vmem:[%s861 + $0xe8] sm:%s853] %v914
                %v916 = vld [vmem:[%s860 + $0x6c] sm:%s853]
                %917 = vst [vmem:[%s861 + $0xec] sm:%s853] %v916
                %v918 = vld [vmem:[%s860 + $0x70] sm:%s853]
                %919 = vst [vmem:[%s861 + $0xf0] sm:%s853] %v918
                %v920 = vld [vmem:[%s860 + $0x74] sm:%s853]
                %921 = vst [vmem:[%s861 + $0xf4] sm:%s853] %v920
                %v922 = vld [vmem:[%s860 + $0x78] sm:%s853]
                %923 = vst [vmem:[%s861 + $0xf8] sm:%s853] %v922
                %v924 = vld [vmem:[%s860 + $0x7c] sm:%s853]
                %925 = vst [vmem:[%s861 + $0xfc] sm:%s853] %v924
              $region49: #{inter_graph_attention.4} parent=43 // loop_footer
                %s859 = sadd.s32 1, %s855
              $region50: #{inter_graph_attention.4} parent=43 // loop_footer_branch
                %854 = sbr.rel target = $region46
              $region51: #{inter_graph_attention.4} parent=43 // loop_exit
                _
            $region44: #{inter_graph_attention.4} parent=35 // pred_fallthru
              _
          $region36: #{inter_graph_attention.4} parent=31 // pred_fallthru
            _
          %1010 = vnop
        $region32: #{inter_graph_attention.4} parent=27 // pred_fallthru
          _
        // Predicated region
        $region70: #{inter_graph_attention.4} parent=27 // pred_check
          %p1011 = pneg %p106
        $region71: #{inter_graph_attention.4} parent=27 // pred_check_branch
          %1013 = sbr.rel (%p1011) target = $region73
        $region72: #{inter_graph_attention.4} parent=27 // pred_region
          %s1014 = smul.u32 16, %s15
        $region73: #{inter_graph_attention.4} parent=27 // pred_fallthru
          _
      $region28: #{inter_graph_attention.4} parent=5 // pred_fallthru
        _
      %p1015 = scmp.le.s32.totalorder 2, %s10
      // Predicated region
      $region74: #{inter_graph_attention.4} parent=5 // pred_check
        %p1016 = pneg %p1015
      $region75: #{inter_graph_attention.4} parent=5 // pred_check_branch
        %1018 = sbr.rel (%p1016) target = $region77
      $region76: #{inter_graph_attention.4} parent=5 // pred_region
        %s1019 = ssub.s32 %s10, 2
        // Predicated region
        $region78: #{inter_graph_attention.4} parent=76 // pred_check
          %p1020 = pneg %p86
        $region79: #{inter_graph_attention.4} parent=76 // pred_check_branch
          %1022 = sbr.rel (%p1020) target = $region81
        $region80: #{inter_graph_attention.4} parent=76 // pred_region
          %s1023 = sand.u32 %s71, 1
          %s1024 = sand.u32 %s71, 1
          %s1025 = smul.addr %s1024, 128
          %s1026 = scalar_lea.vmem [#allocation2], %s1025
        $region81: #{inter_graph_attention.4} parent=76 // pred_fallthru
          _
        // Predicated region
        $region82: #{inter_graph_attention.4} parent=76 // pred_check
          %p1027 = pneg %p112
        $region83: #{inter_graph_attention.4} parent=76 // pred_check_branch
          %1029 = sbr.rel (%p1027) target = $region85
        $region84: #{inter_graph_attention.4} parent=76 // pred_region
          %s1030 = smul.u32 16, %s16
          %p1031 = scmp.lt.s32.totalorder %s1030, 47
          %s1032 = scalar_select %p1031, %s1030, 47
          %s1033 = smul.addr %s1032, 8
          %s1034 = scalar_lea.vmem %s3, %s1033
        $region85: #{inter_graph_attention.4} parent=76 // pred_fallthru
          _
      $region77: #{inter_graph_attention.4} parent=5 // pred_fallthru
        _
    $region6: #{inter_graph_attention.4} parent=1 // loop_footer
      %s14 = sadd.s32 1, %s10
    $region7: #{inter_graph_attention.4} parent=1 // loop_footer_branch
      %9 = sbr.rel target = $region3
    $region8: #{inter_graph_attention.4} parent=1 // loop_exit
      _

// kernel: inter_graph_attention.5
$region0: #{inter_graph_attention.5}
  #allocation0 [shape = 'u32[]', space=smem, size = 0x4, offset = 0x4, fixed_abs, tag = 'smem constant byte address 0x4 - core index']
  #allocation1 [shape = 'u32[144,128]{1,0:T(1,128)}', space=vmem, size = 0x12000, scoped, tag = 'internal scratch']
  %s0 = inlined_call_operand.vmem [shape: f32[256,16], index: 0, kind: input, shape index: {}]
  %s1 = inlined_call_operand.vmem [shape: f32[16,68], index: 1, kind: input, shape index: {}]
  %s2 = inlined_call_operand.vmem [shape: bf16[2,256,64], index: 2, kind: output, shape index: {0}]
  %s3 = inlined_call_operand.vmem [shape: f32[256,4], index: 3, kind: output, shape index: {1}]
  %4 = xla_tuple %s2, %s3
  %s5 = sld [smem:[#allocation0]]
  $region86: #{inter_graph_attention.5} parent=0
    _
  %s7 = ssub.s32 1, %s5
  %s8 = scalar_select 0, %s7, %s5
  $region1: #{inter_graph_attention.5} parent=0
    #allocation2 [shape = 'u8[131072]{0}', space=vmem, size = 0x20000, scoped, tag = 'output window, operand 0']
    loop: start=0, step=1, limit=4
    $region2: #{inter_graph_attention.5} parent=1 // loop_pre_header
      _
    $region3: #{inter_graph_attention.5} parent=1 // loop_header
      %s10 = sphi 0, %s14
      %p11 = scmp.ge.s32.totalorder %s10, 4
      %s20 = sphi 0, %s22
      %s23 = sphi 0, %s20
      %s24 = sphi 0, %s23
      %s40 = sphi 0, %s24
      %s44 = sphi 0, %s44
      %s46 = sphi 0, %s44
      %s47 = sphi 0, %s46
      %s61 = sphi 0, %s47
      %s67 = sphi 0, %s69
      %s70 = sphi 0, %s67
      %s71 = sphi 0, %s70
      %s87 = sphi 0, %s71
      %s93 = sphi 0, %s95
      %s96 = sphi 0, %s93
      %s97 = sphi 0, %s96
      %s113 = sphi 0, %s97
    $region4: #{inter_graph_attention.5} parent=1 // loop_header_branch
      %13 = sbr.rel (%p11) target = $region8
    $region5: #{inter_graph_attention.5} parent=1 // loop_body
      %s15 = ssub.s32 %s10, 1
      %s16 = ssub.s32 %s10, 2
      %s17 = sadd.s32 %s10, 1
      %s18 = ssub.s32 %s10, %s17
      %p19 = scmp.eq.s32.totalorder %s18, 0
      %s21 = sadd.s32 %s20, 1
      %s22 = scalar_select %p19, %s20, %s21
      %p25 = pneg %p19
      %p26 = scmp.eq.s32.totalorder %s10, 1
      %p27 = por %p25, %p26
      %p28 = scmp.ne.s32.totalorder %s20, %s23
      %p29 = scmp.eq.s32.totalorder %s10, 0
      %p30 = por %p28, %p29
      %p31 = scmp.ne.s32.totalorder %s20, %s23
      %p32 = scmp.eq.s32.totalorder %s15, 1
      %p33 = por %p31, %p32
      %p34 = scmp.ne.s32.totalorder %s23, %s24
      %p35 = scmp.eq.s32.totalorder %s15, 0
      %p36 = por %p34, %p35
      %p37 = scmp.ne.s32.totalorder %s23, %s24
      %p38 = scmp.eq.s32.totalorder %s16, 1
      %p39 = por %p37, %p38
      %p41 = scmp.ne.s32.totalorder %s24, %s40
      %p42 = scmp.eq.s32.totalorder %s16, 0
      %p43 = por %p41, %p42
      %s45 = sadd.s32 %s44, 1
      %p48 = scmp.eq.s32.totalorder %s10, 1
      %p49 = scmp.ne.s32.totalorder %s44, %s46
      %p50 = scmp.eq.s32.totalorder %s10, 0
      %p51 = por %p49, %p50
      %p52 = scmp.ne.s32.totalorder %s44, %s46
      %p53 = scmp.eq.s32.totalorder %s15, 1
      %p54 = por %p52, %p53
      %p55 = scmp.ne.s32.totalorder %s46, %s47
      %p56 = scmp.eq.s32.totalorder %s15, 0
      %p57 = por %p55, %p56
      %p58 = scmp.ne.s32.totalorder %s46, %s47
      %p59 = scmp.eq.s32.totalorder %s16, 1
      %p60 = por %p58, %p59
      %p62 = scmp.ne.s32.totalorder %s47, %s61
      %p63 = scmp.eq.s32.totalorder %s16, 0
      %p64 = por %p62, %p63
      %s65 = ssub.s32 %s10, %s17
      %p66 = scmp.eq.s32.totalorder %s65, 0
      %s68 = sadd.s32 %s67, 1
      %s69 = scalar_select %p66, %s67, %s68
      %p72 = pneg %p66
      %p73 = scmp.eq.s32.totalorder %s10, 1
      %p74 = por %p72, %p73
      %p75 = scmp.ne.s32.totalorder %s67, %s70
      %p76 = scmp.eq.s32.totalorder %s10, 0
      %p77 = por %p75, %p76
      %p78 = scmp.ne.s32.totalorder %s67, %s70
      %p79 = scmp.eq.s32.totalorder %s15, 1
      %p80 = por %p78, %p79
      %p81 = scmp.ne.s32.totalorder %s70, %s71
      %p82 = scmp.eq.s32.totalorder %s15, 0
      %p83 = por %p81, %p82
      %p84 = scmp.ne.s32.totalorder %s70, %s71
      %p85 = scmp.eq.s32.totalorder %s16, 1
      %p86 = por %p84, %p85
      %p88 = scmp.ne.s32.totalorder %s71, %s87
      %p89 = scmp.eq.s32.totalorder %s16, 0
      %p90 = por %p88, %p89
      %s91 = ssub.s32 %s10, %s17
      %p92 = scmp.eq.s32.totalorder %s91, 0
      %s94 = sadd.s32 %s93, 1
      %s95 = scalar_select %p92, %s93, %s94
      %p98 = pneg %p92
      %p99 = scmp.eq.s32.totalorder %s10, 1
      %p100 = por %p98, %p99
      %p101 = scmp.ne.s32.totalorder %s93, %s96
      %p102 = scmp.eq.s32.totalorder %s10, 0
      %p103 = por %p101, %p102
      %p104 = scmp.ne.s32.totalorder %s93, %s96
      %p105 = scmp.eq.s32.totalorder %s15, 1
      %p106 = por %p104, %p105
      %p107 = scmp.ne.s32.totalorder %s96, %s97
      %p108 = scmp.eq.s32.totalorder %s15, 0
      %p109 = por %p107, %p108
      %p110 = scmp.ne.s32.totalorder %s96, %s97
      %p111 = scmp.eq.s32.totalorder %s16, 1
      %p112 = por %p110, %p111
      %p114 = scmp.ne.s32.totalorder %s97, %s113
      %p115 = scmp.eq.s32.totalorder %s16, 0
      %p116 = por %p114, %p115
      %p117 = scmp.le.s32.totalorder 1, %s10
      %p118 = scmp.lt.s32.totalorder %s10, 3
      %p119 = pnand %p117, %p118
      %p120 = pneg %p119
      // Predicated region
      $region9: #{inter_graph_attention.5} parent=5 // pred_check
        _
      $region10: #{inter_graph_attention.5} parent=5 // pred_check_branch
        %122 = sbr.rel (%p119) target = $region12
      $region11: #{inter_graph_attention.5} parent=5 // pred_region
        %s123 = ssub.s32 %s10, 1
        // Predicated region
        $region13: #{inter_graph_attention.5} parent=11 // pred_check
          %p124 = pneg %p57
        $region14: #{inter_graph_attention.5} parent=11 // pred_check_branch
          %126 = sbr.rel (%p124) target = $region16
        $region15: #{inter_graph_attention.5} parent=11 // pred_region
          _
        $region16: #{inter_graph_attention.5} parent=11 // pred_fallthru
          _
      $region12: #{inter_graph_attention.5} parent=5 // pred_fallthru
        _
      %p127 = scmp.lt.s32.totalorder %s10, 2
      // Predicated region
      $region17: #{inter_graph_attention.5} parent=5 // pred_check
        %p128 = pneg %p127
      $region18: #{inter_graph_attention.5} parent=5 // pred_check_branch
        %130 = sbr.rel (%p128) target = $region20
      $region19: #{inter_graph_attention.5} parent=5 // pred_region
        // Predicated region
        $region21: #{inter_graph_attention.5} parent=19 // pred_check
          %p131 = pneg %p30
        $region22: #{inter_graph_attention.5} parent=19 // pred_check_branch
          %133 = sbr.rel (%p131) target = $region24
        $region23: #{inter_graph_attention.5} parent=19 // pred_region
          %s134 = smul.u32 16, %s10
          %p135 = scmp.lt.s32.totalorder %s134, 31
          %s136 = scalar_select %p135, %s134, 31
          %s137 = smul.addr %s136, 8
          %s138 = scalar_lea.vmem %s0, %s137
          %s139 = smul.u32 16, %s10
        $region24: #{inter_graph_attention.5} parent=19 // pred_fallthru
          _
      $region20: #{inter_graph_attention.5} parent=5 // pred_fallthru
        _
      %p140 = scmp.le.s32.totalorder 1, %s10
      %p141 = scmp.lt.s32.totalorder %s10, 3
      %p142 = pnand %p140, %p141
      %p143 = pneg %p142
      // Predicated region
      $region25: #{inter_graph_attention.5} parent=5 // pred_check
        _
      $region26: #{inter_graph_attention.5} parent=5 // pred_check_branch
        %145 = sbr.rel (%p142) target = $region28
      $region27: #{inter_graph_attention.5} parent=5 // pred_region
        %s146 = ssub.s32 %s10, 1
        %s147 = smul.u32 16, %s15
        %p148 = scmp.lt.s32.totalorder %s147, 31
        %s149 = scalar_select %p148, %s147, 31
        %s150 = smul.addr %s149, 8
        %s151 = scalar_lea.vmem %s0, %s150
        %p152 = pneg %p36
        %p153 = pneg %p33
        %p154 = pneg %p57
        %p155 = pneg %p54
        %p156 = pneg %p83
        %p157 = pneg %p80
        %s158 = sand.u32 %s70, 1
        %s159 = sand.u32 %s70, 1
        %s160 = smul.addr %s159, 128
        %s161 = scalar_lea.vmem [#allocation2], %s160
        %p162 = pneg %p109
        %p163 = pneg %p106
        %s164 = smul.u32 16, %s15
        %p165 = scmp.lt.s32.totalorder %s164, 31
        %s166 = scalar_select %p165, %s164, 31
        %s167 = smul.addr %s166, 8
        %s168 = scalar_lea.vmem %s3, %s167
        %s169 = smul.u32 16, %s15
        %p170 = scmp.lt.s32.totalorder %s169, 31
        %s171 = scalar_select %p170, %s169, 31
        %s172 = smul.addr %s171, 8
        %s173 = scalar_lea.vmem %s0, %s172
        %s174 = smul.u32 16, %s15
        %s175 = smul.u32 16, %s15
        %s176 = smul.u32 16, %s15
        %p177 = scmp.lt.s32.totalorder %s176, 31
        %s178 = scalar_select %p177, %s176, 31
        %s179 = smul.addr %s178, 8
        %s180 = scalar_lea.vmem %s3, %s179
        %s181 = smul.u32 16, %s15
        %v182 = vld [vmem:[%s173] sm:$0xff]
        %v183 = vld [vmem:[%s173 + $0x8] sm:$0xff]
        %v184 = vld [vmem:[%s173 + $0x10] sm:$0xff]
        %v185 = vld [vmem:[%s173 + $0x18] sm:$0xff]
        %v186 = vld [vmem:[%s173 + $0x20] sm:$0xff]
        %v187 = vld [vmem:[%s173 + $0x28] sm:$0xff]
        %v188 = vld [vmem:[%s173 + $0x30] sm:$0xff]
        %v189 = vld [vmem:[%s173 + $0x38] sm:$0xff]
        %v190 = vld [vmem:[%s173 + $0x40] sm:$0xff]
        %v191 = vld [vmem:[%s173 + $0x48] sm:$0xff]
        %v192 = vld [vmem:[%s173 + $0x50] sm:$0xff]
        %v193 = vld [vmem:[%s173 + $0x58] sm:$0xff]
        %v194 = vld [vmem:[%s173 + $0x60] sm:$0xff]
        %v195 = vld [vmem:[%s173 + $0x68] sm:$0xff]
        %v196 = vld [vmem:[%s173 + $0x70] sm:$0xff]
        %v197 = vld [vmem:[%s173 + $0x78] sm:$0xff]
        %vm198 = vcmp.gt.f32.partialorder %v182, 0.0
        %vm199 = vcmp.gt.f32.partialorder %v183, 0.0
        %vm200 = vcmp.gt.f32.partialorder %v184, 0.0
        %vm201 = vcmp.gt.f32.partialorder %v185, 0.0
        %vm202 = vcmp.gt.f32.partialorder %v186, 0.0
        %vm203 = vcmp.gt.f32.partialorder %v187, 0.0
        %vm204 = vcmp.gt.f32.partialorder %v188, 0.0
        %vm205 = vcmp.gt.f32.partialorder %v189, 0.0
        %vm206 = vcmp.gt.f32.partialorder %v190, 0.0
        %vm207 = vcmp.gt.f32.partialorder %v191, 0.0
        %vm208 = vcmp.gt.f32.partialorder %v192, 0.0
        %vm209 = vcmp.gt.f32.partialorder %v193, 0.0
        %vm210 = vcmp.gt.f32.partialorder %v194, 0.0
        %vm211 = vcmp.gt.f32.partialorder %v195, 0.0
        %vm212 = vcmp.gt.f32.partialorder %v196, 0.0
        %vm213 = vcmp.gt.f32.partialorder %v197, 0.0
        %v214 = vmul.f32 %v182, 1.442695
        %v215 = vpow.pop %v214
        %v216 = vmul.f32 %v183, 1.442695
        %v217 = vpow.pop %v216
        %v218 = vmul.f32 %v184, 1.442695
        %v219 = vpow.pop %v218
        %v220 = vmul.f32 %v185, 1.442695
        %v221 = vpow.pop %v220
        %v222 = vmul.f32 %v186, 1.442695
        %v223 = vpow.pop %v222
        %v224 = vmul.f32 %v187, 1.442695
        %v225 = vpow.pop %v224
        %v226 = vmul.f32 %v188, 1.442695
        %v227 = vpow.pop %v226
        %v228 = vmul.f32 %v189, 1.442695
        %v229 = vpow.pop %v228
        %v230 = vmul.f32 %v190, 1.442695
        %v231 = vpow.pop %v230
        %v232 = vmul.f32 %v191, 1.442695
        %v233 = vpow.pop %v232
        %v234 = vmul.f32 %v192, 1.442695
        %v235 = vpow.pop %v234
        %v236 = vmul.f32 %v193, 1.442695
        %v237 = vpow.pop %v236
        %v238 = vmul.f32 %v194, 1.442695
        %v239 = vpow.pop %v238
        %v240 = vmul.f32 %v195, 1.442695
        %v241 = vpow.pop %v240
        %v242 = vmul.f32 %v196, 1.442695
        %v243 = vpow.pop %v242
        %v244 = vmul.f32 %v197, 1.442695
        %v245 = vpow.pop %v244
        %v246 = vsub.f32 %v215, 1.0
        %v247 = vsub.f32 %v217, 1.0
        %v248 = vsub.f32 %v219, 1.0
        %v249 = vsub.f32 %v221, 1.0
        %v250 = vsub.f32 %v223, 1.0
        %v251 = vsub.f32 %v225, 1.0
        %v252 = vsub.f32 %v227, 1.0
        %v253 = vsub.f32 %v229, 1.0
        %v254 = vsub.f32 %v231, 1.0
        %v255 = vsub.f32 %v233, 1.0
        %v256 = vsub.f32 %v235, 1.0
        %v257 = vsub.f32 %v237, 1.0
        %v258 = vsub.f32 %v239, 1.0
        %v259 = vsub.f32 %v241, 1.0
        %v260 = vsub.f32 %v243, 1.0
        %v261 = vsub.f32 %v245, 1.0
        %v262 = vsel %vm198, %v182, %v246
        %v263 = vsel %vm199, %v183, %v247
        %v264 = vsel %vm200, %v184, %v248
        %v265 = vsel %vm201, %v185, %v249
        %v266 = vsel %vm202, %v186, %v250
        %v267 = vsel %vm203, %v187, %v251
        %v268 = vsel %vm204, %v188, %v252
        %v269 = vsel %vm205, %v189, %v253
        %v270 = vsel %vm206, %v190, %v254
        %v271 = vsel %vm207, %v191, %v255
        %v272 = vsel %vm208, %v192, %v256
        %v273 = vsel %vm209, %v193, %v257
        %v274 = vsel %vm210, %v194, %v258
        %v275 = vsel %vm211, %v195, %v259
        %v276 = vsel %vm212, %v196, %v260
        %v277 = vsel %vm213, %v197, %v261
        %v278 = vld [vmem:[%s1] sm:$0xff]
        %v279 = vld [vmem:[%s1 + $0x8] sm:$0xff]
        %vm280 = vcmask 130048
        %v282 = vsel %vm280, %v262, 0
        %v285 = vsel %vm280, %v263, 0
        %v288 = vsel %vm280, %v264, 0
        %v291 = vsel %vm280, %v265, 0
        %v294 = vsel %vm280, %v266, 0
        %v297 = vsel %vm280, %v267, 0
        %v300 = vsel %vm280, %v268, 0
        %v303 = vsel %vm280, %v269, 0
        %v306 = vsel %vm280, %v270, 0
        %v309 = vsel %vm280, %v271, 0
        %v312 = vsel %vm280, %v272, 0
        %v315 = vsel %vm280, %v273, 0
        %v318 = vsel %vm280, %v274, 0
        %v321 = vsel %vm280, %v275, 0
        %v324 = vsel %vm280, %v276, 0
        %v327 = vsel %vm280, %v277, 0
        %329 = vmatprep.subr.mxu0 0.0
        %330 = vmatpush1.msra.mxu0 0.0
        %331 = vmatprep.subr.mxu0 0.0
        %332 = vmatpush1.msra.mxu0 0.0
        %333 = vmatprep.subr.mxu0 0.0
        %334 = vmatpush1.msra.mxu0 0.0
        %335 = vmatprep.subr.mxu0 0.0
        %336 = vmatpush1.msra.mxu0 0.0
        %337 = vmatprep.subr.mxu0 0.0
        %338 = vmatpush1.msra.mxu0 0.0
        %339 = vmatprep.subr.mxu0 0.0
        %340 = vmatpush1.msra.mxu0 0.0
        %341 = vmatprep.subr.mxu0 0.0
        %342 = vmatpush1.msra.mxu0 0.0
        %343 = vmatprep.subr.mxu0 0.0
        %344 = vmatpush1.msra.mxu0 0.0
        %345 = vmatprep.subr.mxu0 0.0
        %346 = vmatpush1.msra.mxu0 0.0
        %347 = vmatprep.subr.mxu0 0.0
        %348 = vmatpush1.msra.mxu0 0.0
        %349 = vmatprep.subr.mxu0 0.0
        %350 = vmatpush1.msra.mxu0 0.0
        %351 = vmatprep.subr.mxu0 0.0
        %352 = vmatpush1.msra.mxu0 0.0
        %353 = vmatprep.subr.mxu0 0.0
        %354 = vmatpush1.msra.mxu0 0.0
        %355 = vmatprep.subr.mxu0 0.0
        %356 = vmatpush1.msra.mxu0 0.0
        %357 = vmatprep.subr.mxu0 0.0
        %358 = vmatpush1.msra.mxu0 %v279
        %359 = vmatprep.subr.mxu0 0.0
        %360 = vmatpush1.msra.mxu0 %v278
        %361 = vmatprep.subr.mxu0 0.0
        %362 = vmatpush2.msra.mxu0 0.0
        %363 = vmatprep.subr.mxu0 0.0
        %364 = vmatpush2.msra.mxu0 0.0
        %365 = vmatprep.subr.mxu0 0.0
        %366 = vmatpush2.msra.mxu0 0.0
        %367 = vmatprep.subr.mxu0 0.0
        %368 = vmatpush2.msra.mxu0 0.0
        %369 = vmatprep.subr.mxu0 0.0
        %370 = vmatpush2.msra.mxu0 0.0
        %371 = vmatprep.subr.mxu0 0.0
        %372 = vmatpush2.msra.mxu0 0.0
        %373 = vmatprep.subr.mxu0 0.0
        %374 = vmatpush2.msra.mxu0 0.0
        %375 = vmatprep.subr.mxu0 0.0
        %376 = vmatpush2.msra.mxu0 0.0
        %377 = vmatprep.subr.mxu0 0.0
        %378 = vmatpush2.msra.mxu0 0.0
        %379 = vmatprep.subr.mxu0 0.0
        %380 = vmatpush2.msra.mxu0 0.0
        %381 = vmatprep.subr.mxu0 0.0
        %382 = vmatpush2.msra.mxu0 0.0
        %383 = vmatprep.subr.mxu0 0.0
        %384 = vmatpush2.msra.mxu0 0.0
        %385 = vmatprep.subr.mxu0 0.0
        %386 = vmatpush2.msra.mxu0 0.0
        %387 = vmatprep.subr.mxu0 0.0
        %388 = vmatpush2.msra.mxu0 0.0
        %389 = vmatprep.subr.mxu0 0.0
        %390 = vmatpush2.msra.mxu0 0.0
        %391 = vmatprep.subr.mxu0 0.0
        %392 = vmatpush2.msra.mxu0 0.0
        %393 = vmatprep.mubr.f32.mxu0 0.0
        %394 = vmatmul.mubr.f32.gmra.mxu0 %v282
        %v395 = vpop.f32.mrf.mxu0
        %v396 = vadd.f32 0.0, %v395
        %v397 = vpop.f32.mrf.mxu0
        %398 = vmatprep.mubr.f32.mxu0 0.0
        %399 = vmatmul.mubr.f32.gmra.mxu0 %v285
        %v400 = vpop.f32.mrf.mxu0
        %v401 = vadd.f32 0.0, %v400
        %v402 = vpop.f32.mrf.mxu0
        %403 = vmatprep.mubr.f32.mxu0 0.0
        %404 = vmatmul.mubr.f32.gmra.mxu0 %v288
        %v405 = vpop.f32.mrf.mxu0
        %v406 = vadd.f32 0.0, %v405
        %v407 = vpop.f32.mrf.mxu0
        %408 = vmatprep.mubr.f32.mxu0 0.0
        %409 = vmatmul.mubr.f32.gmra.mxu0 %v291
        %v410 = vpop.f32.mrf.mxu0
        %v411 = vadd.f32 0.0, %v410
        %v412 = vpop.f32.mrf.mxu0
        %413 = vmatprep.mubr.f32.mxu0 0.0
        %414 = vmatmul.mubr.f32.gmra.mxu0 %v294
        %v415 = vpop.f32.mrf.mxu0
        %v416 = vadd.f32 0.0, %v415
        %v417 = vpop.f32.mrf.mxu0
        %418 = vmatprep.mubr.f32.mxu0 0.0
        %419 = vmatmul.mubr.f32.gmra.mxu0 %v297
        %v420 = vpop.f32.mrf.mxu0
        %v421 = vadd.f32 0.0, %v420
        %v422 = vpop.f32.mrf.mxu0
        %423 = vmatprep.mubr.f32.mxu0 0.0
        %424 = vmatmul.mubr.f32.gmra.mxu0 %v300
        %v425 = vpop.f32.mrf.mxu0
        %v426 = vadd.f32 0.0, %v425
        %v427 = vpop.f32.mrf.mxu0
        %428 = vmatprep.mubr.f32.mxu0 0.0
        %429 = vmatmul.mubr.f32.gmra.mxu0 %v303
        %v430 = vpop.f32.mrf.mxu0
        %v431 = vadd.f32 0.0, %v430
        %v432 = vpop.f32.mrf.mxu0
        %433 = vmatprep.mubr.f32.mxu0 0.0
        %434 = vmatmul.mubr.f32.gmra.mxu0 %v306
        %v435 = vpop.f32.mrf.mxu0
        %v436 = vadd.f32 0.0, %v435
        %v437 = vpop.f32.mrf.mxu0
        %438 = vmatprep.mubr.f32.mxu0 0.0
        %439 = vmatmul.mubr.f32.gmra.mxu0 %v309
        %v440 = vpop.f32.mrf.mxu0
        %v441 = vadd.f32 0.0, %v440
        %v442 = vpop.f32.mrf.mxu0
        %443 = vmatprep.mubr.f32.mxu0 0.0
        %444 = vmatmul.mubr.f32.gmra.mxu0 %v312
        %v445 = vpop.f32.mrf.mxu0
        %v446 = vadd.f32 0.0, %v445
        %v447 = vpop.f32.mrf.mxu0
        %448 = vmatprep.mubr.f32.mxu0 0.0
        %449 = vmatmul.mubr.f32.gmra.mxu0 %v315
        %v450 = vpop.f32.mrf.mxu0
        %v451 = vadd.f32 0.0, %v450
        %v452 = vpop.f32.mrf.mxu0
        %453 = vmatprep.mubr.f32.mxu0 0.0
        %454 = vmatmul.mubr.f32.gmra.mxu0 %v318
        %v455 = vpop.f32.mrf.mxu0
        %v456 = vadd.f32 0.0, %v455
        %v457 = vpop.f32.mrf.mxu0
        %458 = vmatprep.mubr.f32.mxu0 0.0
        %459 = vmatmul.mubr.f32.gmra.mxu0 %v321
        %v460 = vpop.f32.mrf.mxu0
        %v461 = vadd.f32 0.0, %v460
        %v462 = vpop.f32.mrf.mxu0
        %463 = vmatprep.mubr.f32.mxu0 0.0
        %464 = vmatmul.mubr.f32.gmra.mxu0 %v324
        %v465 = vpop.f32.mrf.mxu0
        %v466 = vadd.f32 0.0, %v465
        %v467 = vpop.f32.mrf.mxu0
        %468 = vmatprep.mubr.f32.mxu0 0.0
        %469 = vmatmul.mubr.f32.gmra.mxu0 %v327
        %v470 = vpop.f32.mrf.mxu0
        %v471 = vadd.f32 0.0, %v470
        %v472 = vpop.f32.mrf.mxu0
        %473 = vdwg.mxu0
        %vm474 = vcmask 261120
        %v475 = vsel %vm474, %v396, 1.0
        %v476 = vsel %vm474, %v401, 1.0
        %v477 = vsel %vm474, %v406, 1.0
        %v478 = vsel %vm474, %v411, 1.0
        %v479 = vsel %vm474, %v416, 1.0
        %v480 = vsel %vm474, %v421, 1.0
        %v481 = vsel %vm474, %v426, 1.0
        %v482 = vsel %vm474, %v431, 1.0
        %v483 = vsel %vm474, %v436, 1.0
        %v484 = vsel %vm474, %v441, 1.0
        %v485 = vsel %vm474, %v446, 1.0
        %v486 = vsel %vm474, %v451, 1.0
        %v487 = vsel %vm474, %v456, 1.0
        %v488 = vsel %vm474, %v461, 1.0
        %v489 = vsel %vm474, %v466, 1.0
        %v490 = vsel %vm474, %v471, 1.0
        %vm491 = vcmask 269312
        %v492 = vsel %vm491, %v475, 0.0
        %v493 = vsel %vm491, %v476, 0.0
        %v494 = vsel %vm491, %v477, 0.0
        %v495 = vsel %vm491, %v478, 0.0
        %v496 = vsel %vm491, %v479, 0.0
        %v497 = vsel %vm491, %v480, 0.0
        %v498 = vsel %vm491, %v481, 0.0
        %v499 = vsel %vm491, %v482, 0.0
        %v500 = vsel %vm491, %v483, 0.0
        %v501 = vsel %vm491, %v484, 0.0
        %v502 = vsel %vm491, %v485, 0.0
        %v503 = vsel %vm491, %v486, 0.0
        %v504 = vsel %vm491, %v487, 0.0
        %v505 = vsel %vm491, %v488, 0.0
        %v506 = vsel %vm491, %v489, 0.0
        %v507 = vsel %vm491, %v490, 0.0
        %v508 = vpack.c.bf16 %v493, %v492
        %v509 = vpack.c.bf16 %v495, %v494
        %v510 = vpack.c.bf16 %v497, %v496
        %v511 = vpack.c.bf16 %v499, %v498
        %v512 = vpack.c.bf16 %v501, %v500
        %v513 = vpack.c.bf16 %v503, %v502
        %v514 = vpack.c.bf16 %v505, %v504
        %v515 = vpack.c.bf16 %v507, %v506
        %v524 = vunpack.c.l.b16 %v508
        %v525 = vunpack.c.h.b16 %v508
        %v526 = vunpack.c.l.b16 %v509
        %v527 = vunpack.c.h.b16 %v509
        %v528 = vunpack.c.l.b16 %v510
        %v529 = vunpack.c.h.b16 %v510
        %v530 = vunpack.c.l.b16 %v511
        %v531 = vunpack.c.h.b16 %v511
        %v532 = vunpack.c.l.b16 %v512
        %v533 = vunpack.c.h.b16 %v512
        %v534 = vunpack.c.l.b16 %v513
        %v535 = vunpack.c.h.b16 %v513
        %v536 = vunpack.c.l.b16 %v514
        %v537 = vunpack.c.h.b16 %v514
        %v538 = vunpack.c.l.b16 %v515
        %v539 = vunpack.c.h.b16 %v515
        %v540 = vpack.c.b16 %v524, %v524
        %v541 = vpack.c.b16 %v525, %v525
        %v542 = vpack.c.b16 %v526, %v526
        %v543 = vpack.c.b16 %v527, %v527
        %v544 = vpack.c.b16 %v528, %v528
        %v545 = vpack.c.b16 %v529, %v529
        %v546 = vpack.c.b16 %v530, %v530
        %v547 = vpack.c.b16 %v531, %v531
        %v548 = vpack.c.b16 %v532, %v532
        %v549 = vpack.c.b16 %v533, %v533
        %v550 = vpack.c.b16 %v534, %v534
        %v551 = vpack.c.b16 %v535, %v535
        %v552 = vpack.c.b16 %v536, %v536
        %v553 = vpack.c.b16 %v537, %v537
        %v554 = vpack.c.b16 %v538, %v538
        %v555 = vpack.c.b16 %v539, %v539
        %vm572 = vcmask 519168
        %573 = vst.msk [vmem:[%s161] sm:$0xf] %vm572, %v540
        %574 = vst.msk [vmem:[%s161 + $0x4] sm:$0xf] %vm572, %v541
        %575 = vst.msk [vmem:[%s161 + $0x8] sm:$0xf] %vm572, %v542
        %576 = vst.msk [vmem:[%s161 + $0xc] sm:$0xf] %vm572, %v543
        %577 = vst.msk [vmem:[%s161 + $0x10] sm:$0xf] %vm572, %v544
        %578 = vst.msk [vmem:[%s161 + $0x14] sm:$0xf] %vm572, %v545
        %579 = vst.msk [vmem:[%s161 + $0x18] sm:$0xf] %vm572, %v546
        %580 = vst.msk [vmem:[%s161 + $0x1c] sm:$0xf] %vm572, %v547
        %581 = vst.msk [vmem:[%s161 + $0x20] sm:$0xf] %vm572, %v548
        %582 = vst.msk [vmem:[%s161 + $0x24] sm:$0xf] %vm572, %v549
        %583 = vst.msk [vmem:[%s161 + $0x28] sm:$0xf] %vm572, %v550
        %584 = vst.msk [vmem:[%s161 + $0x2c] sm:$0xf] %vm572, %v551
        %585 = vst.msk [vmem:[%s161 + $0x30] sm:$0xf] %vm572, %v552
        %586 = vst.msk [vmem:[%s161 + $0x34] sm:$0xf] %vm572, %v553
        %587 = vst.msk [vmem:[%s161 + $0x38] sm:$0xf] %vm572, %v554
        %588 = vst.msk [vmem:[%s161 + $0x3c] sm:$0xf] %vm572, %v555
        %605 = vrot.lane.b32.xlu0 %v396, 96
        %v606 = vpop.permute.xlu0 %605
        %607 = vrot.lane.b32.xlu0 %v401, 96
        %v608 = vpop.permute.xlu0 %607
        %609 = vrot.lane.b32.xlu0 %v406, 96
        %v610 = vpop.permute.xlu0 %609
        %611 = vrot.lane.b32.xlu0 %v411, 96
        %v612 = vpop.permute.xlu0 %611
        %613 = vrot.lane.b32.xlu0 %v416, 96
        %v614 = vpop.permute.xlu0 %613
        %615 = vrot.lane.b32.xlu0 %v421, 96
        %v616 = vpop.permute.xlu0 %615
        %617 = vrot.lane.b32.xlu0 %v426, 96
        %v618 = vpop.permute.xlu0 %617
        %619 = vrot.lane.b32.xlu0 %v431, 96
        %v620 = vpop.permute.xlu0 %619
        %621 = vrot.lane.b32.xlu0 %v436, 96
        %v622 = vpop.permute.xlu0 %621
        %623 = vrot.lane.b32.xlu0 %v441, 96
        %v624 = vpop.permute.xlu0 %623
        %625 = vrot.lane.b32.xlu0 %v446, 96
        %v626 = vpop.permute.xlu0 %625
        %627 = vrot.lane.b32.xlu0 %v451, 96
        %v628 = vpop.permute.xlu0 %627
        %629 = vrot.lane.b32.xlu0 %v456, 96
        %v630 = vpop.permute.xlu0 %629
        %631 = vrot.lane.b32.xlu0 %v461, 96
        %v632 = vpop.permute.xlu0 %631
        %633 = vrot.lane.b32.xlu0 %v466, 96
        %v634 = vpop.permute.xlu0 %633
        %635 = vrot.lane.b32.xlu0 %v471, 96
        %v636 = vpop.permute.xlu0 %635
        %v653 = vsel %vm474, %v606, 1.0
        %v654 = vsel %vm474, %v608, 1.0
        %v655 = vsel %vm474, %v610, 1.0
        %v656 = vsel %vm474, %v612, 1.0
        %v657 = vsel %vm474, %v614, 1.0
        %v658 = vsel %vm474, %v616, 1.0
        %v659 = vsel %vm474, %v618, 1.0
        %v660 = vsel %vm474, %v620, 1.0
        %v661 = vsel %vm474, %v622, 1.0
        %v662 = vsel %vm474, %v624, 1.0
        %v663 = vsel %vm474, %v626, 1.0
        %v664 = vsel %vm474, %v628, 1.0
        %v665 = vsel %vm474, %v630, 1.0
        %v666 = vsel %vm474, %v632, 1.0
        %v667 = vsel %vm474, %v634, 1.0
        %v668 = vsel %vm474, %v636, 1.0
        %v669 = vsel %vm491, %v653, 0.0
        %v670 = vsel %vm491, %v654, 0.0
        %v671 = vsel %vm491, %v655, 0.0
        %v672 = vsel %vm491, %v656, 0.0
        %v673 = vsel %vm491, %v657, 0.0
        %v674 = vsel %vm491, %v658, 0.0
        %v675 = vsel %vm491, %v659, 0.0
        %v676 = vsel %vm491, %v660, 0.0
        %v677 = vsel %vm491, %v661, 0.0
        %v678 = vsel %vm491, %v662, 0.0
        %v679 = vsel %vm491, %v663, 0.0
        %v680 = vsel %vm491, %v664, 0.0
        %v681 = vsel %vm491, %v665, 0.0
        %v682 = vsel %vm491, %v666, 0.0
        %v683 = vsel %vm491, %v667, 0.0
        %v684 = vsel %vm491, %v668, 0.0
        %v685 = vpack.c.bf16 %v670, %v669
        %v686 = vpack.c.bf16 %v672, %v671
        %v687 = vpack.c.bf16 %v674, %v673
        %v688 = vpack.c.bf16 %v676, %v675
        %v689 = vpack.c.bf16 %v678, %v677
        %v690 = vpack.c.bf16 %v680, %v679
        %v691 = vpack.c.bf16 %v682, %v681
        %v692 = vpack.c.bf16 %v684, %v683
        %v701 = vunpack.c.l.b16 %v685
        %v702 = vunpack.c.h.b16 %v685
        %v703 = vunpack.c.l.b16 %v686
        %v704 = vunpack.c.h.b16 %v686
        %v705 = vunpack.c.l.b16 %v687
        %v706 = vunpack.c.h.b16 %v687
        %v707 = vunpack.c.l.b16 %v688
        %v708 = vunpack.c.h.b16 %v688
        %v709 = vunpack.c.l.b16 %v689
        %v710 = vunpack.c.h.b16 %v689
        %v711 = vunpack.c.l.b16 %v690
        %v712 = vunpack.c.h.b16 %v690
        %v713 = vunpack.c.l.b16 %v691
        %v714 = vunpack.c.h.b16 %v691
        %v715 = vunpack.c.l.b16 %v692
        %v716 = vunpack.c.h.b16 %v692
        %v717 = vpack.c.b16 %v701, %v701
        %v718 = vpack.c.b16 %v702, %v702
        %v719 = vpack.c.b16 %v703, %v703
        %v720 = vpack.c.b16 %v704, %v704
        %v721 = vpack.c.b16 %v705, %v705
        %v722 = vpack.c.b16 %v706, %v706
        %v723 = vpack.c.b16 %v707, %v707
        %v724 = vpack.c.b16 %v708, %v708
        %v725 = vpack.c.b16 %v709, %v709
        %v726 = vpack.c.b16 %v710, %v710
        %v727 = vpack.c.b16 %v711, %v711
        %v728 = vpack.c.b16 %v712, %v712
        %v729 = vpack.c.b16 %v713, %v713
        %v730 = vpack.c.b16 %v714, %v714
        %v731 = vpack.c.b16 %v715, %v715
        %v732 = vpack.c.b16 %v716, %v716
        %s749 = scalar_lea.vmem %s161, 64 [#allocation2]
        %750 = vst.msk [vmem:[%s749] sm:$0xf] %vm572, %v717
        %751 = vst.msk [vmem:[%s749 + $0x4] sm:$0xf] %vm572, %v718
        %752 = vst.msk [vmem:[%s749 + $0x8] sm:$0xf] %vm572, %v719
        %753 = vst.msk [vmem:[%s749 + $0xc] sm:$0xf] %vm572, %v720
        %754 = vst.msk [vmem:[%s749 + $0x10] sm:$0xf] %vm572, %v721
        %755 = vst.msk [vmem:[%s749 + $0x14] sm:$0xf] %vm572, %v722
        %756 = vst.msk [vmem:[%s749 + $0x18] sm:$0xf] %vm572, %v723
        %757 = vst.msk [vmem:[%s749 + $0x1c] sm:$0xf] %vm572, %v724
        %758 = vst.msk [vmem:[%s749 + $0x20] sm:$0xf] %vm572, %v725
        %759 = vst.msk [vmem:[%s749 + $0x24] sm:$0xf] %vm572, %v726
        %760 = vst.msk [vmem:[%s749 + $0x28] sm:$0xf] %vm572, %v727
        %761 = vst.msk [vmem:[%s749 + $0x2c] sm:$0xf] %vm572, %v728
        %762 = vst.msk [vmem:[%s749 + $0x30] sm:$0xf] %vm572, %v729
        %763 = vst.msk [vmem:[%s749 + $0x34] sm:$0xf] %vm572, %v730
        %764 = vst.msk [vmem:[%s749 + $0x38] sm:$0xf] %vm572, %v731
        %765 = vst.msk [vmem:[%s749 + $0x3c] sm:$0xf] %vm572, %v732
        %766 = vrot.lane.b32.xlu0 %v396, 64
        %v767 = vpop.permute.xlu0 %766
        %768 = vrot.lane.b32.xlu0 %v401, 64
        %v769 = vpop.permute.xlu0 %768
        %770 = vrot.lane.b32.xlu0 %v406, 64
        %v771 = vpop.permute.xlu0 %770
        %772 = vrot.lane.b32.xlu0 %v411, 64
        %v773 = vpop.permute.xlu0 %772
        %774 = vrot.lane.b32.xlu0 %v416, 64
        %v775 = vpop.permute.xlu0 %774
        %776 = vrot.lane.b32.xlu0 %v421, 64
        %v777 = vpop.permute.xlu0 %776
        %778 = vrot.lane.b32.xlu0 %v426, 64
        %v779 = vpop.permute.xlu0 %778
        %780 = vrot.lane.b32.xlu0 %v431, 64
        %v781 = vpop.permute.xlu0 %780
        %782 = vrot.lane.b32.xlu0 %v436, 64
        %v783 = vpop.permute.xlu0 %782
        %784 = vrot.lane.b32.xlu0 %v441, 64
        %v785 = vpop.permute.xlu0 %784
        %786 = vrot.lane.b32.xlu0 %v446, 64
        %v787 = vpop.permute.xlu0 %786
        %788 = vrot.lane.b32.xlu0 %v451, 64
        %v789 = vpop.permute.xlu0 %788
        %790 = vrot.lane.b32.xlu0 %v456, 64
        %v791 = vpop.permute.xlu0 %790
        %792 = vrot.lane.b32.xlu0 %v461, 64
        %v793 = vpop.permute.xlu0 %792
        %794 = vrot.lane.b32.xlu0 %v466, 64
        %v795 = vpop.permute.xlu0 %794
        %796 = vrot.lane.b32.xlu0 %v471, 64
        %v797 = vpop.permute.xlu0 %796
        %vm814 = vcmask 31744
        %815 = vst.msk [vmem:[%s180] sm:$0xff] %vm814, %v767
        %816 = vst.msk [vmem:[%s180 + $0x8] sm:$0xff] %vm814, %v769
        %817 = vst.msk [vmem:[%s180 + $0x10] sm:$0xff] %vm814, %v771
        %818 = vst.msk [vmem:[%s180 + $0x18] sm:$0xff] %vm814, %v773
        %819 = vst.msk [vmem:[%s180 + $0x20] sm:$0xff] %vm814, %v775
        %820 = vst.msk [vmem:[%s180 + $0x28] sm:$0xff] %vm814, %v777
        %821 = vst.msk [vmem:[%s180 + $0x30] sm:$0xff] %vm814, %v779
        %822 = vst.msk [vmem:[%s180 + $0x38] sm:$0xff] %vm814, %v781
        %823 = vst.msk [vmem:[%s180 + $0x40] sm:$0xff] %vm814, %v783
        %824 = vst.msk [vmem:[%s180 + $0x48] sm:$0xff] %vm814, %v785
        %825 = vst.msk [vmem:[%s180 + $0x50] sm:$0xff] %vm814, %v787
        %826 = vst.msk [vmem:[%s180 + $0x58] sm:$0xff] %vm814, %v789
        %827 = vst.msk [vmem:[%s180 + $0x60] sm:$0xff] %vm814, %v791
        %828 = vst.msk [vmem:[%s180 + $0x68] sm:$0xff] %vm814, %v793
        %829 = vst.msk [vmem:[%s180 + $0x70] sm:$0xff] %vm814, %v795
        %830 = vst.msk [vmem:[%s180 + $0x78] sm:$0xff] %vm814, %v797
        %s831 = sand.u32 %s70, 1
        %s832 = sand.u32 %s70, 1
        %s833 = smul.addr %s832, 128
        %s834 = scalar_lea.vmem [#allocation2], %s833
        %s835 = smul.u32 16, %s15
        %p836 = scmp.lt.s32.totalorder %s835, 31
        %s837 = scalar_select %p836, %s835, 31
        %s838 = smul.addr %s837, 8
        %s839 = scalar_lea.vmem %s3, %s838
        // Predicated region
        $region29: #{inter_graph_attention.5} parent=27 // pred_check
          %p840 = pneg %p80
        $region30: #{inter_graph_attention.5} parent=27 // pred_check_branch
          %842 = sbr.rel (%p840) target = $region32
        $region31: #{inter_graph_attention.5} parent=27 // pred_region
          %s843 = smul.u32 16, %s15
          %s844 = smul.addr %s843, 4
          %s845 = scalar_lea.vmem %s2, %s844
          // Predicated region
          $region33: #{inter_graph_attention.5} parent=31 // pred_check
            _
          $region34: #{inter_graph_attention.5} parent=31 // pred_check_branch
            %847 = sbr.rel (0) target = $region36
          $region35: #{inter_graph_attention.5} parent=31 // pred_region
            // Predicated region
            $region37: #{inter_graph_attention.5} parent=35 // pred_check
              _
            $region38: #{inter_graph_attention.5} parent=35 // pred_check_branch
              %849 = sbr.rel target = $region40
            $region39: #{inter_graph_attention.5} parent=35 // pred_region
              // Predicated region
              $region52: #{inter_graph_attention.5} parent=39 // pred_check
                _
              $region53: #{inter_graph_attention.5} parent=39 // pred_check_branch
                %927 = sbr.rel (0) target = $region55
              $region54: #{inter_graph_attention.5} parent=39 // pred_region
                loop: start=0, step=1, limit=1
                $region56: #{inter_graph_attention.5} parent=54 // loop_pre_header
                  _
                $region57: #{inter_graph_attention.5} parent=54 // loop_header
                  %s929 = sphi 0, %s933
                  %p930 = scmp.ge.s32.totalorder %s929, 1
                  %s934 = sphi %s834, %s834
                  %s935 = sphi %s845, %s845
                $region58: #{inter_graph_attention.5} parent=54 // loop_header_branch
                  %932 = sbr.rel (%p930) target = $region62
                $region59: #{inter_graph_attention.5} parent=54 // loop_body
                  _
                $region60: #{inter_graph_attention.5} parent=54 // loop_footer
                  %s933 = sadd.s32 1, %s929
                $region61: #{inter_graph_attention.5} parent=54 // loop_footer_branch
                  %928 = sbr.rel target = $region57
                $region62: #{inter_graph_attention.5} parent=54 // loop_exit
                  _
                %s937 = ssub.s32 16, 1
                loop: start=0, step=1, limit=1
                $region63: #{inter_graph_attention.5} parent=54 // loop_pre_header
                  _
                $region64: #{inter_graph_attention.5} parent=54 // loop_header
                  %s939 = sphi 0, %s943
                  %p940 = scmp.ge.s32.totalorder %s939, 1
                  %s944 = sphi %s834, %s834
                  %s945 = sphi %s845, %s845
                $region65: #{inter_graph_attention.5} parent=54 // loop_header_branch
                  %942 = sbr.rel (%p940) target = $region69
                $region66: #{inter_graph_attention.5} parent=54 // loop_body
                  %v946 = vld [vmem:[%s944] sm:%s937]
                  %947 = vst [vmem:[%s945] sm:%s937] %v946
                  %v948 = vld [vmem:[%s944 + $0x4] sm:%s937]
                  %949 = vst [vmem:[%s945 + $0x4] sm:%s937] %v948
                  %v950 = vld [vmem:[%s944 + $0x8] sm:%s937]
                  %951 = vst [vmem:[%s945 + $0x8] sm:%s937] %v950
                  %v952 = vld [vmem:[%s944 + $0xc] sm:%s937]
                  %953 = vst [vmem:[%s945 + $0xc] sm:%s937] %v952
                  %v954 = vld [vmem:[%s944 + $0x10] sm:%s937]
                  %955 = vst [vmem:[%s945 + $0x10] sm:%s937] %v954
                  %v956 = vld [vmem:[%s944 + $0x14] sm:%s937]
                  %957 = vst [vmem:[%s945 + $0x14] sm:%s937] %v956
                  %v958 = vld [vmem:[%s944 + $0x18] sm:%s937]
                  %959 = vst [vmem:[%s945 + $0x18] sm:%s937] %v958
                  %v960 = vld [vmem:[%s944 + $0x1c] sm:%s937]
                  %961 = vst [vmem:[%s945 + $0x1c] sm:%s937] %v960
                  %v962 = vld [vmem:[%s944 + $0x20] sm:%s937]
                  %963 = vst [vmem:[%s945 + $0x20] sm:%s937] %v962
                  %v964 = vld [vmem:[%s944 + $0x24] sm:%s937]
                  %965 = vst [vmem:[%s945 + $0x24] sm:%s937] %v964
                  %v966 = vld [vmem:[%s944 + $0x28] sm:%s937]
                  %967 = vst [vmem:[%s945 + $0x28] sm:%s937] %v966
                  %v968 = vld [vmem:[%s944 + $0x2c] sm:%s937]
                  %969 = vst [vmem:[%s945 + $0x2c] sm:%s937] %v968
                  %v970 = vld [vmem:[%s944 + $0x30] sm:%s937]
                  %971 = vst [vmem:[%s945 + $0x30] sm:%s937] %v970
                  %v972 = vld [vmem:[%s944 + $0x34] sm:%s937]
                  %973 = vst [vmem:[%s945 + $0x34] sm:%s937] %v972
                  %v974 = vld [vmem:[%s944 + $0x38] sm:%s937]
                  %975 = vst [vmem:[%s945 + $0x38] sm:%s937] %v974
                  %v976 = vld [vmem:[%s944 + $0x3c] sm:%s937]
                  %977 = vst [vmem:[%s945 + $0x3c] sm:%s937] %v976
                  %v978 = vld [vmem:[%s944 + $0x40] sm:%s937]
                  %979 = vst [vmem:[%s945 + $0x80] sm:%s937] %v978
                  %v980 = vld [vmem:[%s944 + $0x44] sm:%s937]
                  %981 = vst [vmem:[%s945 + $0x84] sm:%s937] %v980
                  %v982 = vld [vmem:[%s944 + $0x48] sm:%s937]
                  %983 = vst [vmem:[%s945 + $0x88] sm:%s937] %v982
                  %v984 = vld [vmem:[%s944 + $0x4c] sm:%s937]
                  %985 = vst [vmem:[%s945 + $0x8c] sm:%s937] %v984
                  %v986 = vld [vmem:[%s944 + $0x50] sm:%s937]
                  %987 = vst [vmem:[%s945 + $0x90] sm:%s937] %v986
                  %v988 = vld [vmem:[%s944 + $0x54] sm:%s937]
                  %989 = vst [vmem:[%s945 + $0x94] sm:%s937] %v988
                  %v990 = vld [vmem:[%s944 + $0x58] sm:%s937]
                  %991 = vst [vmem:[%s945 + $0x98] sm:%s937] %v990
                  %v992 = vld [vmem:[%s944 + $0x5c] sm:%s937]
                  %993 = vst [vmem:[%s945 + $0x9c] sm:%s937] %v992
                  %v994 = vld [vmem:[%s944 + $0x60] sm:%s937]
                  %995 = vst [vmem:[%s945 + $0xa0] sm:%s937] %v994
                  %v996 = vld [vmem:[%s944 + $0x64] sm:%s937]
                  %997 = vst [vmem:[%s945 + $0xa4] sm:%s937] %v996
                  %v998 = vld [vmem:[%s944 + $0x68] sm:%s937]
                  %999 = vst [vmem:[%s945 + $0xa8] sm:%s937] %v998
                  %v1000 = vld [vmem:[%s944 + $0x6c] sm:%s937]
                  %1001 = vst [vmem:[%s945 + $0xac] sm:%s937] %v1000
                  %v1002 = vld [vmem:[%s944 + $0x70] sm:%s937]
                  %1003 = vst [vmem:[%s945 + $0xb0] sm:%s937] %v1002
                  %v1004 = vld [vmem:[%s944 + $0x74] sm:%s937]
                  %1005 = vst [vmem:[%s945 + $0xb4] sm:%s937] %v1004
                  %v1006 = vld [vmem:[%s944 + $0x78] sm:%s937]
                  %1007 = vst [vmem:[%s945 + $0xb8] sm:%s937] %v1006
                  %v1008 = vld [vmem:[%s944 + $0x7c] sm:%s937]
                  %1009 = vst [vmem:[%s945 + $0xbc] sm:%s937] %v1008
                $region67: #{inter_graph_attention.5} parent=54 // loop_footer
                  %s943 = sadd.s32 1, %s939
                $region68: #{inter_graph_attention.5} parent=54 // loop_footer_branch
                  %938 = sbr.rel target = $region64
                $region69: #{inter_graph_attention.5} parent=54 // loop_exit
                  _
              $region55: #{inter_graph_attention.5} parent=39 // pred_fallthru
                _
            $region40: #{inter_graph_attention.5} parent=35 // pred_fallthru
              _
            // Predicated region
            $region41: #{inter_graph_attention.5} parent=35 // pred_check
              _
            $region42: #{inter_graph_attention.5} parent=35 // pred_check_branch
              %851 = sbr.rel (0) target = $region44
            $region43: #{inter_graph_attention.5} parent=35 // pred_region
              %s853 = ssub.s32 16, 1
              loop: start=0, step=1, limit=1
              $region45: #{inter_graph_attention.5} parent=43 // loop_pre_header
                _
              $region46: #{inter_graph_attention.5} parent=43 // loop_header
                %s855 = sphi 0, %s859
                %p856 = scmp.ge.s32.totalorder %s855, 1
                %s860 = sphi %s834, %s834
                %s861 = sphi %s845, %s845
              $region47: #{inter_graph_attention.5} parent=43 // loop_header_branch
                %858 = sbr.rel (%p856) target = $region51
              $region48: #{inter_graph_attention.5} parent=43 // loop_body
                %v862 = vld [vmem:[%s860] sm:%s853]
                %863 = vst [vmem:[%s861] sm:%s853] %v862
                %v864 = vld [vmem:[%s860 + $0x4] sm:%s853]
                %865 = vst [vmem:[%s861 + $0x4] sm:%s853] %v864
                %v866 = vld [vmem:[%s860 + $0x8] sm:%s853]
                %867 = vst [vmem:[%s861 + $0x8] sm:%s853] %v866
                %v868 = vld [vmem:[%s860 + $0xc] sm:%s853]
                %869 = vst [vmem:[%s861 + $0xc] sm:%s853] %v868
                %v870 = vld [vmem:[%s860 + $0x10] sm:%s853]
                %871 = vst [vmem:[%s861 + $0x10] sm:%s853] %v870
                %v872 = vld [vmem:[%s860 + $0x14] sm:%s853]
                %873 = vst [vmem:[%s861 + $0x14] sm:%s853] %v872
                %v874 = vld [vmem:[%s860 + $0x18] sm:%s853]
                %875 = vst [vmem:[%s861 + $0x18] sm:%s853] %v874
                %v876 = vld [vmem:[%s860 + $0x1c] sm:%s853]
                %877 = vst [vmem:[%s861 + $0x1c] sm:%s853] %v876
                %v878 = vld [vmem:[%s860 + $0x20] sm:%s853]
                %879 = vst [vmem:[%s861 + $0x20] sm:%s853] %v878
                %v880 = vld [vmem:[%s860 + $0x24] sm:%s853]
                %881 = vst [vmem:[%s861 + $0x24] sm:%s853] %v880
                %v882 = vld [vmem:[%s860 + $0x28] sm:%s853]
                %883 = vst [vmem:[%s861 + $0x28] sm:%s853] %v882
                %v884 = vld [vmem:[%s860 + $0x2c] sm:%s853]
                %885 = vst [vmem:[%s861 + $0x2c] sm:%s853] %v884
                %v886 = vld [vmem:[%s860 + $0x30] sm:%s853]
                %887 = vst [vmem:[%s861 + $0x30] sm:%s853] %v886
                %v888 = vld [vmem:[%s860 + $0x34] sm:%s853]
                %889 = vst [vmem:[%s861 + $0x34] sm:%s853] %v888
                %v890 = vld [vmem:[%s860 + $0x38] sm:%s853]
                %891 = vst [vmem:[%s861 + $0x38] sm:%s853] %v890
                %v892 = vld [vmem:[%s860 + $0x3c] sm:%s853]
                %893 = vst [vmem:[%s861 + $0x3c] sm:%s853] %v892
                %v894 = vld [vmem:[%s860 + $0x40] sm:%s853]
                %895 = vst [vmem:[%s861 + $0x80] sm:%s853] %v894
                %v896 = vld [vmem:[%s860 + $0x44] sm:%s853]
                %897 = vst [vmem:[%s861 + $0x84] sm:%s853] %v896
                %v898 = vld [vmem:[%s860 + $0x48] sm:%s853]
                %899 = vst [vmem:[%s861 + $0x88] sm:%s853] %v898
                %v900 = vld [vmem:[%s860 + $0x4c] sm:%s853]
                %901 = vst [vmem:[%s861 + $0x8c] sm:%s853] %v900
                %v902 = vld [vmem:[%s860 + $0x50] sm:%s853]
                %903 = vst [vmem:[%s861 + $0x90] sm:%s853] %v902
                %v904 = vld [vmem:[%s860 + $0x54] sm:%s853]
                %905 = vst [vmem:[%s861 + $0x94] sm:%s853] %v904
                %v906 = vld [vmem:[%s860 + $0x58] sm:%s853]
                %907 = vst [vmem:[%s861 + $0x98] sm:%s853] %v906
                %v908 = vld [vmem:[%s860 + $0x5c] sm:%s853]
                %909 = vst [vmem:[%s861 + $0x9c] sm:%s853] %v908
                %v910 = vld [vmem:[%s860 + $0x60] sm:%s853]
                %911 = vst [vmem:[%s861 + $0xa0] sm:%s853] %v910
                %v912 = vld [vmem:[%s860 + $0x64] sm:%s853]
                %913 = vst [vmem:[%s861 + $0xa4] sm:%s853] %v912
                %v914 = vld [vmem:[%s860 + $0x68] sm:%s853]
                %915 = vst [vmem:[%s861 + $0xa8] sm:%s853] %v914
                %v916 = vld [vmem:[%s860 + $0x6c] sm:%s853]
                %917 = vst [vmem:[%s861 + $0xac] sm:%s853] %v916
                %v918 = vld [vmem:[%s860 + $0x70] sm:%s853]
                %919 = vst [vmem:[%s861 + $0xb0] sm:%s853] %v918
                %v920 = vld [vmem:[%s860 + $0x74] sm:%s853]
                %921 = vst [vmem:[%s861 + $0xb4] sm:%s853] %v920
                %v922 = vld [vmem:[%s860 + $0x78] sm:%s853]
                %923 = vst [vmem:[%s861 + $0xb8] sm:%s853] %v922
                %v924 = vld [vmem:[%s860 + $0x7c] sm:%s853]
                %925 = vst [vmem:[%s861 + $0xbc] sm:%s853] %v924
              $region49: #{inter_graph_attention.5} parent=43 // loop_footer
                %s859 = sadd.s32 1, %s855
              $region50: #{inter_graph_attention.5} parent=43 // loop_footer_branch
                %854 = sbr.rel target = $region46
              $region51: #{inter_graph_attention.5} parent=43 // loop_exit
                _
            $region44: #{inter_graph_attention.5} parent=35 // pred_fallthru
              _
          $region36: #{inter_graph_attention.5} parent=31 // pred_fallthru
            _
          %1010 = vnop
        $region32: #{inter_graph_attention.5} parent=27 // pred_fallthru
          _
        // Predicated region
        $region70: #{inter_graph_attention.5} parent=27 // pred_check
          %p1011 = pneg %p106
        $region71: #{inter_graph_attention.5} parent=27 // pred_check_branch
          %1013 = sbr.rel (%p1011) target = $region73
        $region72: #{inter_graph_attention.5} parent=27 // pred_region
          %s1014 = smul.u32 16, %s15
        $region73: #{inter_graph_attention.5} parent=27 // pred_fallthru
          _
      $region28: #{inter_graph_attention.5} parent=5 // pred_fallthru
        _
      %p1015 = scmp.le.s32.totalorder 2, %s10
      // Predicated region
      $region74: #{inter_graph_attention.5} parent=5 // pred_check
        %p1016 = pneg %p1015
      $region75: #{inter_graph_attention.5} parent=5 // pred_check_branch
        %1018 = sbr.rel (%p1016) target = $region77
      $region76: #{inter_graph_attention.5} parent=5 // pred_region
        %s1019 = ssub.s32 %s10, 2
        // Predicated region
        $region78: #{inter_graph_attention.5} parent=76 // pred_check
          %p1020 = pneg %p86
        $region79: #{inter_graph_attention.5} parent=76 // pred_check_branch
          %1022 = sbr.rel (%p1020) target = $region81
        $region80: #{inter_graph_attention.5} parent=76 // pred_region
          %s1023 = sand.u32 %s71, 1
          %s1024 = sand.u32 %s71, 1
          %s1025 = smul.addr %s1024, 128
          %s1026 = scalar_lea.vmem [#allocation2], %s1025
        $region81: #{inter_graph_attention.5} parent=76 // pred_fallthru
          _
        // Predicated region
        $region82: #{inter_graph_attention.5} parent=76 // pred_check
          %p1027 = pneg %p112
        $region83: #{inter_graph_attention.5} parent=76 // pred_check_branch
          %1029 = sbr.rel (%p1027) target = $region85
        $region84: #{inter_graph_attention.5} parent=76 // pred_region
          %s1030 = smul.u32 16, %s16
          %p1031 = scmp.lt.s32.totalorder %s1030, 31
          %s1032 = scalar_select %p1031, %s1030, 31
          %s1033 = smul.addr %s1032, 8
          %s1034 = scalar_lea.vmem %s3, %s1033
        $region85: #{inter_graph_attention.5} parent=76 // pred_fallthru
          _
      $region77: #{inter_graph_attention.5} parent=5 // pred_fallthru
        _
    $region6: #{inter_graph_attention.5} parent=1 // loop_footer
      %s14 = sadd.s32 1, %s10
    $region7: #{inter_graph_attention.5} parent=1 // loop_footer_branch
      %9 = sbr.rel target = $region3
    $region8: #{inter_graph_attention.5} parent=1 // loop_exit
      _

// kernel: inter_graph_attention.6
$region0: #{inter_graph_attention.6}
  #allocation0 [shape = 'u32[]', space=smem, size = 0x4, offset = 0x4, fixed_abs, tag = 'smem constant byte address 0x4 - core index']
  #allocation1 [shape = 'u32[144,128]{1,0:T(1,128)}', space=vmem, size = 0x12000, scoped, tag = 'internal scratch']
  #allocation2 [shape = 'f32[2,128,1]{2,1,0:T(8,128)}', space=vmem, size = 0x20000, scoped, tag = 'scratch operand']
  #allocation3 [shape = 'f32[2,128,64]{2,1,0:T(8,128)}', space=vmem, size = 0x20000, scoped, tag = 'scratch operand']
  %s0 = inlined_call_operand.vmem [shape: bf16[2,384,64], index: 0, kind: input, shape index: {}]
  %s1 = inlined_call_operand.vmem [shape: f32[2,384], index: 1, kind: input, shape index: {}]
  %s2 = inlined_call_operand.vmem [shape: f32[256,2], index: 2, kind: input, shape index: {}]
  %s3 = inlined_call_operand.vmem [shape: bf16[256,384], index: 3, kind: input, shape index: {}]
  %s4 = inlined_call_operand.vmem [shape: f32[1,64], index: 4, kind: input, shape index: {}]
  %s5 = inlined_call_operand.vmem [shape: f32[256,64], index: 5, kind: output, shape index: {}]
  %s6 = sld [smem:[#allocation0]]
  $region61: #{inter_graph_attention.6} parent=0
    _
  %s8 = ssub.s32 1, %s6
  %s9 = scalar_select 0, %s8, %s6
  loop: start=0, step=1, limit=4
  $region2: #{inter_graph_attention.6} parent=0 // loop_pre_header
    _
  $region3: #{inter_graph_attention.6} parent=0 // loop_header
    %s11 = sphi 0, %s15
    %p12 = scmp.ge.s32.totalorder %s11, 4
    %s18 = sphi 0, %s30
    %s19 = sphi 0, %s26
    %s20 = sphi 0, %s18
    %s21 = sphi 0, %s19
    %s22 = sphi 0, %s20
    %s23 = sphi 0, %s21
    %s33 = sphi 0, %s35
    %s36 = sphi 0, %s33
    %s37 = sphi 0, %s36
    %s53 = sphi 0, %s37
    %s59 = sphi 0, %s61
    %s62 = sphi 0, %s59
    %s63 = sphi 0, %s62
    %s79 = sphi 0, %s63
    %s85 = sphi 0, %s87
    %s88 = sphi 0, %s85
    %s89 = sphi 0, %s88
    %s105 = sphi 0, %s89
    %s113 = sphi 0, %s115
    %s116 = sphi 0, %s113
    %s117 = sphi 0, %s116
    %s133 = sphi 0, %s117
    %s137 = sphi 0, %s137
    %s139 = sphi 0, %s137
    %s140 = sphi 0, %s139
    %s154 = sphi 0, %s140
    %s160 = sphi 0, %s162
    %s163 = sphi 0, %s160
    %s164 = sphi 0, %s163
    %s180 = sphi 0, %s164
  $region4: #{inter_graph_attention.6} parent=0 // loop_header_branch
    %14 = sbr.rel (%p12) target = $region8
  $region5: #{inter_graph_attention.6} parent=0 // loop_body
    %s16 = ssub.s32 %s11, 1
    %s17 = ssub.s32 %s11, 2
    %s24 = sadd.s32 1, %s19
    %p25 = scmp.ge.s32.totalorder %s24, 1
    %s26 = scalar_select %p25, 0, %s24
    %s27 = sadd.s32 1, %s18
    %s28 = scalar_select %p25, %s27, %s18
    %p29 = scmp.ge.s32.totalorder %s28, 2
    %s30 = scalar_select %p29, 0, %s28
    %s31 = ssub.s32 %s19, %s26
    %p32 = scmp.eq.s32.totalorder %s31, 0
    %s34 = sadd.s32 %s33, 1
    %s35 = scalar_select %p32, %s33, %s34
    %p38 = pneg %p32
    %p39 = scmp.eq.s32.totalorder %s11, 1
    %p40 = por %p38, %p39
    %p41 = scmp.ne.s32.totalorder %s33, %s36
    %p42 = scmp.eq.s32.totalorder %s11, 0
    %p43 = por %p41, %p42
    %p44 = scmp.ne.s32.totalorder %s33, %s36
    %p45 = scmp.eq.s32.totalorder %s16, 1
    %p46 = por %p44, %p45
    %p47 = scmp.ne.s32.totalorder %s36, %s37
    %p48 = scmp.eq.s32.totalorder %s16, 0
    %p49 = por %p47, %p48
    %p50 = scmp.ne.s32.totalorder %s36, %s37
    %p51 = scmp.eq.s32.totalorder %s17, 1
    %p52 = por %p50, %p51
    %p54 = scmp.ne.s32.totalorder %s37, %s53
    %p55 = scmp.eq.s32.totalorder %s17, 0
    %p56 = por %p54, %p55
    %s57 = ssub.s32 %s19, %s26
    %p58 = scmp.eq.s32.totalorder %s57, 0
    %s60 = sadd.s32 %s59, 1
    %s61 = scalar_select %p58, %s59, %s60
    %p64 = pneg %p58
    %p65 = scmp.eq.s32.totalorder %s11, 1
    %p66 = por %p64, %p65
    %p67 = scmp.ne.s32.totalorder %s59, %s62
    %p68 = scmp.eq.s32.totalorder %s11, 0
    %p69 = por %p67, %p68
    %p70 = scmp.ne.s32.totalorder %s59, %s62
    %p71 = scmp.eq.s32.totalorder %s16, 1
    %p72 = por %p70, %p71
    %p73 = scmp.ne.s32.totalorder %s62, %s63
    %p74 = scmp.eq.s32.totalorder %s16, 0
    %p75 = por %p73, %p74
    %p76 = scmp.ne.s32.totalorder %s62, %s63
    %p77 = scmp.eq.s32.totalorder %s17, 1
    %p78 = por %p76, %p77
    %p80 = scmp.ne.s32.totalorder %s63, %s79
    %p81 = scmp.eq.s32.totalorder %s17, 0
    %p82 = por %p80, %p81
    %s83 = ssub.s32 %s18, %s30
    %p84 = scmp.eq.s32.totalorder %s83, 0
    %s86 = sadd.s32 %s85, 1
    %s87 = scalar_select %p84, %s85, %s86
    %p90 = pneg %p84
    %p91 = scmp.eq.s32.totalorder %s11, 1
    %p92 = por %p90, %p91
    %p93 = scmp.ne.s32.totalorder %s85, %s88
    %p94 = scmp.eq.s32.totalorder %s11, 0
    %p95 = por %p93, %p94
    %p96 = scmp.ne.s32.totalorder %s85, %s88
    %p97 = scmp.eq.s32.totalorder %s16, 1
    %p98 = por %p96, %p97
    %p99 = scmp.ne.s32.totalorder %s88, %s89
    %p100 = scmp.eq.s32.totalorder %s16, 0
    %p101 = por %p99, %p100
    %p102 = scmp.ne.s32.totalorder %s88, %s89
    %p103 = scmp.eq.s32.totalorder %s17, 1
    %p104 = por %p102, %p103
    %p106 = scmp.ne.s32.totalorder %s89, %s105
    %p107 = scmp.eq.s32.totalorder %s17, 0
    %p108 = por %p106, %p107
    %s109 = ssub.s32 %s18, %s30
    %s110 = ssub.s32 %s19, %s26
    %s111 = sor.u32 %s109, %s110
    %p112 = scmp.eq.s32.totalorder %s111, 0
    %s114 = sadd.s32 %s113, 1
    %s115 = scalar_select %p112, %s113, %s114
    %p118 = pneg %p112
    %p119 = scmp.eq.s32.totalorder %s11, 1
    %p120 = por %p118, %p119
    %p121 = scmp.ne.s32.totalorder %s113, %s116
    %p122 = scmp.eq.s32.totalorder %s11, 0
    %p123 = por %p121, %p122
    %p124 = scmp.ne.s32.totalorder %s113, %s116
    %p125 = scmp.eq.s32.totalorder %s16, 1
    %p126 = por %p124, %p125
    %p127 = scmp.ne.s32.totalorder %s116, %s117
    %p128 = scmp.eq.s32.totalorder %s16, 0
    %p129 = por %p127, %p128
    %p130 = scmp.ne.s32.totalorder %s116, %s117
    %p131 = scmp.eq.s32.totalorder %s17, 1
    %p132 = por %p130, %p131
    %p134 = scmp.ne.s32.totalorder %s117, %s133
    %p135 = scmp.eq.s32.totalorder %s17, 0
    %p136 = por %p134, %p135
    %s138 = sadd.s32 %s137, 1
    %p141 = scmp.eq.s32.totalorder %s11, 1
    %p142 = scmp.ne.s32.totalorder %s137, %s139
    %p143 = scmp.eq.s32.totalorder %s11, 0
    %p144 = por %p142, %p143
    %p145 = scmp.ne.s32.totalorder %s137, %s139
    %p146 = scmp.eq.s32.totalorder %s16, 1
    %p147 = por %p145, %p146
    %p148 = scmp.ne.s32.totalorder %s139, %s140
    %p149 = scmp.eq.s32.totalorder %s16, 0
    %p150 = por %p148, %p149
    %p151 = scmp.ne.s32.totalorder %s139, %s140
    %p152 = scmp.eq.s32.totalorder %s17, 1
    %p153 = por %p151, %p152
    %p155 = scmp.ne.s32.totalorder %s140, %s154
    %p156 = scmp.eq.s32.totalorder %s17, 0
    %p157 = por %p155, %p156
    %s158 = ssub.s32 %s18, %s30
    %p159 = scmp.eq.s32.totalorder %s158, 0
    %s161 = sadd.s32 %s160, 1
    %s162 = scalar_select %p159, %s160, %s161
    %p165 = pneg %p159
    %p166 = scmp.eq.s32.totalorder %s11, 1
    %p167 = por %p165, %p166
    %p168 = scmp.ne.s32.totalorder %s160, %s163
    %p169 = scmp.eq.s32.totalorder %s11, 0
    %p170 = por %p168, %p169
    %p171 = scmp.ne.s32.totalorder %s160, %s163
    %p172 = scmp.eq.s32.totalorder %s16, 1
    %p173 = por %p171, %p172
    %p174 = scmp.ne.s32.totalorder %s163, %s164
    %p175 = scmp.eq.s32.totalorder %s16, 0
    %p176 = por %p174, %p175
    %p177 = scmp.ne.s32.totalorder %s163, %s164
    %p178 = scmp.eq.s32.totalorder %s17, 1
    %p179 = por %p177, %p178
    %p181 = scmp.ne.s32.totalorder %s164, %s180
    %p182 = scmp.eq.s32.totalorder %s17, 0
    %p183 = por %p181, %p182
    %p184 = scmp.le.s32.totalorder 1, %s11
    %p185 = scmp.lt.s32.totalorder %s11, 3
    %p186 = pnand %p184, %p185
    %p187 = pneg %p186
    // Predicated region
    $region9: #{inter_graph_attention.6} parent=5 // pred_check
      _
    $region10: #{inter_graph_attention.6} parent=5 // pred_check_branch
      %189 = sbr.rel (%p186) target = $region12
    $region11: #{inter_graph_attention.6} parent=5 // pred_region
      %s190 = ssub.s32 %s11, 1
      // Predicated region
      $region13: #{inter_graph_attention.6} parent=11 // pred_check
        %p191 = pneg %p49
      $region14: #{inter_graph_attention.6} parent=11 // pred_check_branch
        %193 = sbr.rel (%p191) target = $region16
      $region15: #{inter_graph_attention.6} parent=11 // pred_region
        %s194 = smul.u32 48, %s21
        %p195 = scmp.lt.s32.totalorder %s194, 47
        %s196 = scalar_select %p195, %s194, 47
        %s197 = smul.addr %s196, 4
        %s198 = scalar_lea.vmem %s0, %s197
        %s199 = smul.u32 48, %s21
      $region16: #{inter_graph_attention.6} parent=11 // pred_fallthru
        _
      // Predicated region
      $region17: #{inter_graph_attention.6} parent=11 // pred_check
        %p200 = pneg %p75
      $region18: #{inter_graph_attention.6} parent=11 // pred_check_branch
        %202 = sbr.rel (%p200) target = $region20
      $region19: #{inter_graph_attention.6} parent=11 // pred_region
        %s203 = smul.u32 3, %s21
        %p204 = scmp.lt.s32.totalorder %s203, 2
        %s205 = scalar_select %p204, %s203, 2
        %s206 = smul.addr %s205, 2
        %s207 = scalar_lea.vmem %s1, %s206
        %s208 = smul.u32 3, %s21
      $region20: #{inter_graph_attention.6} parent=11 // pred_fallthru
        _
      // Predicated region
      $region21: #{inter_graph_attention.6} parent=11 // pred_check
        %p209 = pneg %p150
      $region22: #{inter_graph_attention.6} parent=11 // pred_check_branch
        %211 = sbr.rel (%p209) target = $region24
      $region23: #{inter_graph_attention.6} parent=11 // pred_region
        _
      $region24: #{inter_graph_attention.6} parent=11 // pred_fallthru
        _
    $region12: #{inter_graph_attention.6} parent=5 // pred_fallthru
      _
    %p212 = scmp.lt.s32.totalorder %s11, 2
    // Predicated region
    $region25: #{inter_graph_attention.6} parent=5 // pred_check
      %p213 = pneg %p212
    $region26: #{inter_graph_attention.6} parent=5 // pred_check_branch
      %215 = sbr.rel (%p213) target = $region28
    $region27: #{inter_graph_attention.6} parent=5 // pred_region
      // Predicated region
      $region29: #{inter_graph_attention.6} parent=27 // pred_check
        %p216 = pneg %p95
      $region30: #{inter_graph_attention.6} parent=27 // pred_check_branch
        %218 = sbr.rel (%p216) target = $region32
      $region31: #{inter_graph_attention.6} parent=27 // pred_region
        %s219 = smul.u32 16, %s18
        %p220 = scmp.lt.s32.totalorder %s219, 31
        %s221 = scalar_select %p220, %s219, 31
        %s222 = smul.addr %s221, 8
        %s223 = scalar_lea.vmem %s2, %s222
        %s224 = smul.u32 16, %s18
      $region32: #{inter_graph_attention.6} parent=27 // pred_fallthru
        _
      // Predicated region
      $region33: #{inter_graph_attention.6} parent=27 // pred_check
        %p225 = pneg %p123
      $region34: #{inter_graph_attention.6} parent=27 // pred_check_branch
        %227 = sbr.rel (%p225) target = $region36
      $region35: #{inter_graph_attention.6} parent=27 // pred_region
        %s228 = smul.u32 16, %s18
        %s229 = smul.u32 3, %s19
        %p230 = scmp.lt.s32.totalorder %s228, 31
        %s231 = scalar_select %p230, %s228, 31
        %p232 = scmp.lt.s32.totalorder %s229, 2
        %s233 = scalar_select %p232, %s229, 2
        %s234 = smul.addr %s231, 3
        %s235 = sadd.s32 %s233, %s234
        %s236 = smul.addr %s235, 4
        %s237 = scalar_lea.vmem %s3, %s236
        %s238 = smul.u32 16, %s18
        %s239 = smul.u32 3, %s19
      $region36: #{inter_graph_attention.6} parent=27 // pred_fallthru
        _
    $region28: #{inter_graph_attention.6} parent=5 // pred_fallthru
      _
    %p240 = scmp.le.s32.totalorder 1, %s11
    %p241 = scmp.lt.s32.totalorder %s11, 3
    %p242 = pnand %p240, %p241
    %p243 = pneg %p242
    // Predicated region
    $region37: #{inter_graph_attention.6} parent=5 // pred_check
      _
    $region38: #{inter_graph_attention.6} parent=5 // pred_check_branch
      %245 = sbr.rel (%p242) target = $region40
    $region39: #{inter_graph_attention.6} parent=5 // pred_region
      %s246 = ssub.s32 %s11, 1
      %s247 = smul.u32 48, %s21
      %p248 = scmp.lt.s32.totalorder %s247, 47
      %s249 = scalar_select %p248, %s247, 47
      %s250 = smul.addr %s249, 4
      %s251 = scalar_lea.vmem %s0, %s250
      %p252 = pneg %p49
      %p253 = pneg %p46
      %s254 = smul.u32 3, %s21
      %p255 = scmp.lt.s32.totalorder %s254, 2
      %s256 = scalar_select %p255, %s254, 2
      %s257 = smul.addr %s256, 2
      %s258 = scalar_lea.vmem %s1, %s257
      %p259 = pneg %p75
      %p260 = pneg %p72
      %s261 = smul.u32 16, %s20
      %p262 = scmp.lt.s32.totalorder %s261, 31
      %s263 = scalar_select %p262, %s261, 31
      %s264 = smul.addr %s263, 8
      %s265 = scalar_lea.vmem %s2, %s264
      %p266 = pneg %p101
      %p267 = pneg %p98
      %s268 = smul.u32 16, %s20
      %s269 = smul.u32 3, %s21
      %p270 = scmp.lt.s32.totalorder %s268, 31
      %s271 = scalar_select %p270, %s268, 31
      %p272 = scmp.lt.s32.totalorder %s269, 2
      %s273 = scalar_select %p272, %s269, 2
      %s274 = smul.addr %s271, 3
      %s275 = sadd.s32 %s273, %s274
      %s276 = smul.addr %s275, 4
      %s277 = scalar_lea.vmem %s3, %s276
      %p278 = pneg %p129
      %p279 = pneg %p126
      %p280 = pneg %p150
      %p281 = pneg %p147
      %p282 = pneg %p176
      %p283 = pneg %p173
      %s284 = smul.u32 16, %s20
      %p285 = scmp.lt.s32.totalorder %s284, 31
      %s286 = scalar_select %p285, %s284, 31
      %s287 = smul.addr %s286, 8
      %s288 = scalar_lea.vmem %s5, %s287
      %s289 = smul.u32 48, %s21
      %p290 = scmp.lt.s32.totalorder %s289, 47
      %s291 = scalar_select %p290, %s289, 47
      %s292 = smul.addr %s291, 4
      %s293 = scalar_lea.vmem %s0, %s292
      %s294 = smul.u32 48, %s21
      %s295 = smul.u32 3, %s21
      %p296 = scmp.lt.s32.totalorder %s295, 2
      %s297 = scalar_select %p296, %s295, 2
      %s298 = smul.addr %s297, 2
      %s299 = scalar_lea.vmem %s1, %s298
      %s300 = smul.u32 3, %s21
      %s301 = smul.u32 16, %s20
      %p302 = scmp.lt.s32.totalorder %s301, 31
      %s303 = scalar_select %p302, %s301, 31
      %s304 = smul.addr %s303, 8
      %s305 = scalar_lea.vmem %s2, %s304
      %s306 = smul.u32 16, %s20
      %s307 = smul.u32 16, %s20
      %s308 = smul.u32 3, %s21
      %p309 = scmp.lt.s32.totalorder %s307, 31
      %s310 = scalar_select %p309, %s307, 31
      %p311 = scmp.lt.s32.totalorder %s308, 2
      %s312 = scalar_select %p311, %s308, 2
      %s313 = smul.addr %s310, 3
      %s314 = sadd.s32 %s312, %s313
      %s315 = smul.addr %s314, 4
      %s316 = scalar_lea.vmem %s3, %s315
      %s317 = smul.u32 16, %s20
      %s318 = smul.u32 3, %s21
      %s319 = smul.u32 16, %s20
      %p320 = scmp.lt.s32.totalorder %s319, 31
      %s321 = scalar_select %p320, %s319, 31
      %s322 = smul.addr %s321, 8
      %s323 = scalar_lea.vmem %s5, %s322
      %s324 = smul.u32 16, %s20
      %p326 = scmp.eq.s32.totalorder %s21, 0
      // Predicated region
      $region41: #{inter_graph_attention.6} parent=39 // pred_check
        %p327 = pneg %p326
      $region42: #{inter_graph_attention.6} parent=39 // pred_check_branch
        %329 = sbr.rel (%p327) target = $region44
      $region43: #{inter_graph_attention.6} parent=39 // pred_region
        %vm330 = vcmask 7168
        %331 = vst.msk [vmem:[#allocation2] sm:$0xff] %vm330, -1e+30
        %332 = vst.msk [vmem:[#allocation2 + $0x8] sm:$0xff] %vm330, -1e+30
        %333 = vst.msk [vmem:[#allocation2 + $0x10] sm:$0xff] %vm330, -1e+30
        %334 = vst.msk [vmem:[#allocation2 + $0x18] sm:$0xff] %vm330, -1e+30
        %335 = vst.msk [vmem:[#allocation2 + $0x20] sm:$0xff] %vm330, -1e+30
        %336 = vst.msk [vmem:[#allocation2 + $0x28] sm:$0xff] %vm330, -1e+30
        %337 = vst.msk [vmem:[#allocation2 + $0x30] sm:$0xff] %vm330, -1e+30
        %338 = vst.msk [vmem:[#allocation2 + $0x38] sm:$0xff] %vm330, -1e+30
        %339 = vst.msk [vmem:[#allocation2 + $0x40] sm:$0xff] %vm330, -1e+30
        %340 = vst.msk [vmem:[#allocation2 + $0x48] sm:$0xff] %vm330, -1e+30
        %341 = vst.msk [vmem:[#allocation2 + $0x50] sm:$0xff] %vm330, -1e+30
        %342 = vst.msk [vmem:[#allocation2 + $0x58] sm:$0xff] %vm330, -1e+30
        %343 = vst.msk [vmem:[#allocation2 + $0x60] sm:$0xff] %vm330, -1e+30
        %344 = vst.msk [vmem:[#allocation2 + $0x68] sm:$0xff] %vm330, -1e+30
        %345 = vst.msk [vmem:[#allocation2 + $0x70] sm:$0xff] %vm330, -1e+30
        %346 = vst.msk [vmem:[#allocation2 + $0x78] sm:$0xff] %vm330, -1e+30
        %347 = vst.msk [vmem:[#allocation2 + $0x80] sm:$0xff] %vm330, -1e+30
        %348 = vst.msk [vmem:[#allocation2 + $0x88] sm:$0xff] %vm330, -1e+30
        %349 = vst.msk [vmem:[#allocation2 + $0x90] sm:$0xff] %vm330, -1e+30
        %350 = vst.msk [vmem:[#allocation2 + $0x98] sm:$0xff] %vm330, -1e+30
        %351 = vst.msk [vmem:[#allocation2 + $0xa0] sm:$0xff] %vm330, -1e+30
        %352 = vst.msk [vmem:[#allocation2 + $0xa8] sm:$0xff] %vm330, -1e+30
        %353 = vst.msk [vmem:[#allocation2 + $0xb0] sm:$0xff] %vm330, -1e+30
        %354 = vst.msk [vmem:[#allocation2 + $0xb8] sm:$0xff] %vm330, -1e+30
        %355 = vst.msk [vmem:[#allocation2 + $0xc0] sm:$0xff] %vm330, -1e+30
        %356 = vst.msk [vmem:[#allocation2 + $0xc8] sm:$0xff] %vm330, -1e+30
        %357 = vst.msk [vmem:[#allocation2 + $0xd0] sm:$0xff] %vm330, -1e+30
        %358 = vst.msk [vmem:[#allocation2 + $0xd8] sm:$0xff] %vm330, -1e+30
        %359 = vst.msk [vmem:[#allocation2 + $0xe0] sm:$0xff] %vm330, -1e+30
        %360 = vst.msk [vmem:[#allocation2 + $0xe8] sm:$0xff] %vm330, -1e+30
        %361 = vst.msk [vmem:[#allocation2 + $0xf0] sm:$0xff] %vm330, -1e+30
        %362 = vst.msk [vmem:[#allocation2 + $0xf8] sm:$0xff] %vm330, -1e+30
        %vm363 = vcmask 523264
        %364 = vst.msk [vmem:[#allocation3] sm:$0xff] %vm363, 0.0
        %365 = vst.msk [vmem:[#allocation3 + $0x8] sm:$0xff] %vm363, 0.0
        %366 = vst.msk [vmem:[#allocation3 + $0x10] sm:$0xff] %vm363, 0.0
        %367 = vst.msk [vmem:[#allocation3 + $0x18] sm:$0xff] %vm363, 0.0
        %368 = vst.msk [vmem:[#allocation3 + $0x20] sm:$0xff] %vm363, 0.0
        %369 = vst.msk [vmem:[#allocation3 + $0x28] sm:$0xff] %vm363, 0.0
        %370 = vst.msk [vmem:[#allocation3 + $0x30] sm:$0xff] %vm363, 0.0
        %371 = vst.msk [vmem:[#allocation3 + $0x38] sm:$0xff] %vm363, 0.0
        %372 = vst.msk [vmem:[#allocation3 + $0x40] sm:$0xff] %vm363, 0.0
        %373 = vst.msk [vmem:[#allocation3 + $0x48] sm:$0xff] %vm363, 0.0
        %374 = vst.msk [vmem:[#allocation3 + $0x50] sm:$0xff] %vm363, 0.0
        %375 = vst.msk [vmem:[#allocation3 + $0x58] sm:$0xff] %vm363, 0.0
        %376 = vst.msk [vmem:[#allocation3 + $0x60] sm:$0xff] %vm363, 0.0
        %377 = vst.msk [vmem:[#allocation3 + $0x68] sm:$0xff] %vm363, 0.0
        %378 = vst.msk [vmem:[#allocation3 + $0x70] sm:$0xff] %vm363, 0.0
        %379 = vst.msk [vmem:[#allocation3 + $0x78] sm:$0xff] %vm363, 0.0
        %380 = vst.msk [vmem:[#allocation3 + $0x80] sm:$0xff] %vm363, 0.0
        %381 = vst.msk [vmem:[#allocation3 + $0x88] sm:$0xff] %vm363, 0.0
        %382 = vst.msk [vmem:[#allocation3 + $0x90] sm:$0xff] %vm363, 0.0
        %383 = vst.msk [vmem:[#allocation3 + $0x98] sm:$0xff] %vm363, 0.0
        %384 = vst.msk [vmem:[#allocation3 + $0xa0] sm:$0xff] %vm363, 0.0
        %385 = vst.msk [vmem:[#allocation3 + $0xa8] sm:$0xff] %vm363, 0.0
        %386 = vst.msk [vmem:[#allocation3 + $0xb0] sm:$0xff] %vm363, 0.0
        %387 = vst.msk [vmem:[#allocation3 + $0xb8] sm:$0xff] %vm363, 0.0
        %388 = vst.msk [vmem:[#allocation3 + $0xc0] sm:$0xff] %vm363, 0.0
        %389 = vst.msk [vmem:[#allocation3 + $0xc8] sm:$0xff] %vm363, 0.0
        %390 = vst.msk [vmem:[#allocation3 + $0xd0] sm:$0xff] %vm363, 0.0
        %391 = vst.msk [vmem:[#allocation3 + $0xd8] sm:$0xff] %vm363, 0.0
        %392 = vst.msk [vmem:[#allocation3 + $0xe0] sm:$0xff] %vm363, 0.0
        %393 = vst.msk [vmem:[#allocation3 + $0xe8] sm:$0xff] %vm363, 0.0
        %394 = vst.msk [vmem:[#allocation3 + $0xf0] sm:$0xff] %vm363, 0.0
        %395 = vst.msk [vmem:[#allocation3 + $0xf8] sm:$0xff] %vm363, 0.0
      $region44: #{inter_graph_attention.6} parent=39 // pred_fallthru
        _
      %v396 = vld [vmem:[%s316] sm:$0xff]
      %v397 = vld [vmem:[%s316 + $0x8] sm:$0xf]
      %v398 = vld [vmem:[%s316 + $0xc] sm:$0xff]
      %v399 = vld [vmem:[%s316 + $0x14] sm:$0xf]
      %v400 = vld [vmem:[%s316 + $0x18] sm:$0xff]
      %v401 = vld [vmem:[%s316 + $0x20] sm:$0xf]
      %v402 = vld [vmem:[%s316 + $0x24] sm:$0xff]
      %v403 = vld [vmem:[%s316 + $0x2c] sm:$0xf]
      %v404 = vld [vmem:[%s316 + $0x30] sm:$0xff]
      %v405 = vld [vmem:[%s316 + $0x38] sm:$0xf]
      %v406 = vld [vmem:[%s316 + $0x3c] sm:$0xff]
      %v407 = vld [vmem:[%s316 + $0x44] sm:$0xf]
      %v408 = vld [vmem:[%s316 + $0x48] sm:$0xff]
      %v409 = vld [vmem:[%s316 + $0x50] sm:$0xf]
      %v410 = vld [vmem:[%s316 + $0x54] sm:$0xff]
      %v411 = vld [vmem:[%s316 + $0x5c] sm:$0xf]
      %v412 = vld [vmem:[%s316 + $0x60] sm:$0xff]
      %v413 = vld [vmem:[%s316 + $0x68] sm:$0xf]
      %v414 = vld [vmem:[%s316 + $0x6c] sm:$0xff]
      %v415 = vld [vmem:[%s316 + $0x74] sm:$0xf]
      %v416 = vld [vmem:[%s316 + $0x78] sm:$0xff]
      %v417 = vld [vmem:[%s316 + $0x80] sm:$0xf]
      %v418 = vld [vmem:[%s316 + $0x84] sm:$0xff]
      %v419 = vld [vmem:[%s316 + $0x8c] sm:$0xf]
      %v420 = vld [vmem:[%s316 + $0x90] sm:$0xff]
      %v421 = vld [vmem:[%s316 + $0x98] sm:$0xf]
      %v422 = vld [vmem:[%s316 + $0x9c] sm:$0xff]
      %v423 = vld [vmem:[%s316 + $0xa4] sm:$0xf]
      %v424 = vld [vmem:[%s316 + $0xa8] sm:$0xff]
      %v425 = vld [vmem:[%s316 + $0xb0] sm:$0xf]
      %v426 = vld [vmem:[%s316 + $0xb4] sm:$0xff]
      %v427 = vld [vmem:[%s316 + $0xbc] sm:$0xf]
      %v428 = vld [vmem:[%s305] sm:$0xff]
      %v429 = vld [vmem:[%s305 + $0x8] sm:$0xff]
      %v430 = vld [vmem:[%s305 + $0x10] sm:$0xff]
      %v431 = vld [vmem:[%s305 + $0x18] sm:$0xff]
      %v432 = vld [vmem:[%s305 + $0x20] sm:$0xff]
      %v433 = vld [vmem:[%s305 + $0x28] sm:$0xff]
      %v434 = vld [vmem:[%s305 + $0x30] sm:$0xff]
      %v435 = vld [vmem:[%s305 + $0x38] sm:$0xff]
      %v436 = vld [vmem:[%s305 + $0x40] sm:$0xff]
      %v437 = vld [vmem:[%s305 + $0x48] sm:$0xff]
      %v438 = vld [vmem:[%s305 + $0x50] sm:$0xff]
      %v439 = vld [vmem:[%s305 + $0x58] sm:$0xff]
      %v440 = vld [vmem:[%s305 + $0x60] sm:$0xff]
      %v441 = vld [vmem:[%s305 + $0x68] sm:$0xff]
      %v442 = vld [vmem:[%s305 + $0x70] sm:$0xff]
      %v443 = vld [vmem:[%s305 + $0x78] sm:$0xff]
      %v444 = vld [vmem:[%s299] sm:$0x3f]
      %446 = vset.pattern.permute.xlu0 0
      %447 = vperm.xlu0 %446, %v428
      %v448 = vpop.permute.xlu0 %447
      %451 = vset.pattern.permute.xlu0 0
      %452 = vperm.xlu0 %451, %v429
      %v453 = vpop.permute.xlu0 %452
      %456 = vset.pattern.permute.xlu0 0
      %457 = vperm.xlu0 %456, %v430
      %v458 = vpop.permute.xlu0 %457
      %461 = vset.pattern.permute.xlu0 0
      %462 = vperm.xlu0 %461, %v431
      %v463 = vpop.permute.xlu0 %462
      %466 = vset.pattern.permute.xlu0 0
      %467 = vperm.xlu0 %466, %v432
      %v468 = vpop.permute.xlu0 %467
      %471 = vset.pattern.permute.xlu0 0
      %472 = vperm.xlu0 %471, %v433
      %v473 = vpop.permute.xlu0 %472
      %476 = vset.pattern.permute.xlu0 0
      %477 = vperm.xlu0 %476, %v434
      %v478 = vpop.permute.xlu0 %477
      %481 = vset.pattern.permute.xlu0 0
      %482 = vperm.xlu0 %481, %v435
      %v483 = vpop.permute.xlu0 %482
      %486 = vset.pattern.permute.xlu0 0
      %487 = vperm.xlu0 %486, %v436
      %v488 = vpop.permute.xlu0 %487
      %491 = vset.pattern.permute.xlu0 0
      %492 = vperm.xlu0 %491, %v437
      %v493 = vpop.permute.xlu0 %492
      %496 = vset.pattern.permute.xlu0 0
      %497 = vperm.xlu0 %496, %v438
      %v498 = vpop.permute.xlu0 %497
      %501 = vset.pattern.permute.xlu0 0
      %502 = vperm.xlu0 %501, %v439
      %v503 = vpop.permute.xlu0 %502
      %506 = vset.pattern.permute.xlu0 0
      %507 = vperm.xlu0 %506, %v440
      %v508 = vpop.permute.xlu0 %507
      %511 = vset.pattern.permute.xlu0 0
      %512 = vperm.xlu0 %511, %v441
      %v513 = vpop.permute.xlu0 %512
      %516 = vset.pattern.permute.xlu0 0
      %517 = vperm.xlu0 %516, %v442
      %v518 = vpop.permute.xlu0 %517
      %521 = vset.pattern.permute.xlu0 0
      %522 = vperm.xlu0 %521, %v443
      %v523 = vpop.permute.xlu0 %522
      %v526 = vlaneseq
      %v527 = vshrl.u32 %v526, 7
      %v528 = vsub.s32 0, %v527
      %v529 = vrot.slane %v444, %v528
      %v530 = vlaneseq
      %v531 = vshrl.u32 %v530, 7
      %v532 = vsub.s32 2, %v531
      %v533 = vrot.slane %v444, %v532
      %v534 = vlaneseq
      %v535 = vshrl.u32 %v534, 7
      %v536 = vsub.s32 4, %v535
      %v537 = vrot.slane %v444, %v536
      %v541 = vlaneseq
      %v542 = vshrl.u32 %v541, 7
      %v543 = vsub.s32 0, %v542
      %v544 = vrot.slane %v529, %v543
      %v545 = vlaneseq
      %v546 = vshrl.u32 %v545, 7
      %v547 = vsub.s32 0, %v546
      %v548 = vrot.slane %v533, %v547
      %v549 = vlaneseq
      %v550 = vshrl.u32 %v549, 7
      %v551 = vsub.s32 0, %v550
      %v552 = vrot.slane %v537, %v551
      %v553 = vadd.f32 %v448, %v544
      %v554 = vadd.f32 %v448, %v548
      %v555 = vadd.f32 %v448, %v552
      %v556 = vadd.f32 %v453, %v544
      %v557 = vadd.f32 %v453, %v548
      %v558 = vadd.f32 %v453, %v552
      %v559 = vadd.f32 %v458, %v544
      %v560 = vadd.f32 %v458, %v548
      %v561 = vadd.f32 %v458, %v552
      %v562 = vadd.f32 %v463, %v544
      %v563 = vadd.f32 %v463, %v548
      %v564 = vadd.f32 %v463, %v552
      %v565 = vadd.f32 %v468, %v544
      %v566 = vadd.f32 %v468, %v548
      %v567 = vadd.f32 %v468, %v552
      %v568 = vadd.f32 %v473, %v544
      %v569 = vadd.f32 %v473, %v548
      %v570 = vadd.f32 %v473, %v552
      %v571 = vadd.f32 %v478, %v544
      %v572 = vadd.f32 %v478, %v548
      %v573 = vadd.f32 %v478, %v552
      %v574 = vadd.f32 %v483, %v544
      %v575 = vadd.f32 %v483, %v548
      %v576 = vadd.f32 %v483, %v552
      %v577 = vadd.f32 %v488, %v544
      %v578 = vadd.f32 %v488, %v548
      %v579 = vadd.f32 %v488, %v552
      %v580 = vadd.f32 %v493, %v544
      %v581 = vadd.f32 %v493, %v548
      %v582 = vadd.f32 %v493, %v552
      %v583 = vadd.f32 %v498, %v544
      %v584 = vadd.f32 %v498, %v548
      %v585 = vadd.f32 %v498, %v552
      %v586 = vadd.f32 %v503, %v544
      %v587 = vadd.f32 %v503, %v548
      %v588 = vadd.f32 %v503, %v552
      %v589 = vadd.f32 %v508, %v544
      %v590 = vadd.f32 %v508, %v548
      %v591 = vadd.f32 %v508, %v552
      %v592 = vadd.f32 %v513, %v544
      %v593 = vadd.f32 %v513, %v548
      %v594 = vadd.f32 %v513, %v552
      %v595 = vadd.f32 %v518, %v544
      %v596 = vadd.f32 %v518, %v548
      %v597 = vadd.f32 %v518, %v552
      %v598 = vadd.f32 %v523, %v544
      %v599 = vadd.f32 %v523, %v548
      %v600 = vadd.f32 %v523, %v552
      %v601 = vmul.f32 %v553, 0.2
      %v602 = vmul.f32 %v554, 0.2
      %v603 = vmul.f32 %v555, 0.2
      %v604 = vmul.f32 %v556, 0.2
      %v605 = vmul.f32 %v557, 0.2
      %v606 = vmul.f32 %v558, 0.2
      %v607 = vmul.f32 %v559, 0.2
      %v608 = vmul.f32 %v560, 0.2
      %v609 = vmul.f32 %v561, 0.2
      %v610 = vmul.f32 %v562, 0.2
      %v611 = vmul.f32 %v563, 0.2
      %v612 = vmul.f32 %v564, 0.2
      %v613 = vmul.f32 %v565, 0.2
      %v614 = vmul.f32 %v566, 0.2
      %v615 = vmul.f32 %v567, 0.2
      %v616 = vmul.f32 %v568, 0.2
      %v617 = vmul.f32 %v569, 0.2
      %v618 = vmul.f32 %v570, 0.2
      %v619 = vmul.f32 %v571, 0.2
      %v620 = vmul.f32 %v572, 0.2
      %v621 = vmul.f32 %v573, 0.2
      %v622 = vmul.f32 %v574, 0.2
      %v623 = vmul.f32 %v575, 0.2
      %v624 = vmul.f32 %v576, 0.2
      %v625 = vmul.f32 %v577, 0.2
      %v626 = vmul.f32 %v578, 0.2
      %v627 = vmul.f32 %v579, 0.2
      %v628 = vmul.f32 %v580, 0.2
      %v629 = vmul.f32 %v581, 0.2
      %v630 = vmul.f32 %v582, 0.2
      %v631 = vmul.f32 %v583, 0.2
      %v632 = vmul.f32 %v584, 0.2
      %v633 = vmul.f32 %v585, 0.2
      %v634 = vmul.f32 %v586, 0.2
      %v635 = vmul.f32 %v587, 0.2
      %v636 = vmul.f32 %v588, 0.2
      %v637 = vmul.f32 %v589, 0.2
      %v638 = vmul.f32 %v590, 0.2
      %v639 = vmul.f32 %v591, 0.2
      %v640 = vmul.f32 %v592, 0.2
      %v641 = vmul.f32 %v593, 0.2
      %v642 = vmul.f32 %v594, 0.2
      %v643 = vmul.f32 %v595, 0.2
      %v644 = vmul.f32 %v596, 0.2
      %v645 = vmul.f32 %v597, 0.2
      %v646 = vmul.f32 %v598, 0.2
      %v647 = vmul.f32 %v599, 0.2
      %v648 = vmul.f32 %v600, 0.2
      %v649 = vmax.f32 %v553, %v601
      %v650 = vmax.f32 %v554, %v602
      %v651 = vmax.f32 %v555, %v603
      %v652 = vmax.f32 %v556, %v604
      %v653 = vmax.f32 %v557, %v605
      %v654 = vmax.f32 %v558, %v606
      %v655 = vmax.f32 %v559, %v607
      %v656 = vmax.f32 %v560, %v608
      %v657 = vmax.f32 %v561, %v609
      %v658 = vmax.f32 %v562, %v610
      %v659 = vmax.f32 %v563, %v611
      %v660 = vmax.f32 %v564, %v612
      %v661 = vmax.f32 %v565, %v613
      %v662 = vmax.f32 %v566, %v614
      %v663 = vmax.f32 %v567, %v615
      %v664 = vmax.f32 %v568, %v616
      %v665 = vmax.f32 %v569, %v617
      %v666 = vmax.f32 %v570, %v618
      %v667 = vmax.f32 %v571, %v619
      %v668 = vmax.f32 %v572, %v620
      %v669 = vmax.f32 %v573, %v621
      %v670 = vmax.f32 %v574, %v622
      %v671 = vmax.f32 %v575, %v623
      %v672 = vmax.f32 %v576, %v624
      %v673 = vmax.f32 %v577, %v625
      %v674 = vmax.f32 %v578, %v626
      %v675 = vmax.f32 %v579, %v627
      %v676 = vmax.f32 %v580, %v628
      %v677 = vmax.f32 %v581, %v629
      %v678 = vmax.f32 %v582, %v630
      %v679 = vmax.f32 %v583, %v631
      %v680 = vmax.f32 %v584, %v632
      %v681 = vmax.f32 %v585, %v633
      %v682 = vmax.f32 %v586, %v634
      %v683 = vmax.f32 %v587, %v635
      %v684 = vmax.f32 %v588, %v636
      %v685 = vmax.f32 %v589, %v637
      %v686 = vmax.f32 %v590, %v638
      %v687 = vmax.f32 %v591, %v639
      %v688 = vmax.f32 %v592, %v640
      %v689 = vmax.f32 %v593, %v641
      %v690 = vmax.f32 %v594, %v642
      %v691 = vmax.f32 %v595, %v643
      %v692 = vmax.f32 %v596, %v644
      %v693 = vmax.f32 %v597, %v645
      %v694 = vmax.f32 %v598, %v646
      %v695 = vmax.f32 %v599, %v647
      %v696 = vmax.f32 %v600, %v648
      %v697 = vld [vmem:[#allocation2] sm:$0xff]
      %v698 = vld [vmem:[#allocation2 + $0x8] sm:$0xff]
      %v699 = vld [vmem:[#allocation2 + $0x10] sm:$0xff]
      %v700 = vld [vmem:[#allocation2 + $0x18] sm:$0xff]
      %v701 = vld [vmem:[#allocation2 + $0x20] sm:$0xff]
      %v702 = vld [vmem:[#allocation2 + $0x28] sm:$0xff]
      %v703 = vld [vmem:[#allocation2 + $0x30] sm:$0xff]
      %v704 = vld [vmem:[#allocation2 + $0x38] sm:$0xff]
      %v705 = vld [vmem:[#allocation2 + $0x40] sm:$0xff]
      %v706 = vld [vmem:[#allocation2 + $0x48] sm:$0xff]
      %v707 = vld [vmem:[#allocation2 + $0x50] sm:$0xff]
      %v708 = vld [vmem:[#allocation2 + $0x58] sm:$0xff]
      %v709 = vld [vmem:[#allocation2 + $0x60] sm:$0xff]
      %v710 = vld [vmem:[#allocation2 + $0x68] sm:$0xff]
      %v711 = vld [vmem:[#allocation2 + $0x70] sm:$0xff]
      %v712 = vld [vmem:[#allocation2 + $0x78] sm:$0xff]
      %v713 = vmax.f32 %v649, %v650
      %v714 = vmax.f32 %v713, %v651
      %715 = vmax.xlane.f32.xlu0 %v714
      %v716 = vpop.xlane.xlu0 %715
      %v717 = vmax.f32 %v652, %v653
      %v718 = vmax.f32 %v717, %v654
      %719 = vmax.xlane.f32.xlu0 %v718
      %v720 = vpop.xlane.xlu0 %719
      %v721 = vmax.f32 %v655, %v656
      %v722 = vmax.f32 %v721, %v657
      %723 = vmax.xlane.f32.xlu0 %v722
      %v724 = vpop.xlane.xlu0 %723
      %v725 = vmax.f32 %v658, %v659
      %v726 = vmax.f32 %v725, %v660
      %727 = vmax.xlane.f32.xlu0 %v726
      %v728 = vpop.xlane.xlu0 %727
      %v729 = vmax.f32 %v661, %v662
      %v730 = vmax.f32 %v729, %v663
      %731 = vmax.xlane.f32.xlu0 %v730
      %v732 = vpop.xlane.xlu0 %731
      %v733 = vmax.f32 %v664, %v665
      %v734 = vmax.f32 %v733, %v666
      %735 = vmax.xlane.f32.xlu0 %v734
      %v736 = vpop.xlane.xlu0 %735
      %v737 = vmax.f32 %v667, %v668
      %v738 = vmax.f32 %v737, %v669
      %739 = vmax.xlane.f32.xlu0 %v738
      %v740 = vpop.xlane.xlu0 %739
      %v741 = vmax.f32 %v670, %v671
      %v742 = vmax.f32 %v741, %v672
      %743 = vmax.xlane.f32.xlu0 %v742
      %v744 = vpop.xlane.xlu0 %743
      %v745 = vmax.f32 %v673, %v674
      %v746 = vmax.f32 %v745, %v675
      %747 = vmax.xlane.f32.xlu0 %v746
      %v748 = vpop.xlane.xlu0 %747
      %v749 = vmax.f32 %v676, %v677
      %v750 = vmax.f32 %v749, %v678
      %751 = vmax.xlane.f32.xlu0 %v750
      %v752 = vpop.xlane.xlu0 %751
      %v753 = vmax.f32 %v679, %v680
      %v754 = vmax.f32 %v753, %v681
      %755 = vmax.xlane.f32.xlu0 %v754
      %v756 = vpop.xlane.xlu0 %755
      %v757 = vmax.f32 %v682, %v683
      %v758 = vmax.f32 %v757, %v684
      %759 = vmax.xlane.f32.xlu0 %v758
      %v760 = vpop.xlane.xlu0 %759
      %v761 = vmax.f32 %v685, %v686
      %v762 = vmax.f32 %v761, %v687
      %763 = vmax.xlane.f32.xlu0 %v762
      %v764 = vpop.xlane.xlu0 %763
      %v765 = vmax.f32 %v688, %v689
      %v766 = vmax.f32 %v765, %v690
      %767 = vmax.xlane.f32.xlu0 %v766
      %v768 = vpop.xlane.xlu0 %767
      %v769 = vmax.f32 %v691, %v692
      %v770 = vmax.f32 %v769, %v693
      %771 = vmax.xlane.f32.xlu0 %v770
      %v772 = vpop.xlane.xlu0 %771
      %v773 = vmax.f32 %v694, %v695
      %v774 = vmax.f32 %v773, %v696
      %775 = vmax.xlane.f32.xlu0 %v774
      %v776 = vpop.xlane.xlu0 %775
      %v777 = vmax.f32 %v697, %v716
      %v778 = vmax.f32 %v698, %v720
      %v779 = vmax.f32 %v699, %v724
      %v780 = vmax.f32 %v700, %v728
      %v781 = vmax.f32 %v701, %v732
      %v782 = vmax.f32 %v702, %v736
      %v783 = vmax.f32 %v703, %v740
      %v784 = vmax.f32 %v704, %v744
      %v785 = vmax.f32 %v705, %v748
      %v786 = vmax.f32 %v706, %v752
      %v787 = vmax.f32 %v707, %v756
      %v788 = vmax.f32 %v708, %v760
      %v789 = vmax.f32 %v709, %v764
      %v790 = vmax.f32 %v710, %v768
      %v791 = vmax.f32 %v711, %v772
      %v792 = vmax.f32 %v712, %v776
      %794 = vset.pattern.permute.xlu0 0
      %795 = vperm.xlu0 %794, %v777
      %v796 = vpop.permute.xlu0 %795
      %799 = vset.pattern.permute.xlu0 0
      %800 = vperm.xlu0 %799, %v778
      %v801 = vpop.permute.xlu0 %800
      %804 = vset.pattern.permute.xlu0 0
      %805 = vperm.xlu0 %804, %v779
      %v806 = vpop.permute.xlu0 %805
      %809 = vset.pattern.permute.xlu0 0
      %810 = vperm.xlu0 %809, %v780
      %v811 = vpop.permute.xlu0 %810
      %814 = vset.pattern.permute.xlu0 0
      %815 = vperm.xlu0 %814, %v781
      %v816 = vpop.permute.xlu0 %815
      %819 = vset.pattern.permute.xlu0 0
      %820 = vperm.xlu0 %819, %v782
      %v821 = vpop.permute.xlu0 %820
      %824 = vset.pattern.permute.xlu0 0
      %825 = vperm.xlu0 %824, %v783
      %v826 = vpop.permute.xlu0 %825
      %829 = vset.pattern.permute.xlu0 0
      %830 = vperm.xlu0 %829, %v784
      %v831 = vpop.permute.xlu0 %830
      %834 = vset.pattern.permute.xlu0 0
      %835 = vperm.xlu0 %834, %v785
      %v836 = vpop.permute.xlu0 %835
      %839 = vset.pattern.permute.xlu0 0
      %840 = vperm.xlu0 %839, %v786
      %v841 = vpop.permute.xlu0 %840
      %844 = vset.pattern.permute.xlu0 0
      %845 = vperm.xlu0 %844, %v787
      %v846 = vpop.permute.xlu0 %845
      %849 = vset.pattern.permute.xlu0 0
      %850 = vperm.xlu0 %849, %v788
      %v851 = vpop.permute.xlu0 %850
      %854 = vset.pattern.permute.xlu0 0
      %855 = vperm.xlu0 %854, %v789
      %v856 = vpop.permute.xlu0 %855
      %859 = vset.pattern.permute.xlu0 0
      %860 = vperm.xlu0 %859, %v790
      %v861 = vpop.permute.xlu0 %860
      %864 = vset.pattern.permute.xlu0 0
      %865 = vperm.xlu0 %864, %v791
      %v866 = vpop.permute.xlu0 %865
      %869 = vset.pattern.permute.xlu0 0
      %870 = vperm.xlu0 %869, %v792
      %v871 = vpop.permute.xlu0 %870
      %v873 = vsub.f32 %v649, %v796
      %v874 = vsub.f32 %v650, %v796
      %v875 = vsub.f32 %v651, %v796
      %v876 = vsub.f32 %v652, %v801
      %v877 = vsub.f32 %v653, %v801
      %v878 = vsub.f32 %v654, %v801
      %v879 = vsub.f32 %v655, %v806
      %v880 = vsub.f32 %v656, %v806
      %v881 = vsub.f32 %v657, %v806
      %v882 = vsub.f32 %v658, %v811
      %v883 = vsub.f32 %v659, %v811
      %v884 = vsub.f32 %v660, %v811
      %v885 = vsub.f32 %v661, %v816
      %v886 = vsub.f32 %v662, %v816
      %v887 = vsub.f32 %v663, %v816
      %v888 = vsub.f32 %v664, %v821
      %v889 = vsub.f32 %v665, %v821
      %v890 = vsub.f32 %v666, %v821
      %v891 = vsub.f32 %v667, %v826
      %v892 = vsub.f32 %v668, %v826
      %v893 = vsub.f32 %v669, %v826
      %v894 = vsub.f32 %v670, %v831
      %v895 = vsub.f32 %v671, %v831
      %v896 = vsub.f32 %v672, %v831
      %v897 = vsub.f32 %v673, %v836
      %v898 = vsub.f32 %v674, %v836
      %v899 = vsub.f32 %v675, %v836
      %v900 = vsub.f32 %v676, %v841
      %v901 = vsub.f32 %v677, %v841
      %v902 = vsub.f32 %v678, %v841
      %v903 = vsub.f32 %v679, %v846
      %v904 = vsub.f32 %v680, %v846
      %v905 = vsub.f32 %v681, %v846
      %v906 = vsub.f32 %v682, %v851
      %v907 = vsub.f32 %v683, %v851
      %v908 = vsub.f32 %v684, %v851
      %v909 = vsub.f32 %v685, %v856
      %v910 = vsub.f32 %v686, %v856
      %v911 = vsub.f32 %v687, %v856
      %v912 = vsub.f32 %v688, %v861
      %v913 = vsub.f32 %v689, %v861
      %v914 = vsub.f32 %v690, %v861
      %v915 = vsub.f32 %v691, %v866
      %v916 = vsub.f32 %v692, %v866
      %v917 = vsub.f32 %v693, %v866
      %v918 = vsub.f32 %v694, %v871
      %v919 = vsub.f32 %v695, %v871
      %v920 = vsub.f32 %v696, %v871
      %v921 = vmul.f32 %v873, 1.442695
      %v922 = vpow.pop %v921
      %v923 = vmul.f32 %v874, 1.442695
      %v924 = vpow.pop %v923
      %v925 = vmul.f32 %v875, 1.442695
      %v926 = vpow.pop %v925
      %v927 = vmul.f32 %v876, 1.442695
      %v928 = vpow.pop %v927
      %v929 = vmul.f32 %v877, 1.442695
      %v930 = vpow.pop %v929
      %v931 = vmul.f32 %v878, 1.442695
      %v932 = vpow.pop %v931
      %v933 = vmul.f32 %v879, 1.442695
      %v934 = vpow.pop %v933
      %v935 = vmul.f32 %v880, 1.442695
      %v936 = vpow.pop %v935
      %v937 = vmul.f32 %v881, 1.442695
      %v938 = vpow.pop %v937
      %v939 = vmul.f32 %v882, 1.442695
      %v940 = vpow.pop %v939
      %v941 = vmul.f32 %v883, 1.442695
      %v942 = vpow.pop %v941
      %v943 = vmul.f32 %v884, 1.442695
      %v944 = vpow.pop %v943
      %v945 = vmul.f32 %v885, 1.442695
      %v946 = vpow.pop %v945
      %v947 = vmul.f32 %v886, 1.442695
      %v948 = vpow.pop %v947
      %v949 = vmul.f32 %v887, 1.442695
      %v950 = vpow.pop %v949
      %v951 = vmul.f32 %v888, 1.442695
      %v952 = vpow.pop %v951
      %v953 = vmul.f32 %v889, 1.442695
      %v954 = vpow.pop %v953
      %v955 = vmul.f32 %v890, 1.442695
      %v956 = vpow.pop %v955
      %v957 = vmul.f32 %v891, 1.442695
      %v958 = vpow.pop %v957
      %v959 = vmul.f32 %v892, 1.442695
      %v960 = vpow.pop %v959
      %v961 = vmul.f32 %v893, 1.442695
      %v962 = vpow.pop %v961
      %v963 = vmul.f32 %v894, 1.442695
      %v964 = vpow.pop %v963
      %v965 = vmul.f32 %v895, 1.442695
      %v966 = vpow.pop %v965
      %v967 = vmul.f32 %v896, 1.442695
      %v968 = vpow.pop %v967
      %v969 = vmul.f32 %v897, 1.442695
      %v970 = vpow.pop %v969
      %v971 = vmul.f32 %v898, 1.442695
      %v972 = vpow.pop %v971
      %v973 = vmul.f32 %v899, 1.442695
      %v974 = vpow.pop %v973
      %v975 = vmul.f32 %v900, 1.442695
      %v976 = vpow.pop %v975
      %v977 = vmul.f32 %v901, 1.442695
      %v978 = vpow.pop %v977
      %v979 = vmul.f32 %v902, 1.442695
      %v980 = vpow.pop %v979
      %v981 = vmul.f32 %v903, 1.442695
      %v982 = vpow.pop %v981
      %v983 = vmul.f32 %v904, 1.442695
      %v984 = vpow.pop %v983
      %v985 = vmul.f32 %v905, 1.442695
      %v986 = vpow.pop %v985
      %v987 = vmul.f32 %v906, 1.442695
      %v988 = vpow.pop %v987
      %v989 = vmul.f32 %v907, 1.442695
      %v990 = vpow.pop %v989
      %v991 = vmul.f32 %v908, 1.442695
      %v992 = vpow.pop %v991
      %v993 = vmul.f32 %v909, 1.442695
      %v994 = vpow.pop %v993
      %v995 = vmul.f32 %v910, 1.442695
      %v996 = vpow.pop %v995
      %v997 = vmul.f32 %v911, 1.442695
      %v998 = vpow.pop %v997
      %v999 = vmul.f32 %v912, 1.442695
      %v1000 = vpow.pop %v999
      %v1001 = vmul.f32 %v913, 1.442695
      %v1002 = vpow.pop %v1001
      %v1003 = vmul.f32 %v914, 1.442695
      %v1004 = vpow.pop %v1003
      %v1005 = vmul.f32 %v915, 1.442695
      %v1006 = vpow.pop %v1005
      %v1007 = vmul.f32 %v916, 1.442695
      %v1008 = vpow.pop %v1007
      %v1009 = vmul.f32 %v917, 1.442695
      %v1010 = vpow.pop %v1009
      %v1011 = vmul.f32 %v918, 1.442695
      %v1012 = vpow.pop %v1011
      %v1013 = vmul.f32 %v919, 1.442695
      %v1014 = vpow.pop %v1013
      %v1015 = vmul.f32 %v920, 1.442695
      %v1016 = vpow.pop %v1015
      %v1017 = vpack.c.bf16 %v928, %v922
      %v1018 = vpack.c.bf16 %v930, %v924
      %v1019 = vpack.c.bf16 %v932, %v926
      %v1020 = vpack.c.bf16 %v940, %v934
      %v1021 = vpack.c.bf16 %v942, %v936
      %v1022 = vpack.c.bf16 %v944, %v938
      %v1023 = vpack.c.bf16 %v952, %v946
      %v1024 = vpack.c.bf16 %v954, %v948
      %v1025 = vpack.c.bf16 %v956, %v950
      %v1026 = vpack.c.bf16 %v964, %v958
      %v1027 = vpack.c.bf16 %v966, %v960
      %v1028 = vpack.c.bf16 %v968, %v962
      %v1029 = vpack.c.bf16 %v976, %v970
      %v1030 = vpack.c.bf16 %v978, %v972
      %v1031 = vpack.c.bf16 %v980, %v974
      %v1032 = vpack.c.bf16 %v988, %v982
      %v1033 = vpack.c.bf16 %v990, %v984
      %v1034 = vpack.c.bf16 %v992, %v986
      %v1035 = vpack.c.bf16 %v1000, %v994
      %v1036 = vpack.c.bf16 %v1002, %v996
      %v1037 = vpack.c.bf16 %v1004, %v998
      %v1038 = vpack.c.bf16 %v1012, %v1006
      %v1039 = vpack.c.bf16 %v1014, %v1008
      %v1040 = vpack.c.bf16 %v1016, %v1010
      %v1073 = vunpack.c.l.b16 %v396
      %v1074 = vunpack.c.h.b16 %v396
      %v1075 = vunpack.c.l.b16 %v397
      %v1076 = vunpack.c.l.b16 %v398
      %v1077 = vunpack.c.h.b16 %v398
      %v1078 = vunpack.c.l.b16 %v399
      %v1079 = vunpack.c.l.b16 %v400
      %v1080 = vunpack.c.h.b16 %v400
      %v1081 = vunpack.c.l.b16 %v401
      %v1082 = vunpack.c.l.b16 %v402
      %v1083 = vunpack.c.h.b16 %v402
      %v1084 = vunpack.c.l.b16 %v403
      %v1085 = vunpack.c.l.b16 %v404
      %v1086 = vunpack.c.h.b16 %v404
      %v1087 = vunpack.c.l.b16 %v405
      %v1088 = vunpack.c.l.b16 %v406
      %v1089 = vunpack.c.h.b16 %v406
      %v1090 = vunpack.c.l.b16 %v407
      %v1091 = vunpack.c.l.b16 %v408
      %v1092 = vunpack.c.h.b16 %v408
      %v1093 = vunpack.c.l.b16 %v409
      %v1094 = vunpack.c.l.b16 %v410
      %v1095 = vunpack.c.h.b16 %v410
      %v1096 = vunpack.c.l.b16 %v411
      %v1097 = vunpack.c.l.b16 %v412
      %v1098 = vunpack.c.h.b16 %v412
      %v1099 = vunpack.c.l.b16 %v413
      %v1100 = vunpack.c.l.b16 %v414
      %v1101 = vunpack.c.h.b16 %v414
      %v1102 = vunpack.c.l.b16 %v415
      %v1103 = vunpack.c.l.b16 %v416
      %v1104 = vunpack.c.h.b16 %v416
      %v1105 = vunpack.c.l.b16 %v417
      %v1106 = vunpack.c.l.b16 %v418
      %v1107 = vunpack.c.h.b16 %v418
      %v1108 = vunpack.c.l.b16 %v419
      %v1109 = vunpack.c.l.b16 %v420
      %v1110 = vunpack.c.h.b16 %v420
      %v1111 = vunpack.c.l.b16 %v421
      %v1112 = vunpack.c.l.b16 %v422
      %v1113 = vunpack.c.h.b16 %v422
      %v1114 = vunpack.c.l.b16 %v423
      %v1115 = vunpack.c.l.b16 %v424
      %v1116 = vunpack.c.h.b16 %v424
      %v1117 = vunpack.c.l.b16 %v425
      %v1118 = vunpack.c.l.b16 %v426
      %v1119 = vunpack.c.h.b16 %v426
      %v1120 = vunpack.c.l.b16 %v427
      %v1121 = vpack.c.b16 %v1076, %v1073
      %v1122 = vpack.c.b16 %v1077, %v1074
      %v1123 = vpack.c.b16 %v1078, %v1075
      %v1124 = vpack.c.b16 %v1082, %v1079
      %v1125 = vpack.c.b16 %v1083, %v1080
      %v1126 = vpack.c.b16 %v1084, %v1081
      %v1127 = vpack.c.b16 %v1088, %v1085
      %v1128 = vpack.c.b16 %v1089, %v1086
      %v1129 = vpack.c.b16 %v1090, %v1087
      %v1130 = vpack.c.b16 %v1094, %v1091
      %v1131 = vpack.c.b16 %v1095, %v1092
      %v1132 = vpack.c.b16 %v1096, %v1093
      %v1133 = vpack.c.b16 %v1100, %v1097
      %v1134 = vpack.c.b16 %v1101, %v1098
      %v1135 = vpack.c.b16 %v1102, %v1099
      %v1136 = vpack.c.b16 %v1106, %v1103
      %v1137 = vpack.c.b16 %v1107, %v1104
      %v1138 = vpack.c.b16 %v1108, %v1105
      %v1139 = vpack.c.b16 %v1112, %v1109
      %v1140 = vpack.c.b16 %v1113, %v1110
      %v1141 = vpack.c.b16 %v1114, %v1111
      %v1142 = vpack.c.b16 %v1118, %v1115
      %v1143 = vpack.c.b16 %v1119, %v1116
      %v1144 = vpack.c.b16 %v1120, %v1117
      %v1169 = vmul.bf16 %v1017, %v1121
      %v1170 = vmul.bf16 %v1018, %v1122
      %v1171 = vmul.bf16 %v1019, %v1123
      %v1172 = vmul.bf16 %v1020, %v1124
      %v1173 = vmul.bf16 %v1021, %v1125
      %v1174 = vmul.bf16 %v1022, %v1126
      %v1175 = vmul.bf16 %v1023, %v1127
      %v1176 = vmul.bf16 %v1024, %v1128
      %v1177 = vmul.bf16 %v1025, %v1129
      %v1178 = vmul.bf16 %v1026, %v1130
      %v1179 = vmul.bf16 %v1027, %v1131
      %v1180 = vmul.bf16 %v1028, %v1132
      %v1181 = vmul.bf16 %v1029, %v1133
      %v1182 = vmul.bf16 %v1030, %v1134
      %v1183 = vmul.bf16 %v1031, %v1135
      %v1184 = vmul.bf16 %v1032, %v1136
      %v1185 = vmul.bf16 %v1033, %v1137
      %v1186 = vmul.bf16 %v1034, %v1138
      %v1187 = vmul.bf16 %v1035, %v1139
      %v1188 = vmul.bf16 %v1036, %v1140
      %v1189 = vmul.bf16 %v1037, %v1141
      %v1190 = vmul.bf16 %v1038, %v1142
      %v1191 = vmul.bf16 %v1039, %v1143
      %v1192 = vmul.bf16 %v1040, %v1144
      %v1193 = vld [vmem:[%s293] sm:$0xf]
      %v1194 = vld [vmem:[%s293 + $0x4] sm:$0xf]
      %v1195 = vld [vmem:[%s293 + $0x8] sm:$0xf]
      %v1196 = vld [vmem:[%s293 + $0xc] sm:$0xf]
      %v1197 = vld [vmem:[%s293 + $0x10] sm:$0xf]
      %v1198 = vld [vmem:[%s293 + $0x14] sm:$0xf]
      %v1199 = vld [vmem:[%s293 + $0x18] sm:$0xf]
      %v1200 = vld [vmem:[%s293 + $0x1c] sm:$0xf]
      %v1201 = vld [vmem:[%s293 + $0x20] sm:$0xf]
      %v1202 = vld [vmem:[%s293 + $0x24] sm:$0xf]
      %v1203 = vld [vmem:[%s293 + $0x28] sm:$0xf]
      %v1204 = vld [vmem:[%s293 + $0x2c] sm:$0xf]
      %v1205 = vld [vmem:[%s293 + $0x30] sm:$0xf]
      %v1206 = vld [vmem:[%s293 + $0x34] sm:$0xf]
      %v1207 = vld [vmem:[%s293 + $0x38] sm:$0xf]
      %v1208 = vld [vmem:[%s293 + $0x3c] sm:$0xf]
      %v1209 = vld [vmem:[%s293 + $0x40] sm:$0xf]
      %v1210 = vld [vmem:[%s293 + $0x44] sm:$0xf]
      %v1211 = vld [vmem:[%s293 + $0x48] sm:$0xf]
      %v1212 = vld [vmem:[%s293 + $0x4c] sm:$0xf]
      %v1213 = vld [vmem:[%s293 + $0x50] sm:$0xf]
      %v1214 = vld [vmem:[%s293 + $0x54] sm:$0xf]
      %v1215 = vld [vmem:[%s293 + $0x58] sm:$0xf]
      %v1216 = vld [vmem:[%s293 + $0x5c] sm:$0xf]
      %v1217 = vld [vmem:[%s293 + $0x60] sm:$0xf]
      %v1218 = vld [vmem:[%s293 + $0x64] sm:$0xf]
      %v1219 = vld [vmem:[%s293 + $0x68] sm:$0xf]
      %v1220 = vld [vmem:[%s293 + $0x6c] sm:$0xf]
      %v1221 = vld [vmem:[%s293 + $0x70] sm:$0xf]
      %v1222 = vld [vmem:[%s293 + $0x74] sm:$0xf]
      %v1223 = vld [vmem:[%s293 + $0x78] sm:$0xf]
      %v1224 = vld [vmem:[%s293 + $0x7c] sm:$0xf]
      %v1225 = vld [vmem:[%s293 + $0x80] sm:$0xf]
      %v1226 = vld [vmem:[%s293 + $0x84] sm:$0xf]
      %v1227 = vld [vmem:[%s293 + $0x88] sm:$0xf]
      %v1228 = vld [vmem:[%s293 + $0x8c] sm:$0xf]
      %v1229 = vld [vmem:[%s293 + $0x90] sm:$0xf]
      %v1230 = vld [vmem:[%s293 + $0x94] sm:$0xf]
      %v1231 = vld [vmem:[%s293 + $0x98] sm:$0xf]
      %v1232 = vld [vmem:[%s293 + $0x9c] sm:$0xf]
      %v1233 = vld [vmem:[%s293 + $0xa0] sm:$0xf]
      %v1234 = vld [vmem:[%s293 + $0xa4] sm:$0xf]
      %v1235 = vld [vmem:[%s293 + $0xa8] sm:$0xf]
      %v1236 = vld [vmem:[%s293 + $0xac] sm:$0xf]
      %v1237 = vld [vmem:[%s293 + $0xb0] sm:$0xf]
      %v1238 = vld [vmem:[%s293 + $0xb4] sm:$0xf]
      %v1239 = vld [vmem:[%s293 + $0xb8] sm:$0xf]
      %v1240 = vld [vmem:[%s293 + $0xbc] sm:$0xf]
      %v1289 = vunpack.c.l.b16 %v1193
      %v1290 = vunpack.c.l.b16 %v1194
      %v1291 = vunpack.c.l.b16 %v1195
      %v1292 = vunpack.c.l.b16 %v1196
      %v1293 = vunpack.c.l.b16 %v1197
      %v1294 = vunpack.c.l.b16 %v1198
      %v1295 = vunpack.c.l.b16 %v1199
      %v1296 = vunpack.c.l.b16 %v1200
      %v1297 = vunpack.c.l.b16 %v1201
      %v1298 = vunpack.c.l.b16 %v1202
      %v1299 = vunpack.c.l.b16 %v1203
      %v1300 = vunpack.c.l.b16 %v1204
      %v1301 = vunpack.c.l.b16 %v1205
      %v1302 = vunpack.c.l.b16 %v1206
      %v1303 = vunpack.c.l.b16 %v1207
      %v1304 = vunpack.c.l.b16 %v1208
      %v1305 = vunpack.c.l.b16 %v1209
      %v1306 = vunpack.c.l.b16 %v1210
      %v1307 = vunpack.c.l.b16 %v1211
      %v1308 = vunpack.c.l.b16 %v1212
      %v1309 = vunpack.c.l.b16 %v1213
      %v1310 = vunpack.c.l.b16 %v1214
      %v1311 = vunpack.c.l.b16 %v1215
      %v1312 = vunpack.c.l.b16 %v1216
      %v1313 = vunpack.c.l.b16 %v1217
      %v1314 = vunpack.c.l.b16 %v1218
      %v1315 = vunpack.c.l.b16 %v1219
      %v1316 = vunpack.c.l.b16 %v1220
      %v1317 = vunpack.c.l.b16 %v1221
      %v1318 = vunpack.c.l.b16 %v1222
      %v1319 = vunpack.c.l.b16 %v1223
      %v1320 = vunpack.c.l.b16 %v1224
      %v1321 = vunpack.c.l.b16 %v1225
      %v1322 = vunpack.c.l.b16 %v1226
      %v1323 = vunpack.c.l.b16 %v1227
      %v1324 = vunpack.c.l.b16 %v1228
      %v1325 = vunpack.c.l.b16 %v1229
      %v1326 = vunpack.c.l.b16 %v1230
      %v1327 = vunpack.c.l.b16 %v1231
      %v1328 = vunpack.c.l.b16 %v1232
      %v1329 = vunpack.c.l.b16 %v1233
      %v1330 = vunpack.c.l.b16 %v1234
      %v1331 = vunpack.c.l.b16 %v1235
      %v1332 = vunpack.c.l.b16 %v1236
      %v1333 = vunpack.c.l.b16 %v1237
      %v1334 = vunpack.c.l.b16 %v1238
      %v1335 = vunpack.c.l.b16 %v1239
      %v1336 = vunpack.c.l.b16 %v1240
      %v1337 = vpack.c.b16 %v1290, %v1289
      %v1338 = vpack.c.b16 %v1292, %v1291
      %v1339 = vpack.c.b16 %v1294, %v1293
      %v1340 = vpack.c.b16 %v1296, %v1295
      %v1341 = vpack.c.b16 %v1298, %v1297
      %v1342 = vpack.c.b16 %v1300, %v1299
      %v1343 = vpack.c.b16 %v1302, %v1301
      %v1344 = vpack.c.b16 %v1304, %v1303
      %v1345 = vpack.c.b16 %v1306, %v1305
      %v1346 = vpack.c.b16 %v1308, %v1307
      %v1347 = vpack.c.b16 %v1310, %v1309
      %v1348 = vpack.c.b16 %v1312, %v1311
      %v1349 = vpack.c.b16 %v1314, %v1313
      %v1350 = vpack.c.b16 %v1316, %v1315
      %v1351 = vpack.c.b16 %v1318, %v1317
      %v1352 = vpack.c.b16 %v1320, %v1319
      %v1353 = vpack.c.b16 %v1322, %v1321
      %v1354 = vpack.c.b16 %v1324, %v1323
      %v1355 = vpack.c.b16 %v1326, %v1325
      %v1356 = vpack.c.b16 %v1328, %v1327
      %v1357 = vpack.c.b16 %v1330, %v1329
      %v1358 = vpack.c.b16 %v1332, %v1331
      %v1359 = vpack.c.b16 %v1334, %v1333
      %v1360 = vpack.c.b16 %v1336, %v1335
      %1385 = vmatprep.subr.bf16.mxu0 0
      %1386 = vmatpush1.bf16.msra.mxu0 %v1344
      %1387 = vmatprep.subr.bf16.mxu0 0
      %1388 = vmatpush1.bf16.msra.mxu0 %v1343
      %1389 = vmatprep.subr.bf16.mxu0 0
      %1390 = vmatpush1.bf16.msra.mxu0 %v1342
      %1391 = vmatprep.subr.bf16.mxu0 0
      %1392 = vmatpush1.bf16.msra.mxu0 %v1341
      %1393 = vmatprep.subr.bf16.mxu0 0
      %1394 = vmatpush1.bf16.msra.mxu0 %v1340
      %1395 = vmatprep.subr.bf16.mxu0 0
      %1396 = vmatpush1.bf16.msra.mxu0 %v1339
      %1397 = vmatprep.subr.bf16.mxu0 0
      %1398 = vmatpush1.bf16.msra.mxu0 %v1338
      %1399 = vmatprep.subr.bf16.mxu0 0
      %1400 = vmatpush1.bf16.msra.mxu0 %v1337
      %1401 = vmatprep.subr.bf16.mxu0 0
      %1402 = vmatpush2.bf16.msra.mxu0 %v1352
      %1403 = vmatprep.subr.bf16.mxu0 0
      %1404 = vmatpush2.bf16.msra.mxu0 %v1351
      %1405 = vmatprep.subr.bf16.mxu0 0
      %1406 = vmatpush2.bf16.msra.mxu0 %v1350
      %1407 = vmatprep.subr.bf16.mxu0 0
      %1408 = vmatpush2.bf16.msra.mxu0 %v1349
      %1409 = vmatprep.subr.bf16.mxu0 0
      %1410 = vmatpush2.bf16.msra.mxu0 %v1348
      %1411 = vmatprep.subr.bf16.mxu0 0
      %1412 = vmatpush2.bf16.msra.mxu0 %v1347
      %1413 = vmatprep.subr.bf16.mxu0 0
      %1414 = vmatpush2.bf16.msra.mxu0 %v1346
      %1415 = vmatprep.subr.bf16.mxu0 0
      %1416 = vmatpush2.bf16.msra.mxu0 %v1345
      %1417 = vmatprep.mubr.bf16.mxu0 %v1170
      %1418 = vmatmul.mubr.bf16.gmra.mxu0 %v1169
      %v1419 = vpop.f32.mrf.mxu0
      %v1420 = vadd.f32 0.0, %v1419
      %v1421 = vpop.f32.mrf.mxu0
      %v1422 = vpop.f32.mrf.mxu0
      %v1423 = vadd.f32 0.0, %v1422
      %v1424 = vpop.f32.mrf.mxu0
      %1425 = vmatprep.mubr.bf16.mxu0 %v1173
      %1426 = vmatmul.mubr.bf16.gmra.mxu0 %v1172
      %v1427 = vpop.f32.mrf.mxu0
      %v1428 = vadd.f32 0.0, %v1427
      %v1429 = vpop.f32.mrf.mxu0
      %v1430 = vpop.f32.mrf.mxu0
      %v1431 = vadd.f32 0.0, %v1430
      %v1432 = vpop.f32.mrf.mxu0
      %1433 = vmatprep.mubr.bf16.mxu0 %v1176
      %1434 = vmatmul.mubr.bf16.gmra.mxu0 %v1175
      %v1435 = vpop.f32.mrf.mxu0
      %v1436 = vadd.f32 0.0, %v1435
      %v1437 = vpop.f32.mrf.mxu0
      %v1438 = vpop.f32.mrf.mxu0
      %v1439 = vadd.f32 0.0, %v1438
      %v1440 = vpop.f32.mrf.mxu0
      %1441 = vmatprep.mubr.bf16.mxu0 %v1179
      %1442 = vmatmul.mubr.bf16.gmra.mxu0 %v1178
      %v1443 = vpop.f32.mrf.mxu0
      %v1444 = vadd.f32 0.0, %v1443
      %v1445 = vpop.f32.mrf.mxu0
      %v1446 = vpop.f32.mrf.mxu0
      %v1447 = vadd.f32 0.0, %v1446
      %v1448 = vpop.f32.mrf.mxu0
      %1449 = vmatprep.mubr.bf16.mxu0 %v1182
      %1450 = vmatmul.mubr.bf16.gmra.mxu0 %v1181
      %v1451 = vpop.f32.mrf.mxu0
      %v1452 = vadd.f32 0.0, %v1451
      %v1453 = vpop.f32.mrf.mxu0
      %v1454 = vpop.f32.mrf.mxu0
      %v1455 = vadd.f32 0.0, %v1454
      %v1456 = vpop.f32.mrf.mxu0
      %1457 = vmatprep.mubr.bf16.mxu0 %v1185
      %1458 = vmatmul.mubr.bf16.gmra.mxu0 %v1184
      %v1459 = vpop.f32.mrf.mxu0
      %v1460 = vadd.f32 0.0, %v1459
      %v1461 = vpop.f32.mrf.mxu0
      %v1462 = vpop.f32.mrf.mxu0
      %v1463 = vadd.f32 0.0, %v1462
      %v1464 = vpop.f32.mrf.mxu0
      %1465 = vmatprep.mubr.bf16.mxu0 %v1188
      %1466 = vmatmul.mubr.bf16.gmra.mxu0 %v1187
      %v1467 = vpop.f32.mrf.mxu0
      %v1468 = vadd.f32 0.0, %v1467
      %v1469 = vpop.f32.mrf.mxu0
      %v1470 = vpop.f32.mrf.mxu0
      %v1471 = vadd.f32 0.0, %v1470
      %v1472 = vpop.f32.mrf.mxu0
      %1473 = vmatprep.mubr.bf16.mxu0 %v1191
      %1474 = vmatmul.mubr.bf16.gmra.mxu0 %v1190
      %v1475 = vpop.f32.mrf.mxu0
      %v1476 = vadd.f32 0.0, %v1475
      %v1477 = vpop.f32.mrf.mxu0
      %v1478 = vpop.f32.mrf.mxu0
      %v1479 = vadd.f32 0.0, %v1478
      %v1480 = vpop.f32.mrf.mxu0
      %1481 = vdwg.mxu0
      %1482 = vmatprep.subr.bf16.mxu0 0
      %1483 = vmatpush1.bf16.msra.mxu0 %v1360
      %1484 = vmatprep.subr.bf16.mxu0 0
      %1485 = vmatpush1.bf16.msra.mxu0 %v1359
      %1486 = vmatprep.subr.bf16.mxu0 0
      %1487 = vmatpush1.bf16.msra.mxu0 %v1358
      %1488 = vmatprep.subr.bf16.mxu0 0
      %1489 = vmatpush1.bf16.msra.mxu0 %v1357
      %1490 = vmatprep.subr.bf16.mxu0 0
      %1491 = vmatpush1.bf16.msra.mxu0 %v1356
      %1492 = vmatprep.subr.bf16.mxu0 0
      %1493 = vmatpush1.bf16.msra.mxu0 %v1355
      %1494 = vmatprep.subr.bf16.mxu0 0
      %1495 = vmatpush1.bf16.msra.mxu0 %v1354
      %1496 = vmatprep.subr.bf16.mxu0 0
      %1497 = vmatpush1.bf16.msra.mxu0 %v1353
      %1498 = vmatprep.subr.bf16.mxu0 0
      %1499 = vmatpush2.bf16.msra.mxu0 0
      %1500 = vmatprep.subr.bf16.mxu0 0
      %1501 = vmatpush2.bf16.msra.mxu0 0
      %1502 = vmatprep.subr.bf16.mxu0 0
      %1503 = vmatpush2.bf16.msra.mxu0 0
      %1504 = vmatprep.subr.bf16.mxu0 0
      %1505 = vmatpush2.bf16.msra.mxu0 0
      %1506 = vmatprep.subr.bf16.mxu0 0
      %1507 = vmatpush2.bf16.msra.mxu0 0
      %1508 = vmatprep.subr.bf16.mxu0 0
      %1509 = vmatpush2.bf16.msra.mxu0 0
      %1510 = vmatprep.subr.bf16.mxu0 0
      %1511 = vmatpush2.bf16.msra.mxu0 0
      %1512 = vmatprep.subr.bf16.mxu0 0
      %1513 = vmatpush2.bf16.msra.mxu0 0
      %1514 = vmatprep.mubr.bf16.mxu0 0
      %1515 = vmatmul.mubr.bf16.gmra.mxu0 %v1171
      %v1516 = vpop.f32.mrf.mxu0
      %v1517 = vadd.f32 %v1420, %v1516
      %v1518 = vpop.f32.mrf.mxu0
      %v1519 = vpop.f32.mrf.mxu0
      %v1520 = vadd.f32 %v1423, %v1519
      %v1521 = vpop.f32.mrf.mxu0
      %1522 = vmatprep.mubr.bf16.mxu0 0
      %1523 = vmatmul.mubr.bf16.gmra.mxu0 %v1174
      %v1524 = vpop.f32.mrf.mxu0
      %v1525 = vadd.f32 %v1428, %v1524
      %v1526 = vpop.f32.mrf.mxu0
      %v1527 = vpop.f32.mrf.mxu0
      %v1528 = vadd.f32 %v1431, %v1527
      %v1529 = vpop.f32.mrf.mxu0
      %1530 = vmatprep.mubr.bf16.mxu0 0
      %1531 = vmatmul.mubr.bf16.gmra.mxu0 %v1177
      %v1532 = vpop.f32.mrf.mxu0
      %v1533 = vadd.f32 %v1436, %v1532
      %v1534 = vpop.f32.mrf.mxu0
      %v1535 = vpop.f32.mrf.mxu0
      %v1536 = vadd.f32 %v1439, %v1535
      %v1537 = vpop.f32.mrf.mxu0
      %1538 = vmatprep.mubr.bf16.mxu0 0
      %1539 = vmatmul.mubr.bf16.gmra.mxu0 %v1180
      %v1540 = vpop.f32.mrf.mxu0
      %v1541 = vadd.f32 %v1444, %v1540
      %v1542 = vpop.f32.mrf.mxu0
      %v1543 = vpop.f32.mrf.mxu0
      %v1544 = vadd.f32 %v1447, %v1543
      %v1545 = vpop.f32.mrf.mxu0
      %1546 = vmatprep.mubr.bf16.mxu0 0
      %1547 = vmatmul.mubr.bf16.gmra.mxu0 %v1183
      %v1548 = vpop.f32.mrf.mxu0
      %v1549 = vadd.f32 %v1452, %v1548
      %v1550 = vpop.f32.mrf.mxu0
      %v1551 = vpop.f32.mrf.mxu0
      %v1552 = vadd.f32 %v1455, %v1551
      %v1553 = vpop.f32.mrf.mxu0
      %1554 = vmatprep.mubr.bf16.mxu0 0
      %1555 = vmatmul.mubr.bf16.gmra.mxu0 %v1186
      %v1556 = vpop.f32.mrf.mxu0
      %v1557 = vadd.f32 %v1460, %v1556
      %v1558 = vpop.f32.mrf.mxu0
      %v1559 = vpop.f32.mrf.mxu0
      %v1560 = vadd.f32 %v1463, %v1559
      %v1561 = vpop.f32.mrf.mxu0
      %1562 = vmatprep.mubr.bf16.mxu0 0
      %1563 = vmatmul.mubr.bf16.gmra.mxu0 %v1189
      %v1564 = vpop.f32.mrf.mxu0
      %v1565 = vadd.f32 %v1468, %v1564
      %v1566 = vpop.f32.mrf.mxu0
      %v1567 = vpop.f32.mrf.mxu0
      %v1568 = vadd.f32 %v1471, %v1567
      %v1569 = vpop.f32.mrf.mxu0
      %1570 = vmatprep.mubr.bf16.mxu0 0
      %1571 = vmatmul.mubr.bf16.gmra.mxu0 %v1192
      %v1572 = vpop.f32.mrf.mxu0
      %v1573 = vadd.f32 %v1476, %v1572
      %v1574 = vpop.f32.mrf.mxu0
      %v1575 = vpop.f32.mrf.mxu0
      %v1576 = vadd.f32 %v1479, %v1575
      %v1577 = vpop.f32.mrf.mxu0
      %1578 = vdwg.mxu0
      %v1579 = vsub.f32 %v697, %v777
      %v1580 = vsub.f32 %v698, %v778
      %v1581 = vsub.f32 %v699, %v779
      %v1582 = vsub.f32 %v700, %v780
      %v1583 = vsub.f32 %v701, %v781
      %v1584 = vsub.f32 %v702, %v782
      %v1585 = vsub.f32 %v703, %v783
      %v1586 = vsub.f32 %v704, %v784
      %v1587 = vsub.f32 %v705, %v785
      %v1588 = vsub.f32 %v706, %v786
      %v1589 = vsub.f32 %v707, %v787
      %v1590 = vsub.f32 %v708, %v788
      %v1591 = vsub.f32 %v709, %v789
      %v1592 = vsub.f32 %v710, %v790
      %v1593 = vsub.f32 %v711, %v791
      %v1594 = vsub.f32 %v712, %v792
      %v1595 = vmul.f32 %v1579, 1.442695
      %v1596 = vpow.pop %v1595
      %v1597 = vmul.f32 %v1580, 1.442695
      %v1598 = vpow.pop %v1597
      %v1599 = vmul.f32 %v1581, 1.442695
      %v1600 = vpow.pop %v1599
      %v1601 = vmul.f32 %v1582, 1.442695
      %v1602 = vpow.pop %v1601
      %v1603 = vmul.f32 %v1583, 1.442695
      %v1604 = vpow.pop %v1603
      %v1605 = vmul.f32 %v1584, 1.442695
      %v1606 = vpow.pop %v1605
      %v1607 = vmul.f32 %v1585, 1.442695
      %v1608 = vpow.pop %v1607
      %v1609 = vmul.f32 %v1586, 1.442695
      %v1610 = vpow.pop %v1609
      %v1611 = vmul.f32 %v1587, 1.442695
      %v1612 = vpow.pop %v1611
      %v1613 = vmul.f32 %v1588, 1.442695
      %v1614 = vpow.pop %v1613
      %v1615 = vmul.f32 %v1589, 1.442695
      %v1616 = vpow.pop %v1615
      %v1617 = vmul.f32 %v1590, 1.442695
      %v1618 = vpow.pop %v1617
      %v1619 = vmul.f32 %v1591, 1.442695
      %v1620 = vpow.pop %v1619
      %v1621 = vmul.f32 %v1592, 1.442695
      %v1622 = vpow.pop %v1621
      %v1623 = vmul.f32 %v1593, 1.442695
      %v1624 = vpow.pop %v1623
      %v1625 = vmul.f32 %v1594, 1.442695
      %v1626 = vpow.pop %v1625
      %v1627 = vld [vmem:[#allocation3] sm:$0xff]
      %v1628 = vld [vmem:[#allocation3 + $0x8] sm:$0xff]
      %v1629 = vld [vmem:[#allocation3 + $0x10] sm:$0xff]
      %v1630 = vld [vmem:[#allocation3 + $0x18] sm:$0xff]
      %v1631 = vld [vmem:[#allocation3 + $0x20] sm:$0xff]
      %v1632 = vld [vmem:[#allocation3 + $0x28] sm:$0xff]
      %v1633 = vld [vmem:[#allocation3 + $0x30] sm:$0xff]
      %v1634 = vld [vmem:[#allocation3 + $0x38] sm:$0xff]
      %v1635 = vld [vmem:[#allocation3 + $0x40] sm:$0xff]
      %v1636 = vld [vmem:[#allocation3 + $0x48] sm:$0xff]
      %v1637 = vld [vmem:[#allocation3 + $0x50] sm:$0xff]
      %v1638 = vld [vmem:[#allocation3 + $0x58] sm:$0xff]
      %v1639 = vld [vmem:[#allocation3 + $0x60] sm:$0xff]
      %v1640 = vld [vmem:[#allocation3 + $0x68] sm:$0xff]
      %v1641 = vld [vmem:[#allocation3 + $0x70] sm:$0xff]
      %v1642 = vld [vmem:[#allocation3 + $0x78] sm:$0xff]
      %1644 = vset.pattern.permute.xlu0 0
      %1645 = vperm.xlu0 %1644, %v1596
      %v1646 = vpop.permute.xlu0 %1645
      %1649 = vset.pattern.permute.xlu0 0
      %1650 = vperm.xlu0 %1649, %v1598
      %v1651 = vpop.permute.xlu0 %1650
      %1654 = vset.pattern.permute.xlu0 0
      %1655 = vperm.xlu0 %1654, %v1600
      %v1656 = vpop.permute.xlu0 %1655
      %1659 = vset.pattern.permute.xlu0 0
      %1660 = vperm.xlu0 %1659, %v1602
      %v1661 = vpop.permute.xlu0 %1660
      %1664 = vset.pattern.permute.xlu0 0
      %1665 = vperm.xlu0 %1664, %v1604
      %v1666 = vpop.permute.xlu0 %1665
      %1669 = vset.pattern.permute.xlu0 0
      %1670 = vperm.xlu0 %1669, %v1606
      %v1671 = vpop.permute.xlu0 %1670
      %1674 = vset.pattern.permute.xlu0 0
      %1675 = vperm.xlu0 %1674, %v1608
      %v1676 = vpop.permute.xlu0 %1675
      %1679 = vset.pattern.permute.xlu0 0
      %1680 = vperm.xlu0 %1679, %v1610
      %v1681 = vpop.permute.xlu0 %1680
      %1684 = vset.pattern.permute.xlu0 0
      %1685 = vperm.xlu0 %1684, %v1612
      %v1686 = vpop.permute.xlu0 %1685
      %1689 = vset.pattern.permute.xlu0 0
      %1690 = vperm.xlu0 %1689, %v1614
      %v1691 = vpop.permute.xlu0 %1690
      %1694 = vset.pattern.permute.xlu0 0
      %1695 = vperm.xlu0 %1694, %v1616
      %v1696 = vpop.permute.xlu0 %1695
      %1699 = vset.pattern.permute.xlu0 0
      %1700 = vperm.xlu0 %1699, %v1618
      %v1701 = vpop.permute.xlu0 %1700
      %1704 = vset.pattern.permute.xlu0 0
      %1705 = vperm.xlu0 %1704, %v1620
      %v1706 = vpop.permute.xlu0 %1705
      %1709 = vset.pattern.permute.xlu0 0
      %1710 = vperm.xlu0 %1709, %v1622
      %v1711 = vpop.permute.xlu0 %1710
      %1714 = vset.pattern.permute.xlu0 0
      %1715 = vperm.xlu0 %1714, %v1624
      %v1716 = vpop.permute.xlu0 %1715
      %1719 = vset.pattern.permute.xlu0 0
      %1720 = vperm.xlu0 %1719, %v1626
      %v1721 = vpop.permute.xlu0 %1720
      %v1723 = vmul.f32 %v1627, %v1646
      %v1724 = vmul.f32 %v1628, %v1651
      %v1725 = vmul.f32 %v1629, %v1656
      %v1726 = vmul.f32 %v1630, %v1661
      %v1727 = vmul.f32 %v1631, %v1666
      %v1728 = vmul.f32 %v1632, %v1671
      %v1729 = vmul.f32 %v1633, %v1676
      %v1730 = vmul.f32 %v1634, %v1681
      %v1731 = vmul.f32 %v1635, %v1686
      %v1732 = vmul.f32 %v1636, %v1691
      %v1733 = vmul.f32 %v1637, %v1696
      %v1734 = vmul.f32 %v1638, %v1701
      %v1735 = vmul.f32 %v1639, %v1706
      %v1736 = vmul.f32 %v1640, %v1711
      %v1737 = vmul.f32 %v1641, %v1716
      %v1738 = vmul.f32 %v1642, %v1721
      %v1739 = vadd.f32 %v1723, %v1517
      %v1740 = vadd.f32 %v1724, %v1520
      %v1741 = vadd.f32 %v1725, %v1525
      %v1742 = vadd.f32 %v1726, %v1528
      %v1743 = vadd.f32 %v1727, %v1533
      %v1744 = vadd.f32 %v1728, %v1536
      %v1745 = vadd.f32 %v1729, %v1541
      %v1746 = vadd.f32 %v1730, %v1544
      %v1747 = vadd.f32 %v1731, %v1549
      %v1748 = vadd.f32 %v1732, %v1552
      %v1749 = vadd.f32 %v1733, %v1557
      %v1750 = vadd.f32 %v1734, %v1560
      %v1751 = vadd.f32 %v1735, %v1565
      %v1752 = vadd.f32 %v1736, %v1568
      %v1753 = vadd.f32 %v1737, %v1573
      %v1754 = vadd.f32 %v1738, %v1576
      %vm1755 = vcmask 523264
      %1756 = vst.msk [vmem:[#allocation3] sm:$0xff] %vm1755, %v1739
      %1757 = vst.msk [vmem:[#allocation3 + $0x8] sm:$0xff] %vm1755, %v1740
      %1758 = vst.msk [vmem:[#allocation3 + $0x10] sm:$0xff] %vm1755, %v1741
      %1759 = vst.msk [vmem:[#allocation3 + $0x18] sm:$0xff] %vm1755, %v1742
      %1760 = vst.msk [vmem:[#allocation3 + $0x20] sm:$0xff] %vm1755, %v1743
      %1761 = vst.msk [vmem:[#allocation3 + $0x28] sm:$0xff] %vm1755, %v1744
      %1762 = vst.msk [vmem:[#allocation3 + $0x30] sm:$0xff] %vm1755, %v1745
      %1763 = vst.msk [vmem:[#allocation3 + $0x38] sm:$0xff] %vm1755, %v1746
      %1764 = vst.msk [vmem:[#allocation3 + $0x40] sm:$0xff] %vm1755, %v1747
      %1765 = vst.msk [vmem:[#allocation3 + $0x48] sm:$0xff] %vm1755, %v1748
      %1766 = vst.msk [vmem:[#allocation3 + $0x50] sm:$0xff] %vm1755, %v1749
      %1767 = vst.msk [vmem:[#allocation3 + $0x58] sm:$0xff] %vm1755, %v1750
      %1768 = vst.msk [vmem:[#allocation3 + $0x60] sm:$0xff] %vm1755, %v1751
      %1769 = vst.msk [vmem:[#allocation3 + $0x68] sm:$0xff] %vm1755, %v1752
      %1770 = vst.msk [vmem:[#allocation3 + $0x70] sm:$0xff] %vm1755, %v1753
      %1771 = vst.msk [vmem:[#allocation3 + $0x78] sm:$0xff] %vm1755, %v1754
      %vm1772 = vcmask 7168
      %1773 = vst.msk [vmem:[#allocation2] sm:$0xff] %vm1772, %v777
      %1774 = vst.msk [vmem:[#allocation2 + $0x8] sm:$0xff] %vm1772, %v778
      %1775 = vst.msk [vmem:[#allocation2 + $0x10] sm:$0xff] %vm1772, %v779
      %1776 = vst.msk [vmem:[#allocation2 + $0x18] sm:$0xff] %vm1772, %v780
      %1777 = vst.msk [vmem:[#allocation2 + $0x20] sm:$0xff] %vm1772, %v781
      %1778 = vst.msk [vmem:[#allocation2 + $0x28] sm:$0xff] %vm1772, %v782
      %1779 = vst.msk [vmem:[#allocation2 + $0x30] sm:$0xff] %vm1772, %v783
      %1780 = vst.msk [vmem:[#allocation2 + $0x38] sm:$0xff] %vm1772, %v784
      %1781 = vst.msk [vmem:[#allocation2 + $0x40] sm:$0xff] %vm1772, %v785
      %1782 = vst.msk [vmem:[#allocation2 + $0x48] sm:$0xff] %vm1772, %v786
      %1783 = vst.msk [vmem:[#allocation2 + $0x50] sm:$0xff] %vm1772, %v787
      %1784 = vst.msk [vmem:[#allocation2 + $0x58] sm:$0xff] %vm1772, %v788
      %1785 = vst.msk [vmem:[#allocation2 + $0x60] sm:$0xff] %vm1772, %v789
      %1786 = vst.msk [vmem:[#allocation2 + $0x68] sm:$0xff] %vm1772, %v790
      %1787 = vst.msk [vmem:[#allocation2 + $0x70] sm:$0xff] %vm1772, %v791
      %1788 = vst.msk [vmem:[#allocation2 + $0x78] sm:$0xff] %vm1772, %v792
      %1789 = vset.pattern.permute.xlu0 1
      %1790 = vperm.xlu0 %1789, %v428
      %v1791 = vpop.permute.xlu0 %1790
      %1793 = vset.pattern.permute.xlu0 1
      %1794 = vperm.xlu0 %1793, %v429
      %v1795 = vpop.permute.xlu0 %1794
      %1797 = vset.pattern.permute.xlu0 1
      %1798 = vperm.xlu0 %1797, %v430
      %v1799 = vpop.permute.xlu0 %1798
      %1801 = vset.pattern.permute.xlu0 1
      %1802 = vperm.xlu0 %1801, %v431
      %v1803 = vpop.permute.xlu0 %1802
      %1805 = vset.pattern.permute.xlu0 1
      %1806 = vperm.xlu0 %1805, %v432
      %v1807 = vpop.permute.xlu0 %1806
      %1809 = vset.pattern.permute.xlu0 1
      %1810 = vperm.xlu0 %1809, %v433
      %v1811 = vpop.permute.xlu0 %1810
      %1813 = vset.pattern.permute.xlu0 1
      %1814 = vperm.xlu0 %1813, %v434
      %v1815 = vpop.permute.xlu0 %1814
      %1817 = vset.pattern.permute.xlu0 1
      %1818 = vperm.xlu0 %1817, %v435
      %v1819 = vpop.permute.xlu0 %1818
      %1821 = vset.pattern.permute.xlu0 1
      %1822 = vperm.xlu0 %1821, %v436
      %v1823 = vpop.permute.xlu0 %1822
      %1825 = vset.pattern.permute.xlu0 1
      %1826 = vperm.xlu0 %1825, %v437
      %v1827 = vpop.permute.xlu0 %1826
      %1829 = vset.pattern.permute.xlu0 1
      %1830 = vperm.xlu0 %1829, %v438
      %v1831 = vpop.permute.xlu0 %1830
      %1833 = vset.pattern.permute.xlu0 1
      %1834 = vperm.xlu0 %1833, %v439
      %v1835 = vpop.permute.xlu0 %1834
      %1837 = vset.pattern.permute.xlu0 1
      %1838 = vperm.xlu0 %1837, %v440
      %v1839 = vpop.permute.xlu0 %1838
      %1841 = vset.pattern.permute.xlu0 1
      %1842 = vperm.xlu0 %1841, %v441
      %v1843 = vpop.permute.xlu0 %1842
      %1845 = vset.pattern.permute.xlu0 1
      %1846 = vperm.xlu0 %1845, %v442
      %v1847 = vpop.permute.xlu0 %1846
      %1849 = vset.pattern.permute.xlu0 1
      %1850 = vperm.xlu0 %1849, %v443
      %v1851 = vpop.permute.xlu0 %1850
      %v1853 = vlaneseq
      %v1854 = vshrl.u32 %v1853, 7
      %v1855 = vsub.s32 1, %v1854
      %v1856 = vrot.slane %v444, %v1855
      %v1857 = vlaneseq
      %v1858 = vshrl.u32 %v1857, 7
      %v1859 = vsub.s32 3, %v1858
      %v1860 = vrot.slane %v444, %v1859
      %v1861 = vlaneseq
      %v1862 = vshrl.u32 %v1861, 7
      %v1863 = vsub.s32 5, %v1862
      %v1864 = vrot.slane %v444, %v1863
      %v1868 = vlaneseq
      %v1869 = vshrl.u32 %v1868, 7
      %v1870 = vsub.s32 1, %v1869
      %v1871 = vrot.slane %v1856, %v1870
      %v1872 = vlaneseq
      %v1873 = vshrl.u32 %v1872, 7
      %v1874 = vsub.s32 1, %v1873
      %v1875 = vrot.slane %v1860, %v1874
      %v1876 = vlaneseq
      %v1877 = vshrl.u32 %v1876, 7
      %v1878 = vsub.s32 1, %v1877
      %v1879 = vrot.slane %v1864, %v1878
      %v1880 = vadd.f32 %v1791, %v1871
      %v1881 = vadd.f32 %v1791, %v1875
      %v1882 = vadd.f32 %v1791, %v1879
      %v1883 = vadd.f32 %v1795, %v1871
      %v1884 = vadd.f32 %v1795, %v1875
      %v1885 = vadd.f32 %v1795, %v1879
      %v1886 = vadd.f32 %v1799, %v1871
      %v1887 = vadd.f32 %v1799, %v1875
      %v1888 = vadd.f32 %v1799, %v1879
      %v1889 = vadd.f32 %v1803, %v1871
      %v1890 = vadd.f32 %v1803, %v1875
      %v1891 = vadd.f32 %v1803, %v1879
      %v1892 = vadd.f32 %v1807, %v1871
      %v1893 = vadd.f32 %v1807, %v1875
      %v1894 = vadd.f32 %v1807, %v1879
      %v1895 = vadd.f32 %v1811, %v1871
      %v1896 = vadd.f32 %v1811, %v1875
      %v1897 = vadd.f32 %v1811, %v1879
      %v1898 = vadd.f32 %v1815, %v1871
      %v1899 = vadd.f32 %v1815, %v1875
      %v1900 = vadd.f32 %v1815, %v1879
      %v1901 = vadd.f32 %v1819, %v1871
      %v1902 = vadd.f32 %v1819, %v1875
      %v1903 = vadd.f32 %v1819, %v1879
      %v1904 = vadd.f32 %v1823, %v1871
      %v1905 = vadd.f32 %v1823, %v1875
      %v1906 = vadd.f32 %v1823, %v1879
      %v1907 = vadd.f32 %v1827, %v1871
      %v1908 = vadd.f32 %v1827, %v1875
      %v1909 = vadd.f32 %v1827, %v1879
      %v1910 = vadd.f32 %v1831, %v1871
      %v1911 = vadd.f32 %v1831, %v1875
      %v1912 = vadd.f32 %v1831, %v1879
      %v1913 = vadd.f32 %v1835, %v1871
      %v1914 = vadd.f32 %v1835, %v1875
      %v1915 = vadd.f32 %v1835, %v1879
      %v1916 = vadd.f32 %v1839, %v1871
      %v1917 = vadd.f32 %v1839, %v1875
      %v1918 = vadd.f32 %v1839, %v1879
      %v1919 = vadd.f32 %v1843, %v1871
      %v1920 = vadd.f32 %v1843, %v1875
      %v1921 = vadd.f32 %v1843, %v1879
      %v1922 = vadd.f32 %v1847, %v1871
      %v1923 = vadd.f32 %v1847, %v1875
      %v1924 = vadd.f32 %v1847, %v1879
      %v1925 = vadd.f32 %v1851, %v1871
      %v1926 = vadd.f32 %v1851, %v1875
      %v1927 = vadd.f32 %v1851, %v1879
      %v1928 = vmul.f32 %v1880, 0.2
      %v1929 = vmul.f32 %v1881, 0.2
      %v1930 = vmul.f32 %v1882, 0.2
      %v1931 = vmul.f32 %v1883, 0.2
      %v1932 = vmul.f32 %v1884, 0.2
      %v1933 = vmul.f32 %v1885, 0.2
      %v1934 = vmul.f32 %v1886, 0.2
      %v1935 = vmul.f32 %v1887, 0.2
      %v1936 = vmul.f32 %v1888, 0.2
      %v1937 = vmul.f32 %v1889, 0.2
      %v1938 = vmul.f32 %v1890, 0.2
      %v1939 = vmul.f32 %v1891, 0.2
      %v1940 = vmul.f32 %v1892, 0.2
      %v1941 = vmul.f32 %v1893, 0.2
      %v1942 = vmul.f32 %v1894, 0.2
      %v1943 = vmul.f32 %v1895, 0.2
      %v1944 = vmul.f32 %v1896, 0.2
      %v1945 = vmul.f32 %v1897, 0.2
      %v1946 = vmul.f32 %v1898, 0.2
      %v1947 = vmul.f32 %v1899, 0.2
      %v1948 = vmul.f32 %v1900, 0.2
      %v1949 = vmul.f32 %v1901, 0.2
      %v1950 = vmul.f32 %v1902, 0.2
      %v1951 = vmul.f32 %v1903, 0.2
      %v1952 = vmul.f32 %v1904, 0.2
      %v1953 = vmul.f32 %v1905, 0.2
      %v1954 = vmul.f32 %v1906, 0.2
      %v1955 = vmul.f32 %v1907, 0.2
      %v1956 = vmul.f32 %v1908, 0.2
      %v1957 = vmul.f32 %v1909, 0.2
      %v1958 = vmul.f32 %v1910, 0.2
      %v1959 = vmul.f32 %v1911, 0.2
      %v1960 = vmul.f32 %v1912, 0.2
      %v1961 = vmul.f32 %v1913, 0.2
      %v1962 = vmul.f32 %v1914, 0.2
      %v1963 = vmul.f32 %v1915, 0.2
      %v1964 = vmul.f32 %v1916, 0.2
      %v1965 = vmul.f32 %v1917, 0.2
      %v1966 = vmul.f32 %v1918, 0.2
      %v1967 = vmul.f32 %v1919, 0.2
      %v1968 = vmul.f32 %v1920, 0.2
      %v1969 = vmul.f32 %v1921, 0.2
      %v1970 = vmul.f32 %v1922, 0.2
      %v1971 = vmul.f32 %v1923, 0.2
      %v1972 = vmul.f32 %v1924, 0.2
      %v1973 = vmul.f32 %v1925, 0.2
      %v1974 = vmul.f32 %v1926, 0.2
      %v1975 = vmul.f32 %v1927, 0.2
      %v1976 = vmax.f32 %v1880, %v1928
      %v1977 = vmax.f32 %v1881, %v1929
      %v1978 = vmax.f32 %v1882, %v1930
      %v1979 = vmax.f32 %v1883, %v1931
      %v1980 = vmax.f32 %v1884, %v1932
      %v1981 = vmax.f32 %v1885, %v1933
      %v1982 = vmax.f32 %v1886, %v1934
      %v1983 = vmax.f32 %v1887, %v1935
      %v1984 = vmax.f32 %v1888, %v1936
      %v1985 = vmax.f32 %v1889, %v1937
      %v1986 = vmax.f32 %v1890, %v1938
      %v1987 = vmax.f32 %v1891, %v1939
      %v1988 = vmax.f32 %v1892, %v1940
      %v1989 = vmax.f32 %v1893, %v1941
      %v1990 = vmax.f32 %v1894, %v1942
      %v1991 = vmax.f32 %v1895, %v1943
      %v1992 = vmax.f32 %v1896, %v1944
      %v1993 = vmax.f32 %v1897, %v1945
      %v1994 = vmax.f32 %v1898, %v1946
      %v1995 = vmax.f32 %v1899, %v1947
      %v1996 = vmax.f32 %v1900, %v1948
      %v1997 = vmax.f32 %v1901, %v1949
      %v1998 = vmax.f32 %v1902, %v1950
      %v1999 = vmax.f32 %v1903, %v1951
      %v2000 = vmax.f32 %v1904, %v1952
      %v2001 = vmax.f32 %v1905, %v1953
      %v2002 = vmax.f32 %v1906, %v1954
      %v2003 = vmax.f32 %v1907, %v1955
      %v2004 = vmax.f32 %v1908, %v1956
      %v2005 = vmax.f32 %v1909, %v1957
      %v2006 = vmax.f32 %v1910, %v1958
      %v2007 = vmax.f32 %v1911, %v1959
      %v2008 = vmax.f32 %v1912, %v1960
      %v2009 = vmax.f32 %v1913, %v1961
      %v2010 = vmax.f32 %v1914, %v1962
      %v2011 = vmax.f32 %v1915, %v1963
      %v2012 = vmax.f32 %v1916, %v1964
      %v2013 = vmax.f32 %v1917, %v1965
      %v2014 = vmax.f32 %v1918, %v1966
      %v2015 = vmax.f32 %v1919, %v1967
      %v2016 = vmax.f32 %v1920, %v1968
      %v2017 = vmax.f32 %v1921, %v1969
      %v2018 = vmax.f32 %v1922, %v1970
      %v2019 = vmax.f32 %v1923, %v1971
      %v2020 = vmax.f32 %v1924, %v1972
      %v2021 = vmax.f32 %v1925, %v1973
      %v2022 = vmax.f32 %v1926, %v1974
      %v2023 = vmax.f32 %v1927, %v1975
      %s2024 = scalar_lea.vmem [#allocation2], 128
      %v2025 = vld [vmem:[%s2024] sm:$0xff]
      %v2026 = vld [vmem:[%s2024 + $0x8] sm:$0xff]
      %v2027 = vld [vmem:[%s2024 + $0x10] sm:$0xff]
      %v2028 = vld [vmem:[%s2024 + $0x18] sm:$0xff]
      %v2029 = vld [vmem:[%s2024 + $0x20] sm:$0xff]
      %v2030 = vld [vmem:[%s2024 + $0x28] sm:$0xff]
      %v2031 = vld [vmem:[%s2024 + $0x30] sm:$0xff]
      %v2032 = vld [vmem:[%s2024 + $0x38] sm:$0xff]
      %v2033 = vld [vmem:[%s2024 + $0x40] sm:$0xff]
      %v2034 = vld [vmem:[%s2024 + $0x48] sm:$0xff]
      %v2035 = vld [vmem:[%s2024 + $0x50] sm:$0xff]
      %v2036 = vld [vmem:[%s2024 + $0x58] sm:$0xff]
      %v2037 = vld [vmem:[%s2024 + $0x60] sm:$0xff]
      %v2038 = vld [vmem:[%s2024 + $0x68] sm:$0xff]
      %v2039 = vld [vmem:[%s2024 + $0x70] sm:$0xff]
      %v2040 = vld [vmem:[%s2024 + $0x78] sm:$0xff]
      %v2041 = vmax.f32 %v1976, %v1977
      %v2042 = vmax.f32 %v2041, %v1978
      %2043 = vmax.xlane.f32.xlu0 %v2042
      %v2044 = vpop.xlane.xlu0 %2043
      %v2045 = vmax.f32 %v1979, %v1980
      %v2046 = vmax.f32 %v2045, %v1981
      %2047 = vmax.xlane.f32.xlu0 %v2046
      %v2048 = vpop.xlane.xlu0 %2047
      %v2049 = vmax.f32 %v1982, %v1983
      %v2050 = vmax.f32 %v2049, %v1984
      %2051 = vmax.xlane.f32.xlu0 %v2050
      %v2052 = vpop.xlane.xlu0 %2051
      %v2053 = vmax.f32 %v1985, %v1986
      %v2054 = vmax.f32 %v2053, %v1987
      %2055 = vmax.xlane.f32.xlu0 %v2054
      %v2056 = vpop.xlane.xlu0 %2055
      %v2057 = vmax.f32 %v1988, %v1989
      %v2058 = vmax.f32 %v2057, %v1990
      %2059 = vmax.xlane.f32.xlu0 %v2058
      %v2060 = vpop.xlane.xlu0 %2059
      %v2061 = vmax.f32 %v1991, %v1992
      %v2062 = vmax.f32 %v2061, %v1993
      %2063 = vmax.xlane.f32.xlu0 %v2062
      %v2064 = vpop.xlane.xlu0 %2063
      %v2065 = vmax.f32 %v1994, %v1995
      %v2066 = vmax.f32 %v2065, %v1996
      %2067 = vmax.xlane.f32.xlu0 %v2066
      %v2068 = vpop.xlane.xlu0 %2067
      %v2069 = vmax.f32 %v1997, %v1998
      %v2070 = vmax.f32 %v2069, %v1999
      %2071 = vmax.xlane.f32.xlu0 %v2070
      %v2072 = vpop.xlane.xlu0 %2071
      %v2073 = vmax.f32 %v2000, %v2001
      %v2074 = vmax.f32 %v2073, %v2002
      %2075 = vmax.xlane.f32.xlu0 %v2074
      %v2076 = vpop.xlane.xlu0 %2075
      %v2077 = vmax.f32 %v2003, %v2004
      %v2078 = vmax.f32 %v2077, %v2005
      %2079 = vmax.xlane.f32.xlu0 %v2078
      %v2080 = vpop.xlane.xlu0 %2079
      %v2081 = vmax.f32 %v2006, %v2007
      %v2082 = vmax.f32 %v2081, %v2008
      %2083 = vmax.xlane.f32.xlu0 %v2082
      %v2084 = vpop.xlane.xlu0 %2083
      %v2085 = vmax.f32 %v2009, %v2010
      %v2086 = vmax.f32 %v2085, %v2011
      %2087 = vmax.xlane.f32.xlu0 %v2086
      %v2088 = vpop.xlane.xlu0 %2087
      %v2089 = vmax.f32 %v2012, %v2013
      %v2090 = vmax.f32 %v2089, %v2014
      %2091 = vmax.xlane.f32.xlu0 %v2090
      %v2092 = vpop.xlane.xlu0 %2091
      %v2093 = vmax.f32 %v2015, %v2016
      %v2094 = vmax.f32 %v2093, %v2017
      %2095 = vmax.xlane.f32.xlu0 %v2094
      %v2096 = vpop.xlane.xlu0 %2095
      %v2097 = vmax.f32 %v2018, %v2019
      %v2098 = vmax.f32 %v2097, %v2020
      %2099 = vmax.xlane.f32.xlu0 %v2098
      %v2100 = vpop.xlane.xlu0 %2099
      %v2101 = vmax.f32 %v2021, %v2022
      %v2102 = vmax.f32 %v2101, %v2023
      %2103 = vmax.xlane.f32.xlu0 %v2102
      %v2104 = vpop.xlane.xlu0 %2103
      %v2105 = vmax.f32 %v2025, %v2044
      %v2106 = vmax.f32 %v2026, %v2048
      %v2107 = vmax.f32 %v2027, %v2052
      %v2108 = vmax.f32 %v2028, %v2056
      %v2109 = vmax.f32 %v2029, %v2060
      %v2110 = vmax.f32 %v2030, %v2064
      %v2111 = vmax.f32 %v2031, %v2068
      %v2112 = vmax.f32 %v2032, %v2072
      %v2113 = vmax.f32 %v2033, %v2076
      %v2114 = vmax.f32 %v2034, %v2080
      %v2115 = vmax.f32 %v2035, %v2084
      %v2116 = vmax.f32 %v2036, %v2088
      %v2117 = vmax.f32 %v2037, %v2092
      %v2118 = vmax.f32 %v2038, %v2096
      %v2119 = vmax.f32 %v2039, %v2100
      %v2120 = vmax.f32 %v2040, %v2104
      %2122 = vset.pattern.permute.xlu0 0
      %2123 = vperm.xlu0 %2122, %v2105
      %v2124 = vpop.permute.xlu0 %2123
      %2127 = vset.pattern.permute.xlu0 0
      %2128 = vperm.xlu0 %2127, %v2106
      %v2129 = vpop.permute.xlu0 %2128
      %2132 = vset.pattern.permute.xlu0 0
      %2133 = vperm.xlu0 %2132, %v2107
      %v2134 = vpop.permute.xlu0 %2133
      %2137 = vset.pattern.permute.xlu0 0
      %2138 = vperm.xlu0 %2137, %v2108
      %v2139 = vpop.permute.xlu0 %2138
      %2142 = vset.pattern.permute.xlu0 0
      %2143 = vperm.xlu0 %2142, %v2109
      %v2144 = vpop.permute.xlu0 %2143
      %2147 = vset.pattern.permute.xlu0 0
      %2148 = vperm.xlu0 %2147, %v2110
      %v2149 = vpop.permute.xlu0 %2148
      %2152 = vset.pattern.permute.xlu0 0
      %2153 = vperm.xlu0 %2152, %v2111
      %v2154 = vpop.permute.xlu0 %2153
      %2157 = vset.pattern.permute.xlu0 0
      %2158 = vperm.xlu0 %2157, %v2112
      %v2159 = vpop.permute.xlu0 %2158
      %2162 = vset.pattern.permute.xlu0 0
      %2163 = vperm.xlu0 %2162, %v2113
      %v2164 = vpop.permute.xlu0 %2163
      %2167 = vset.pattern.permute.xlu0 0
      %2168 = vperm.xlu0 %2167, %v2114
      %v2169 = vpop.permute.xlu0 %2168
      %2172 = vset.pattern.permute.xlu0 0
      %2173 = vperm.xlu0 %2172, %v2115
      %v2174 = vpop.permute.xlu0 %2173
      %2177 = vset.pattern.permute.xlu0 0
      %2178 = vperm.xlu0 %2177, %v2116
      %v2179 = vpop.permute.xlu0 %2178
      %2182 = vset.pattern.permute.xlu0 0
      %2183 = vperm.xlu0 %2182, %v2117
      %v2184 = vpop.permute.xlu0 %2183
      %2187 = vset.pattern.permute.xlu0 0
      %2188 = vperm.xlu0 %2187, %v2118
      %v2189 = vpop.permute.xlu0 %2188
      %2192 = vset.pattern.permute.xlu0 0
      %2193 = vperm.xlu0 %2192, %v2119
      %v2194 = vpop.permute.xlu0 %2193
      %2197 = vset.pattern.permute.xlu0 0
      %2198 = vperm.xlu0 %2197, %v2120
      %v2199 = vpop.permute.xlu0 %2198
      %v2201 = vsub.f32 %v1976, %v2124
      %v2202 = vsub.f32 %v1977, %v2124
      %v2203 = vsub.f32 %v1978, %v2124
      %v2204 = vsub.f32 %v1979, %v2129
      %v2205 = vsub.f32 %v1980, %v2129
      %v2206 = vsub.f32 %v1981, %v2129
      %v2207 = vsub.f32 %v1982, %v2134
      %v2208 = vsub.f32 %v1983, %v2134
      %v2209 = vsub.f32 %v1984, %v2134
      %v2210 = vsub.f32 %v1985, %v2139
      %v2211 = vsub.f32 %v1986, %v2139
      %v2212 = vsub.f32 %v1987, %v2139
      %v2213 = vsub.f32 %v1988, %v2144
      %v2214 = vsub.f32 %v1989, %v2144
      %v2215 = vsub.f32 %v1990, %v2144
      %v2216 = vsub.f32 %v1991, %v2149
      %v2217 = vsub.f32 %v1992, %v2149
      %v2218 = vsub.f32 %v1993, %v2149
      %v2219 = vsub.f32 %v1994, %v2154
      %v2220 = vsub.f32 %v1995, %v2154
      %v2221 = vsub.f32 %v1996, %v2154
      %v2222 = vsub.f32 %v1997, %v2159
      %v2223 = vsub.f32 %v1998, %v2159
      %v2224 = vsub.f32 %v1999, %v2159
      %v2225 = vsub.f32 %v2000, %v2164
      %v2226 = vsub.f32 %v2001, %v2164
      %v2227 = vsub.f32 %v2002, %v2164
      %v2228 = vsub.f32 %v2003, %v2169
      %v2229 = vsub.f32 %v2004, %v2169
      %v2230 = vsub.f32 %v2005, %v2169
      %v2231 = vsub.f32 %v2006, %v2174
      %v2232 = vsub.f32 %v2007, %v2174
      %v2233 = vsub.f32 %v2008, %v2174
      %v2234 = vsub.f32 %v2009, %v2179
      %v2235 = vsub.f32 %v2010, %v2179
      %v2236 = vsub.f32 %v2011, %v2179
      %v2237 = vsub.f32 %v2012, %v2184
      %v2238 = vsub.f32 %v2013, %v2184
      %v2239 = vsub.f32 %v2014, %v2184
      %v2240 = vsub.f32 %v2015, %v2189
      %v2241 = vsub.f32 %v2016, %v2189
      %v2242 = vsub.f32 %v2017, %v2189
      %v2243 = vsub.f32 %v2018, %v2194
      %v2244 = vsub.f32 %v2019, %v2194
      %v2245 = vsub.f32 %v2020, %v2194
      %v2246 = vsub.f32 %v2021, %v2199
      %v2247 = vsub.f32 %v2022, %v2199
      %v2248 = vsub.f32 %v2023, %v2199
      %v2249 = vmul.f32 %v2201, 1.442695
      %v2250 = vpow.pop %v2249
      %v2251 = vmul.f32 %v2202, 1.442695
      %v2252 = vpow.pop %v2251
      %v2253 = vmul.f32 %v2203, 1.442695
      %v2254 = vpow.pop %v2253
      %v2255 = vmul.f32 %v2204, 1.442695
      %v2256 = vpow.pop %v2255
      %v2257 = vmul.f32 %v2205, 1.442695
      %v2258 = vpow.pop %v2257
      %v2259 = vmul.f32 %v2206, 1.442695
      %v2260 = vpow.pop %v2259
      %v2261 = vmul.f32 %v2207, 1.442695
      %v2262 = vpow.pop %v2261
      %v2263 = vmul.f32 %v2208, 1.442695
      %v2264 = vpow.pop %v2263
      %v2265 = vmul.f32 %v2209, 1.442695
      %v2266 = vpow.pop %v2265
      %v2267 = vmul.f32 %v2210, 1.442695
      %v2268 = vpow.pop %v2267
      %v2269 = vmul.f32 %v2211, 1.442695
      %v2270 = vpow.pop %v2269
      %v2271 = vmul.f32 %v2212, 1.442695
      %v2272 = vpow.pop %v2271
      %v2273 = vmul.f32 %v2213, 1.442695
      %v2274 = vpow.pop %v2273
      %v2275 = vmul.f32 %v2214, 1.442695
      %v2276 = vpow.pop %v2275
      %v2277 = vmul.f32 %v2215, 1.442695
      %v2278 = vpow.pop %v2277
      %v2279 = vmul.f32 %v2216, 1.442695
      %v2280 = vpow.pop %v2279
      %v2281 = vmul.f32 %v2217, 1.442695
      %v2282 = vpow.pop %v2281
      %v2283 = vmul.f32 %v2218, 1.442695
      %v2284 = vpow.pop %v2283
      %v2285 = vmul.f32 %v2219, 1.442695
      %v2286 = vpow.pop %v2285
      %v2287 = vmul.f32 %v2220, 1.442695
      %v2288 = vpow.pop %v2287
      %v2289 = vmul.f32 %v2221, 1.442695
      %v2290 = vpow.pop %v2289
      %v2291 = vmul.f32 %v2222, 1.442695
      %v2292 = vpow.pop %v2291
      %v2293 = vmul.f32 %v2223, 1.442695
      %v2294 = vpow.pop %v2293
      %v2295 = vmul.f32 %v2224, 1.442695
      %v2296 = vpow.pop %v2295
      %v2297 = vmul.f32 %v2225, 1.442695
      %v2298 = vpow.pop %v2297
      %v2299 = vmul.f32 %v2226, 1.442695
      %v2300 = vpow.pop %v2299
      %v2301 = vmul.f32 %v2227, 1.442695
      %v2302 = vpow.pop %v2301
      %v2303 = vmul.f32 %v2228, 1.442695
      %v2304 = vpow.pop %v2303
      %v2305 = vmul.f32 %v2229, 1.442695
      %v2306 = vpow.pop %v2305
      %v2307 = vmul.f32 %v2230, 1.442695
      %v2308 = vpow.pop %v2307
      %v2309 = vmul.f32 %v2231, 1.442695
      %v2310 = vpow.pop %v2309
      %v2311 = vmul.f32 %v2232, 1.442695
      %v2312 = vpow.pop %v2311
      %v2313 = vmul.f32 %v2233, 1.442695
      %v2314 = vpow.pop %v2313
      %v2315 = vmul.f32 %v2234, 1.442695
      %v2316 = vpow.pop %v2315
      %v2317 = vmul.f32 %v2235, 1.442695
      %v2318 = vpow.pop %v2317
      %v2319 = vmul.f32 %v2236, 1.442695
      %v2320 = vpow.pop %v2319
      %v2321 = vmul.f32 %v2237, 1.442695
      %v2322 = vpow.pop %v2321
      %v2323 = vmul.f32 %v2238, 1.442695
      %v2324 = vpow.pop %v2323
      %v2325 = vmul.f32 %v2239, 1.442695
      %v2326 = vpow.pop %v2325
      %v2327 = vmul.f32 %v2240, 1.442695
      %v2328 = vpow.pop %v2327
      %v2329 = vmul.f32 %v2241, 1.442695
      %v2330 = vpow.pop %v2329
      %v2331 = vmul.f32 %v2242, 1.442695
      %v2332 = vpow.pop %v2331
      %v2333 = vmul.f32 %v2243, 1.442695
      %v2334 = vpow.pop %v2333
      %v2335 = vmul.f32 %v2244, 1.442695
      %v2336 = vpow.pop %v2335
      %v2337 = vmul.f32 %v2245, 1.442695
      %v2338 = vpow.pop %v2337
      %v2339 = vmul.f32 %v2246, 1.442695
      %v2340 = vpow.pop %v2339
      %v2341 = vmul.f32 %v2247, 1.442695
      %v2342 = vpow.pop %v2341
      %v2343 = vmul.f32 %v2248, 1.442695
      %v2344 = vpow.pop %v2343
      %v2345 = vpack.c.bf16 %v2256, %v2250
      %v2346 = vpack.c.bf16 %v2258, %v2252
      %v2347 = vpack.c.bf16 %v2260, %v2254
      %v2348 = vpack.c.bf16 %v2268, %v2262
      %v2349 = vpack.c.bf16 %v2270, %v2264
      %v2350 = vpack.c.bf16 %v2272, %v2266
      %v2351 = vpack.c.bf16 %v2280, %v2274
      %v2352 = vpack.c.bf16 %v2282, %v2276
      %v2353 = vpack.c.bf16 %v2284, %v2278
      %v2354 = vpack.c.bf16 %v2292, %v2286
      %v2355 = vpack.c.bf16 %v2294, %v2288
      %v2356 = vpack.c.bf16 %v2296, %v2290
      %v2357 = vpack.c.bf16 %v2304, %v2298
      %v2358 = vpack.c.bf16 %v2306, %v2300
      %v2359 = vpack.c.bf16 %v2308, %v2302
      %v2360 = vpack.c.bf16 %v2316, %v2310
      %v2361 = vpack.c.bf16 %v2318, %v2312
      %v2362 = vpack.c.bf16 %v2320, %v2314
      %v2363 = vpack.c.bf16 %v2328, %v2322
      %v2364 = vpack.c.bf16 %v2330, %v2324
      %v2365 = vpack.c.bf16 %v2332, %v2326
      %v2366 = vpack.c.bf16 %v2340, %v2334
      %v2367 = vpack.c.bf16 %v2342, %v2336
      %v2368 = vpack.c.bf16 %v2344, %v2338
      %v2369 = vmul.bf16 %v2345, %v1121
      %v2370 = vmul.bf16 %v2346, %v1122
      %v2371 = vmul.bf16 %v2347, %v1123
      %v2372 = vmul.bf16 %v2348, %v1124
      %v2373 = vmul.bf16 %v2349, %v1125
      %v2374 = vmul.bf16 %v2350, %v1126
      %v2375 = vmul.bf16 %v2351, %v1127
      %v2376 = vmul.bf16 %v2352, %v1128
      %v2377 = vmul.bf16 %v2353, %v1129
      %v2378 = vmul.bf16 %v2354, %v1130
      %v2379 = vmul.bf16 %v2355, %v1131
      %v2380 = vmul.bf16 %v2356, %v1132
      %v2381 = vmul.bf16 %v2357, %v1133
      %v2382 = vmul.bf16 %v2358, %v1134
      %v2383 = vmul.bf16 %v2359, %v1135
      %v2384 = vmul.bf16 %v2360, %v1136
      %v2385 = vmul.bf16 %v2361, %v1137
      %v2386 = vmul.bf16 %v2362, %v1138
      %v2387 = vmul.bf16 %v2363, %v1139
      %v2388 = vmul.bf16 %v2364, %v1140
      %v2389 = vmul.bf16 %v2365, %v1141
      %v2390 = vmul.bf16 %v2366, %v1142
      %v2391 = vmul.bf16 %v2367, %v1143
      %v2392 = vmul.bf16 %v2368, %v1144
      %s2393 = scalar_lea.vmem %s293, 192
      %v2394 = vld [vmem:[%s2393] sm:$0xf]
      %v2395 = vld [vmem:[%s2393 + $0x4] sm:$0xf]
      %v2396 = vld [vmem:[%s2393 + $0x8] sm:$0xf]
      %v2397 = vld [vmem:[%s2393 + $0xc] sm:$0xf]
      %v2398 = vld [vmem:[%s2393 + $0x10] sm:$0xf]
      %v2399 = vld [vmem:[%s2393 + $0x14] sm:$0xf]
      %v2400 = vld [vmem:[%s2393 + $0x18] sm:$0xf]
      %v2401 = vld [vmem:[%s2393 + $0x1c] sm:$0xf]
      %v2402 = vld [vmem:[%s2393 + $0x20] sm:$0xf]
      %v2403 = vld [vmem:[%s2393 + $0x24] sm:$0xf]
      %v2404 = vld [vmem:[%s2393 + $0x28] sm:$0xf]
      %v2405 = vld [vmem:[%s2393 + $0x2c] sm:$0xf]
      %v2406 = vld [vmem:[%s2393 + $0x30] sm:$0xf]
      %v2407 = vld [vmem:[%s2393 + $0x34] sm:$0xf]
      %v2408 = vld [vmem:[%s2393 + $0x38] sm:$0xf]
      %v2409 = vld [vmem:[%s2393 + $0x3c] sm:$0xf]
      %v2410 = vld [vmem:[%s2393 + $0x40] sm:$0xf]
      %v2411 = vld [vmem:[%s2393 + $0x44] sm:$0xf]
      %v2412 = vld [vmem:[%s2393 + $0x48] sm:$0xf]
      %v2413 = vld [vmem:[%s2393 + $0x4c] sm:$0xf]
      %v2414 = vld [vmem:[%s2393 + $0x50] sm:$0xf]
      %v2415 = vld [vmem:[%s2393 + $0x54] sm:$0xf]
      %v2416 = vld [vmem:[%s2393 + $0x58] sm:$0xf]
      %v2417 = vld [vmem:[%s2393 + $0x5c] sm:$0xf]
      %v2418 = vld [vmem:[%s2393 + $0x60] sm:$0xf]
      %v2419 = vld [vmem:[%s2393 + $0x64] sm:$0xf]
      %v2420 = vld [vmem:[%s2393 + $0x68] sm:$0xf]
      %v2421 = vld [vmem:[%s2393 + $0x6c] sm:$0xf]
      %v2422 = vld [vmem:[%s2393 + $0x70] sm:$0xf]
      %v2423 = vld [vmem:[%s2393 + $0x74] sm:$0xf]
      %v2424 = vld [vmem:[%s2393 + $0x78] sm:$0xf]
      %v2425 = vld [vmem:[%s2393 + $0x7c] sm:$0xf]
      %v2426 = vld [vmem:[%s2393 + $0x80] sm:$0xf]
      %v2427 = vld [vmem:[%s2393 + $0x84] sm:$0xf]
      %v2428 = vld [vmem:[%s2393 + $0x88] sm:$0xf]
      %v2429 = vld [vmem:[%s2393 + $0x8c] sm:$0xf]
      %v2430 = vld [vmem:[%s2393 + $0x90] sm:$0xf]
      %v2431 = vld [vmem:[%s2393 + $0x94] sm:$0xf]
      %v2432 = vld [vmem:[%s2393 + $0x98] sm:$0xf]
      %v2433 = vld [vmem:[%s2393 + $0x9c] sm:$0xf]
      %v2434 = vld [vmem:[%s2393 + $0xa0] sm:$0xf]
      %v2435 = vld [vmem:[%s2393 + $0xa4] sm:$0xf]
      %v2436 = vld [vmem:[%s2393 + $0xa8] sm:$0xf]
      %v2437 = vld [vmem:[%s2393 + $0xac] sm:$0xf]
      %v2438 = vld [vmem:[%s2393 + $0xb0] sm:$0xf]
      %v2439 = vld [vmem:[%s2393 + $0xb4] sm:$0xf]
      %v2440 = vld [vmem:[%s2393 + $0xb8] sm:$0xf]
      %v2441 = vld [vmem:[%s2393 + $0xbc] sm:$0xf]
      %v2490 = vunpack.c.l.b16 %v2394
      %v2491 = vunpack.c.l.b16 %v2395
      %v2492 = vunpack.c.l.b16 %v2396
      %v2493 = vunpack.c.l.b16 %v2397
      %v2494 = vunpack.c.l.b16 %v2398
      %v2495 = vunpack.c.l.b16 %v2399
      %v2496 = vunpack.c.l.b16 %v2400
      %v2497 = vunpack.c.l.b16 %v2401
      %v2498 = vunpack.c.l.b16 %v2402
      %v2499 = vunpack.c.l.b16 %v2403
      %v2500 = vunpack.c.l.b16 %v2404
      %v2501 = vunpack.c.l.b16 %v2405
      %v2502 = vunpack.c.l.b16 %v2406
      %v2503 = vunpack.c.l.b16 %v2407
      %v2504 = vunpack.c.l.b16 %v2408
      %v2505 = vunpack.c.l.b16 %v2409
      %v2506 = vunpack.c.l.b16 %v2410
      %v2507 = vunpack.c.l.b16 %v2411
      %v2508 = vunpack.c.l.b16 %v2412
      %v2509 = vunpack.c.l.b16 %v2413
      %v2510 = vunpack.c.l.b16 %v2414
      %v2511 = vunpack.c.l.b16 %v2415
      %v2512 = vunpack.c.l.b16 %v2416
      %v2513 = vunpack.c.l.b16 %v2417
      %v2514 = vunpack.c.l.b16 %v2418
      %v2515 = vunpack.c.l.b16 %v2419
      %v2516 = vunpack.c.l.b16 %v2420
      %v2517 = vunpack.c.l.b16 %v2421
      %v2518 = vunpack.c.l.b16 %v2422
      %v2519 = vunpack.c.l.b16 %v2423
      %v2520 = vunpack.c.l.b16 %v2424
      %v2521 = vunpack.c.l.b16 %v2425
      %v2522 = vunpack.c.l.b16 %v2426
      %v2523 = vunpack.c.l.b16 %v2427
      %v2524 = vunpack.c.l.b16 %v2428
      %v2525 = vunpack.c.l.b16 %v2429
      %v2526 = vunpack.c.l.b16 %v2430
      %v2527 = vunpack.c.l.b16 %v2431
      %v2528 = vunpack.c.l.b16 %v2432
      %v2529 = vunpack.c.l.b16 %v2433
      %v2530 = vunpack.c.l.b16 %v2434
      %v2531 = vunpack.c.l.b16 %v2435
      %v2532 = vunpack.c.l.b16 %v2436
      %v2533 = vunpack.c.l.b16 %v2437
      %v2534 = vunpack.c.l.b16 %v2438
      %v2535 = vunpack.c.l.b16 %v2439
      %v2536 = vunpack.c.l.b16 %v2440
      %v2537 = vunpack.c.l.b16 %v2441
      %v2538 = vpack.c.b16 %v2491, %v2490
      %v2539 = vpack.c.b16 %v2493, %v2492
      %v2540 = vpack.c.b16 %v2495, %v2494
      %v2541 = vpack.c.b16 %v2497, %v2496
      %v2542 = vpack.c.b16 %v2499, %v2498
      %v2543 = vpack.c.b16 %v2501, %v2500
      %v2544 = vpack.c.b16 %v2503, %v2502
      %v2545 = vpack.c.b16 %v2505, %v2504
      %v2546 = vpack.c.b16 %v2507, %v2506
      %v2547 = vpack.c.b16 %v2509, %v2508
      %v2548 = vpack.c.b16 %v2511, %v2510
      %v2549 = vpack.c.b16 %v2513, %v2512
      %v2550 = vpack.c.b16 %v2515, %v2514
      %v2551 = vpack.c.b16 %v2517, %v2516
      %v2552 = vpack.c.b16 %v2519, %v2518
      %v2553 = vpack.c.b16 %v2521, %v2520
      %v2554 = vpack.c.b16 %v2523, %v2522
      %v2555 = vpack.c.b16 %v2525, %v2524
      %v2556 = vpack.c.b16 %v2527, %v2526
      %v2557 = vpack.c.b16 %v2529, %v2528
      %v2558 = vpack.c.b16 %v2531, %v2530
      %v2559 = vpack.c.b16 %v2533, %v2532
      %v2560 = vpack.c.b16 %v2535, %v2534
      %v2561 = vpack.c.b16 %v2537, %v2536
      %2586 = vmatprep.subr.bf16.mxu0 0
      %2587 = vmatpush1.bf16.msra.mxu0 %v2545
      %2588 = vmatprep.subr.bf16.mxu0 0
      %2589 = vmatpush1.bf16.msra.mxu0 %v2544
      %2590 = vmatprep.subr.bf16.mxu0 0
      %2591 = vmatpush1.bf16.msra.mxu0 %v2543
      %2592 = vmatprep.subr.bf16.mxu0 0
      %2593 = vmatpush1.bf16.msra.mxu0 %v2542
      %2594 = vmatprep.subr.bf16.mxu0 0
      %2595 = vmatpush1.bf16.msra.mxu0 %v2541
      %2596 = vmatprep.subr.bf16.mxu0 0
      %2597 = vmatpush1.bf16.msra.mxu0 %v2540
      %2598 = vmatprep.subr.bf16.mxu0 0
      %2599 = vmatpush1.bf16.msra.mxu0 %v2539
      %2600 = vmatprep.subr.bf16.mxu0 0
      %2601 = vmatpush1.bf16.msra.mxu0 %v2538
      %2602 = vmatprep.subr.bf16.mxu0 0
      %2603 = vmatpush2.bf16.msra.mxu0 %v2553
      %2604 = vmatprep.subr.bf16.mxu0 0
      %2605 = vmatpush2.bf16.msra.mxu0 %v2552
      %2606 = vmatprep.subr.bf16.mxu0 0
      %2607 = vmatpush2.bf16.msra.mxu0 %v2551
      %2608 = vmatprep.subr.bf16.mxu0 0
      %2609 = vmatpush2.bf16.msra.mxu0 %v2550
      %2610 = vmatprep.subr.bf16.mxu0 0
      %2611 = vmatpush2.bf16.msra.mxu0 %v2549
      %2612 = vmatprep.subr.bf16.mxu0 0
      %2613 = vmatpush2.bf16.msra.mxu0 %v2548
      %2614 = vmatprep.subr.bf16.mxu0 0
      %2615 = vmatpush2.bf16.msra.mxu0 %v2547
      %2616 = vmatprep.subr.bf16.mxu0 0
      %2617 = vmatpush2.bf16.msra.mxu0 %v2546
      %2618 = vmatprep.mubr.bf16.mxu0 %v2370
      %2619 = vmatmul.mubr.bf16.gmra.mxu0 %v2369
      %v2620 = vpop.f32.mrf.mxu0
      %v2621 = vadd.f32 0.0, %v2620
      %v2622 = vpop.f32.mrf.mxu0
      %v2623 = vpop.f32.mrf.mxu0
      %v2624 = vadd.f32 0.0, %v2623
      %v2625 = vpop.f32.mrf.mxu0
      %2626 = vmatprep.mubr.bf16.mxu0 %v2373
      %2627 = vmatmul.mubr.bf16.gmra.mxu0 %v2372
      %v2628 = vpop.f32.mrf.mxu0
      %v2629 = vadd.f32 0.0, %v2628
      %v2630 = vpop.f32.mrf.mxu0
      %v2631 = vpop.f32.mrf.mxu0
      %v2632 = vadd.f32 0.0, %v2631
      %v2633 = vpop.f32.mrf.mxu0
      %2634 = vmatprep.mubr.bf16.mxu0 %v2376
      %2635 = vmatmul.mubr.bf16.gmra.mxu0 %v2375
      %v2636 = vpop.f32.mrf.mxu0
      %v2637 = vadd.f32 0.0, %v2636
      %v2638 = vpop.f32.mrf.mxu0
      %v2639 = vpop.f32.mrf.mxu0
      %v2640 = vadd.f32 0.0, %v2639
      %v2641 = vpop.f32.mrf.mxu0
      %2642 = vmatprep.mubr.bf16.mxu0 %v2379
      %2643 = vmatmul.mubr.bf16.gmra.mxu0 %v2378
      %v2644 = vpop.f32.mrf.mxu0
      %v2645 = vadd.f32 0.0, %v2644
      %v2646 = vpop.f32.mrf.mxu0
      %v2647 = vpop.f32.mrf.mxu0
      %v2648 = vadd.f32 0.0, %v2647
      %v2649 = vpop.f32.mrf.mxu0
      %2650 = vmatprep.mubr.bf16.mxu0 %v2382
      %2651 = vmatmul.mubr.bf16.gmra.mxu0 %v2381
      %v2652 = vpop.f32.mrf.mxu0
      %v2653 = vadd.f32 0.0, %v2652
      %v2654 = vpop.f32.mrf.mxu0
      %v2655 = vpop.f32.mrf.mxu0
      %v2656 = vadd.f32 0.0, %v2655
      %v2657 = vpop.f32.mrf.mxu0
      %2658 = vmatprep.mubr.bf16.mxu0 %v2385
      %2659 = vmatmul.mubr.bf16.gmra.mxu0 %v2384
      %v2660 = vpop.f32.mrf.mxu0
      %v2661 = vadd.f32 0.0, %v2660
      %v2662 = vpop.f32.mrf.mxu0
      %v2663 = vpop.f32.mrf.mxu0
      %v2664 = vadd.f32 0.0, %v2663
      %v2665 = vpop.f32.mrf.mxu0
      %2666 = vmatprep.mubr.bf16.mxu0 %v2388
      %2667 = vmatmul.mubr.bf16.gmra.mxu0 %v2387
      %v2668 = vpop.f32.mrf.mxu0
      %v2669 = vadd.f32 0.0, %v2668
      %v2670 = vpop.f32.mrf.mxu0
      %v2671 = vpop.f32.mrf.mxu0
      %v2672 = vadd.f32 0.0, %v2671
      %v2673 = vpop.f32.mrf.mxu0
      %2674 = vmatprep.mubr.bf16.mxu0 %v2391
      %2675 = vmatmul.mubr.bf16.gmra.mxu0 %v2390
      %v2676 = vpop.f32.mrf.mxu0
      %v2677 = vadd.f32 0.0, %v2676
      %v2678 = vpop.f32.mrf.mxu0
      %v2679 = vpop.f32.mrf.mxu0
      %v2680 = vadd.f32 0.0, %v2679
      %v2681 = vpop.f32.mrf.mxu0
      %2682 = vdwg.mxu0
      %2683 = vmatprep.subr.bf16.mxu0 0
      %2684 = vmatpush1.bf16.msra.mxu0 %v2561
      %2685 = vmatprep.subr.bf16.mxu0 0
      %2686 = vmatpush1.bf16.msra.mxu0 %v2560
      %2687 = vmatprep.subr.bf16.mxu0 0
      %2688 = vmatpush1.bf16.msra.mxu0 %v2559
      %2689 = vmatprep.subr.bf16.mxu0 0
      %2690 = vmatpush1.bf16.msra.mxu0 %v2558
      %2691 = vmatprep.subr.bf16.mxu0 0
      %2692 = vmatpush1.bf16.msra.mxu0 %v2557
      %2693 = vmatprep.subr.bf16.mxu0 0
      %2694 = vmatpush1.bf16.msra.mxu0 %v2556
      %2695 = vmatprep.subr.bf16.mxu0 0
      %2696 = vmatpush1.bf16.msra.mxu0 %v2555
      %2697 = vmatprep.subr.bf16.mxu0 0
      %2698 = vmatpush1.bf16.msra.mxu0 %v2554
      %2699 = vmatprep.subr.bf16.mxu0 0
      %2700 = vmatpush2.bf16.msra.mxu0 0
      %2701 = vmatprep.subr.bf16.mxu0 0
      %2702 = vmatpush2.bf16.msra.mxu0 0
      %2703 = vmatprep.subr.bf16.mxu0 0
      %2704 = vmatpush2.bf16.msra.mxu0 0
      %2705 = vmatprep.subr.bf16.mxu0 0
      %2706 = vmatpush2.bf16.msra.mxu0 0
      %2707 = vmatprep.subr.bf16.mxu0 0
      %2708 = vmatpush2.bf16.msra.mxu0 0
      %2709 = vmatprep.subr.bf16.mxu0 0
      %2710 = vmatpush2.bf16.msra.mxu0 0
      %2711 = vmatprep.subr.bf16.mxu0 0
      %2712 = vmatpush2.bf16.msra.mxu0 0
      %2713 = vmatprep.subr.bf16.mxu0 0
      %2714 = vmatpush2.bf16.msra.mxu0 0
      %2715 = vmatprep.mubr.bf16.mxu0 0
      %2716 = vmatmul.mubr.bf16.gmra.mxu0 %v2371
      %v2717 = vpop.f32.mrf.mxu0
      %v2718 = vadd.f32 %v2621, %v2717
      %v2719 = vpop.f32.mrf.mxu0
      %v2720 = vpop.f32.mrf.mxu0
      %v2721 = vadd.f32 %v2624, %v2720
      %v2722 = vpop.f32.mrf.mxu0
      %2723 = vmatprep.mubr.bf16.mxu0 0
      %2724 = vmatmul.mubr.bf16.gmra.mxu0 %v2374
      %v2725 = vpop.f32.mrf.mxu0
      %v2726 = vadd.f32 %v2629, %v2725
      %v2727 = vpop.f32.mrf.mxu0
      %v2728 = vpop.f32.mrf.mxu0
      %v2729 = vadd.f32 %v2632, %v2728
      %v2730 = vpop.f32.mrf.mxu0
      %2731 = vmatprep.mubr.bf16.mxu0 0
      %2732 = vmatmul.mubr.bf16.gmra.mxu0 %v2377
      %v2733 = vpop.f32.mrf.mxu0
      %v2734 = vadd.f32 %v2637, %v2733
      %v2735 = vpop.f32.mrf.mxu0
      %v2736 = vpop.f32.mrf.mxu0
      %v2737 = vadd.f32 %v2640, %v2736
      %v2738 = vpop.f32.mrf.mxu0
      %2739 = vmatprep.mubr.bf16.mxu0 0
      %2740 = vmatmul.mubr.bf16.gmra.mxu0 %v2380
      %v2741 = vpop.f32.mrf.mxu0
      %v2742 = vadd.f32 %v2645, %v2741
      %v2743 = vpop.f32.mrf.mxu0
      %v2744 = vpop.f32.mrf.mxu0
      %v2745 = vadd.f32 %v2648, %v2744
      %v2746 = vpop.f32.mrf.mxu0
      %2747 = vmatprep.mubr.bf16.mxu0 0
      %2748 = vmatmul.mubr.bf16.gmra.mxu0 %v2383
      %v2749 = vpop.f32.mrf.mxu0
      %v2750 = vadd.f32 %v2653, %v2749
      %v2751 = vpop.f32.mrf.mxu0
      %v2752 = vpop.f32.mrf.mxu0
      %v2753 = vadd.f32 %v2656, %v2752
      %v2754 = vpop.f32.mrf.mxu0
      %2755 = vmatprep.mubr.bf16.mxu0 0
      %2756 = vmatmul.mubr.bf16.gmra.mxu0 %v2386
      %v2757 = vpop.f32.mrf.mxu0
      %v2758 = vadd.f32 %v2661, %v2757
      %v2759 = vpop.f32.mrf.mxu0
      %v2760 = vpop.f32.mrf.mxu0
      %v2761 = vadd.f32 %v2664, %v2760
      %v2762 = vpop.f32.mrf.mxu0
      %2763 = vmatprep.mubr.bf16.mxu0 0
      %2764 = vmatmul.mubr.bf16.gmra.mxu0 %v2389
      %v2765 = vpop.f32.mrf.mxu0
      %v2766 = vadd.f32 %v2669, %v2765
      %v2767 = vpop.f32.mrf.mxu0
      %v2768 = vpop.f32.mrf.mxu0
      %v2769 = vadd.f32 %v2672, %v2768
      %v2770 = vpop.f32.mrf.mxu0
      %2771 = vmatprep.mubr.bf16.mxu0 0
      %2772 = vmatmul.mubr.bf16.gmra.mxu0 %v2392
      %v2773 = vpop.f32.mrf.mxu0
      %v2774 = vadd.f32 %v2677, %v2773
      %v2775 = vpop.f32.mrf.mxu0
      %v2776 = vpop.f32.mrf.mxu0
      %v2777 = vadd.f32 %v2680, %v2776
      %v2778 = vpop.f32.mrf.mxu0
      %2779 = vdwg.mxu0
      %v2780 = vsub.f32 %v2025, %v2105
      %v2781 = vsub.f32 %v2026, %v2106
      %v2782 = vsub.f32 %v2027, %v2107
      %v2783 = vsub.f32 %v2028, %v2108
      %v2784 = vsub.f32 %v2029, %v2109
      %v2785 = vsub.f32 %v2030, %v2110
      %v2786 = vsub.f32 %v2031, %v2111
      %v2787 = vsub.f32 %v2032, %v2112
      %v2788 = vsub.f32 %v2033, %v2113
      %v2789 = vsub.f32 %v2034, %v2114
      %v2790 = vsub.f32 %v2035, %v2115
      %v2791 = vsub.f32 %v2036, %v2116
      %v2792 = vsub.f32 %v2037, %v2117
      %v2793 = vsub.f32 %v2038, %v2118
      %v2794 = vsub.f32 %v2039, %v2119
      %v2795 = vsub.f32 %v2040, %v2120
      %v2796 = vmul.f32 %v2780, 1.442695
      %v2797 = vpow.pop %v2796
      %v2798 = vmul.f32 %v2781, 1.442695
      %v2799 = vpow.pop %v2798
      %v2800 = vmul.f32 %v2782, 1.442695
      %v2801 = vpow.pop %v2800
      %v2802 = vmul.f32 %v2783, 1.442695
      %v2803 = vpow.pop %v2802
      %v2804 = vmul.f32 %v2784, 1.442695
      %v2805 = vpow.pop %v2804
      %v2806 = vmul.f32 %v2785, 1.442695
      %v2807 = vpow.pop %v2806
      %v2808 = vmul.f32 %v2786, 1.442695
      %v2809 = vpow.pop %v2808
      %v2810 = vmul.f32 %v2787, 1.442695
      %v2811 = vpow.pop %v2810
      %v2812 = vmul.f32 %v2788, 1.442695
      %v2813 = vpow.pop %v2812
      %v2814 = vmul.f32 %v2789, 1.442695
      %v2815 = vpow.pop %v2814
      %v2816 = vmul.f32 %v2790, 1.442695
      %v2817 = vpow.pop %v2816
      %v2818 = vmul.f32 %v2791, 1.442695
      %v2819 = vpow.pop %v2818
      %v2820 = vmul.f32 %v2792, 1.442695
      %v2821 = vpow.pop %v2820
      %v2822 = vmul.f32 %v2793, 1.442695
      %v2823 = vpow.pop %v2822
      %v2824 = vmul.f32 %v2794, 1.442695
      %v2825 = vpow.pop %v2824
      %v2826 = vmul.f32 %v2795, 1.442695
      %v2827 = vpow.pop %v2826
      %s2828 = scalar_lea.vmem [#allocation3], 128
      %v2829 = vld [vmem:[%s2828] sm:$0xff]
      %v2830 = vld [vmem:[%s2828 + $0x8] sm:$0xff]
      %v2831 = vld [vmem:[%s2828 + $0x10] sm:$0xff]
      %v2832 = vld [vmem:[%s2828 + $0x18] sm:$0xff]
      %v2833 = vld [vmem:[%s2828 + $0x20] sm:$0xff]
      %v2834 = vld [vmem:[%s2828 + $0x28] sm:$0xff]
      %v2835 = vld [vmem:[%s2828 + $0x30] sm:$0xff]
      %v2836 = vld [vmem:[%s2828 + $0x38] sm:$0xff]
      %v2837 = vld [vmem:[%s2828 + $0x40] sm:$0xff]
      %v2838 = vld [vmem:[%s2828 + $0x48] sm:$0xff]
      %v2839 = vld [vmem:[%s2828 + $0x50] sm:$0xff]
      %v2840 = vld [vmem:[%s2828 + $0x58] sm:$0xff]
      %v2841 = vld [vmem:[%s2828 + $0x60] sm:$0xff]
      %v2842 = vld [vmem:[%s2828 + $0x68] sm:$0xff]
      %v2843 = vld [vmem:[%s2828 + $0x70] sm:$0xff]
      %v2844 = vld [vmem:[%s2828 + $0x78] sm:$0xff]
      %2846 = vset.pattern.permute.xlu0 0
      %2847 = vperm.xlu0 %2846, %v2797
      %v2848 = vpop.permute.xlu0 %2847
      %2851 = vset.pattern.permute.xlu0 0
      %2852 = vperm.xlu0 %2851, %v2799
      %v2853 = vpop.permute.xlu0 %2852
      %2856 = vset.pattern.permute.xlu0 0
      %2857 = vperm.xlu0 %2856, %v2801
      %v2858 = vpop.permute.xlu0 %2857
      %2861 = vset.pattern.permute.xlu0 0
      %2862 = vperm.xlu0 %2861, %v2803
      %v2863 = vpop.permute.xlu0 %2862
      %2866 = vset.pattern.permute.xlu0 0
      %2867 = vperm.xlu0 %2866, %v2805
      %v2868 = vpop.permute.xlu0 %2867
      %2871 = vset.pattern.permute.xlu0 0
      %2872 = vperm.xlu0 %2871, %v2807
      %v2873 = vpop.permute.xlu0 %2872
      %2876 = vset.pattern.permute.xlu0 0
      %2877 = vperm.xlu0 %2876, %v2809
      %v2878 = vpop.permute.xlu0 %2877
      %2881 = vset.pattern.permute.xlu0 0
      %2882 = vperm.xlu0 %2881, %v2811
      %v2883 = vpop.permute.xlu0 %2882
      %2886 = vset.pattern.permute.xlu0 0
      %2887 = vperm.xlu0 %2886, %v2813
      %v2888 = vpop.permute.xlu0 %2887
      %2891 = vset.pattern.permute.xlu0 0
      %2892 = vperm.xlu0 %2891, %v2815
      %v2893 = vpop.permute.xlu0 %2892
      %2896 = vset.pattern.permute.xlu0 0
      %2897 = vperm.xlu0 %2896, %v2817
      %v2898 = vpop.permute.xlu0 %2897
      %2901 = vset.pattern.permute.xlu0 0
      %2902 = vperm.xlu0 %2901, %v2819
      %v2903 = vpop.permute.xlu0 %2902
      %2906 = vset.pattern.permute.xlu0 0
      %2907 = vperm.xlu0 %2906, %v2821
      %v2908 = vpop.permute.xlu0 %2907
      %2911 = vset.pattern.permute.xlu0 0
      %2912 = vperm.xlu0 %2911, %v2823
      %v2913 = vpop.permute.xlu0 %2912
      %2916 = vset.pattern.permute.xlu0 0
      %2917 = vperm.xlu0 %2916, %v2825
      %v2918 = vpop.permute.xlu0 %2917
      %2921 = vset.pattern.permute.xlu0 0
      %2922 = vperm.xlu0 %2921, %v2827
      %v2923 = vpop.permute.xlu0 %2922
      %v2925 = vmul.f32 %v2829, %v2848
      %v2926 = vmul.f32 %v2830, %v2853
      %v2927 = vmul.f32 %v2831, %v2858
      %v2928 = vmul.f32 %v2832, %v2863
      %v2929 = vmul.f32 %v2833, %v2868
      %v2930 = vmul.f32 %v2834, %v2873
      %v2931 = vmul.f32 %v2835, %v2878
      %v2932 = vmul.f32 %v2836, %v2883
      %v2933 = vmul.f32 %v2837, %v2888
      %v2934 = vmul.f32 %v2838, %v2893
      %v2935 = vmul.f32 %v2839, %v2898
      %v2936 = vmul.f32 %v2840, %v2903
      %v2937 = vmul.f32 %v2841, %v2908
      %v2938 = vmul.f32 %v2842, %v2913
      %v2939 = vmul.f32 %v2843, %v2918
      %v2940 = vmul.f32 %v2844, %v2923
      %v2941 = vadd.f32 %v2925, %v2718
      %v2942 = vadd.f32 %v2926, %v2721
      %v2943 = vadd.f32 %v2927, %v2726
      %v2944 = vadd.f32 %v2928, %v2729
      %v2945 = vadd.f32 %v2929, %v2734
      %v2946 = vadd.f32 %v2930, %v2737
      %v2947 = vadd.f32 %v2931, %v2742
      %v2948 = vadd.f32 %v2932, %v2745
      %v2949 = vadd.f32 %v2933, %v2750
      %v2950 = vadd.f32 %v2934, %v2753
      %v2951 = vadd.f32 %v2935, %v2758
      %v2952 = vadd.f32 %v2936, %v2761
      %v2953 = vadd.f32 %v2937, %v2766
      %v2954 = vadd.f32 %v2938, %v2769
      %v2955 = vadd.f32 %v2939, %v2774
      %v2956 = vadd.f32 %v2940, %v2777
      %2957 = vst.msk [vmem:[%s2828] sm:$0xff] %vm1755, %v2941
      %2958 = vst.msk [vmem:[%s2828 + $0x8] sm:$0xff] %vm1755, %v2942
      %2959 = vst.msk [vmem:[%s2828 + $0x10] sm:$0xff] %vm1755, %v2943
      %2960 = vst.msk [vmem:[%s2828 + $0x18] sm:$0xff] %vm1755, %v2944
      %2961 = vst.msk [vmem:[%s2828 + $0x20] sm:$0xff] %vm1755, %v2945
      %2962 = vst.msk [vmem:[%s2828 + $0x28] sm:$0xff] %vm1755, %v2946
      %2963 = vst.msk [vmem:[%s2828 + $0x30] sm:$0xff] %vm1755, %v2947
      %2964 = vst.msk [vmem:[%s2828 + $0x38] sm:$0xff] %vm1755, %v2948
      %2965 = vst.msk [vmem:[%s2828 + $0x40] sm:$0xff] %vm1755, %v2949
      %2966 = vst.msk [vmem:[%s2828 + $0x48] sm:$0xff] %vm1755, %v2950
      %2967 = vst.msk [vmem:[%s2828 + $0x50] sm:$0xff] %vm1755, %v2951
      %2968 = vst.msk [vmem:[%s2828 + $0x58] sm:$0xff] %vm1755, %v2952
      %2969 = vst.msk [vmem:[%s2828 + $0x60] sm:$0xff] %vm1755, %v2953
      %2970 = vst.msk [vmem:[%s2828 + $0x68] sm:$0xff] %vm1755, %v2954
      %2971 = vst.msk [vmem:[%s2828 + $0x70] sm:$0xff] %vm1755, %v2955
      %2972 = vst.msk [vmem:[%s2828 + $0x78] sm:$0xff] %vm1755, %v2956
      %2973 = vst.msk [vmem:[%s2024] sm:$0xff] %vm1772, %v2105
      %2974 = vst.msk [vmem:[%s2024 + $0x8] sm:$0xff] %vm1772, %v2106
      %2975 = vst.msk [vmem:[%s2024 + $0x10] sm:$0xff] %vm1772, %v2107
      %2976 = vst.msk [vmem:[%s2024 + $0x18] sm:$0xff] %vm1772, %v2108
      %2977 = vst.msk [vmem:[%s2024 + $0x20] sm:$0xff] %vm1772, %v2109
      %2978 = vst.msk [vmem:[%s2024 + $0x28] sm:$0xff] %vm1772, %v2110
      %2979 = vst.msk [vmem:[%s2024 + $0x30] sm:$0xff] %vm1772, %v2111
      %2980 = vst.msk [vmem:[%s2024 + $0x38] sm:$0xff] %vm1772, %v2112
      %2981 = vst.msk [vmem:[%s2024 + $0x40] sm:$0xff] %vm1772, %v2113
      %2982 = vst.msk [vmem:[%s2024 + $0x48] sm:$0xff] %vm1772, %v2114
      %2983 = vst.msk [vmem:[%s2024 + $0x50] sm:$0xff] %vm1772, %v2115
      %2984 = vst.msk [vmem:[%s2024 + $0x58] sm:$0xff] %vm1772, %v2116
      %2985 = vst.msk [vmem:[%s2024 + $0x60] sm:$0xff] %vm1772, %v2117
      %2986 = vst.msk [vmem:[%s2024 + $0x68] sm:$0xff] %vm1772, %v2118
      %2987 = vst.msk [vmem:[%s2024 + $0x70] sm:$0xff] %vm1772, %v2119
      %2988 = vst.msk [vmem:[%s2024 + $0x78] sm:$0xff] %vm1772, %v2120
      // Predicated region
      $region45: #{inter_graph_attention.6} parent=39 // pred_check
        %p2989 = pneg %p326
      $region46: #{inter_graph_attention.6} parent=39 // pred_check_branch
        %2991 = sbr.rel (%p2989) target = $region48
      $region47: #{inter_graph_attention.6} parent=39 // pred_region
        %v2992 = vld [vmem:[#allocation3] sm:$0xff]
        %v2993 = vld [vmem:[#allocation3 + $0x8] sm:$0xff]
        %v2994 = vld [vmem:[#allocation3 + $0x10] sm:$0xff]
        %v2995 = vld [vmem:[#allocation3 + $0x18] sm:$0xff]
        %v2996 = vld [vmem:[#allocation3 + $0x20] sm:$0xff]
        %v2997 = vld [vmem:[#allocation3 + $0x28] sm:$0xff]
        %v2998 = vld [vmem:[#allocation3 + $0x30] sm:$0xff]
        %v2999 = vld [vmem:[#allocation3 + $0x38] sm:$0xff]
        %v3000 = vld [vmem:[#allocation3 + $0x40] sm:$0xff]
        %v3001 = vld [vmem:[#allocation3 + $0x48] sm:$0xff]
        %v3002 = vld [vmem:[#allocation3 + $0x50] sm:$0xff]
        %v3003 = vld [vmem:[#allocation3 + $0x58] sm:$0xff]
        %v3004 = vld [vmem:[#allocation3 + $0x60] sm:$0xff]
        %v3005 = vld [vmem:[#allocation3 + $0x68] sm:$0xff]
        %v3006 = vld [vmem:[#allocation3 + $0x70] sm:$0xff]
        %v3007 = vld [vmem:[#allocation3 + $0x78] sm:$0xff]
        %v3008 = vmax.f32 %v2992, 1e-20
        %v3009 = vmax.f32 %v2993, 1e-20
        %v3010 = vmax.f32 %v2994, 1e-20
        %v3011 = vmax.f32 %v2995, 1e-20
        %v3012 = vmax.f32 %v2996, 1e-20
        %v3013 = vmax.f32 %v2997, 1e-20
        %v3014 = vmax.f32 %v2998, 1e-20
        %v3015 = vmax.f32 %v2999, 1e-20
        %v3016 = vmax.f32 %v3000, 1e-20
        %v3017 = vmax.f32 %v3001, 1e-20
        %v3018 = vmax.f32 %v3002, 1e-20
        %v3019 = vmax.f32 %v3003, 1e-20
        %v3020 = vmax.f32 %v3004, 1e-20
        %v3021 = vmax.f32 %v3005, 1e-20
        %v3022 = vmax.f32 %v3006, 1e-20
        %v3023 = vmax.f32 %v3007, 1e-20
        %v3024 = vrcp.pop %v3008
        %v3025 = vrcp.pop %v3009
        %v3026 = vrcp.pop %v3010
        %v3027 = vrcp.pop %v3011
        %v3028 = vrcp.pop %v3012
        %v3029 = vrcp.pop %v3013
        %v3030 = vrcp.pop %v3014
        %v3031 = vrcp.pop %v3015
        %v3032 = vrcp.pop %v3016
        %v3033 = vrcp.pop %v3017
        %v3034 = vrcp.pop %v3018
        %v3035 = vrcp.pop %v3019
        %v3036 = vrcp.pop %v3020
        %v3037 = vrcp.pop %v3021
        %v3038 = vrcp.pop %v3022
        %v3039 = vrcp.pop %v3023
        %3041 = vset.pattern.permute.xlu0 32
        %3042 = vperm.xlu0 %3041, %v3024
        %v3043 = vpop.permute.xlu0 %3042
        %3046 = vset.pattern.permute.xlu0 32
        %3047 = vperm.xlu0 %3046, %v3025
        %v3048 = vpop.permute.xlu0 %3047
        %3051 = vset.pattern.permute.xlu0 32
        %3052 = vperm.xlu0 %3051, %v3026
        %v3053 = vpop.permute.xlu0 %3052
        %3056 = vset.pattern.permute.xlu0 32
        %3057 = vperm.xlu0 %3056, %v3027
        %v3058 = vpop.permute.xlu0 %3057
        %3061 = vset.pattern.permute.xlu0 32
        %3062 = vperm.xlu0 %3061, %v3028
        %v3063 = vpop.permute.xlu0 %3062
        %3066 = vset.pattern.permute.xlu0 32
        %3067 = vperm.xlu0 %3066, %v3029
        %v3068 = vpop.permute.xlu0 %3067
        %3071 = vset.pattern.permute.xlu0 32
        %3072 = vperm.xlu0 %3071, %v3030
        %v3073 = vpop.permute.xlu0 %3072
        %3076 = vset.pattern.permute.xlu0 32
        %3077 = vperm.xlu0 %3076, %v3031
        %v3078 = vpop.permute.xlu0 %3077
        %3081 = vset.pattern.permute.xlu0 32
        %3082 = vperm.xlu0 %3081, %v3032
        %v3083 = vpop.permute.xlu0 %3082
        %3086 = vset.pattern.permute.xlu0 32
        %3087 = vperm.xlu0 %3086, %v3033
        %v3088 = vpop.permute.xlu0 %3087
        %3091 = vset.pattern.permute.xlu0 32
        %3092 = vperm.xlu0 %3091, %v3034
        %v3093 = vpop.permute.xlu0 %3092
        %3096 = vset.pattern.permute.xlu0 32
        %3097 = vperm.xlu0 %3096, %v3035
        %v3098 = vpop.permute.xlu0 %3097
        %3101 = vset.pattern.permute.xlu0 32
        %3102 = vperm.xlu0 %3101, %v3036
        %v3103 = vpop.permute.xlu0 %3102
        %3106 = vset.pattern.permute.xlu0 32
        %3107 = vperm.xlu0 %3106, %v3037
        %v3108 = vpop.permute.xlu0 %3107
        %3111 = vset.pattern.permute.xlu0 32
        %3112 = vperm.xlu0 %3111, %v3038
        %v3113 = vpop.permute.xlu0 %3112
        %3116 = vset.pattern.permute.xlu0 32
        %3117 = vperm.xlu0 %3116, %v3039
        %v3118 = vpop.permute.xlu0 %3117
        %v3120 = vmul.f32 %v2992, %v3043
        %v3121 = vmul.f32 %v2993, %v3048
        %v3122 = vmul.f32 %v2994, %v3053
        %v3123 = vmul.f32 %v2995, %v3058
        %v3124 = vmul.f32 %v2996, %v3063
        %v3125 = vmul.f32 %v2997, %v3068
        %v3126 = vmul.f32 %v2998, %v3073
        %v3127 = vmul.f32 %v2999, %v3078
        %v3128 = vmul.f32 %v3000, %v3083
        %v3129 = vmul.f32 %v3001, %v3088
        %v3130 = vmul.f32 %v3002, %v3093
        %v3131 = vmul.f32 %v3003, %v3098
        %v3132 = vmul.f32 %v3004, %v3103
        %v3133 = vmul.f32 %v3005, %v3108
        %v3134 = vmul.f32 %v3006, %v3113
        %v3135 = vmul.f32 %v3007, %v3118
        %v3136 = vld [vmem:[%s2828] sm:$0xff]
        %v3137 = vld [vmem:[%s2828 + $0x8] sm:$0xff]
        %v3138 = vld [vmem:[%s2828 + $0x10] sm:$0xff]
        %v3139 = vld [vmem:[%s2828 + $0x18] sm:$0xff]
        %v3140 = vld [vmem:[%s2828 + $0x20] sm:$0xff]
        %v3141 = vld [vmem:[%s2828 + $0x28] sm:$0xff]
        %v3142 = vld [vmem:[%s2828 + $0x30] sm:$0xff]
        %v3143 = vld [vmem:[%s2828 + $0x38] sm:$0xff]
        %v3144 = vld [vmem:[%s2828 + $0x40] sm:$0xff]
        %v3145 = vld [vmem:[%s2828 + $0x48] sm:$0xff]
        %v3146 = vld [vmem:[%s2828 + $0x50] sm:$0xff]
        %v3147 = vld [vmem:[%s2828 + $0x58] sm:$0xff]
        %v3148 = vld [vmem:[%s2828 + $0x60] sm:$0xff]
        %v3149 = vld [vmem:[%s2828 + $0x68] sm:$0xff]
        %v3150 = vld [vmem:[%s2828 + $0x70] sm:$0xff]
        %v3151 = vld [vmem:[%s2828 + $0x78] sm:$0xff]
        %v3152 = vmax.f32 %v3136, 1e-20
        %v3153 = vmax.f32 %v3137, 1e-20
        %v3154 = vmax.f32 %v3138, 1e-20
        %v3155 = vmax.f32 %v3139, 1e-20
        %v3156 = vmax.f32 %v3140, 1e-20
        %v3157 = vmax.f32 %v3141, 1e-20
        %v3158 = vmax.f32 %v3142, 1e-20
        %v3159 = vmax.f32 %v3143, 1e-20
        %v3160 = vmax.f32 %v3144, 1e-20
        %v3161 = vmax.f32 %v3145, 1e-20
        %v3162 = vmax.f32 %v3146, 1e-20
        %v3163 = vmax.f32 %v3147, 1e-20
        %v3164 = vmax.f32 %v3148, 1e-20
        %v3165 = vmax.f32 %v3149, 1e-20
        %v3166 = vmax.f32 %v3150, 1e-20
        %v3167 = vmax.f32 %v3151, 1e-20
        %v3168 = vrcp.pop %v3152
        %v3169 = vrcp.pop %v3153
        %v3170 = vrcp.pop %v3154
        %v3171 = vrcp.pop %v3155
        %v3172 = vrcp.pop %v3156
        %v3173 = vrcp.pop %v3157
        %v3174 = vrcp.pop %v3158
        %v3175 = vrcp.pop %v3159
        %v3176 = vrcp.pop %v3160
        %v3177 = vrcp.pop %v3161
        %v3178 = vrcp.pop %v3162
        %v3179 = vrcp.pop %v3163
        %v3180 = vrcp.pop %v3164
        %v3181 = vrcp.pop %v3165
        %v3182 = vrcp.pop %v3166
        %v3183 = vrcp.pop %v3167
        %3185 = vset.pattern.permute.xlu0 32
        %3186 = vperm.xlu0 %3185, %v3168
        %v3187 = vpop.permute.xlu0 %3186
        %3190 = vset.pattern.permute.xlu0 32
        %3191 = vperm.xlu0 %3190, %v3169
        %v3192 = vpop.permute.xlu0 %3191
        %3195 = vset.pattern.permute.xlu0 32
        %3196 = vperm.xlu0 %3195, %v3170
        %v3197 = vpop.permute.xlu0 %3196
        %3200 = vset.pattern.permute.xlu0 32
        %3201 = vperm.xlu0 %3200, %v3171
        %v3202 = vpop.permute.xlu0 %3201
        %3205 = vset.pattern.permute.xlu0 32
        %3206 = vperm.xlu0 %3205, %v3172
        %v3207 = vpop.permute.xlu0 %3206
        %3210 = vset.pattern.permute.xlu0 32
        %3211 = vperm.xlu0 %3210, %v3173
        %v3212 = vpop.permute.xlu0 %3211
        %3215 = vset.pattern.permute.xlu0 32
        %3216 = vperm.xlu0 %3215, %v3174
        %v3217 = vpop.permute.xlu0 %3216
        %3220 = vset.pattern.permute.xlu0 32
        %3221 = vperm.xlu0 %3220, %v3175
        %v3222 = vpop.permute.xlu0 %3221
        %3225 = vset.pattern.permute.xlu0 32
        %3226 = vperm.xlu0 %3225, %v3176
        %v3227 = vpop.permute.xlu0 %3226
        %3230 = vset.pattern.permute.xlu0 32
        %3231 = vperm.xlu0 %3230, %v3177
        %v3232 = vpop.permute.xlu0 %3231
        %3235 = vset.pattern.permute.xlu0 32
        %3236 = vperm.xlu0 %3235, %v3178
        %v3237 = vpop.permute.xlu0 %3236
        %3240 = vset.pattern.permute.xlu0 32
        %3241 = vperm.xlu0 %3240, %v3179
        %v3242 = vpop.permute.xlu0 %3241
        %3245 = vset.pattern.permute.xlu0 32
        %3246 = vperm.xlu0 %3245, %v3180
        %v3247 = vpop.permute.xlu0 %3246
        %3250 = vset.pattern.permute.xlu0 32
        %3251 = vperm.xlu0 %3250, %v3181
        %v3252 = vpop.permute.xlu0 %3251
        %3255 = vset.pattern.permute.xlu0 32
        %3256 = vperm.xlu0 %3255, %v3182
        %v3257 = vpop.permute.xlu0 %3256
        %3260 = vset.pattern.permute.xlu0 32
        %3261 = vperm.xlu0 %3260, %v3183
        %v3262 = vpop.permute.xlu0 %3261
        %v3264 = vmul.f32 %v3136, %v3187
        %v3265 = vmul.f32 %v3137, %v3192
        %v3266 = vmul.f32 %v3138, %v3197
        %v3267 = vmul.f32 %v3139, %v3202
        %v3268 = vmul.f32 %v3140, %v3207
        %v3269 = vmul.f32 %v3141, %v3212
        %v3270 = vmul.f32 %v3142, %v3217
        %v3271 = vmul.f32 %v3143, %v3222
        %v3272 = vmul.f32 %v3144, %v3227
        %v3273 = vmul.f32 %v3145, %v3232
        %v3274 = vmul.f32 %v3146, %v3237
        %v3275 = vmul.f32 %v3147, %v3242
        %v3276 = vmul.f32 %v3148, %v3247
        %v3277 = vmul.f32 %v3149, %v3252
        %v3278 = vmul.f32 %v3150, %v3257
        %v3279 = vmul.f32 %v3151, %v3262
        %3296 = vrot.lane.b32.xlu0 %v3264, 32
        %v3297 = vpop.permute.xlu0 %3296
        %3298 = vrot.lane.b32.xlu0 %v3265, 32
        %v3299 = vpop.permute.xlu0 %3298
        %3300 = vrot.lane.b32.xlu0 %v3266, 32
        %v3301 = vpop.permute.xlu0 %3300
        %3302 = vrot.lane.b32.xlu0 %v3267, 32
        %v3303 = vpop.permute.xlu0 %3302
        %3304 = vrot.lane.b32.xlu0 %v3268, 32
        %v3305 = vpop.permute.xlu0 %3304
        %3306 = vrot.lane.b32.xlu0 %v3269, 32
        %v3307 = vpop.permute.xlu0 %3306
        %3308 = vrot.lane.b32.xlu0 %v3270, 32
        %v3309 = vpop.permute.xlu0 %3308
        %3310 = vrot.lane.b32.xlu0 %v3271, 32
        %v3311 = vpop.permute.xlu0 %3310
        %3312 = vrot.lane.b32.xlu0 %v3272, 32
        %v3313 = vpop.permute.xlu0 %3312
        %3314 = vrot.lane.b32.xlu0 %v3273, 32
        %v3315 = vpop.permute.xlu0 %3314
        %3316 = vrot.lane.b32.xlu0 %v3274, 32
        %v3317 = vpop.permute.xlu0 %3316
        %3318 = vrot.lane.b32.xlu0 %v3275, 32
        %v3319 = vpop.permute.xlu0 %3318
        %3320 = vrot.lane.b32.xlu0 %v3276, 32
        %v3321 = vpop.permute.xlu0 %3320
        %3322 = vrot.lane.b32.xlu0 %v3277, 32
        %v3323 = vpop.permute.xlu0 %3322
        %3324 = vrot.lane.b32.xlu0 %v3278, 32
        %v3325 = vpop.permute.xlu0 %3324
        %3326 = vrot.lane.b32.xlu0 %v3279, 32
        %v3327 = vpop.permute.xlu0 %3326
        %vm3344 = vcmask 261120
        %v3345 = vsel %vm3344, %v3120, %v3297
        %v3346 = vsel %vm3344, %v3121, %v3299
        %v3347 = vsel %vm3344, %v3122, %v3301
        %v3348 = vsel %vm3344, %v3123, %v3303
        %v3349 = vsel %vm3344, %v3124, %v3305
        %v3350 = vsel %vm3344, %v3125, %v3307
        %v3351 = vsel %vm3344, %v3126, %v3309
        %v3352 = vsel %vm3344, %v3127, %v3311
        %v3353 = vsel %vm3344, %v3128, %v3313
        %v3354 = vsel %vm3344, %v3129, %v3315
        %v3355 = vsel %vm3344, %v3130, %v3317
        %v3356 = vsel %vm3344, %v3131, %v3319
        %v3357 = vsel %vm3344, %v3132, %v3321
        %v3358 = vsel %vm3344, %v3133, %v3323
        %v3359 = vsel %vm3344, %v3134, %v3325
        %v3360 = vsel %vm3344, %v3135, %v3327
        %v3361 = vld [vmem:[%s4] sm:$0x1]
        %v3363 = vlaneseq
        %v3364 = vshrl.u32 %v3363, 7
        %v3365 = vsub.s32 0, %v3364
        %v3366 = vrot.slane %v3361, %v3365
        %v3368 = vadd.f32 %v3345, %v3366
        %v3369 = vadd.f32 %v3346, %v3366
        %v3370 = vadd.f32 %v3347, %v3366
        %v3371 = vadd.f32 %v3348, %v3366
        %v3372 = vadd.f32 %v3349, %v3366
        %v3373 = vadd.f32 %v3350, %v3366
        %v3374 = vadd.f32 %v3351, %v3366
        %v3375 = vadd.f32 %v3352, %v3366
        %v3376 = vadd.f32 %v3353, %v3366
        %v3377 = vadd.f32 %v3354, %v3366
        %v3378 = vadd.f32 %v3355, %v3366
        %v3379 = vadd.f32 %v3356, %v3366
        %v3380 = vadd.f32 %v3357, %v3366
        %v3381 = vadd.f32 %v3358, %v3366
        %v3382 = vadd.f32 %v3359, %v3366
        %v3383 = vadd.f32 %v3360, %v3366
        %3384 = vst.msk [vmem:[%s323] sm:$0xff] %vm1755, %v3368
        %3385 = vst.msk [vmem:[%s323 + $0x8] sm:$0xff] %vm1755, %v3369
        %3386 = vst.msk [vmem:[%s323 + $0x10] sm:$0xff] %vm1755, %v3370
        %3387 = vst.msk [vmem:[%s323 + $0x18] sm:$0xff] %vm1755, %v3371
        %3388 = vst.msk [vmem:[%s323 + $0x20] sm:$0xff] %vm1755, %v3372
        %3389 = vst.msk [vmem:[%s323 + $0x28] sm:$0xff] %vm1755, %v3373
        %3390 = vst.msk [vmem:[%s323 + $0x30] sm:$0xff] %vm1755, %v3374
        %3391 = vst.msk [vmem:[%s323 + $0x38] sm:$0xff] %vm1755, %v3375
        %3392 = vst.msk [vmem:[%s323 + $0x40] sm:$0xff] %vm1755, %v3376
        %3393 = vst.msk [vmem:[%s323 + $0x48] sm:$0xff] %vm1755, %v3377
        %3394 = vst.msk [vmem:[%s323 + $0x50] sm:$0xff] %vm1755, %v3378
        %3395 = vst.msk [vmem:[%s323 + $0x58] sm:$0xff] %vm1755, %v3379
        %3396 = vst.msk [vmem:[%s323 + $0x60] sm:$0xff] %vm1755, %v3380
        %3397 = vst.msk [vmem:[%s323 + $0x68] sm:$0xff] %vm1755, %v3381
        %3398 = vst.msk [vmem:[%s323 + $0x70] sm:$0xff] %vm1755, %v3382
        %3399 = vst.msk [vmem:[%s323 + $0x78] sm:$0xff] %vm1755, %v3383
      $region48: #{inter_graph_attention.6} parent=39 // pred_fallthru
        _
      %s3400 = smul.u32 16, %s20
      %p3401 = scmp.lt.s32.totalorder %s3400, 31
      %s3402 = scalar_select %p3401, %s3400, 31
      %s3403 = smul.addr %s3402, 8
      %s3404 = scalar_lea.vmem %s5, %s3403
      // Predicated region
      $region49: #{inter_graph_attention.6} parent=39 // pred_check
        %p3405 = pneg %p173
      $region50: #{inter_graph_attention.6} parent=39 // pred_check_branch
        %3407 = sbr.rel (%p3405) target = $region52
      $region51: #{inter_graph_attention.6} parent=39 // pred_region
        %s3408 = smul.u32 16, %s20
      $region52: #{inter_graph_attention.6} parent=39 // pred_fallthru
        _
    $region40: #{inter_graph_attention.6} parent=5 // pred_fallthru
      _
    %p3409 = scmp.le.s32.totalorder 2, %s11
    // Predicated region
    $region53: #{inter_graph_attention.6} parent=5 // pred_check
      %p3410 = pneg %p3409
    $region54: #{inter_graph_attention.6} parent=5 // pred_check_branch
      %3412 = sbr.rel (%p3410) target = $region56
    $region55: #{inter_graph_attention.6} parent=5 // pred_region
      %s3413 = ssub.s32 %s11, 2
      // Predicated region
      $region57: #{inter_graph_attention.6} parent=55 // pred_check
        %p3414 = pneg %p179
      $region58: #{inter_graph_attention.6} parent=55 // pred_check_branch
        %3416 = sbr.rel (%p3414) target = $region60
      $region59: #{inter_graph_attention.6} parent=55 // pred_region
        %s3417 = smul.u32 16, %s22
        %p3418 = scmp.lt.s32.totalorder %s3417, 31
        %s3419 = scalar_select %p3418, %s3417, 31
        %s3420 = smul.addr %s3419, 8
        %s3421 = scalar_lea.vmem %s5, %s3420
      $region60: #{inter_graph_attention.6} parent=55 // pred_fallthru
        _
    $region56: #{inter_graph_attention.6} parent=5 // pred_fallthru
      _
  $region6: #{inter_graph_attention.6} parent=0 // loop_footer
    %s15 = sadd.s32 1, %s11
  $region7: #{inter_graph_attention.6} parent=0 // loop_footer_branch
    %10 = sbr.rel target = $region3
  $region8: #{inter_graph_attention.6} parent=0 // loop_exit
    _

// kernel: inter_graph_attention.7
$region0: #{inter_graph_attention.7}
  #allocation0 [shape = 'u32[]', space=smem, size = 0x4, offset = 0x4, fixed_abs, tag = 'smem constant byte address 0x4 - core index']
  #allocation1 [shape = 'u32[144,128]{1,0:T(1,128)}', space=vmem, size = 0x12000, scoped, tag = 'internal scratch']
  #allocation2 [shape = 'f32[2,128,1]{2,1,0:T(8,128)}', space=vmem, size = 0x20000, scoped, tag = 'scratch operand']
  #allocation3 [shape = 'f32[2,128,64]{2,1,0:T(8,128)}', space=vmem, size = 0x20000, scoped, tag = 'scratch operand']
  %s0 = inlined_call_operand.vmem [shape: bf16[2,256,64], index: 0, kind: input, shape index: {}]
  %s1 = inlined_call_operand.vmem [shape: f32[2,256], index: 1, kind: input, shape index: {}]
  %s2 = inlined_call_operand.vmem [shape: f32[384,2], index: 2, kind: input, shape index: {}]
  %s3 = inlined_call_operand.vmem [shape: bf16[384,256], index: 3, kind: input, shape index: {}]
  %s4 = inlined_call_operand.vmem [shape: f32[1,64], index: 4, kind: input, shape index: {}]
  %s5 = inlined_call_operand.vmem [shape: f32[384,64], index: 5, kind: output, shape index: {}]
  %s6 = sld [smem:[#allocation0]]
  $region61: #{inter_graph_attention.7} parent=0
    _
  %s8 = ssub.s32 1, %s6
  %s9 = scalar_select 0, %s8, %s6
  loop: start=0, step=1, limit=5
  $region2: #{inter_graph_attention.7} parent=0 // loop_pre_header
    _
  $region3: #{inter_graph_attention.7} parent=0 // loop_header
    %s11 = sphi 0, %s15
    %p12 = scmp.ge.s32.totalorder %s11, 5
    %s18 = sphi 0, %s30
    %s19 = sphi 0, %s26
    %s20 = sphi 0, %s18
    %s21 = sphi 0, %s19
    %s22 = sphi 0, %s20
    %s23 = sphi 0, %s21
    %s33 = sphi 0, %s35
    %s36 = sphi 0, %s33
    %s37 = sphi 0, %s36
    %s53 = sphi 0, %s37
    %s59 = sphi 0, %s61
    %s62 = sphi 0, %s59
    %s63 = sphi 0, %s62
    %s79 = sphi 0, %s63
    %s85 = sphi 0, %s87
    %s88 = sphi 0, %s85
    %s89 = sphi 0, %s88
    %s105 = sphi 0, %s89
    %s113 = sphi 0, %s115
    %s116 = sphi 0, %s113
    %s117 = sphi 0, %s116
    %s133 = sphi 0, %s117
    %s137 = sphi 0, %s137
    %s139 = sphi 0, %s137
    %s140 = sphi 0, %s139
    %s154 = sphi 0, %s140
    %s160 = sphi 0, %s162
    %s163 = sphi 0, %s160
    %s164 = sphi 0, %s163
    %s180 = sphi 0, %s164
  $region4: #{inter_graph_attention.7} parent=0 // loop_header_branch
    %14 = sbr.rel (%p12) target = $region8
  $region5: #{inter_graph_attention.7} parent=0 // loop_body
    %s16 = ssub.s32 %s11, 1
    %s17 = ssub.s32 %s11, 2
    %s24 = sadd.s32 1, %s19
    %p25 = scmp.ge.s32.totalorder %s24, 1
    %s26 = scalar_select %p25, 0, %s24
    %s27 = sadd.s32 1, %s18
    %s28 = scalar_select %p25, %s27, %s18
    %p29 = scmp.ge.s32.totalorder %s28, 3
    %s30 = scalar_select %p29, 0, %s28
    %s31 = ssub.s32 %s19, %s26
    %p32 = scmp.eq.s32.totalorder %s31, 0
    %s34 = sadd.s32 %s33, 1
    %s35 = scalar_select %p32, %s33, %s34
    %p38 = pneg %p32
    %p39 = scmp.eq.s32.totalorder %s11, 2
    %p40 = por %p38, %p39
    %p41 = scmp.ne.s32.totalorder %s33, %s36
    %p42 = scmp.eq.s32.totalorder %s11, 0
    %p43 = por %p41, %p42
    %p44 = scmp.ne.s32.totalorder %s33, %s36
    %p45 = scmp.eq.s32.totalorder %s16, 2
    %p46 = por %p44, %p45
    %p47 = scmp.ne.s32.totalorder %s36, %s37
    %p48 = scmp.eq.s32.totalorder %s16, 0
    %p49 = por %p47, %p48
    %p50 = scmp.ne.s32.totalorder %s36, %s37
    %p51 = scmp.eq.s32.totalorder %s17, 2
    %p52 = por %p50, %p51
    %p54 = scmp.ne.s32.totalorder %s37, %s53
    %p55 = scmp.eq.s32.totalorder %s17, 0
    %p56 = por %p54, %p55
    %s57 = ssub.s32 %s19, %s26
    %p58 = scmp.eq.s32.totalorder %s57, 0
    %s60 = sadd.s32 %s59, 1
    %s61 = scalar_select %p58, %s59, %s60
    %p64 = pneg %p58
    %p65 = scmp.eq.s32.totalorder %s11, 2
    %p66 = por %p64, %p65
    %p67 = scmp.ne.s32.totalorder %s59, %s62
    %p68 = scmp.eq.s32.totalorder %s11, 0
    %p69 = por %p67, %p68
    %p70 = scmp.ne.s32.totalorder %s59, %s62
    %p71 = scmp.eq.s32.totalorder %s16, 2
    %p72 = por %p70, %p71
    %p73 = scmp.ne.s32.totalorder %s62, %s63
    %p74 = scmp.eq.s32.totalorder %s16, 0
    %p75 = por %p73, %p74
    %p76 = scmp.ne.s32.totalorder %s62, %s63
    %p77 = scmp.eq.s32.totalorder %s17, 2
    %p78 = por %p76, %p77
    %p80 = scmp.ne.s32.totalorder %s63, %s79
    %p81 = scmp.eq.s32.totalorder %s17, 0
    %p82 = por %p80, %p81
    %s83 = ssub.s32 %s18, %s30
    %p84 = scmp.eq.s32.totalorder %s83, 0
    %s86 = sadd.s32 %s85, 1
    %s87 = scalar_select %p84, %s85, %s86
    %p90 = pneg %p84
    %p91 = scmp.eq.s32.totalorder %s11, 2
    %p92 = por %p90, %p91
    %p93 = scmp.ne.s32.totalorder %s85, %s88
    %p94 = scmp.eq.s32.totalorder %s11, 0
    %p95 = por %p93, %p94
    %p96 = scmp.ne.s32.totalorder %s85, %s88
    %p97 = scmp.eq.s32.totalorder %s16, 2
    %p98 = por %p96, %p97
    %p99 = scmp.ne.s32.totalorder %s88, %s89
    %p100 = scmp.eq.s32.totalorder %s16, 0
    %p101 = por %p99, %p100
    %p102 = scmp.ne.s32.totalorder %s88, %s89
    %p103 = scmp.eq.s32.totalorder %s17, 2
    %p104 = por %p102, %p103
    %p106 = scmp.ne.s32.totalorder %s89, %s105
    %p107 = scmp.eq.s32.totalorder %s17, 0
    %p108 = por %p106, %p107
    %s109 = ssub.s32 %s18, %s30
    %s110 = ssub.s32 %s19, %s26
    %s111 = sor.u32 %s109, %s110
    %p112 = scmp.eq.s32.totalorder %s111, 0
    %s114 = sadd.s32 %s113, 1
    %s115 = scalar_select %p112, %s113, %s114
    %p118 = pneg %p112
    %p119 = scmp.eq.s32.totalorder %s11, 2
    %p120 = por %p118, %p119
    %p121 = scmp.ne.s32.totalorder %s113, %s116
    %p122 = scmp.eq.s32.totalorder %s11, 0
    %p123 = por %p121, %p122
    %p124 = scmp.ne.s32.totalorder %s113, %s116
    %p125 = scmp.eq.s32.totalorder %s16, 2
    %p126 = por %p124, %p125
    %p127 = scmp.ne.s32.totalorder %s116, %s117
    %p128 = scmp.eq.s32.totalorder %s16, 0
    %p129 = por %p127, %p128
    %p130 = scmp.ne.s32.totalorder %s116, %s117
    %p131 = scmp.eq.s32.totalorder %s17, 2
    %p132 = por %p130, %p131
    %p134 = scmp.ne.s32.totalorder %s117, %s133
    %p135 = scmp.eq.s32.totalorder %s17, 0
    %p136 = por %p134, %p135
    %s138 = sadd.s32 %s137, 1
    %p141 = scmp.eq.s32.totalorder %s11, 2
    %p142 = scmp.ne.s32.totalorder %s137, %s139
    %p143 = scmp.eq.s32.totalorder %s11, 0
    %p144 = por %p142, %p143
    %p145 = scmp.ne.s32.totalorder %s137, %s139
    %p146 = scmp.eq.s32.totalorder %s16, 2
    %p147 = por %p145, %p146
    %p148 = scmp.ne.s32.totalorder %s139, %s140
    %p149 = scmp.eq.s32.totalorder %s16, 0
    %p150 = por %p148, %p149
    %p151 = scmp.ne.s32.totalorder %s139, %s140
    %p152 = scmp.eq.s32.totalorder %s17, 2
    %p153 = por %p151, %p152
    %p155 = scmp.ne.s32.totalorder %s140, %s154
    %p156 = scmp.eq.s32.totalorder %s17, 0
    %p157 = por %p155, %p156
    %s158 = ssub.s32 %s18, %s30
    %p159 = scmp.eq.s32.totalorder %s158, 0
    %s161 = sadd.s32 %s160, 1
    %s162 = scalar_select %p159, %s160, %s161
    %p165 = pneg %p159
    %p166 = scmp.eq.s32.totalorder %s11, 2
    %p167 = por %p165, %p166
    %p168 = scmp.ne.s32.totalorder %s160, %s163
    %p169 = scmp.eq.s32.totalorder %s11, 0
    %p170 = por %p168, %p169
    %p171 = scmp.ne.s32.totalorder %s160, %s163
    %p172 = scmp.eq.s32.totalorder %s16, 2
    %p173 = por %p171, %p172
    %p174 = scmp.ne.s32.totalorder %s163, %s164
    %p175 = scmp.eq.s32.totalorder %s16, 0
    %p176 = por %p174, %p175
    %p177 = scmp.ne.s32.totalorder %s163, %s164
    %p178 = scmp.eq.s32.totalorder %s17, 2
    %p179 = por %p177, %p178
    %p181 = scmp.ne.s32.totalorder %s164, %s180
    %p182 = scmp.eq.s32.totalorder %s17, 0
    %p183 = por %p181, %p182
    %p184 = scmp.le.s32.totalorder 1, %s11
    %p185 = scmp.lt.s32.totalorder %s11, 4
    %p186 = pnand %p184, %p185
    %p187 = pneg %p186
    // Predicated region
    $region9: #{inter_graph_attention.7} parent=5 // pred_check
      _
    $region10: #{inter_graph_attention.7} parent=5 // pred_check_branch
      %189 = sbr.rel (%p186) target = $region12
    $region11: #{inter_graph_attention.7} parent=5 // pred_region
      %s190 = ssub.s32 %s11, 1
      // Predicated region
      $region13: #{inter_graph_attention.7} parent=11 // pred_check
        %p191 = pneg %p49
      $region14: #{inter_graph_attention.7} parent=11 // pred_check_branch
        %193 = sbr.rel (%p191) target = $region16
      $region15: #{inter_graph_attention.7} parent=11 // pred_region
        %s194 = smul.u32 32, %s21
        %p195 = scmp.lt.s32.totalorder %s194, 31
        %s196 = scalar_select %p195, %s194, 31
        %s197 = smul.addr %s196, 4
        %s198 = scalar_lea.vmem %s0, %s197
        %s199 = smul.u32 32, %s21
      $region16: #{inter_graph_attention.7} parent=11 // pred_fallthru
        _
      // Predicated region
      $region17: #{inter_graph_attention.7} parent=11 // pred_check
        %p200 = pneg %p75
      $region18: #{inter_graph_attention.7} parent=11 // pred_check_branch
        %202 = sbr.rel (%p200) target = $region20
      $region19: #{inter_graph_attention.7} parent=11 // pred_region
        %s203 = smul.u32 2, %s21
        %p204 = scmp.lt.s32.totalorder %s203, 1
        %s205 = scalar_select %p204, %s203, 1
        %s206 = smul.addr %s205, 2
        %s207 = scalar_lea.vmem %s1, %s206
        %s208 = smul.u32 2, %s21
      $region20: #{inter_graph_attention.7} parent=11 // pred_fallthru
        _
      // Predicated region
      $region21: #{inter_graph_attention.7} parent=11 // pred_check
        %p209 = pneg %p150
      $region22: #{inter_graph_attention.7} parent=11 // pred_check_branch
        %211 = sbr.rel (%p209) target = $region24
      $region23: #{inter_graph_attention.7} parent=11 // pred_region
        _
      $region24: #{inter_graph_attention.7} parent=11 // pred_fallthru
        _
    $region12: #{inter_graph_attention.7} parent=5 // pred_fallthru
      _
    %p212 = scmp.lt.s32.totalorder %s11, 3
    // Predicated region
    $region25: #{inter_graph_attention.7} parent=5 // pred_check
      %p213 = pneg %p212
    $region26: #{inter_graph_attention.7} parent=5 // pred_check_branch
      %215 = sbr.rel (%p213) target = $region28
    $region27: #{inter_graph_attention.7} parent=5 // pred_region
      // Predicated region
      $region29: #{inter_graph_attention.7} parent=27 // pred_check
        %p216 = pneg %p95
      $region30: #{inter_graph_attention.7} parent=27 // pred_check_branch
        %218 = sbr.rel (%p216) target = $region32
      $region31: #{inter_graph_attention.7} parent=27 // pred_region
        %s219 = smul.u32 16, %s18
        %p220 = scmp.lt.s32.totalorder %s219, 47
        %s221 = scalar_select %p220, %s219, 47
        %s222 = smul.addr %s221, 8
        %s223 = scalar_lea.vmem %s2, %s222
        %s224 = smul.u32 16, %s18
      $region32: #{inter_graph_attention.7} parent=27 // pred_fallthru
        _
      // Predicated region
      $region33: #{inter_graph_attention.7} parent=27 // pred_check
        %p225 = pneg %p123
      $region34: #{inter_graph_attention.7} parent=27 // pred_check_branch
        %227 = sbr.rel (%p225) target = $region36
      $region35: #{inter_graph_attention.7} parent=27 // pred_region
        %s228 = smul.u32 16, %s18
        %s229 = smul.u32 2, %s19
        %p230 = scmp.lt.s32.totalorder %s228, 47
        %s231 = scalar_select %p230, %s228, 47
        %p232 = scmp.lt.s32.totalorder %s229, 1
        %s233 = scalar_select %p232, %s229, 1
        %s234 = smul.addr %s231, 2
        %s235 = sadd.s32 %s233, %s234
        %s236 = smul.addr %s235, 4
        %s237 = scalar_lea.vmem %s3, %s236
        %s238 = smul.u32 16, %s18
        %s239 = smul.u32 2, %s19
      $region36: #{inter_graph_attention.7} parent=27 // pred_fallthru
        _
    $region28: #{inter_graph_attention.7} parent=5 // pred_fallthru
      _
    %p240 = scmp.le.s32.totalorder 1, %s11
    %p241 = scmp.lt.s32.totalorder %s11, 4
    %p242 = pnand %p240, %p241
    %p243 = pneg %p242
    // Predicated region
    $region37: #{inter_graph_attention.7} parent=5 // pred_check
      _
    $region38: #{inter_graph_attention.7} parent=5 // pred_check_branch
      %245 = sbr.rel (%p242) target = $region40
    $region39: #{inter_graph_attention.7} parent=5 // pred_region
      %s246 = ssub.s32 %s11, 1
      %s247 = smul.u32 32, %s21
      %p248 = scmp.lt.s32.totalorder %s247, 31
      %s249 = scalar_select %p248, %s247, 31
      %s250 = smul.addr %s249, 4
      %s251 = scalar_lea.vmem %s0, %s250
      %p252 = pneg %p49
      %p253 = pneg %p46
      %s254 = smul.u32 2, %s21
      %p255 = scmp.lt.s32.totalorder %s254, 1
      %s256 = scalar_select %p255, %s254, 1
      %s257 = smul.addr %s256, 2
      %s258 = scalar_lea.vmem %s1, %s257
      %p259 = pneg %p75
      %p260 = pneg %p72
      %s261 = smul.u32 16, %s20
      %p262 = scmp.lt.s32.totalorder %s261, 47
      %s263 = scalar_select %p262, %s261, 47
      %s264 = smul.addr %s263, 8
      %s265 = scalar_lea.vmem %s2, %s264
      %p266 = pneg %p101
      %p267 = pneg %p98
      %s268 = smul.u32 16, %s20
      %s269 = smul.u32 2, %s21
      %p270 = scmp.lt.s32.totalorder %s268, 47
      %s271 = scalar_select %p270, %s268, 47
      %p272 = scmp.lt.s32.totalorder %s269, 1
      %s273 = scalar_select %p272, %s269, 1
      %s274 = smul.addr %s271, 2
      %s275 = sadd.s32 %s273, %s274
      %s276 = smul.addr %s275, 4
      %s277 = scalar_lea.vmem %s3, %s276
      %p278 = pneg %p129
      %p279 = pneg %p126
      %p280 = pneg %p150
      %p281 = pneg %p147
      %p282 = pneg %p176
      %p283 = pneg %p173
      %s284 = smul.u32 16, %s20
      %p285 = scmp.lt.s32.totalorder %s284, 47
      %s286 = scalar_select %p285, %s284, 47
      %s287 = smul.addr %s286, 8
      %s288 = scalar_lea.vmem %s5, %s287
      %s289 = smul.u32 32, %s21
      %p290 = scmp.lt.s32.totalorder %s289, 31
      %s291 = scalar_select %p290, %s289, 31
      %s292 = smul.addr %s291, 4
      %s293 = scalar_lea.vmem %s0, %s292
      %s294 = smul.u32 32, %s21
      %s295 = smul.u32 2, %s21
      %p296 = scmp.lt.s32.totalorder %s295, 1
      %s297 = scalar_select %p296, %s295, 1
      %s298 = smul.addr %s297, 2
      %s299 = scalar_lea.vmem %s1, %s298
      %s300 = smul.u32 2, %s21
      %s301 = smul.u32 16, %s20
      %p302 = scmp.lt.s32.totalorder %s301, 47
      %s303 = scalar_select %p302, %s301, 47
      %s304 = smul.addr %s303, 8
      %s305 = scalar_lea.vmem %s2, %s304
      %s306 = smul.u32 16, %s20
      %s307 = smul.u32 16, %s20
      %s308 = smul.u32 2, %s21
      %p309 = scmp.lt.s32.totalorder %s307, 47
      %s310 = scalar_select %p309, %s307, 47
      %p311 = scmp.lt.s32.totalorder %s308, 1
      %s312 = scalar_select %p311, %s308, 1
      %s313 = smul.addr %s310, 2
      %s314 = sadd.s32 %s312, %s313
      %s315 = smul.addr %s314, 4
      %s316 = scalar_lea.vmem %s3, %s315
      %s317 = smul.u32 16, %s20
      %s318 = smul.u32 2, %s21
      %s319 = smul.u32 16, %s20
      %p320 = scmp.lt.s32.totalorder %s319, 47
      %s321 = scalar_select %p320, %s319, 47
      %s322 = smul.addr %s321, 8
      %s323 = scalar_lea.vmem %s5, %s322
      %s324 = smul.u32 16, %s20
      %p326 = scmp.eq.s32.totalorder %s21, 0
      // Predicated region
      $region41: #{inter_graph_attention.7} parent=39 // pred_check
        %p327 = pneg %p326
      $region42: #{inter_graph_attention.7} parent=39 // pred_check_branch
        %329 = sbr.rel (%p327) target = $region44
      $region43: #{inter_graph_attention.7} parent=39 // pred_region
        %vm330 = vcmask 7168
        %331 = vst.msk [vmem:[#allocation2] sm:$0xff] %vm330, -1e+30
        %332 = vst.msk [vmem:[#allocation2 + $0x8] sm:$0xff] %vm330, -1e+30
        %333 = vst.msk [vmem:[#allocation2 + $0x10] sm:$0xff] %vm330, -1e+30
        %334 = vst.msk [vmem:[#allocation2 + $0x18] sm:$0xff] %vm330, -1e+30
        %335 = vst.msk [vmem:[#allocation2 + $0x20] sm:$0xff] %vm330, -1e+30
        %336 = vst.msk [vmem:[#allocation2 + $0x28] sm:$0xff] %vm330, -1e+30
        %337 = vst.msk [vmem:[#allocation2 + $0x30] sm:$0xff] %vm330, -1e+30
        %338 = vst.msk [vmem:[#allocation2 + $0x38] sm:$0xff] %vm330, -1e+30
        %339 = vst.msk [vmem:[#allocation2 + $0x40] sm:$0xff] %vm330, -1e+30
        %340 = vst.msk [vmem:[#allocation2 + $0x48] sm:$0xff] %vm330, -1e+30
        %341 = vst.msk [vmem:[#allocation2 + $0x50] sm:$0xff] %vm330, -1e+30
        %342 = vst.msk [vmem:[#allocation2 + $0x58] sm:$0xff] %vm330, -1e+30
        %343 = vst.msk [vmem:[#allocation2 + $0x60] sm:$0xff] %vm330, -1e+30
        %344 = vst.msk [vmem:[#allocation2 + $0x68] sm:$0xff] %vm330, -1e+30
        %345 = vst.msk [vmem:[#allocation2 + $0x70] sm:$0xff] %vm330, -1e+30
        %346 = vst.msk [vmem:[#allocation2 + $0x78] sm:$0xff] %vm330, -1e+30
        %347 = vst.msk [vmem:[#allocation2 + $0x80] sm:$0xff] %vm330, -1e+30
        %348 = vst.msk [vmem:[#allocation2 + $0x88] sm:$0xff] %vm330, -1e+30
        %349 = vst.msk [vmem:[#allocation2 + $0x90] sm:$0xff] %vm330, -1e+30
        %350 = vst.msk [vmem:[#allocation2 + $0x98] sm:$0xff] %vm330, -1e+30
        %351 = vst.msk [vmem:[#allocation2 + $0xa0] sm:$0xff] %vm330, -1e+30
        %352 = vst.msk [vmem:[#allocation2 + $0xa8] sm:$0xff] %vm330, -1e+30
        %353 = vst.msk [vmem:[#allocation2 + $0xb0] sm:$0xff] %vm330, -1e+30
        %354 = vst.msk [vmem:[#allocation2 + $0xb8] sm:$0xff] %vm330, -1e+30
        %355 = vst.msk [vmem:[#allocation2 + $0xc0] sm:$0xff] %vm330, -1e+30
        %356 = vst.msk [vmem:[#allocation2 + $0xc8] sm:$0xff] %vm330, -1e+30
        %357 = vst.msk [vmem:[#allocation2 + $0xd0] sm:$0xff] %vm330, -1e+30
        %358 = vst.msk [vmem:[#allocation2 + $0xd8] sm:$0xff] %vm330, -1e+30
        %359 = vst.msk [vmem:[#allocation2 + $0xe0] sm:$0xff] %vm330, -1e+30
        %360 = vst.msk [vmem:[#allocation2 + $0xe8] sm:$0xff] %vm330, -1e+30
        %361 = vst.msk [vmem:[#allocation2 + $0xf0] sm:$0xff] %vm330, -1e+30
        %362 = vst.msk [vmem:[#allocation2 + $0xf8] sm:$0xff] %vm330, -1e+30
        %vm363 = vcmask 523264
        %364 = vst.msk [vmem:[#allocation3] sm:$0xff] %vm363, 0.0
        %365 = vst.msk [vmem:[#allocation3 + $0x8] sm:$0xff] %vm363, 0.0
        %366 = vst.msk [vmem:[#allocation3 + $0x10] sm:$0xff] %vm363, 0.0
        %367 = vst.msk [vmem:[#allocation3 + $0x18] sm:$0xff] %vm363, 0.0
        %368 = vst.msk [vmem:[#allocation3 + $0x20] sm:$0xff] %vm363, 0.0
        %369 = vst.msk [vmem:[#allocation3 + $0x28] sm:$0xff] %vm363, 0.0
        %370 = vst.msk [vmem:[#allocation3 + $0x30] sm:$0xff] %vm363, 0.0
        %371 = vst.msk [vmem:[#allocation3 + $0x38] sm:$0xff] %vm363, 0.0
        %372 = vst.msk [vmem:[#allocation3 + $0x40] sm:$0xff] %vm363, 0.0
        %373 = vst.msk [vmem:[#allocation3 + $0x48] sm:$0xff] %vm363, 0.0
        %374 = vst.msk [vmem:[#allocation3 + $0x50] sm:$0xff] %vm363, 0.0
        %375 = vst.msk [vmem:[#allocation3 + $0x58] sm:$0xff] %vm363, 0.0
        %376 = vst.msk [vmem:[#allocation3 + $0x60] sm:$0xff] %vm363, 0.0
        %377 = vst.msk [vmem:[#allocation3 + $0x68] sm:$0xff] %vm363, 0.0
        %378 = vst.msk [vmem:[#allocation3 + $0x70] sm:$0xff] %vm363, 0.0
        %379 = vst.msk [vmem:[#allocation3 + $0x78] sm:$0xff] %vm363, 0.0
        %380 = vst.msk [vmem:[#allocation3 + $0x80] sm:$0xff] %vm363, 0.0
        %381 = vst.msk [vmem:[#allocation3 + $0x88] sm:$0xff] %vm363, 0.0
        %382 = vst.msk [vmem:[#allocation3 + $0x90] sm:$0xff] %vm363, 0.0
        %383 = vst.msk [vmem:[#allocation3 + $0x98] sm:$0xff] %vm363, 0.0
        %384 = vst.msk [vmem:[#allocation3 + $0xa0] sm:$0xff] %vm363, 0.0
        %385 = vst.msk [vmem:[#allocation3 + $0xa8] sm:$0xff] %vm363, 0.0
        %386 = vst.msk [vmem:[#allocation3 + $0xb0] sm:$0xff] %vm363, 0.0
        %387 = vst.msk [vmem:[#allocation3 + $0xb8] sm:$0xff] %vm363, 0.0
        %388 = vst.msk [vmem:[#allocation3 + $0xc0] sm:$0xff] %vm363, 0.0
        %389 = vst.msk [vmem:[#allocation3 + $0xc8] sm:$0xff] %vm363, 0.0
        %390 = vst.msk [vmem:[#allocation3 + $0xd0] sm:$0xff] %vm363, 0.0
        %391 = vst.msk [vmem:[#allocation3 + $0xd8] sm:$0xff] %vm363, 0.0
        %392 = vst.msk [vmem:[#allocation3 + $0xe0] sm:$0xff] %vm363, 0.0
        %393 = vst.msk [vmem:[#allocation3 + $0xe8] sm:$0xff] %vm363, 0.0
        %394 = vst.msk [vmem:[#allocation3 + $0xf0] sm:$0xff] %vm363, 0.0
        %395 = vst.msk [vmem:[#allocation3 + $0xf8] sm:$0xff] %vm363, 0.0
      $region44: #{inter_graph_attention.7} parent=39 // pred_fallthru
        _
      %v396 = vld [vmem:[%s316] sm:$0xff]
      %v397 = vld [vmem:[%s316 + $0x8] sm:$0xff]
      %v398 = vld [vmem:[%s316 + $0x10] sm:$0xff]
      %v399 = vld [vmem:[%s316 + $0x18] sm:$0xff]
      %v400 = vld [vmem:[%s316 + $0x20] sm:$0xff]
      %v401 = vld [vmem:[%s316 + $0x28] sm:$0xff]
      %v402 = vld [vmem:[%s316 + $0x30] sm:$0xff]
      %v403 = vld [vmem:[%s316 + $0x38] sm:$0xff]
      %v404 = vld [vmem:[%s316 + $0x40] sm:$0xff]
      %v405 = vld [vmem:[%s316 + $0x48] sm:$0xff]
      %v406 = vld [vmem:[%s316 + $0x50] sm:$0xff]
      %v407 = vld [vmem:[%s316 + $0x58] sm:$0xff]
      %v408 = vld [vmem:[%s316 + $0x60] sm:$0xff]
      %v409 = vld [vmem:[%s316 + $0x68] sm:$0xff]
      %v410 = vld [vmem:[%s316 + $0x70] sm:$0xff]
      %v411 = vld [vmem:[%s316 + $0x78] sm:$0xff]
      %v412 = vld [vmem:[%s305] sm:$0xff]
      %v413 = vld [vmem:[%s305 + $0x8] sm:$0xff]
      %v414 = vld [vmem:[%s305 + $0x10] sm:$0xff]
      %v415 = vld [vmem:[%s305 + $0x18] sm:$0xff]
      %v416 = vld [vmem:[%s305 + $0x20] sm:$0xff]
      %v417 = vld [vmem:[%s305 + $0x28] sm:$0xff]
      %v418 = vld [vmem:[%s305 + $0x30] sm:$0xff]
      %v419 = vld [vmem:[%s305 + $0x38] sm:$0xff]
      %v420 = vld [vmem:[%s305 + $0x40] sm:$0xff]
      %v421 = vld [vmem:[%s305 + $0x48] sm:$0xff]
      %v422 = vld [vmem:[%s305 + $0x50] sm:$0xff]
      %v423 = vld [vmem:[%s305 + $0x58] sm:$0xff]
      %v424 = vld [vmem:[%s305 + $0x60] sm:$0xff]
      %v425 = vld [vmem:[%s305 + $0x68] sm:$0xff]
      %v426 = vld [vmem:[%s305 + $0x70] sm:$0xff]
      %v427 = vld [vmem:[%s305 + $0x78] sm:$0xff]
      %v428 = vld [vmem:[%s299] sm:$0xf]
      %430 = vset.pattern.permute.xlu0 0
      %431 = vperm.xlu0 %430, %v412
      %v432 = vpop.permute.xlu0 %431
      %435 = vset.pattern.permute.xlu0 0
      %436 = vperm.xlu0 %435, %v413
      %v437 = vpop.permute.xlu0 %436
      %440 = vset.pattern.permute.xlu0 0
      %441 = vperm.xlu0 %440, %v414
      %v442 = vpop.permute.xlu0 %441
      %445 = vset.pattern.permute.xlu0 0
      %446 = vperm.xlu0 %445, %v415
      %v447 = vpop.permute.xlu0 %446
      %450 = vset.pattern.permute.xlu0 0
      %451 = vperm.xlu0 %450, %v416
      %v452 = vpop.permute.xlu0 %451
      %455 = vset.pattern.permute.xlu0 0
      %456 = vperm.xlu0 %455, %v417
      %v457 = vpop.permute.xlu0 %456
      %460 = vset.pattern.permute.xlu0 0
      %461 = vperm.xlu0 %460, %v418
      %v462 = vpop.permute.xlu0 %461
      %465 = vset.pattern.permute.xlu0 0
      %466 = vperm.xlu0 %465, %v419
      %v467 = vpop.permute.xlu0 %466
      %470 = vset.pattern.permute.xlu0 0
      %471 = vperm.xlu0 %470, %v420
      %v472 = vpop.permute.xlu0 %471
      %475 = vset.pattern.permute.xlu0 0
      %476 = vperm.xlu0 %475, %v421
      %v477 = vpop.permute.xlu0 %476
      %480 = vset.pattern.permute.xlu0 0
      %481 = vperm.xlu0 %480, %v422
      %v482 = vpop.permute.xlu0 %481
      %485 = vset.pattern.permute.xlu0 0
      %486 = vperm.xlu0 %485, %v423
      %v487 = vpop.permute.xlu0 %486
      %490 = vset.pattern.permute.xlu0 0
      %491 = vperm.xlu0 %490, %v424
      %v492 = vpop.permute.xlu0 %491
      %495 = vset.pattern.permute.xlu0 0
      %496 = vperm.xlu0 %495, %v425
      %v497 = vpop.permute.xlu0 %496
      %500 = vset.pattern.permute.xlu0 0
      %501 = vperm.xlu0 %500, %v426
      %v502 = vpop.permute.xlu0 %501
      %505 = vset.pattern.permute.xlu0 0
      %506 = vperm.xlu0 %505, %v427
      %v507 = vpop.permute.xlu0 %506
      %v510 = vlaneseq
      %v511 = vshrl.u32 %v510, 7
      %v512 = vsub.s32 0, %v511
      %v513 = vrot.slane %v428, %v512
      %v514 = vlaneseq
      %v515 = vshrl.u32 %v514, 7
      %v516 = vsub.s32 2, %v515
      %v517 = vrot.slane %v428, %v516
      %v520 = vlaneseq
      %v521 = vshrl.u32 %v520, 7
      %v522 = vsub.s32 0, %v521
      %v523 = vrot.slane %v513, %v522
      %v524 = vlaneseq
      %v525 = vshrl.u32 %v524, 7
      %v526 = vsub.s32 0, %v525
      %v527 = vrot.slane %v517, %v526
      %v528 = vadd.f32 %v432, %v523
      %v529 = vadd.f32 %v432, %v527
      %v530 = vadd.f32 %v437, %v523
      %v531 = vadd.f32 %v437, %v527
      %v532 = vadd.f32 %v442, %v523
      %v533 = vadd.f32 %v442, %v527
      %v534 = vadd.f32 %v447, %v523
      %v535 = vadd.f32 %v447, %v527
      %v536 = vadd.f32 %v452, %v523
      %v537 = vadd.f32 %v452, %v527
      %v538 = vadd.f32 %v457, %v523
      %v539 = vadd.f32 %v457, %v527
      %v540 = vadd.f32 %v462, %v523
      %v541 = vadd.f32 %v462, %v527
      %v542 = vadd.f32 %v467, %v523
      %v543 = vadd.f32 %v467, %v527
      %v544 = vadd.f32 %v472, %v523
      %v545 = vadd.f32 %v472, %v527
      %v546 = vadd.f32 %v477, %v523
      %v547 = vadd.f32 %v477, %v527
      %v548 = vadd.f32 %v482, %v523
      %v549 = vadd.f32 %v482, %v527
      %v550 = vadd.f32 %v487, %v523
      %v551 = vadd.f32 %v487, %v527
      %v552 = vadd.f32 %v492, %v523
      %v553 = vadd.f32 %v492, %v527
      %v554 = vadd.f32 %v497, %v523
      %v555 = vadd.f32 %v497, %v527
      %v556 = vadd.f32 %v502, %v523
      %v557 = vadd.f32 %v502, %v527
      %v558 = vadd.f32 %v507, %v523
      %v559 = vadd.f32 %v507, %v527
      %v560 = vmul.f32 %v528, 0.2
      %v561 = vmul.f32 %v529, 0.2
      %v562 = vmul.f32 %v530, 0.2
      %v563 = vmul.f32 %v531, 0.2
      %v564 = vmul.f32 %v532, 0.2
      %v565 = vmul.f32 %v533, 0.2
      %v566 = vmul.f32 %v534, 0.2
      %v567 = vmul.f32 %v535, 0.2
      %v568 = vmul.f32 %v536, 0.2
      %v569 = vmul.f32 %v537, 0.2
      %v570 = vmul.f32 %v538, 0.2
      %v571 = vmul.f32 %v539, 0.2
      %v572 = vmul.f32 %v540, 0.2
      %v573 = vmul.f32 %v541, 0.2
      %v574 = vmul.f32 %v542, 0.2
      %v575 = vmul.f32 %v543, 0.2
      %v576 = vmul.f32 %v544, 0.2
      %v577 = vmul.f32 %v545, 0.2
      %v578 = vmul.f32 %v546, 0.2
      %v579 = vmul.f32 %v547, 0.2
      %v580 = vmul.f32 %v548, 0.2
      %v581 = vmul.f32 %v549, 0.2
      %v582 = vmul.f32 %v550, 0.2
      %v583 = vmul.f32 %v551, 0.2
      %v584 = vmul.f32 %v552, 0.2
      %v585 = vmul.f32 %v553, 0.2
      %v586 = vmul.f32 %v554, 0.2
      %v587 = vmul.f32 %v555, 0.2
      %v588 = vmul.f32 %v556, 0.2
      %v589 = vmul.f32 %v557, 0.2
      %v590 = vmul.f32 %v558, 0.2
      %v591 = vmul.f32 %v559, 0.2
      %v592 = vmax.f32 %v528, %v560
      %v593 = vmax.f32 %v529, %v561
      %v594 = vmax.f32 %v530, %v562
      %v595 = vmax.f32 %v531, %v563
      %v596 = vmax.f32 %v532, %v564
      %v597 = vmax.f32 %v533, %v565
      %v598 = vmax.f32 %v534, %v566
      %v599 = vmax.f32 %v535, %v567
      %v600 = vmax.f32 %v536, %v568
      %v601 = vmax.f32 %v537, %v569
      %v602 = vmax.f32 %v538, %v570
      %v603 = vmax.f32 %v539, %v571
      %v604 = vmax.f32 %v540, %v572
      %v605 = vmax.f32 %v541, %v573
      %v606 = vmax.f32 %v542, %v574
      %v607 = vmax.f32 %v543, %v575
      %v608 = vmax.f32 %v544, %v576
      %v609 = vmax.f32 %v545, %v577
      %v610 = vmax.f32 %v546, %v578
      %v611 = vmax.f32 %v547, %v579
      %v612 = vmax.f32 %v548, %v580
      %v613 = vmax.f32 %v549, %v581
      %v614 = vmax.f32 %v550, %v582
      %v615 = vmax.f32 %v551, %v583
      %v616 = vmax.f32 %v552, %v584
      %v617 = vmax.f32 %v553, %v585
      %v618 = vmax.f32 %v554, %v586
      %v619 = vmax.f32 %v555, %v587
      %v620 = vmax.f32 %v556, %v588
      %v621 = vmax.f32 %v557, %v589
      %v622 = vmax.f32 %v558, %v590
      %v623 = vmax.f32 %v559, %v591
      %v624 = vld [vmem:[#allocation2] sm:$0xff]
      %v625 = vld [vmem:[#allocation2 + $0x8] sm:$0xff]
      %v626 = vld [vmem:[#allocation2 + $0x10] sm:$0xff]
      %v627 = vld [vmem:[#allocation2 + $0x18] sm:$0xff]
      %v628 = vld [vmem:[#allocation2 + $0x20] sm:$0xff]
      %v629 = vld [vmem:[#allocation2 + $0x28] sm:$0xff]
      %v630 = vld [vmem:[#allocation2 + $0x30] sm:$0xff]
      %v631 = vld [vmem:[#allocation2 + $0x38] sm:$0xff]
      %v632 = vld [vmem:[#allocation2 + $0x40] sm:$0xff]
      %v633 = vld [vmem:[#allocation2 + $0x48] sm:$0xff]
      %v634 = vld [vmem:[#allocation2 + $0x50] sm:$0xff]
      %v635 = vld [vmem:[#allocation2 + $0x58] sm:$0xff]
      %v636 = vld [vmem:[#allocation2 + $0x60] sm:$0xff]
      %v637 = vld [vmem:[#allocation2 + $0x68] sm:$0xff]
      %v638 = vld [vmem:[#allocation2 + $0x70] sm:$0xff]
      %v639 = vld [vmem:[#allocation2 + $0x78] sm:$0xff]
      %v640 = vmax.f32 %v592, %v593
      %641 = vmax.xlane.f32.xlu0 %v640
      %v642 = vpop.xlane.xlu0 %641
      %v643 = vmax.f32 %v594, %v595
      %644 = vmax.xlane.f32.xlu0 %v643
      %v645 = vpop.xlane.xlu0 %644
      %v646 = vmax.f32 %v596, %v597
      %647 = vmax.xlane.f32.xlu0 %v646
      %v648 = vpop.xlane.xlu0 %647
      %v649 = vmax.f32 %v598, %v599
      %650 = vmax.xlane.f32.xlu0 %v649
      %v651 = vpop.xlane.xlu0 %650
      %v652 = vmax.f32 %v600, %v601
      %653 = vmax.xlane.f32.xlu0 %v652
      %v654 = vpop.xlane.xlu0 %653
      %v655 = vmax.f32 %v602, %v603
      %656 = vmax.xlane.f32.xlu0 %v655
      %v657 = vpop.xlane.xlu0 %656
      %v658 = vmax.f32 %v604, %v605
      %659 = vmax.xlane.f32.xlu0 %v658
      %v660 = vpop.xlane.xlu0 %659
      %v661 = vmax.f32 %v606, %v607
      %662 = vmax.xlane.f32.xlu0 %v661
      %v663 = vpop.xlane.xlu0 %662
      %v664 = vmax.f32 %v608, %v609
      %665 = vmax.xlane.f32.xlu0 %v664
      %v666 = vpop.xlane.xlu0 %665
      %v667 = vmax.f32 %v610, %v611
      %668 = vmax.xlane.f32.xlu0 %v667
      %v669 = vpop.xlane.xlu0 %668
      %v670 = vmax.f32 %v612, %v613
      %671 = vmax.xlane.f32.xlu0 %v670
      %v672 = vpop.xlane.xlu0 %671
      %v673 = vmax.f32 %v614, %v615
      %674 = vmax.xlane.f32.xlu0 %v673
      %v675 = vpop.xlane.xlu0 %674
      %v676 = vmax.f32 %v616, %v617
      %677 = vmax.xlane.f32.xlu0 %v676
      %v678 = vpop.xlane.xlu0 %677
      %v679 = vmax.f32 %v618, %v619
      %680 = vmax.xlane.f32.xlu0 %v679
      %v681 = vpop.xlane.xlu0 %680
      %v682 = vmax.f32 %v620, %v621
      %683 = vmax.xlane.f32.xlu0 %v682
      %v684 = vpop.xlane.xlu0 %683
      %v685 = vmax.f32 %v622, %v623
      %686 = vmax.xlane.f32.xlu0 %v685
      %v687 = vpop.xlane.xlu0 %686
      %v688 = vmax.f32 %v624, %v642
      %v689 = vmax.f32 %v625, %v645
      %v690 = vmax.f32 %v626, %v648
      %v691 = vmax.f32 %v627, %v651
      %v692 = vmax.f32 %v628, %v654
      %v693 = vmax.f32 %v629, %v657
      %v694 = vmax.f32 %v630, %v660
      %v695 = vmax.f32 %v631, %v663
      %v696 = vmax.f32 %v632, %v666
      %v697 = vmax.f32 %v633, %v669
      %v698 = vmax.f32 %v634, %v672
      %v699 = vmax.f32 %v635, %v675
      %v700 = vmax.f32 %v636, %v678
      %v701 = vmax.f32 %v637, %v681
      %v702 = vmax.f32 %v638, %v684
      %v703 = vmax.f32 %v639, %v687
      %705 = vset.pattern.permute.xlu0 0
      %706 = vperm.xlu0 %705, %v688
      %v707 = vpop.permute.xlu0 %706
      %710 = vset.pattern.permute.xlu0 0
      %711 = vperm.xlu0 %710, %v689
      %v712 = vpop.permute.xlu0 %711
      %715 = vset.pattern.permute.xlu0 0
      %716 = vperm.xlu0 %715, %v690
      %v717 = vpop.permute.xlu0 %716
      %720 = vset.pattern.permute.xlu0 0
      %721 = vperm.xlu0 %720, %v691
      %v722 = vpop.permute.xlu0 %721
      %725 = vset.pattern.permute.xlu0 0
      %726 = vperm.xlu0 %725, %v692
      %v727 = vpop.permute.xlu0 %726
      %730 = vset.pattern.permute.xlu0 0
      %731 = vperm.xlu0 %730, %v693
      %v732 = vpop.permute.xlu0 %731
      %735 = vset.pattern.permute.xlu0 0
      %736 = vperm.xlu0 %735, %v694
      %v737 = vpop.permute.xlu0 %736
      %740 = vset.pattern.permute.xlu0 0
      %741 = vperm.xlu0 %740, %v695
      %v742 = vpop.permute.xlu0 %741
      %745 = vset.pattern.permute.xlu0 0
      %746 = vperm.xlu0 %745, %v696
      %v747 = vpop.permute.xlu0 %746
      %750 = vset.pattern.permute.xlu0 0
      %751 = vperm.xlu0 %750, %v697
      %v752 = vpop.permute.xlu0 %751
      %755 = vset.pattern.permute.xlu0 0
      %756 = vperm.xlu0 %755, %v698
      %v757 = vpop.permute.xlu0 %756
      %760 = vset.pattern.permute.xlu0 0
      %761 = vperm.xlu0 %760, %v699
      %v762 = vpop.permute.xlu0 %761
      %765 = vset.pattern.permute.xlu0 0
      %766 = vperm.xlu0 %765, %v700
      %v767 = vpop.permute.xlu0 %766
      %770 = vset.pattern.permute.xlu0 0
      %771 = vperm.xlu0 %770, %v701
      %v772 = vpop.permute.xlu0 %771
      %775 = vset.pattern.permute.xlu0 0
      %776 = vperm.xlu0 %775, %v702
      %v777 = vpop.permute.xlu0 %776
      %780 = vset.pattern.permute.xlu0 0
      %781 = vperm.xlu0 %780, %v703
      %v782 = vpop.permute.xlu0 %781
      %v784 = vsub.f32 %v592, %v707
      %v785 = vsub.f32 %v593, %v707
      %v786 = vsub.f32 %v594, %v712
      %v787 = vsub.f32 %v595, %v712
      %v788 = vsub.f32 %v596, %v717
      %v789 = vsub.f32 %v597, %v717
      %v790 = vsub.f32 %v598, %v722
      %v791 = vsub.f32 %v599, %v722
      %v792 = vsub.f32 %v600, %v727
      %v793 = vsub.f32 %v601, %v727
      %v794 = vsub.f32 %v602, %v732
      %v795 = vsub.f32 %v603, %v732
      %v796 = vsub.f32 %v604, %v737
      %v797 = vsub.f32 %v605, %v737
      %v798 = vsub.f32 %v606, %v742
      %v799 = vsub.f32 %v607, %v742
      %v800 = vsub.f32 %v608, %v747
      %v801 = vsub.f32 %v609, %v747
      %v802 = vsub.f32 %v610, %v752
      %v803 = vsub.f32 %v611, %v752
      %v804 = vsub.f32 %v612, %v757
      %v805 = vsub.f32 %v613, %v757
      %v806 = vsub.f32 %v614, %v762
      %v807 = vsub.f32 %v615, %v762
      %v808 = vsub.f32 %v616, %v767
      %v809 = vsub.f32 %v617, %v767
      %v810 = vsub.f32 %v618, %v772
      %v811 = vsub.f32 %v619, %v772
      %v812 = vsub.f32 %v620, %v777
      %v813 = vsub.f32 %v621, %v777
      %v814 = vsub.f32 %v622, %v782
      %v815 = vsub.f32 %v623, %v782
      %v816 = vmul.f32 %v784, 1.442695
      %v817 = vpow.pop %v816
      %v818 = vmul.f32 %v785, 1.442695
      %v819 = vpow.pop %v818
      %v820 = vmul.f32 %v786, 1.442695
      %v821 = vpow.pop %v820
      %v822 = vmul.f32 %v787, 1.442695
      %v823 = vpow.pop %v822
      %v824 = vmul.f32 %v788, 1.442695
      %v825 = vpow.pop %v824
      %v826 = vmul.f32 %v789, 1.442695
      %v827 = vpow.pop %v826
      %v828 = vmul.f32 %v790, 1.442695
      %v829 = vpow.pop %v828
      %v830 = vmul.f32 %v791, 1.442695
      %v831 = vpow.pop %v830
      %v832 = vmul.f32 %v792, 1.442695
      %v833 = vpow.pop %v832
      %v834 = vmul.f32 %v793, 1.442695
      %v835 = vpow.pop %v834
      %v836 = vmul.f32 %v794, 1.442695
      %v837 = vpow.pop %v836
      %v838 = vmul.f32 %v795, 1.442695
      %v839 = vpow.pop %v838
      %v840 = vmul.f32 %v796, 1.442695
      %v841 = vpow.pop %v840
      %v842 = vmul.f32 %v797, 1.442695
      %v843 = vpow.pop %v842
      %v844 = vmul.f32 %v798, 1.442695
      %v845 = vpow.pop %v844
      %v846 = vmul.f32 %v799, 1.442695
      %v847 = vpow.pop %v846
      %v848 = vmul.f32 %v800, 1.442695
      %v849 = vpow.pop %v848
      %v850 = vmul.f32 %v801, 1.442695
      %v851 = vpow.pop %v850
      %v852 = vmul.f32 %v802, 1.442695
      %v853 = vpow.pop %v852
      %v854 = vmul.f32 %v803, 1.442695
      %v855 = vpow.pop %v854
      %v856 = vmul.f32 %v804, 1.442695
      %v857 = vpow.pop %v856
      %v858 = vmul.f32 %v805, 1.442695
      %v859 = vpow.pop %v858
      %v860 = vmul.f32 %v806, 1.442695
      %v861 = vpow.pop %v860
      %v862 = vmul.f32 %v807, 1.442695
      %v863 = vpow.pop %v862
      %v864 = vmul.f32 %v808, 1.442695
      %v865 = vpow.pop %v864
      %v866 = vmul.f32 %v809, 1.442695
      %v867 = vpow.pop %v866
      %v868 = vmul.f32 %v810, 1.442695
      %v869 = vpow.pop %v868
      %v870 = vmul.f32 %v811, 1.442695
      %v871 = vpow.pop %v870
      %v872 = vmul.f32 %v812, 1.442695
      %v873 = vpow.pop %v872
      %v874 = vmul.f32 %v813, 1.442695
      %v875 = vpow.pop %v874
      %v876 = vmul.f32 %v814, 1.442695
      %v877 = vpow.pop %v876
      %v878 = vmul.f32 %v815, 1.442695
      %v879 = vpow.pop %v878
      %v880 = vpack.c.bf16 %v821, %v817
      %v881 = vpack.c.bf16 %v823, %v819
      %v882 = vpack.c.bf16 %v829, %v825
      %v883 = vpack.c.bf16 %v831, %v827
      %v884 = vpack.c.bf16 %v837, %v833
      %v885 = vpack.c.bf16 %v839, %v835
      %v886 = vpack.c.bf16 %v845, %v841
      %v887 = vpack.c.bf16 %v847, %v843
      %v888 = vpack.c.bf16 %v853, %v849
      %v889 = vpack.c.bf16 %v855, %v851
      %v890 = vpack.c.bf16 %v861, %v857
      %v891 = vpack.c.bf16 %v863, %v859
      %v892 = vpack.c.bf16 %v869, %v865
      %v893 = vpack.c.bf16 %v871, %v867
      %v894 = vpack.c.bf16 %v877, %v873
      %v895 = vpack.c.bf16 %v879, %v875
      %v912 = vunpack.c.l.b16 %v396
      %v913 = vunpack.c.h.b16 %v396
      %v914 = vunpack.c.l.b16 %v397
      %v915 = vunpack.c.h.b16 %v397
      %v916 = vunpack.c.l.b16 %v398
      %v917 = vunpack.c.h.b16 %v398
      %v918 = vunpack.c.l.b16 %v399
      %v919 = vunpack.c.h.b16 %v399
      %v920 = vunpack.c.l.b16 %v400
      %v921 = vunpack.c.h.b16 %v400
      %v922 = vunpack.c.l.b16 %v401
      %v923 = vunpack.c.h.b16 %v401
      %v924 = vunpack.c.l.b16 %v402
      %v925 = vunpack.c.h.b16 %v402
      %v926 = vunpack.c.l.b16 %v403
      %v927 = vunpack.c.h.b16 %v403
      %v928 = vunpack.c.l.b16 %v404
      %v929 = vunpack.c.h.b16 %v404
      %v930 = vunpack.c.l.b16 %v405
      %v931 = vunpack.c.h.b16 %v405
      %v932 = vunpack.c.l.b16 %v406
      %v933 = vunpack.c.h.b16 %v406
      %v934 = vunpack.c.l.b16 %v407
      %v935 = vunpack.c.h.b16 %v407
      %v936 = vunpack.c.l.b16 %v408
      %v937 = vunpack.c.h.b16 %v408
      %v938 = vunpack.c.l.b16 %v409
      %v939 = vunpack.c.h.b16 %v409
      %v940 = vunpack.c.l.b16 %v410
      %v941 = vunpack.c.h.b16 %v410
      %v942 = vunpack.c.l.b16 %v411
      %v943 = vunpack.c.h.b16 %v411
      %v944 = vpack.c.b16 %v914, %v912
      %v945 = vpack.c.b16 %v915, %v913
      %v946 = vpack.c.b16 %v918, %v916
      %v947 = vpack.c.b16 %v919, %v917
      %v948 = vpack.c.b16 %v922, %v920
      %v949 = vpack.c.b16 %v923, %v921
      %v950 = vpack.c.b16 %v926, %v924
      %v951 = vpack.c.b16 %v927, %v925
      %v952 = vpack.c.b16 %v930, %v928
      %v953 = vpack.c.b16 %v931, %v929
      %v954 = vpack.c.b16 %v934, %v932
      %v955 = vpack.c.b16 %v935, %v933
      %v956 = vpack.c.b16 %v938, %v936
      %v957 = vpack.c.b16 %v939, %v937
      %v958 = vpack.c.b16 %v942, %v940
      %v959 = vpack.c.b16 %v943, %v941
      %v976 = vmul.bf16 %v880, %v944
      %v977 = vmul.bf16 %v881, %v945
      %v978 = vmul.bf16 %v882, %v946
      %v979 = vmul.bf16 %v883, %v947
      %v980 = vmul.bf16 %v884, %v948
      %v981 = vmul.bf16 %v885, %v949
      %v982 = vmul.bf16 %v886, %v950
      %v983 = vmul.bf16 %v887, %v951
      %v984 = vmul.bf16 %v888, %v952
      %v985 = vmul.bf16 %v889, %v953
      %v986 = vmul.bf16 %v890, %v954
      %v987 = vmul.bf16 %v891, %v955
      %v988 = vmul.bf16 %v892, %v956
      %v989 = vmul.bf16 %v893, %v957
      %v990 = vmul.bf16 %v894, %v958
      %v991 = vmul.bf16 %v895, %v959
      %v992 = vld [vmem:[%s293] sm:$0xf]
      %v993 = vld [vmem:[%s293 + $0x4] sm:$0xf]
      %v994 = vld [vmem:[%s293 + $0x8] sm:$0xf]
      %v995 = vld [vmem:[%s293 + $0xc] sm:$0xf]
      %v996 = vld [vmem:[%s293 + $0x10] sm:$0xf]
      %v997 = vld [vmem:[%s293 + $0x14] sm:$0xf]
      %v998 = vld [vmem:[%s293 + $0x18] sm:$0xf]
      %v999 = vld [vmem:[%s293 + $0x1c] sm:$0xf]
      %v1000 = vld [vmem:[%s293 + $0x20] sm:$0xf]
      %v1001 = vld [vmem:[%s293 + $0x24] sm:$0xf]
      %v1002 = vld [vmem:[%s293 + $0x28] sm:$0xf]
      %v1003 = vld [vmem:[%s293 + $0x2c] sm:$0xf]
      %v1004 = vld [vmem:[%s293 + $0x30] sm:$0xf]
      %v1005 = vld [vmem:[%s293 + $0x34] sm:$0xf]
      %v1006 = vld [vmem:[%s293 + $0x38] sm:$0xf]
      %v1007 = vld [vmem:[%s293 + $0x3c] sm:$0xf]
      %v1008 = vld [vmem:[%s293 + $0x40] sm:$0xf]
      %v1009 = vld [vmem:[%s293 + $0x44] sm:$0xf]
      %v1010 = vld [vmem:[%s293 + $0x48] sm:$0xf]
      %v1011 = vld [vmem:[%s293 + $0x4c] sm:$0xf]
      %v1012 = vld [vmem:[%s293 + $0x50] sm:$0xf]
      %v1013 = vld [vmem:[%s293 + $0x54] sm:$0xf]
      %v1014 = vld [vmem:[%s293 + $0x58] sm:$0xf]
      %v1015 = vld [vmem:[%s293 + $0x5c] sm:$0xf]
      %v1016 = vld [vmem:[%s293 + $0x60] sm:$0xf]
      %v1017 = vld [vmem:[%s293 + $0x64] sm:$0xf]
      %v1018 = vld [vmem:[%s293 + $0x68] sm:$0xf]
      %v1019 = vld [vmem:[%s293 + $0x6c] sm:$0xf]
      %v1020 = vld [vmem:[%s293 + $0x70] sm:$0xf]
      %v1021 = vld [vmem:[%s293 + $0x74] sm:$0xf]
      %v1022 = vld [vmem:[%s293 + $0x78] sm:$0xf]
      %v1023 = vld [vmem:[%s293 + $0x7c] sm:$0xf]
      %v1056 = vunpack.c.l.b16 %v992
      %v1057 = vunpack.c.l.b16 %v993
      %v1058 = vunpack.c.l.b16 %v994
      %v1059 = vunpack.c.l.b16 %v995
      %v1060 = vunpack.c.l.b16 %v996
      %v1061 = vunpack.c.l.b16 %v997
      %v1062 = vunpack.c.l.b16 %v998
      %v1063 = vunpack.c.l.b16 %v999
      %v1064 = vunpack.c.l.b16 %v1000
      %v1065 = vunpack.c.l.b16 %v1001
      %v1066 = vunpack.c.l.b16 %v1002
      %v1067 = vunpack.c.l.b16 %v1003
      %v1068 = vunpack.c.l.b16 %v1004
      %v1069 = vunpack.c.l.b16 %v1005
      %v1070 = vunpack.c.l.b16 %v1006
      %v1071 = vunpack.c.l.b16 %v1007
      %v1072 = vunpack.c.l.b16 %v1008
      %v1073 = vunpack.c.l.b16 %v1009
      %v1074 = vunpack.c.l.b16 %v1010
      %v1075 = vunpack.c.l.b16 %v1011
      %v1076 = vunpack.c.l.b16 %v1012
      %v1077 = vunpack.c.l.b16 %v1013
      %v1078 = vunpack.c.l.b16 %v1014
      %v1079 = vunpack.c.l.b16 %v1015
      %v1080 = vunpack.c.l.b16 %v1016
      %v1081 = vunpack.c.l.b16 %v1017
      %v1082 = vunpack.c.l.b16 %v1018
      %v1083 = vunpack.c.l.b16 %v1019
      %v1084 = vunpack.c.l.b16 %v1020
      %v1085 = vunpack.c.l.b16 %v1021
      %v1086 = vunpack.c.l.b16 %v1022
      %v1087 = vunpack.c.l.b16 %v1023
      %v1088 = vpack.c.b16 %v1057, %v1056
      %v1089 = vpack.c.b16 %v1059, %v1058
      %v1090 = vpack.c.b16 %v1061, %v1060
      %v1091 = vpack.c.b16 %v1063, %v1062
      %v1092 = vpack.c.b16 %v1065, %v1064
      %v1093 = vpack.c.b16 %v1067, %v1066
      %v1094 = vpack.c.b16 %v1069, %v1068
      %v1095 = vpack.c.b16 %v1071, %v1070
      %v1096 = vpack.c.b16 %v1073, %v1072
      %v1097 = vpack.c.b16 %v1075, %v1074
      %v1098 = vpack.c.b16 %v1077, %v1076
      %v1099 = vpack.c.b16 %v1079, %v1078
      %v1100 = vpack.c.b16 %v1081, %v1080
      %v1101 = vpack.c.b16 %v1083, %v1082
      %v1102 = vpack.c.b16 %v1085, %v1084
      %v1103 = vpack.c.b16 %v1087, %v1086
      %1120 = vmatprep.subr.bf16.mxu0 0
      %1121 = vmatpush1.bf16.msra.mxu0 %v1095
      %1122 = vmatprep.subr.bf16.mxu0 0
      %1123 = vmatpush1.bf16.msra.mxu0 %v1094
      %1124 = vmatprep.subr.bf16.mxu0 0
      %1125 = vmatpush1.bf16.msra.mxu0 %v1093
      %1126 = vmatprep.subr.bf16.mxu0 0
      %1127 = vmatpush1.bf16.msra.mxu0 %v1092
      %1128 = vmatprep.subr.bf16.mxu0 0
      %1129 = vmatpush1.bf16.msra.mxu0 %v1091
      %1130 = vmatprep.subr.bf16.mxu0 0
      %1131 = vmatpush1.bf16.msra.mxu0 %v1090
      %1132 = vmatprep.subr.bf16.mxu0 0
      %1133 = vmatpush1.bf16.msra.mxu0 %v1089
      %1134 = vmatprep.subr.bf16.mxu0 0
      %1135 = vmatpush1.bf16.msra.mxu0 %v1088
      %1136 = vmatprep.subr.bf16.mxu0 0
      %1137 = vmatpush2.bf16.msra.mxu0 %v1103
      %1138 = vmatprep.subr.bf16.mxu0 0
      %1139 = vmatpush2.bf16.msra.mxu0 %v1102
      %1140 = vmatprep.subr.bf16.mxu0 0
      %1141 = vmatpush2.bf16.msra.mxu0 %v1101
      %1142 = vmatprep.subr.bf16.mxu0 0
      %1143 = vmatpush2.bf16.msra.mxu0 %v1100
      %1144 = vmatprep.subr.bf16.mxu0 0
      %1145 = vmatpush2.bf16.msra.mxu0 %v1099
      %1146 = vmatprep.subr.bf16.mxu0 0
      %1147 = vmatpush2.bf16.msra.mxu0 %v1098
      %1148 = vmatprep.subr.bf16.mxu0 0
      %1149 = vmatpush2.bf16.msra.mxu0 %v1097
      %1150 = vmatprep.subr.bf16.mxu0 0
      %1151 = vmatpush2.bf16.msra.mxu0 %v1096
      %1152 = vmatprep.mubr.bf16.mxu0 %v977
      %1153 = vmatmul.mubr.bf16.gmra.mxu0 %v976
      %v1154 = vpop.f32.mrf.mxu0
      %v1155 = vadd.f32 0.0, %v1154
      %v1156 = vpop.f32.mrf.mxu0
      %v1157 = vpop.f32.mrf.mxu0
      %v1158 = vadd.f32 0.0, %v1157
      %v1159 = vpop.f32.mrf.mxu0
      %1160 = vmatprep.mubr.bf16.mxu0 %v979
      %1161 = vmatmul.mubr.bf16.gmra.mxu0 %v978
      %v1162 = vpop.f32.mrf.mxu0
      %v1163 = vadd.f32 0.0, %v1162
      %v1164 = vpop.f32.mrf.mxu0
      %v1165 = vpop.f32.mrf.mxu0
      %v1166 = vadd.f32 0.0, %v1165
      %v1167 = vpop.f32.mrf.mxu0
      %1168 = vmatprep.mubr.bf16.mxu0 %v981
      %1169 = vmatmul.mubr.bf16.gmra.mxu0 %v980
      %v1170 = vpop.f32.mrf.mxu0
      %v1171 = vadd.f32 0.0, %v1170
      %v1172 = vpop.f32.mrf.mxu0
      %v1173 = vpop.f32.mrf.mxu0
      %v1174 = vadd.f32 0.0, %v1173
      %v1175 = vpop.f32.mrf.mxu0
      %1176 = vmatprep.mubr.bf16.mxu0 %v983
      %1177 = vmatmul.mubr.bf16.gmra.mxu0 %v982
      %v1178 = vpop.f32.mrf.mxu0
      %v1179 = vadd.f32 0.0, %v1178
      %v1180 = vpop.f32.mrf.mxu0
      %v1181 = vpop.f32.mrf.mxu0
      %v1182 = vadd.f32 0.0, %v1181
      %v1183 = vpop.f32.mrf.mxu0
      %1184 = vmatprep.mubr.bf16.mxu0 %v985
      %1185 = vmatmul.mubr.bf16.gmra.mxu0 %v984
      %v1186 = vpop.f32.mrf.mxu0
      %v1187 = vadd.f32 0.0, %v1186
      %v1188 = vpop.f32.mrf.mxu0
      %v1189 = vpop.f32.mrf.mxu0
      %v1190 = vadd.f32 0.0, %v1189
      %v1191 = vpop.f32.mrf.mxu0
      %1192 = vmatprep.mubr.bf16.mxu0 %v987
      %1193 = vmatmul.mubr.bf16.gmra.mxu0 %v986
      %v1194 = vpop.f32.mrf.mxu0
      %v1195 = vadd.f32 0.0, %v1194
      %v1196 = vpop.f32.mrf.mxu0
      %v1197 = vpop.f32.mrf.mxu0
      %v1198 = vadd.f32 0.0, %v1197
      %v1199 = vpop.f32.mrf.mxu0
      %1200 = vmatprep.mubr.bf16.mxu0 %v989
      %1201 = vmatmul.mubr.bf16.gmra.mxu0 %v988
      %v1202 = vpop.f32.mrf.mxu0
      %v1203 = vadd.f32 0.0, %v1202
      %v1204 = vpop.f32.mrf.mxu0
      %v1205 = vpop.f32.mrf.mxu0
      %v1206 = vadd.f32 0.0, %v1205
      %v1207 = vpop.f32.mrf.mxu0
      %1208 = vmatprep.mubr.bf16.mxu0 %v991
      %1209 = vmatmul.mubr.bf16.gmra.mxu0 %v990
      %v1210 = vpop.f32.mrf.mxu0
      %v1211 = vadd.f32 0.0, %v1210
      %v1212 = vpop.f32.mrf.mxu0
      %v1213 = vpop.f32.mrf.mxu0
      %v1214 = vadd.f32 0.0, %v1213
      %v1215 = vpop.f32.mrf.mxu0
      %1216 = vdwg.mxu0
      %v1217 = vsub.f32 %v624, %v688
      %v1218 = vsub.f32 %v625, %v689
      %v1219 = vsub.f32 %v626, %v690
      %v1220 = vsub.f32 %v627, %v691
      %v1221 = vsub.f32 %v628, %v692
      %v1222 = vsub.f32 %v629, %v693
      %v1223 = vsub.f32 %v630, %v694
      %v1224 = vsub.f32 %v631, %v695
      %v1225 = vsub.f32 %v632, %v696
      %v1226 = vsub.f32 %v633, %v697
      %v1227 = vsub.f32 %v634, %v698
      %v1228 = vsub.f32 %v635, %v699
      %v1229 = vsub.f32 %v636, %v700
      %v1230 = vsub.f32 %v637, %v701
      %v1231 = vsub.f32 %v638, %v702
      %v1232 = vsub.f32 %v639, %v703
      %v1233 = vmul.f32 %v1217, 1.442695
      %v1234 = vpow.pop %v1233
      %v1235 = vmul.f32 %v1218, 1.442695
      %v1236 = vpow.pop %v1235
      %v1237 = vmul.f32 %v1219, 1.442695
      %v1238 = vpow.pop %v1237
      %v1239 = vmul.f32 %v1220, 1.442695
      %v1240 = vpow.pop %v1239
      %v1241 = vmul.f32 %v1221, 1.442695
      %v1242 = vpow.pop %v1241
      %v1243 = vmul.f32 %v1222, 1.442695
      %v1244 = vpow.pop %v1243
      %v1245 = vmul.f32 %v1223, 1.442695
      %v1246 = vpow.pop %v1245
      %v1247 = vmul.f32 %v1224, 1.442695
      %v1248 = vpow.pop %v1247
      %v1249 = vmul.f32 %v1225, 1.442695
      %v1250 = vpow.pop %v1249
      %v1251 = vmul.f32 %v1226, 1.442695
      %v1252 = vpow.pop %v1251
      %v1253 = vmul.f32 %v1227, 1.442695
      %v1254 = vpow.pop %v1253
      %v1255 = vmul.f32 %v1228, 1.442695
      %v1256 = vpow.pop %v1255
      %v1257 = vmul.f32 %v1229, 1.442695
      %v1258 = vpow.pop %v1257
      %v1259 = vmul.f32 %v1230, 1.442695
      %v1260 = vpow.pop %v1259
      %v1261 = vmul.f32 %v1231, 1.442695
      %v1262 = vpow.pop %v1261
      %v1263 = vmul.f32 %v1232, 1.442695
      %v1264 = vpow.pop %v1263
      %v1265 = vld [vmem:[#allocation3] sm:$0xff]
      %v1266 = vld [vmem:[#allocation3 + $0x8] sm:$0xff]
      %v1267 = vld [vmem:[#allocation3 + $0x10] sm:$0xff]
      %v1268 = vld [vmem:[#allocation3 + $0x18] sm:$0xff]
      %v1269 = vld [vmem:[#allocation3 + $0x20] sm:$0xff]
      %v1270 = vld [vmem:[#allocation3 + $0x28] sm:$0xff]
      %v1271 = vld [vmem:[#allocation3 + $0x30] sm:$0xff]
      %v1272 = vld [vmem:[#allocation3 + $0x38] sm:$0xff]
      %v1273 = vld [vmem:[#allocation3 + $0x40] sm:$0xff]
      %v1274 = vld [vmem:[#allocation3 + $0x48] sm:$0xff]
      %v1275 = vld [vmem:[#allocation3 + $0x50] sm:$0xff]
      %v1276 = vld [vmem:[#allocation3 + $0x58] sm:$0xff]
      %v1277 = vld [vmem:[#allocation3 + $0x60] sm:$0xff]
      %v1278 = vld [vmem:[#allocation3 + $0x68] sm:$0xff]
      %v1279 = vld [vmem:[#allocation3 + $0x70] sm:$0xff]
      %v1280 = vld [vmem:[#allocation3 + $0x78] sm:$0xff]
      %1282 = vset.pattern.permute.xlu0 0
      %1283 = vperm.xlu0 %1282, %v1234
      %v1284 = vpop.permute.xlu0 %1283
      %1287 = vset.pattern.permute.xlu0 0
      %1288 = vperm.xlu0 %1287, %v1236
      %v1289 = vpop.permute.xlu0 %1288
      %1292 = vset.pattern.permute.xlu0 0
      %1293 = vperm.xlu0 %1292, %v1238
      %v1294 = vpop.permute.xlu0 %1293
      %1297 = vset.pattern.permute.xlu0 0
      %1298 = vperm.xlu0 %1297, %v1240
      %v1299 = vpop.permute.xlu0 %1298
      %1302 = vset.pattern.permute.xlu0 0
      %1303 = vperm.xlu0 %1302, %v1242
      %v1304 = vpop.permute.xlu0 %1303
      %1307 = vset.pattern.permute.xlu0 0
      %1308 = vperm.xlu0 %1307, %v1244
      %v1309 = vpop.permute.xlu0 %1308
      %1312 = vset.pattern.permute.xlu0 0
      %1313 = vperm.xlu0 %1312, %v1246
      %v1314 = vpop.permute.xlu0 %1313
      %1317 = vset.pattern.permute.xlu0 0
      %1318 = vperm.xlu0 %1317, %v1248
      %v1319 = vpop.permute.xlu0 %1318
      %1322 = vset.pattern.permute.xlu0 0
      %1323 = vperm.xlu0 %1322, %v1250
      %v1324 = vpop.permute.xlu0 %1323
      %1327 = vset.pattern.permute.xlu0 0
      %1328 = vperm.xlu0 %1327, %v1252
      %v1329 = vpop.permute.xlu0 %1328
      %1332 = vset.pattern.permute.xlu0 0
      %1333 = vperm.xlu0 %1332, %v1254
      %v1334 = vpop.permute.xlu0 %1333
      %1337 = vset.pattern.permute.xlu0 0
      %1338 = vperm.xlu0 %1337, %v1256
      %v1339 = vpop.permute.xlu0 %1338
      %1342 = vset.pattern.permute.xlu0 0
      %1343 = vperm.xlu0 %1342, %v1258
      %v1344 = vpop.permute.xlu0 %1343
      %1347 = vset.pattern.permute.xlu0 0
      %1348 = vperm.xlu0 %1347, %v1260
      %v1349 = vpop.permute.xlu0 %1348
      %1352 = vset.pattern.permute.xlu0 0
      %1353 = vperm.xlu0 %1352, %v1262
      %v1354 = vpop.permute.xlu0 %1353
      %1357 = vset.pattern.permute.xlu0 0
      %1358 = vperm.xlu0 %1357, %v1264
      %v1359 = vpop.permute.xlu0 %1358
      %v1361 = vmul.f32 %v1265, %v1284
      %v1362 = vmul.f32 %v1266, %v1289
      %v1363 = vmul.f32 %v1267, %v1294
      %v1364 = vmul.f32 %v1268, %v1299
      %v1365 = vmul.f32 %v1269, %v1304
      %v1366 = vmul.f32 %v1270, %v1309
      %v1367 = vmul.f32 %v1271, %v1314
      %v1368 = vmul.f32 %v1272, %v1319
      %v1369 = vmul.f32 %v1273, %v1324
      %v1370 = vmul.f32 %v1274, %v1329
      %v1371 = vmul.f32 %v1275, %v1334
      %v1372 = vmul.f32 %v1276, %v1339
      %v1373 = vmul.f32 %v1277, %v1344
      %v1374 = vmul.f32 %v1278, %v1349
      %v1375 = vmul.f32 %v1279, %v1354
      %v1376 = vmul.f32 %v1280, %v1359
      %v1377 = vadd.f32 %v1361, %v1155
      %v1378 = vadd.f32 %v1362, %v1158
      %v1379 = vadd.f32 %v1363, %v1163
      %v1380 = vadd.f32 %v1364, %v1166
      %v1381 = vadd.f32 %v1365, %v1171
      %v1382 = vadd.f32 %v1366, %v1174
      %v1383 = vadd.f32 %v1367, %v1179
      %v1384 = vadd.f32 %v1368, %v1182
      %v1385 = vadd.f32 %v1369, %v1187
      %v1386 = vadd.f32 %v1370, %v1190
      %v1387 = vadd.f32 %v1371, %v1195
      %v1388 = vadd.f32 %v1372, %v1198
      %v1389 = vadd.f32 %v1373, %v1203
      %v1390 = vadd.f32 %v1374, %v1206
      %v1391 = vadd.f32 %v1375, %v1211
      %v1392 = vadd.f32 %v1376, %v1214
      %vm1393 = vcmask 523264
      %1394 = vst.msk [vmem:[#allocation3] sm:$0xff] %vm1393, %v1377
      %1395 = vst.msk [vmem:[#allocation3 + $0x8] sm:$0xff] %vm1393, %v1378
      %1396 = vst.msk [vmem:[#allocation3 + $0x10] sm:$0xff] %vm1393, %v1379
      %1397 = vst.msk [vmem:[#allocation3 + $0x18] sm:$0xff] %vm1393, %v1380
      %1398 = vst.msk [vmem:[#allocation3 + $0x20] sm:$0xff] %vm1393, %v1381
      %1399 = vst.msk [vmem:[#allocation3 + $0x28] sm:$0xff] %vm1393, %v1382
      %1400 = vst.msk [vmem:[#allocation3 + $0x30] sm:$0xff] %vm1393, %v1383
      %1401 = vst.msk [vmem:[#allocation3 + $0x38] sm:$0xff] %vm1393, %v1384
      %1402 = vst.msk [vmem:[#allocation3 + $0x40] sm:$0xff] %vm1393, %v1385
      %1403 = vst.msk [vmem:[#allocation3 + $0x48] sm:$0xff] %vm1393, %v1386
      %1404 = vst.msk [vmem:[#allocation3 + $0x50] sm:$0xff] %vm1393, %v1387
      %1405 = vst.msk [vmem:[#allocation3 + $0x58] sm:$0xff] %vm1393, %v1388
      %1406 = vst.msk [vmem:[#allocation3 + $0x60] sm:$0xff] %vm1393, %v1389
      %1407 = vst.msk [vmem:[#allocation3 + $0x68] sm:$0xff] %vm1393, %v1390
      %1408 = vst.msk [vmem:[#allocation3 + $0x70] sm:$0xff] %vm1393, %v1391
      %1409 = vst.msk [vmem:[#allocation3 + $0x78] sm:$0xff] %vm1393, %v1392
      %vm1410 = vcmask 7168
      %1411 = vst.msk [vmem:[#allocation2] sm:$0xff] %vm1410, %v688
      %1412 = vst.msk [vmem:[#allocation2 + $0x8] sm:$0xff] %vm1410, %v689
      %1413 = vst.msk [vmem:[#allocation2 + $0x10] sm:$0xff] %vm1410, %v690
      %1414 = vst.msk [vmem:[#allocation2 + $0x18] sm:$0xff] %vm1410, %v691
      %1415 = vst.msk [vmem:[#allocation2 + $0x20] sm:$0xff] %vm1410, %v692
      %1416 = vst.msk [vmem:[#allocation2 + $0x28] sm:$0xff] %vm1410, %v693
      %1417 = vst.msk [vmem:[#allocation2 + $0x30] sm:$0xff] %vm1410, %v694
      %1418 = vst.msk [vmem:[#allocation2 + $0x38] sm:$0xff] %vm1410, %v695
      %1419 = vst.msk [vmem:[#allocation2 + $0x40] sm:$0xff] %vm1410, %v696
      %1420 = vst.msk [vmem:[#allocation2 + $0x48] sm:$0xff] %vm1410, %v697
      %1421 = vst.msk [vmem:[#allocation2 + $0x50] sm:$0xff] %vm1410, %v698
      %1422 = vst.msk [vmem:[#allocation2 + $0x58] sm:$0xff] %vm1410, %v699
      %1423 = vst.msk [vmem:[#allocation2 + $0x60] sm:$0xff] %vm1410, %v700
      %1424 = vst.msk [vmem:[#allocation2 + $0x68] sm:$0xff] %vm1410, %v701
      %1425 = vst.msk [vmem:[#allocation2 + $0x70] sm:$0xff] %vm1410, %v702
      %1426 = vst.msk [vmem:[#allocation2 + $0x78] sm:$0xff] %vm1410, %v703
      %1427 = vset.pattern.permute.xlu0 1
      %1428 = vperm.xlu0 %1427, %v412
      %v1429 = vpop.permute.xlu0 %1428
      %1431 = vset.pattern.permute.xlu0 1
      %1432 = vperm.xlu0 %1431, %v413
      %v1433 = vpop.permute.xlu0 %1432
      %1435 = vset.pattern.permute.xlu0 1
      %1436 = vperm.xlu0 %1435, %v414
      %v1437 = vpop.permute.xlu0 %1436
      %1439 = vset.pattern.permute.xlu0 1
      %1440 = vperm.xlu0 %1439, %v415
      %v1441 = vpop.permute.xlu0 %1440
      %1443 = vset.pattern.permute.xlu0 1
      %1444 = vperm.xlu0 %1443, %v416
      %v1445 = vpop.permute.xlu0 %1444
      %1447 = vset.pattern.permute.xlu0 1
      %1448 = vperm.xlu0 %1447, %v417
      %v1449 = vpop.permute.xlu0 %1448
      %1451 = vset.pattern.permute.xlu0 1
      %1452 = vperm.xlu0 %1451, %v418
      %v1453 = vpop.permute.xlu0 %1452
      %1455 = vset.pattern.permute.xlu0 1
      %1456 = vperm.xlu0 %1455, %v419
      %v1457 = vpop.permute.xlu0 %1456
      %1459 = vset.pattern.permute.xlu0 1
      %1460 = vperm.xlu0 %1459, %v420
      %v1461 = vpop.permute.xlu0 %1460
      %1463 = vset.pattern.permute.xlu0 1
      %1464 = vperm.xlu0 %1463, %v421
      %v1465 = vpop.permute.xlu0 %1464
      %1467 = vset.pattern.permute.xlu0 1
      %1468 = vperm.xlu0 %1467, %v422
      %v1469 = vpop.permute.xlu0 %1468
      %1471 = vset.pattern.permute.xlu0 1
      %1472 = vperm.xlu0 %1471, %v423
      %v1473 = vpop.permute.xlu0 %1472
      %1475 = vset.pattern.permute.xlu0 1
      %1476 = vperm.xlu0 %1475, %v424
      %v1477 = vpop.permute.xlu0 %1476
      %1479 = vset.pattern.permute.xlu0 1
      %1480 = vperm.xlu0 %1479, %v425
      %v1481 = vpop.permute.xlu0 %1480
      %1483 = vset.pattern.permute.xlu0 1
      %1484 = vperm.xlu0 %1483, %v426
      %v1485 = vpop.permute.xlu0 %1484
      %1487 = vset.pattern.permute.xlu0 1
      %1488 = vperm.xlu0 %1487, %v427
      %v1489 = vpop.permute.xlu0 %1488
      %v1491 = vlaneseq
      %v1492 = vshrl.u32 %v1491, 7
      %v1493 = vsub.s32 1, %v1492
      %v1494 = vrot.slane %v428, %v1493
      %v1495 = vlaneseq
      %v1496 = vshrl.u32 %v1495, 7
      %v1497 = vsub.s32 3, %v1496
      %v1498 = vrot.slane %v428, %v1497
      %v1501 = vlaneseq
      %v1502 = vshrl.u32 %v1501, 7
      %v1503 = vsub.s32 1, %v1502
      %v1504 = vrot.slane %v1494, %v1503
      %v1505 = vlaneseq
      %v1506 = vshrl.u32 %v1505, 7
      %v1507 = vsub.s32 1, %v1506
      %v1508 = vrot.slane %v1498, %v1507
      %v1509 = vadd.f32 %v1429, %v1504
      %v1510 = vadd.f32 %v1429, %v1508
      %v1511 = vadd.f32 %v1433, %v1504
      %v1512 = vadd.f32 %v1433, %v1508
      %v1513 = vadd.f32 %v1437, %v1504
      %v1514 = vadd.f32 %v1437, %v1508
      %v1515 = vadd.f32 %v1441, %v1504
      %v1516 = vadd.f32 %v1441, %v1508
      %v1517 = vadd.f32 %v1445, %v1504
      %v1518 = vadd.f32 %v1445, %v1508
      %v1519 = vadd.f32 %v1449, %v1504
      %v1520 = vadd.f32 %v1449, %v1508
      %v1521 = vadd.f32 %v1453, %v1504
      %v1522 = vadd.f32 %v1453, %v1508
      %v1523 = vadd.f32 %v1457, %v1504
      %v1524 = vadd.f32 %v1457, %v1508
      %v1525 = vadd.f32 %v1461, %v1504
      %v1526 = vadd.f32 %v1461, %v1508
      %v1527 = vadd.f32 %v1465, %v1504
      %v1528 = vadd.f32 %v1465, %v1508
      %v1529 = vadd.f32 %v1469, %v1504
      %v1530 = vadd.f32 %v1469, %v1508
      %v1531 = vadd.f32 %v1473, %v1504
      %v1532 = vadd.f32 %v1473, %v1508
      %v1533 = vadd.f32 %v1477, %v1504
      %v1534 = vadd.f32 %v1477, %v1508
      %v1535 = vadd.f32 %v1481, %v1504
      %v1536 = vadd.f32 %v1481, %v1508
      %v1537 = vadd.f32 %v1485, %v1504
      %v1538 = vadd.f32 %v1485, %v1508
      %v1539 = vadd.f32 %v1489, %v1504
      %v1540 = vadd.f32 %v1489, %v1508
      %v1541 = vmul.f32 %v1509, 0.2
      %v1542 = vmul.f32 %v1510, 0.2
      %v1543 = vmul.f32 %v1511, 0.2
      %v1544 = vmul.f32 %v1512, 0.2
      %v1545 = vmul.f32 %v1513, 0.2
      %v1546 = vmul.f32 %v1514, 0.2
      %v1547 = vmul.f32 %v1515, 0.2
      %v1548 = vmul.f32 %v1516, 0.2
      %v1549 = vmul.f32 %v1517, 0.2
      %v1550 = vmul.f32 %v1518, 0.2
      %v1551 = vmul.f32 %v1519, 0.2
      %v1552 = vmul.f32 %v1520, 0.2
      %v1553 = vmul.f32 %v1521, 0.2
      %v1554 = vmul.f32 %v1522, 0.2
      %v1555 = vmul.f32 %v1523, 0.2
      %v1556 = vmul.f32 %v1524, 0.2
      %v1557 = vmul.f32 %v1525, 0.2
      %v1558 = vmul.f32 %v1526, 0.2
      %v1559 = vmul.f32 %v1527, 0.2
      %v1560 = vmul.f32 %v1528, 0.2
      %v1561 = vmul.f32 %v1529, 0.2
      %v1562 = vmul.f32 %v1530, 0.2
      %v1563 = vmul.f32 %v1531, 0.2
      %v1564 = vmul.f32 %v1532, 0.2
      %v1565 = vmul.f32 %v1533, 0.2
      %v1566 = vmul.f32 %v1534, 0.2
      %v1567 = vmul.f32 %v1535, 0.2
      %v1568 = vmul.f32 %v1536, 0.2
      %v1569 = vmul.f32 %v1537, 0.2
      %v1570 = vmul.f32 %v1538, 0.2
      %v1571 = vmul.f32 %v1539, 0.2
      %v1572 = vmul.f32 %v1540, 0.2
      %v1573 = vmax.f32 %v1509, %v1541
      %v1574 = vmax.f32 %v1510, %v1542
      %v1575 = vmax.f32 %v1511, %v1543
      %v1576 = vmax.f32 %v1512, %v1544
      %v1577 = vmax.f32 %v1513, %v1545
      %v1578 = vmax.f32 %v1514, %v1546
      %v1579 = vmax.f32 %v1515, %v1547
      %v1580 = vmax.f32 %v1516, %v1548
      %v1581 = vmax.f32 %v1517, %v1549
      %v1582 = vmax.f32 %v1518, %v1550
      %v1583 = vmax.f32 %v1519, %v1551
      %v1584 = vmax.f32 %v1520, %v1552
      %v1585 = vmax.f32 %v1521, %v1553
      %v1586 = vmax.f32 %v1522, %v1554
      %v1587 = vmax.f32 %v1523, %v1555
      %v1588 = vmax.f32 %v1524, %v1556
      %v1589 = vmax.f32 %v1525, %v1557
      %v1590 = vmax.f32 %v1526, %v1558
      %v1591 = vmax.f32 %v1527, %v1559
      %v1592 = vmax.f32 %v1528, %v1560
      %v1593 = vmax.f32 %v1529, %v1561
      %v1594 = vmax.f32 %v1530, %v1562
      %v1595 = vmax.f32 %v1531, %v1563
      %v1596 = vmax.f32 %v1532, %v1564
      %v1597 = vmax.f32 %v1533, %v1565
      %v1598 = vmax.f32 %v1534, %v1566
      %v1599 = vmax.f32 %v1535, %v1567
      %v1600 = vmax.f32 %v1536, %v1568
      %v1601 = vmax.f32 %v1537, %v1569
      %v1602 = vmax.f32 %v1538, %v1570
      %v1603 = vmax.f32 %v1539, %v1571
      %v1604 = vmax.f32 %v1540, %v1572
      %s1605 = scalar_lea.vmem [#allocation2], 128
      %v1606 = vld [vmem:[%s1605] sm:$0xff]
      %v1607 = vld [vmem:[%s1605 + $0x8] sm:$0xff]
      %v1608 = vld [vmem:[%s1605 + $0x10] sm:$0xff]
      %v1609 = vld [vmem:[%s1605 + $0x18] sm:$0xff]
      %v1610 = vld [vmem:[%s1605 + $0x20] sm:$0xff]
      %v1611 = vld [vmem:[%s1605 + $0x28] sm:$0xff]
      %v1612 = vld [vmem:[%s1605 + $0x30] sm:$0xff]
      %v1613 = vld [vmem:[%s1605 + $0x38] sm:$0xff]
      %v1614 = vld [vmem:[%s1605 + $0x40] sm:$0xff]
      %v1615 = vld [vmem:[%s1605 + $0x48] sm:$0xff]
      %v1616 = vld [vmem:[%s1605 + $0x50] sm:$0xff]
      %v1617 = vld [vmem:[%s1605 + $0x58] sm:$0xff]
      %v1618 = vld [vmem:[%s1605 + $0x60] sm:$0xff]
      %v1619 = vld [vmem:[%s1605 + $0x68] sm:$0xff]
      %v1620 = vld [vmem:[%s1605 + $0x70] sm:$0xff]
      %v1621 = vld [vmem:[%s1605 + $0x78] sm:$0xff]
      %v1622 = vmax.f32 %v1573, %v1574
      %1623 = vmax.xlane.f32.xlu0 %v1622
      %v1624 = vpop.xlane.xlu0 %1623
      %v1625 = vmax.f32 %v1575, %v1576
      %1626 = vmax.xlane.f32.xlu0 %v1625
      %v1627 = vpop.xlane.xlu0 %1626
      %v1628 = vmax.f32 %v1577, %v1578
      %1629 = vmax.xlane.f32.xlu0 %v1628
      %v1630 = vpop.xlane.xlu0 %1629
      %v1631 = vmax.f32 %v1579, %v1580
      %1632 = vmax.xlane.f32.xlu0 %v1631
      %v1633 = vpop.xlane.xlu0 %1632
      %v1634 = vmax.f32 %v1581, %v1582
      %1635 = vmax.xlane.f32.xlu0 %v1634
      %v1636 = vpop.xlane.xlu0 %1635
      %v1637 = vmax.f32 %v1583, %v1584
      %1638 = vmax.xlane.f32.xlu0 %v1637
      %v1639 = vpop.xlane.xlu0 %1638
      %v1640 = vmax.f32 %v1585, %v1586
      %1641 = vmax.xlane.f32.xlu0 %v1640
      %v1642 = vpop.xlane.xlu0 %1641
      %v1643 = vmax.f32 %v1587, %v1588
      %1644 = vmax.xlane.f32.xlu0 %v1643
      %v1645 = vpop.xlane.xlu0 %1644
      %v1646 = vmax.f32 %v1589, %v1590
      %1647 = vmax.xlane.f32.xlu0 %v1646
      %v1648 = vpop.xlane.xlu0 %1647
      %v1649 = vmax.f32 %v1591, %v1592
      %1650 = vmax.xlane.f32.xlu0 %v1649
      %v1651 = vpop.xlane.xlu0 %1650
      %v1652 = vmax.f32 %v1593, %v1594
      %1653 = vmax.xlane.f32.xlu0 %v1652
      %v1654 = vpop.xlane.xlu0 %1653
      %v1655 = vmax.f32 %v1595, %v1596
      %1656 = vmax.xlane.f32.xlu0 %v1655
      %v1657 = vpop.xlane.xlu0 %1656
      %v1658 = vmax.f32 %v1597, %v1598
      %1659 = vmax.xlane.f32.xlu0 %v1658
      %v1660 = vpop.xlane.xlu0 %1659
      %v1661 = vmax.f32 %v1599, %v1600
      %1662 = vmax.xlane.f32.xlu0 %v1661
      %v1663 = vpop.xlane.xlu0 %1662
      %v1664 = vmax.f32 %v1601, %v1602
      %1665 = vmax.xlane.f32.xlu0 %v1664
      %v1666 = vpop.xlane.xlu0 %1665
      %v1667 = vmax.f32 %v1603, %v1604
      %1668 = vmax.xlane.f32.xlu0 %v1667
      %v1669 = vpop.xlane.xlu0 %1668
      %v1670 = vmax.f32 %v1606, %v1624
      %v1671 = vmax.f32 %v1607, %v1627
      %v1672 = vmax.f32 %v1608, %v1630
      %v1673 = vmax.f32 %v1609, %v1633
      %v1674 = vmax.f32 %v1610, %v1636
      %v1675 = vmax.f32 %v1611, %v1639
      %v1676 = vmax.f32 %v1612, %v1642
      %v1677 = vmax.f32 %v1613, %v1645
      %v1678 = vmax.f32 %v1614, %v1648
      %v1679 = vmax.f32 %v1615, %v1651
      %v1680 = vmax.f32 %v1616, %v1654
      %v1681 = vmax.f32 %v1617, %v1657
      %v1682 = vmax.f32 %v1618, %v1660
      %v1683 = vmax.f32 %v1619, %v1663
      %v1684 = vmax.f32 %v1620, %v1666
      %v1685 = vmax.f32 %v1621, %v1669
      %1687 = vset.pattern.permute.xlu0 0
      %1688 = vperm.xlu0 %1687, %v1670
      %v1689 = vpop.permute.xlu0 %1688
      %1692 = vset.pattern.permute.xlu0 0
      %1693 = vperm.xlu0 %1692, %v1671
      %v1694 = vpop.permute.xlu0 %1693
      %1697 = vset.pattern.permute.xlu0 0
      %1698 = vperm.xlu0 %1697, %v1672
      %v1699 = vpop.permute.xlu0 %1698
      %1702 = vset.pattern.permute.xlu0 0
      %1703 = vperm.xlu0 %1702, %v1673
      %v1704 = vpop.permute.xlu0 %1703
      %1707 = vset.pattern.permute.xlu0 0
      %1708 = vperm.xlu0 %1707, %v1674
      %v1709 = vpop.permute.xlu0 %1708
      %1712 = vset.pattern.permute.xlu0 0
      %1713 = vperm.xlu0 %1712, %v1675
      %v1714 = vpop.permute.xlu0 %1713
      %1717 = vset.pattern.permute.xlu0 0
      %1718 = vperm.xlu0 %1717, %v1676
      %v1719 = vpop.permute.xlu0 %1718
      %1722 = vset.pattern.permute.xlu0 0
      %1723 = vperm.xlu0 %1722, %v1677
      %v1724 = vpop.permute.xlu0 %1723
      %1727 = vset.pattern.permute.xlu0 0
      %1728 = vperm.xlu0 %1727, %v1678
      %v1729 = vpop.permute.xlu0 %1728
      %1732 = vset.pattern.permute.xlu0 0
      %1733 = vperm.xlu0 %1732, %v1679
      %v1734 = vpop.permute.xlu0 %1733
      %1737 = vset.pattern.permute.xlu0 0
      %1738 = vperm.xlu0 %1737, %v1680
      %v1739 = vpop.permute.xlu0 %1738
      %1742 = vset.pattern.permute.xlu0 0
      %1743 = vperm.xlu0 %1742, %v1681
      %v1744 = vpop.permute.xlu0 %1743
      %1747 = vset.pattern.permute.xlu0 0
      %1748 = vperm.xlu0 %1747, %v1682
      %v1749 = vpop.permute.xlu0 %1748
      %1752 = vset.pattern.permute.xlu0 0
      %1753 = vperm.xlu0 %1752, %v1683
      %v1754 = vpop.permute.xlu0 %1753
      %1757 = vset.pattern.permute.xlu0 0
      %1758 = vperm.xlu0 %1757, %v1684
      %v1759 = vpop.permute.xlu0 %1758
      %1762 = vset.pattern.permute.xlu0 0
      %1763 = vperm.xlu0 %1762, %v1685
      %v1764 = vpop.permute.xlu0 %1763
      %v1766 = vsub.f32 %v1573, %v1689
      %v1767 = vsub.f32 %v1574, %v1689
      %v1768 = vsub.f32 %v1575, %v1694
      %v1769 = vsub.f32 %v1576, %v1694
      %v1770 = vsub.f32 %v1577, %v1699
      %v1771 = vsub.f32 %v1578, %v1699
      %v1772 = vsub.f32 %v1579, %v1704
      %v1773 = vsub.f32 %v1580, %v1704
      %v1774 = vsub.f32 %v1581, %v1709
      %v1775 = vsub.f32 %v1582, %v1709
      %v1776 = vsub.f32 %v1583, %v1714
      %v1777 = vsub.f32 %v1584, %v1714
      %v1778 = vsub.f32 %v1585, %v1719
      %v1779 = vsub.f32 %v1586, %v1719
      %v1780 = vsub.f32 %v1587, %v1724
      %v1781 = vsub.f32 %v1588, %v1724
      %v1782 = vsub.f32 %v1589, %v1729
      %v1783 = vsub.f32 %v1590, %v1729
      %v1784 = vsub.f32 %v1591, %v1734
      %v1785 = vsub.f32 %v1592, %v1734
      %v1786 = vsub.f32 %v1593, %v1739
      %v1787 = vsub.f32 %v1594, %v1739
      %v1788 = vsub.f32 %v1595, %v1744
      %v1789 = vsub.f32 %v1596, %v1744
      %v1790 = vsub.f32 %v1597, %v1749
      %v1791 = vsub.f32 %v1598, %v1749
      %v1792 = vsub.f32 %v1599, %v1754
      %v1793 = vsub.f32 %v1600, %v1754
      %v1794 = vsub.f32 %v1601, %v1759
      %v1795 = vsub.f32 %v1602, %v1759
      %v1796 = vsub.f32 %v1603, %v1764
      %v1797 = vsub.f32 %v1604, %v1764
      %v1798 = vmul.f32 %v1766, 1.442695
      %v1799 = vpow.pop %v1798
      %v1800 = vmul.f32 %v1767, 1.442695
      %v1801 = vpow.pop %v1800
      %v1802 = vmul.f32 %v1768, 1.442695
      %v1803 = vpow.pop %v1802
      %v1804 = vmul.f32 %v1769, 1.442695
      %v1805 = vpow.pop %v1804
      %v1806 = vmul.f32 %v1770, 1.442695
      %v1807 = vpow.pop %v1806
      %v1808 = vmul.f32 %v1771, 1.442695
      %v1809 = vpow.pop %v1808
      %v1810 = vmul.f32 %v1772, 1.442695
      %v1811 = vpow.pop %v1810
      %v1812 = vmul.f32 %v1773, 1.442695
      %v1813 = vpow.pop %v1812
      %v1814 = vmul.f32 %v1774, 1.442695
      %v1815 = vpow.pop %v1814
      %v1816 = vmul.f32 %v1775, 1.442695
      %v1817 = vpow.pop %v1816
      %v1818 = vmul.f32 %v1776, 1.442695
      %v1819 = vpow.pop %v1818
      %v1820 = vmul.f32 %v1777, 1.442695
      %v1821 = vpow.pop %v1820
      %v1822 = vmul.f32 %v1778, 1.442695
      %v1823 = vpow.pop %v1822
      %v1824 = vmul.f32 %v1779, 1.442695
      %v1825 = vpow.pop %v1824
      %v1826 = vmul.f32 %v1780, 1.442695
      %v1827 = vpow.pop %v1826
      %v1828 = vmul.f32 %v1781, 1.442695
      %v1829 = vpow.pop %v1828
      %v1830 = vmul.f32 %v1782, 1.442695
      %v1831 = vpow.pop %v1830
      %v1832 = vmul.f32 %v1783, 1.442695
      %v1833 = vpow.pop %v1832
      %v1834 = vmul.f32 %v1784, 1.442695
      %v1835 = vpow.pop %v1834
      %v1836 = vmul.f32 %v1785, 1.442695
      %v1837 = vpow.pop %v1836
      %v1838 = vmul.f32 %v1786, 1.442695
      %v1839 = vpow.pop %v1838
      %v1840 = vmul.f32 %v1787, 1.442695
      %v1841 = vpow.pop %v1840
      %v1842 = vmul.f32 %v1788, 1.442695
      %v1843 = vpow.pop %v1842
      %v1844 = vmul.f32 %v1789, 1.442695
      %v1845 = vpow.pop %v1844
      %v1846 = vmul.f32 %v1790, 1.442695
      %v1847 = vpow.pop %v1846
      %v1848 = vmul.f32 %v1791, 1.442695
      %v1849 = vpow.pop %v1848
      %v1850 = vmul.f32 %v1792, 1.442695
      %v1851 = vpow.pop %v1850
      %v1852 = vmul.f32 %v1793, 1.442695
      %v1853 = vpow.pop %v1852
      %v1854 = vmul.f32 %v1794, 1.442695
      %v1855 = vpow.pop %v1854
      %v1856 = vmul.f32 %v1795, 1.442695
      %v1857 = vpow.pop %v1856
      %v1858 = vmul.f32 %v1796, 1.442695
      %v1859 = vpow.pop %v1858
      %v1860 = vmul.f32 %v1797, 1.442695
      %v1861 = vpow.pop %v1860
      %v1862 = vpack.c.bf16 %v1803, %v1799
      %v1863 = vpack.c.bf16 %v1805, %v1801
      %v1864 = vpack.c.bf16 %v1811, %v1807
      %v1865 = vpack.c.bf16 %v1813, %v1809
      %v1866 = vpack.c.bf16 %v1819, %v1815
      %v1867 = vpack.c.bf16 %v1821, %v1817
      %v1868 = vpack.c.bf16 %v1827, %v1823
      %v1869 = vpack.c.bf16 %v1829, %v1825
      %v1870 = vpack.c.bf16 %v1835, %v1831
      %v1871 = vpack.c.bf16 %v1837, %v1833
      %v1872 = vpack.c.bf16 %v1843, %v1839
      %v1873 = vpack.c.bf16 %v1845, %v1841
      %v1874 = vpack.c.bf16 %v1851, %v1847
      %v1875 = vpack.c.bf16 %v1853, %v1849
      %v1876 = vpack.c.bf16 %v1859, %v1855
      %v1877 = vpack.c.bf16 %v1861, %v1857
      %v1878 = vmul.bf16 %v1862, %v944
      %v1879 = vmul.bf16 %v1863, %v945
      %v1880 = vmul.bf16 %v1864, %v946
      %v1881 = vmul.bf16 %v1865, %v947
      %v1882 = vmul.bf16 %v1866, %v948
      %v1883 = vmul.bf16 %v1867, %v949
      %v1884 = vmul.bf16 %v1868, %v950
      %v1885 = vmul.bf16 %v1869, %v951
      %v1886 = vmul.bf16 %v1870, %v952
      %v1887 = vmul.bf16 %v1871, %v953
      %v1888 = vmul.bf16 %v1872, %v954
      %v1889 = vmul.bf16 %v1873, %v955
      %v1890 = vmul.bf16 %v1874, %v956
      %v1891 = vmul.bf16 %v1875, %v957
      %v1892 = vmul.bf16 %v1876, %v958
      %v1893 = vmul.bf16 %v1877, %v959
      %s1894 = scalar_lea.vmem %s293, 128
      %v1895 = vld [vmem:[%s1894] sm:$0xf]
      %v1896 = vld [vmem:[%s1894 + $0x4] sm:$0xf]
      %v1897 = vld [vmem:[%s1894 + $0x8] sm:$0xf]
      %v1898 = vld [vmem:[%s1894 + $0xc] sm:$0xf]
      %v1899 = vld [vmem:[%s1894 + $0x10] sm:$0xf]
      %v1900 = vld [vmem:[%s1894 + $0x14] sm:$0xf]
      %v1901 = vld [vmem:[%s1894 + $0x18] sm:$0xf]
      %v1902 = vld [vmem:[%s1894 + $0x1c] sm:$0xf]
      %v1903 = vld [vmem:[%s1894 + $0x20] sm:$0xf]
      %v1904 = vld [vmem:[%s1894 + $0x24] sm:$0xf]
      %v1905 = vld [vmem:[%s1894 + $0x28] sm:$0xf]
      %v1906 = vld [vmem:[%s1894 + $0x2c] sm:$0xf]
      %v1907 = vld [vmem:[%s1894 + $0x30] sm:$0xf]
      %v1908 = vld [vmem:[%s1894 + $0x34] sm:$0xf]
      %v1909 = vld [vmem:[%s1894 + $0x38] sm:$0xf]
      %v1910 = vld [vmem:[%s1894 + $0x3c] sm:$0xf]
      %v1911 = vld [vmem:[%s1894 + $0x40] sm:$0xf]
      %v1912 = vld [vmem:[%s1894 + $0x44] sm:$0xf]
      %v1913 = vld [vmem:[%s1894 + $0x48] sm:$0xf]
      %v1914 = vld [vmem:[%s1894 + $0x4c] sm:$0xf]
      %v1915 = vld [vmem:[%s1894 + $0x50] sm:$0xf]
      %v1916 = vld [vmem:[%s1894 + $0x54] sm:$0xf]
      %v1917 = vld [vmem:[%s1894 + $0x58] sm:$0xf]
      %v1918 = vld [vmem:[%s1894 + $0x5c] sm:$0xf]
      %v1919 = vld [vmem:[%s1894 + $0x60] sm:$0xf]
      %v1920 = vld [vmem:[%s1894 + $0x64] sm:$0xf]
      %v1921 = vld [vmem:[%s1894 + $0x68] sm:$0xf]
      %v1922 = vld [vmem:[%s1894 + $0x6c] sm:$0xf]
      %v1923 = vld [vmem:[%s1894 + $0x70] sm:$0xf]
      %v1924 = vld [vmem:[%s1894 + $0x74] sm:$0xf]
      %v1925 = vld [vmem:[%s1894 + $0x78] sm:$0xf]
      %v1926 = vld [vmem:[%s1894 + $0x7c] sm:$0xf]
      %v1959 = vunpack.c.l.b16 %v1895
      %v1960 = vunpack.c.l.b16 %v1896
      %v1961 = vunpack.c.l.b16 %v1897
      %v1962 = vunpack.c.l.b16 %v1898
      %v1963 = vunpack.c.l.b16 %v1899
      %v1964 = vunpack.c.l.b16 %v1900
      %v1965 = vunpack.c.l.b16 %v1901
      %v1966 = vunpack.c.l.b16 %v1902
      %v1967 = vunpack.c.l.b16 %v1903
      %v1968 = vunpack.c.l.b16 %v1904
      %v1969 = vunpack.c.l.b16 %v1905
      %v1970 = vunpack.c.l.b16 %v1906
      %v1971 = vunpack.c.l.b16 %v1907
      %v1972 = vunpack.c.l.b16 %v1908
      %v1973 = vunpack.c.l.b16 %v1909
      %v1974 = vunpack.c.l.b16 %v1910
      %v1975 = vunpack.c.l.b16 %v1911
      %v1976 = vunpack.c.l.b16 %v1912
      %v1977 = vunpack.c.l.b16 %v1913
      %v1978 = vunpack.c.l.b16 %v1914
      %v1979 = vunpack.c.l.b16 %v1915
      %v1980 = vunpack.c.l.b16 %v1916
      %v1981 = vunpack.c.l.b16 %v1917
      %v1982 = vunpack.c.l.b16 %v1918
      %v1983 = vunpack.c.l.b16 %v1919
      %v1984 = vunpack.c.l.b16 %v1920
      %v1985 = vunpack.c.l.b16 %v1921
      %v1986 = vunpack.c.l.b16 %v1922
      %v1987 = vunpack.c.l.b16 %v1923
      %v1988 = vunpack.c.l.b16 %v1924
      %v1989 = vunpack.c.l.b16 %v1925
      %v1990 = vunpack.c.l.b16 %v1926
      %v1991 = vpack.c.b16 %v1960, %v1959
      %v1992 = vpack.c.b16 %v1962, %v1961
      %v1993 = vpack.c.b16 %v1964, %v1963
      %v1994 = vpack.c.b16 %v1966, %v1965
      %v1995 = vpack.c.b16 %v1968, %v1967
      %v1996 = vpack.c.b16 %v1970, %v1969
      %v1997 = vpack.c.b16 %v1972, %v1971
      %v1998 = vpack.c.b16 %v1974, %v1973
      %v1999 = vpack.c.b16 %v1976, %v1975
      %v2000 = vpack.c.b16 %v1978, %v1977
      %v2001 = vpack.c.b16 %v1980, %v1979
      %v2002 = vpack.c.b16 %v1982, %v1981
      %v2003 = vpack.c.b16 %v1984, %v1983
      %v2004 = vpack.c.b16 %v1986, %v1985
      %v2005 = vpack.c.b16 %v1988, %v1987
      %v2006 = vpack.c.b16 %v1990, %v1989
      %2023 = vmatprep.subr.bf16.mxu0 0
      %2024 = vmatpush1.bf16.msra.mxu0 %v1998
      %2025 = vmatprep.subr.bf16.mxu0 0
      %2026 = vmatpush1.bf16.msra.mxu0 %v1997
      %2027 = vmatprep.subr.bf16.mxu0 0
      %2028 = vmatpush1.bf16.msra.mxu0 %v1996
      %2029 = vmatprep.subr.bf16.mxu0 0
      %2030 = vmatpush1.bf16.msra.mxu0 %v1995
      %2031 = vmatprep.subr.bf16.mxu0 0
      %2032 = vmatpush1.bf16.msra.mxu0 %v1994
      %2033 = vmatprep.subr.bf16.mxu0 0
      %2034 = vmatpush1.bf16.msra.mxu0 %v1993
      %2035 = vmatprep.subr.bf16.mxu0 0
      %2036 = vmatpush1.bf16.msra.mxu0 %v1992
      %2037 = vmatprep.subr.bf16.mxu0 0
      %2038 = vmatpush1.bf16.msra.mxu0 %v1991
      %2039 = vmatprep.subr.bf16.mxu0 0
      %2040 = vmatpush2.bf16.msra.mxu0 %v2006
      %2041 = vmatprep.subr.bf16.mxu0 0
      %2042 = vmatpush2.bf16.msra.mxu0 %v2005
      %2043 = vmatprep.subr.bf16.mxu0 0
      %2044 = vmatpush2.bf16.msra.mxu0 %v2004
      %2045 = vmatprep.subr.bf16.mxu0 0
      %2046 = vmatpush2.bf16.msra.mxu0 %v2003
      %2047 = vmatprep.subr.bf16.mxu0 0
      %2048 = vmatpush2.bf16.msra.mxu0 %v2002
      %2049 = vmatprep.subr.bf16.mxu0 0
      %2050 = vmatpush2.bf16.msra.mxu0 %v2001
      %2051 = vmatprep.subr.bf16.mxu0 0
      %2052 = vmatpush2.bf16.msra.mxu0 %v2000
      %2053 = vmatprep.subr.bf16.mxu0 0
      %2054 = vmatpush2.bf16.msra.mxu0 %v1999
      %2055 = vmatprep.mubr.bf16.mxu0 %v1879
      %2056 = vmatmul.mubr.bf16.gmra.mxu0 %v1878
      %v2057 = vpop.f32.mrf.mxu0
      %v2058 = vadd.f32 0.0, %v2057
      %v2059 = vpop.f32.mrf.mxu0
      %v2060 = vpop.f32.mrf.mxu0
      %v2061 = vadd.f32 0.0, %v2060
      %v2062 = vpop.f32.mrf.mxu0
      %2063 = vmatprep.mubr.bf16.mxu0 %v1881
      %2064 = vmatmul.mubr.bf16.gmra.mxu0 %v1880
      %v2065 = vpop.f32.mrf.mxu0
      %v2066 = vadd.f32 0.0, %v2065
      %v2067 = vpop.f32.mrf.mxu0
      %v2068 = vpop.f32.mrf.mxu0
      %v2069 = vadd.f32 0.0, %v2068
      %v2070 = vpop.f32.mrf.mxu0
      %2071 = vmatprep.mubr.bf16.mxu0 %v1883
      %2072 = vmatmul.mubr.bf16.gmra.mxu0 %v1882
      %v2073 = vpop.f32.mrf.mxu0
      %v2074 = vadd.f32 0.0, %v2073
      %v2075 = vpop.f32.mrf.mxu0
      %v2076 = vpop.f32.mrf.mxu0
      %v2077 = vadd.f32 0.0, %v2076
      %v2078 = vpop.f32.mrf.mxu0
      %2079 = vmatprep.mubr.bf16.mxu0 %v1885
      %2080 = vmatmul.mubr.bf16.gmra.mxu0 %v1884
      %v2081 = vpop.f32.mrf.mxu0
      %v2082 = vadd.f32 0.0, %v2081
      %v2083 = vpop.f32.mrf.mxu0
      %v2084 = vpop.f32.mrf.mxu0
      %v2085 = vadd.f32 0.0, %v2084
      %v2086 = vpop.f32.mrf.mxu0
      %2087 = vmatprep.mubr.bf16.mxu0 %v1887
      %2088 = vmatmul.mubr.bf16.gmra.mxu0 %v1886
      %v2089 = vpop.f32.mrf.mxu0
      %v2090 = vadd.f32 0.0, %v2089
      %v2091 = vpop.f32.mrf.mxu0
      %v2092 = vpop.f32.mrf.mxu0
      %v2093 = vadd.f32 0.0, %v2092
      %v2094 = vpop.f32.mrf.mxu0
      %2095 = vmatprep.mubr.bf16.mxu0 %v1889
      %2096 = vmatmul.mubr.bf16.gmra.mxu0 %v1888
      %v2097 = vpop.f32.mrf.mxu0
      %v2098 = vadd.f32 0.0, %v2097
      %v2099 = vpop.f32.mrf.mxu0
      %v2100 = vpop.f32.mrf.mxu0
      %v2101 = vadd.f32 0.0, %v2100
      %v2102 = vpop.f32.mrf.mxu0
      %2103 = vmatprep.mubr.bf16.mxu0 %v1891
      %2104 = vmatmul.mubr.bf16.gmra.mxu0 %v1890
      %v2105 = vpop.f32.mrf.mxu0
      %v2106 = vadd.f32 0.0, %v2105
      %v2107 = vpop.f32.mrf.mxu0
      %v2108 = vpop.f32.mrf.mxu0
      %v2109 = vadd.f32 0.0, %v2108
      %v2110 = vpop.f32.mrf.mxu0
      %2111 = vmatprep.mubr.bf16.mxu0 %v1893
      %2112 = vmatmul.mubr.bf16.gmra.mxu0 %v1892
      %v2113 = vpop.f32.mrf.mxu0
      %v2114 = vadd.f32 0.0, %v2113
      %v2115 = vpop.f32.mrf.mxu0
      %v2116 = vpop.f32.mrf.mxu0
      %v2117 = vadd.f32 0.0, %v2116
      %v2118 = vpop.f32.mrf.mxu0
      %2119 = vdwg.mxu0
      %v2120 = vsub.f32 %v1606, %v1670
      %v2121 = vsub.f32 %v1607, %v1671
      %v2122 = vsub.f32 %v1608, %v1672
      %v2123 = vsub.f32 %v1609, %v1673
      %v2124 = vsub.f32 %v1610, %v1674
      %v2125 = vsub.f32 %v1611, %v1675
      %v2126 = vsub.f32 %v1612, %v1676
      %v2127 = vsub.f32 %v1613, %v1677
      %v2128 = vsub.f32 %v1614, %v1678
      %v2129 = vsub.f32 %v1615, %v1679
      %v2130 = vsub.f32 %v1616, %v1680
      %v2131 = vsub.f32 %v1617, %v1681
      %v2132 = vsub.f32 %v1618, %v1682
      %v2133 = vsub.f32 %v1619, %v1683
      %v2134 = vsub.f32 %v1620, %v1684
      %v2135 = vsub.f32 %v1621, %v1685
      %v2136 = vmul.f32 %v2120, 1.442695
      %v2137 = vpow.pop %v2136
      %v2138 = vmul.f32 %v2121, 1.442695
      %v2139 = vpow.pop %v2138
      %v2140 = vmul.f32 %v2122, 1.442695
      %v2141 = vpow.pop %v2140
      %v2142 = vmul.f32 %v2123, 1.442695
      %v2143 = vpow.pop %v2142
      %v2144 = vmul.f32 %v2124, 1.442695
      %v2145 = vpow.pop %v2144
      %v2146 = vmul.f32 %v2125, 1.442695
      %v2147 = vpow.pop %v2146
      %v2148 = vmul.f32 %v2126, 1.442695
      %v2149 = vpow.pop %v2148
      %v2150 = vmul.f32 %v2127, 1.442695
      %v2151 = vpow.pop %v2150
      %v2152 = vmul.f32 %v2128, 1.442695
      %v2153 = vpow.pop %v2152
      %v2154 = vmul.f32 %v2129, 1.442695
      %v2155 = vpow.pop %v2154
      %v2156 = vmul.f32 %v2130, 1.442695
      %v2157 = vpow.pop %v2156
      %v2158 = vmul.f32 %v2131, 1.442695
      %v2159 = vpow.pop %v2158
      %v2160 = vmul.f32 %v2132, 1.442695
      %v2161 = vpow.pop %v2160
      %v2162 = vmul.f32 %v2133, 1.442695
      %v2163 = vpow.pop %v2162
      %v2164 = vmul.f32 %v2134, 1.442695
      %v2165 = vpow.pop %v2164
      %v2166 = vmul.f32 %v2135, 1.442695
      %v2167 = vpow.pop %v2166
      %s2168 = scalar_lea.vmem [#allocation3], 128
      %v2169 = vld [vmem:[%s2168] sm:$0xff]
      %v2170 = vld [vmem:[%s2168 + $0x8] sm:$0xff]
      %v2171 = vld [vmem:[%s2168 + $0x10] sm:$0xff]
      %v2172 = vld [vmem:[%s2168 + $0x18] sm:$0xff]
      %v2173 = vld [vmem:[%s2168 + $0x20] sm:$0xff]
      %v2174 = vld [vmem:[%s2168 + $0x28] sm:$0xff]
      %v2175 = vld [vmem:[%s2168 + $0x30] sm:$0xff]
      %v2176 = vld [vmem:[%s2168 + $0x38] sm:$0xff]
      %v2177 = vld [vmem:[%s2168 + $0x40] sm:$0xff]
      %v2178 = vld [vmem:[%s2168 + $0x48] sm:$0xff]
      %v2179 = vld [vmem:[%s2168 + $0x50] sm:$0xff]
      %v2180 = vld [vmem:[%s2168 + $0x58] sm:$0xff]
      %v2181 = vld [vmem:[%s2168 + $0x60] sm:$0xff]
      %v2182 = vld [vmem:[%s2168 + $0x68] sm:$0xff]
      %v2183 = vld [vmem:[%s2168 + $0x70] sm:$0xff]
      %v2184 = vld [vmem:[%s2168 + $0x78] sm:$0xff]
      %2186 = vset.pattern.permute.xlu0 0
      %2187 = vperm.xlu0 %2186, %v2137
      %v2188 = vpop.permute.xlu0 %2187
      %2191 = vset.pattern.permute.xlu0 0
      %2192 = vperm.xlu0 %2191, %v2139
      %v2193 = vpop.permute.xlu0 %2192
      %2196 = vset.pattern.permute.xlu0 0
      %2197 = vperm.xlu0 %2196, %v2141
      %v2198 = vpop.permute.xlu0 %2197
      %2201 = vset.pattern.permute.xlu0 0
      %2202 = vperm.xlu0 %2201, %v2143
      %v2203 = vpop.permute.xlu0 %2202
      %2206 = vset.pattern.permute.xlu0 0
      %2207 = vperm.xlu0 %2206, %v2145
      %v2208 = vpop.permute.xlu0 %2207
      %2211 = vset.pattern.permute.xlu0 0
      %2212 = vperm.xlu0 %2211, %v2147
      %v2213 = vpop.permute.xlu0 %2212
      %2216 = vset.pattern.permute.xlu0 0
      %2217 = vperm.xlu0 %2216, %v2149
      %v2218 = vpop.permute.xlu0 %2217
      %2221 = vset.pattern.permute.xlu0 0
      %2222 = vperm.xlu0 %2221, %v2151
      %v2223 = vpop.permute.xlu0 %2222
      %2226 = vset.pattern.permute.xlu0 0
      %2227 = vperm.xlu0 %2226, %v2153
      %v2228 = vpop.permute.xlu0 %2227
      %2231 = vset.pattern.permute.xlu0 0
      %2232 = vperm.xlu0 %2231, %v2155
      %v2233 = vpop.permute.xlu0 %2232
      %2236 = vset.pattern.permute.xlu0 0
      %2237 = vperm.xlu0 %2236, %v2157
      %v2238 = vpop.permute.xlu0 %2237
      %2241 = vset.pattern.permute.xlu0 0
      %2242 = vperm.xlu0 %2241, %v2159
      %v2243 = vpop.permute.xlu0 %2242
      %2246 = vset.pattern.permute.xlu0 0
      %2247 = vperm.xlu0 %2246, %v2161
      %v2248 = vpop.permute.xlu0 %2247
      %2251 = vset.pattern.permute.xlu0 0
      %2252 = vperm.xlu0 %2251, %v2163
      %v2253 = vpop.permute.xlu0 %2252
      %2256 = vset.pattern.permute.xlu0 0
      %2257 = vperm.xlu0 %2256, %v2165
      %v2258 = vpop.permute.xlu0 %2257
      %2261 = vset.pattern.permute.xlu0 0
      %2262 = vperm.xlu0 %2261, %v2167
      %v2263 = vpop.permute.xlu0 %2262
      %v2265 = vmul.f32 %v2169, %v2188
      %v2266 = vmul.f32 %v2170, %v2193
      %v2267 = vmul.f32 %v2171, %v2198
      %v2268 = vmul.f32 %v2172, %v2203
      %v2269 = vmul.f32 %v2173, %v2208
      %v2270 = vmul.f32 %v2174, %v2213
      %v2271 = vmul.f32 %v2175, %v2218
      %v2272 = vmul.f32 %v2176, %v2223
      %v2273 = vmul.f32 %v2177, %v2228
      %v2274 = vmul.f32 %v2178, %v2233
      %v2275 = vmul.f32 %v2179, %v2238
      %v2276 = vmul.f32 %v2180, %v2243
      %v2277 = vmul.f32 %v2181, %v2248
      %v2278 = vmul.f32 %v2182, %v2253
      %v2279 = vmul.f32 %v2183, %v2258
      %v2280 = vmul.f32 %v2184, %v2263
      %v2281 = vadd.f32 %v2265, %v2058
      %v2282 = vadd.f32 %v2266, %v2061
      %v2283 = vadd.f32 %v2267, %v2066
      %v2284 = vadd.f32 %v2268, %v2069
      %v2285 = vadd.f32 %v2269, %v2074
      %v2286 = vadd.f32 %v2270, %v2077
      %v2287 = vadd.f32 %v2271, %v2082
      %v2288 = vadd.f32 %v2272, %v2085
      %v2289 = vadd.f32 %v2273, %v2090
      %v2290 = vadd.f32 %v2274, %v2093
      %v2291 = vadd.f32 %v2275, %v2098
      %v2292 = vadd.f32 %v2276, %v2101
      %v2293 = vadd.f32 %v2277, %v2106
      %v2294 = vadd.f32 %v2278, %v2109
      %v2295 = vadd.f32 %v2279, %v2114
      %v2296 = vadd.f32 %v2280, %v2117
      %2297 = vst.msk [vmem:[%s2168] sm:$0xff] %vm1393, %v2281
      %2298 = vst.msk [vmem:[%s2168 + $0x8] sm:$0xff] %vm1393, %v2282
      %2299 = vst.msk [vmem:[%s2168 + $0x10] sm:$0xff] %vm1393, %v2283
      %2300 = vst.msk [vmem:[%s2168 + $0x18] sm:$0xff] %vm1393, %v2284
      %2301 = vst.msk [vmem:[%s2168 + $0x20] sm:$0xff] %vm1393, %v2285
      %2302 = vst.msk [vmem:[%s2168 + $0x28] sm:$0xff] %vm1393, %v2286
      %2303 = vst.msk [vmem:[%s2168 + $0x30] sm:$0xff] %vm1393, %v2287
      %2304 = vst.msk [vmem:[%s2168 + $0x38] sm:$0xff] %vm1393, %v2288
      %2305 = vst.msk [vmem:[%s2168 + $0x40] sm:$0xff] %vm1393, %v2289
      %2306 = vst.msk [vmem:[%s2168 + $0x48] sm:$0xff] %vm1393, %v2290
      %2307 = vst.msk [vmem:[%s2168 + $0x50] sm:$0xff] %vm1393, %v2291
      %2308 = vst.msk [vmem:[%s2168 + $0x58] sm:$0xff] %vm1393, %v2292
      %2309 = vst.msk [vmem:[%s2168 + $0x60] sm:$0xff] %vm1393, %v2293
      %2310 = vst.msk [vmem:[%s2168 + $0x68] sm:$0xff] %vm1393, %v2294
      %2311 = vst.msk [vmem:[%s2168 + $0x70] sm:$0xff] %vm1393, %v2295
      %2312 = vst.msk [vmem:[%s2168 + $0x78] sm:$0xff] %vm1393, %v2296
      %2313 = vst.msk [vmem:[%s1605] sm:$0xff] %vm1410, %v1670
      %2314 = vst.msk [vmem:[%s1605 + $0x8] sm:$0xff] %vm1410, %v1671
      %2315 = vst.msk [vmem:[%s1605 + $0x10] sm:$0xff] %vm1410, %v1672
      %2316 = vst.msk [vmem:[%s1605 + $0x18] sm:$0xff] %vm1410, %v1673
      %2317 = vst.msk [vmem:[%s1605 + $0x20] sm:$0xff] %vm1410, %v1674
      %2318 = vst.msk [vmem:[%s1605 + $0x28] sm:$0xff] %vm1410, %v1675
      %2319 = vst.msk [vmem:[%s1605 + $0x30] sm:$0xff] %vm1410, %v1676
      %2320 = vst.msk [vmem:[%s1605 + $0x38] sm:$0xff] %vm1410, %v1677
      %2321 = vst.msk [vmem:[%s1605 + $0x40] sm:$0xff] %vm1410, %v1678
      %2322 = vst.msk [vmem:[%s1605 + $0x48] sm:$0xff] %vm1410, %v1679
      %2323 = vst.msk [vmem:[%s1605 + $0x50] sm:$0xff] %vm1410, %v1680
      %2324 = vst.msk [vmem:[%s1605 + $0x58] sm:$0xff] %vm1410, %v1681
      %2325 = vst.msk [vmem:[%s1605 + $0x60] sm:$0xff] %vm1410, %v1682
      %2326 = vst.msk [vmem:[%s1605 + $0x68] sm:$0xff] %vm1410, %v1683
      %2327 = vst.msk [vmem:[%s1605 + $0x70] sm:$0xff] %vm1410, %v1684
      %2328 = vst.msk [vmem:[%s1605 + $0x78] sm:$0xff] %vm1410, %v1685
      // Predicated region
      $region45: #{inter_graph_attention.7} parent=39 // pred_check
        %p2329 = pneg %p326
      $region46: #{inter_graph_attention.7} parent=39 // pred_check_branch
        %2331 = sbr.rel (%p2329) target = $region48
      $region47: #{inter_graph_attention.7} parent=39 // pred_region
        %v2332 = vld [vmem:[#allocation3] sm:$0xff]
        %v2333 = vld [vmem:[#allocation3 + $0x8] sm:$0xff]
        %v2334 = vld [vmem:[#allocation3 + $0x10] sm:$0xff]
        %v2335 = vld [vmem:[#allocation3 + $0x18] sm:$0xff]
        %v2336 = vld [vmem:[#allocation3 + $0x20] sm:$0xff]
        %v2337 = vld [vmem:[#allocation3 + $0x28] sm:$0xff]
        %v2338 = vld [vmem:[#allocation3 + $0x30] sm:$0xff]
        %v2339 = vld [vmem:[#allocation3 + $0x38] sm:$0xff]
        %v2340 = vld [vmem:[#allocation3 + $0x40] sm:$0xff]
        %v2341 = vld [vmem:[#allocation3 + $0x48] sm:$0xff]
        %v2342 = vld [vmem:[#allocation3 + $0x50] sm:$0xff]
        %v2343 = vld [vmem:[#allocation3 + $0x58] sm:$0xff]
        %v2344 = vld [vmem:[#allocation3 + $0x60] sm:$0xff]
        %v2345 = vld [vmem:[#allocation3 + $0x68] sm:$0xff]
        %v2346 = vld [vmem:[#allocation3 + $0x70] sm:$0xff]
        %v2347 = vld [vmem:[#allocation3 + $0x78] sm:$0xff]
        %v2348 = vmax.f32 %v2332, 1e-20
        %v2349 = vmax.f32 %v2333, 1e-20
        %v2350 = vmax.f32 %v2334, 1e-20
        %v2351 = vmax.f32 %v2335, 1e-20
        %v2352 = vmax.f32 %v2336, 1e-20
        %v2353 = vmax.f32 %v2337, 1e-20
        %v2354 = vmax.f32 %v2338, 1e-20
        %v2355 = vmax.f32 %v2339, 1e-20
        %v2356 = vmax.f32 %v2340, 1e-20
        %v2357 = vmax.f32 %v2341, 1e-20
        %v2358 = vmax.f32 %v2342, 1e-20
        %v2359 = vmax.f32 %v2343, 1e-20
        %v2360 = vmax.f32 %v2344, 1e-20
        %v2361 = vmax.f32 %v2345, 1e-20
        %v2362 = vmax.f32 %v2346, 1e-20
        %v2363 = vmax.f32 %v2347, 1e-20
        %v2364 = vrcp.pop %v2348
        %v2365 = vrcp.pop %v2349
        %v2366 = vrcp.pop %v2350
        %v2367 = vrcp.pop %v2351
        %v2368 = vrcp.pop %v2352
        %v2369 = vrcp.pop %v2353
        %v2370 = vrcp.pop %v2354
        %v2371 = vrcp.pop %v2355
        %v2372 = vrcp.pop %v2356
        %v2373 = vrcp.pop %v2357
        %v2374 = vrcp.pop %v2358
        %v2375 = vrcp.pop %v2359
        %v2376 = vrcp.pop %v2360
        %v2377 = vrcp.pop %v2361
        %v2378 = vrcp.pop %v2362
        %v2379 = vrcp.pop %v2363
        %2381 = vset.pattern.permute.xlu0 32
        %2382 = vperm.xlu0 %2381, %v2364
        %v2383 = vpop.permute.xlu0 %2382
        %2386 = vset.pattern.permute.xlu0 32
        %2387 = vperm.xlu0 %2386, %v2365
        %v2388 = vpop.permute.xlu0 %2387
        %2391 = vset.pattern.permute.xlu0 32
        %2392 = vperm.xlu0 %2391, %v2366
        %v2393 = vpop.permute.xlu0 %2392
        %2396 = vset.pattern.permute.xlu0 32
        %2397 = vperm.xlu0 %2396, %v2367
        %v2398 = vpop.permute.xlu0 %2397
        %2401 = vset.pattern.permute.xlu0 32
        %2402 = vperm.xlu0 %2401, %v2368
        %v2403 = vpop.permute.xlu0 %2402
        %2406 = vset.pattern.permute.xlu0 32
        %2407 = vperm.xlu0 %2406, %v2369
        %v2408 = vpop.permute.xlu0 %2407
        %2411 = vset.pattern.permute.xlu0 32
        %2412 = vperm.xlu0 %2411, %v2370
        %v2413 = vpop.permute.xlu0 %2412
        %2416 = vset.pattern.permute.xlu0 32
        %2417 = vperm.xlu0 %2416, %v2371
        %v2418 = vpop.permute.xlu0 %2417
        %2421 = vset.pattern.permute.xlu0 32
        %2422 = vperm.xlu0 %2421, %v2372
        %v2423 = vpop.permute.xlu0 %2422
        %2426 = vset.pattern.permute.xlu0 32
        %2427 = vperm.xlu0 %2426, %v2373
        %v2428 = vpop.permute.xlu0 %2427
        %2431 = vset.pattern.permute.xlu0 32
        %2432 = vperm.xlu0 %2431, %v2374
        %v2433 = vpop.permute.xlu0 %2432
        %2436 = vset.pattern.permute.xlu0 32
        %2437 = vperm.xlu0 %2436, %v2375
        %v2438 = vpop.permute.xlu0 %2437
        %2441 = vset.pattern.permute.xlu0 32
        %2442 = vperm.xlu0 %2441, %v2376
        %v2443 = vpop.permute.xlu0 %2442
        %2446 = vset.pattern.permute.xlu0 32
        %2447 = vperm.xlu0 %2446, %v2377
        %v2448 = vpop.permute.xlu0 %2447
        %2451 = vset.pattern.permute.xlu0 32
        %2452 = vperm.xlu0 %2451, %v2378
        %v2453 = vpop.permute.xlu0 %2452
        %2456 = vset.pattern.permute.xlu0 32
        %2457 = vperm.xlu0 %2456, %v2379
        %v2458 = vpop.permute.xlu0 %2457
        %v2460 = vmul.f32 %v2332, %v2383
        %v2461 = vmul.f32 %v2333, %v2388
        %v2462 = vmul.f32 %v2334, %v2393
        %v2463 = vmul.f32 %v2335, %v2398
        %v2464 = vmul.f32 %v2336, %v2403
        %v2465 = vmul.f32 %v2337, %v2408
        %v2466 = vmul.f32 %v2338, %v2413
        %v2467 = vmul.f32 %v2339, %v2418
        %v2468 = vmul.f32 %v2340, %v2423
        %v2469 = vmul.f32 %v2341, %v2428
        %v2470 = vmul.f32 %v2342, %v2433
        %v2471 = vmul.f32 %v2343, %v2438
        %v2472 = vmul.f32 %v2344, %v2443
        %v2473 = vmul.f32 %v2345, %v2448
        %v2474 = vmul.f32 %v2346, %v2453
        %v2475 = vmul.f32 %v2347, %v2458
        %v2476 = vld [vmem:[%s2168] sm:$0xff]
        %v2477 = vld [vmem:[%s2168 + $0x8] sm:$0xff]
        %v2478 = vld [vmem:[%s2168 + $0x10] sm:$0xff]
        %v2479 = vld [vmem:[%s2168 + $0x18] sm:$0xff]
        %v2480 = vld [vmem:[%s2168 + $0x20] sm:$0xff]
        %v2481 = vld [vmem:[%s2168 + $0x28] sm:$0xff]
        %v2482 = vld [vmem:[%s2168 + $0x30] sm:$0xff]
        %v2483 = vld [vmem:[%s2168 + $0x38] sm:$0xff]
        %v2484 = vld [vmem:[%s2168 + $0x40] sm:$0xff]
        %v2485 = vld [vmem:[%s2168 + $0x48] sm:$0xff]
        %v2486 = vld [vmem:[%s2168 + $0x50] sm:$0xff]
        %v2487 = vld [vmem:[%s2168 + $0x58] sm:$0xff]
        %v2488 = vld [vmem:[%s2168 + $0x60] sm:$0xff]
        %v2489 = vld [vmem:[%s2168 + $0x68] sm:$0xff]
        %v2490 = vld [vmem:[%s2168 + $0x70] sm:$0xff]
        %v2491 = vld [vmem:[%s2168 + $0x78] sm:$0xff]
        %v2492 = vmax.f32 %v2476, 1e-20
        %v2493 = vmax.f32 %v2477, 1e-20
        %v2494 = vmax.f32 %v2478, 1e-20
        %v2495 = vmax.f32 %v2479, 1e-20
        %v2496 = vmax.f32 %v2480, 1e-20
        %v2497 = vmax.f32 %v2481, 1e-20
        %v2498 = vmax.f32 %v2482, 1e-20
        %v2499 = vmax.f32 %v2483, 1e-20
        %v2500 = vmax.f32 %v2484, 1e-20
        %v2501 = vmax.f32 %v2485, 1e-20
        %v2502 = vmax.f32 %v2486, 1e-20
        %v2503 = vmax.f32 %v2487, 1e-20
        %v2504 = vmax.f32 %v2488, 1e-20
        %v2505 = vmax.f32 %v2489, 1e-20
        %v2506 = vmax.f32 %v2490, 1e-20
        %v2507 = vmax.f32 %v2491, 1e-20
        %v2508 = vrcp.pop %v2492
        %v2509 = vrcp.pop %v2493
        %v2510 = vrcp.pop %v2494
        %v2511 = vrcp.pop %v2495
        %v2512 = vrcp.pop %v2496
        %v2513 = vrcp.pop %v2497
        %v2514 = vrcp.pop %v2498
        %v2515 = vrcp.pop %v2499
        %v2516 = vrcp.pop %v2500
        %v2517 = vrcp.pop %v2501
        %v2518 = vrcp.pop %v2502
        %v2519 = vrcp.pop %v2503
        %v2520 = vrcp.pop %v2504
        %v2521 = vrcp.pop %v2505
        %v2522 = vrcp.pop %v2506
        %v2523 = vrcp.pop %v2507
        %2525 = vset.pattern.permute.xlu0 32
        %2526 = vperm.xlu0 %2525, %v2508
        %v2527 = vpop.permute.xlu0 %2526
        %2530 = vset.pattern.permute.xlu0 32
        %2531 = vperm.xlu0 %2530, %v2509
        %v2532 = vpop.permute.xlu0 %2531
        %2535 = vset.pattern.permute.xlu0 32
        %2536 = vperm.xlu0 %2535, %v2510
        %v2537 = vpop.permute.xlu0 %2536
        %2540 = vset.pattern.permute.xlu0 32
        %2541 = vperm.xlu0 %2540, %v2511
        %v2542 = vpop.permute.xlu0 %2541
        %2545 = vset.pattern.permute.xlu0 32
        %2546 = vperm.xlu0 %2545, %v2512
        %v2547 = vpop.permute.xlu0 %2546
        %2550 = vset.pattern.permute.xlu0 32
        %2551 = vperm.xlu0 %2550, %v2513
        %v2552 = vpop.permute.xlu0 %2551
        %2555 = vset.pattern.permute.xlu0 32
        %2556 = vperm.xlu0 %2555, %v2514
        %v2557 = vpop.permute.xlu0 %2556
        %2560 = vset.pattern.permute.xlu0 32
        %2561 = vperm.xlu0 %2560, %v2515
        %v2562 = vpop.permute.xlu0 %2561
        %2565 = vset.pattern.permute.xlu0 32
        %2566 = vperm.xlu0 %2565, %v2516
        %v2567 = vpop.permute.xlu0 %2566
        %2570 = vset.pattern.permute.xlu0 32
        %2571 = vperm.xlu0 %2570, %v2517
        %v2572 = vpop.permute.xlu0 %2571
        %2575 = vset.pattern.permute.xlu0 32
        %2576 = vperm.xlu0 %2575, %v2518
        %v2577 = vpop.permute.xlu0 %2576
        %2580 = vset.pattern.permute.xlu0 32
        %2581 = vperm.xlu0 %2580, %v2519
        %v2582 = vpop.permute.xlu0 %2581
        %2585 = vset.pattern.permute.xlu0 32
        %2586 = vperm.xlu0 %2585, %v2520
        %v2587 = vpop.permute.xlu0 %2586
        %2590 = vset.pattern.permute.xlu0 32
        %2591 = vperm.xlu0 %2590, %v2521
        %v2592 = vpop.permute.xlu0 %2591
        %2595 = vset.pattern.permute.xlu0 32
        %2596 = vperm.xlu0 %2595, %v2522
        %v2597 = vpop.permute.xlu0 %2596
        %2600 = vset.pattern.permute.xlu0 32
        %2601 = vperm.xlu0 %2600, %v2523
        %v2602 = vpop.permute.xlu0 %2601
        %v2604 = vmul.f32 %v2476, %v2527
        %v2605 = vmul.f32 %v2477, %v2532
        %v2606 = vmul.f32 %v2478, %v2537
        %v2607 = vmul.f32 %v2479, %v2542
        %v2608 = vmul.f32 %v2480, %v2547
        %v2609 = vmul.f32 %v2481, %v2552
        %v2610 = vmul.f32 %v2482, %v2557
        %v2611 = vmul.f32 %v2483, %v2562
        %v2612 = vmul.f32 %v2484, %v2567
        %v2613 = vmul.f32 %v2485, %v2572
        %v2614 = vmul.f32 %v2486, %v2577
        %v2615 = vmul.f32 %v2487, %v2582
        %v2616 = vmul.f32 %v2488, %v2587
        %v2617 = vmul.f32 %v2489, %v2592
        %v2618 = vmul.f32 %v2490, %v2597
        %v2619 = vmul.f32 %v2491, %v2602
        %2636 = vrot.lane.b32.xlu0 %v2604, 32
        %v2637 = vpop.permute.xlu0 %2636
        %2638 = vrot.lane.b32.xlu0 %v2605, 32
        %v2639 = vpop.permute.xlu0 %2638
        %2640 = vrot.lane.b32.xlu0 %v2606, 32
        %v2641 = vpop.permute.xlu0 %2640
        %2642 = vrot.lane.b32.xlu0 %v2607, 32
        %v2643 = vpop.permute.xlu0 %2642
        %2644 = vrot.lane.b32.xlu0 %v2608, 32
        %v2645 = vpop.permute.xlu0 %2644
        %2646 = vrot.lane.b32.xlu0 %v2609, 32
        %v2647 = vpop.permute.xlu0 %2646
        %2648 = vrot.lane.b32.xlu0 %v2610, 32
        %v2649 = vpop.permute.xlu0 %2648
        %2650 = vrot.lane.b32.xlu0 %v2611, 32
        %v2651 = vpop.permute.xlu0 %2650
        %2652 = vrot.lane.b32.xlu0 %v2612, 32
        %v2653 = vpop.permute.xlu0 %2652
        %2654 = vrot.lane.b32.xlu0 %v2613, 32
        %v2655 = vpop.permute.xlu0 %2654
        %2656 = vrot.lane.b32.xlu0 %v2614, 32
        %v2657 = vpop.permute.xlu0 %2656
        %2658 = vrot.lane.b32.xlu0 %v2615, 32
        %v2659 = vpop.permute.xlu0 %2658
        %2660 = vrot.lane.b32.xlu0 %v2616, 32
        %v2661 = vpop.permute.xlu0 %2660
        %2662 = vrot.lane.b32.xlu0 %v2617, 32
        %v2663 = vpop.permute.xlu0 %2662
        %2664 = vrot.lane.b32.xlu0 %v2618, 32
        %v2665 = vpop.permute.xlu0 %2664
        %2666 = vrot.lane.b32.xlu0 %v2619, 32
        %v2667 = vpop.permute.xlu0 %2666
        %vm2684 = vcmask 261120
        %v2685 = vsel %vm2684, %v2460, %v2637
        %v2686 = vsel %vm2684, %v2461, %v2639
        %v2687 = vsel %vm2684, %v2462, %v2641
        %v2688 = vsel %vm2684, %v2463, %v2643
        %v2689 = vsel %vm2684, %v2464, %v2645
        %v2690 = vsel %vm2684, %v2465, %v2647
        %v2691 = vsel %vm2684, %v2466, %v2649
        %v2692 = vsel %vm2684, %v2467, %v2651
        %v2693 = vsel %vm2684, %v2468, %v2653
        %v2694 = vsel %vm2684, %v2469, %v2655
        %v2695 = vsel %vm2684, %v2470, %v2657
        %v2696 = vsel %vm2684, %v2471, %v2659
        %v2697 = vsel %vm2684, %v2472, %v2661
        %v2698 = vsel %vm2684, %v2473, %v2663
        %v2699 = vsel %vm2684, %v2474, %v2665
        %v2700 = vsel %vm2684, %v2475, %v2667
        %v2701 = vld [vmem:[%s4] sm:$0x1]
        %v2703 = vlaneseq
        %v2704 = vshrl.u32 %v2703, 7
        %v2705 = vsub.s32 0, %v2704
        %v2706 = vrot.slane %v2701, %v2705
        %v2708 = vadd.f32 %v2685, %v2706
        %v2709 = vadd.f32 %v2686, %v2706
        %v2710 = vadd.f32 %v2687, %v2706
        %v2711 = vadd.f32 %v2688, %v2706
        %v2712 = vadd.f32 %v2689, %v2706
        %v2713 = vadd.f32 %v2690, %v2706
        %v2714 = vadd.f32 %v2691, %v2706
        %v2715 = vadd.f32 %v2692, %v2706
        %v2716 = vadd.f32 %v2693, %v2706
        %v2717 = vadd.f32 %v2694, %v2706
        %v2718 = vadd.f32 %v2695, %v2706
        %v2719 = vadd.f32 %v2696, %v2706
        %v2720 = vadd.f32 %v2697, %v2706
        %v2721 = vadd.f32 %v2698, %v2706
        %v2722 = vadd.f32 %v2699, %v2706
        %v2723 = vadd.f32 %v2700, %v2706
        %2724 = vst.msk [vmem:[%s323] sm:$0xff] %vm1393, %v2708
        %2725 = vst.msk [vmem:[%s323 + $0x8] sm:$0xff] %vm1393, %v2709
        %2726 = vst.msk [vmem:[%s323 + $0x10] sm:$0xff] %vm1393, %v2710
        %2727 = vst.msk [vmem:[%s323 + $0x18] sm:$0xff] %vm1393, %v2711
        %2728 = vst.msk [vmem:[%s323 + $0x20] sm:$0xff] %vm1393, %v2712
        %2729 = vst.msk [vmem:[%s323 + $0x28] sm:$0xff] %vm1393, %v2713
        %2730 = vst.msk [vmem:[%s323 + $0x30] sm:$0xff] %vm1393, %v2714
        %2731 = vst.msk [vmem:[%s323 + $0x38] sm:$0xff] %vm1393, %v2715
        %2732 = vst.msk [vmem:[%s323 + $0x40] sm:$0xff] %vm1393, %v2716
        %2733 = vst.msk [vmem:[%s323 + $0x48] sm:$0xff] %vm1393, %v2717
        %2734 = vst.msk [vmem:[%s323 + $0x50] sm:$0xff] %vm1393, %v2718
        %2735 = vst.msk [vmem:[%s323 + $0x58] sm:$0xff] %vm1393, %v2719
        %2736 = vst.msk [vmem:[%s323 + $0x60] sm:$0xff] %vm1393, %v2720
        %2737 = vst.msk [vmem:[%s323 + $0x68] sm:$0xff] %vm1393, %v2721
        %2738 = vst.msk [vmem:[%s323 + $0x70] sm:$0xff] %vm1393, %v2722
        %2739 = vst.msk [vmem:[%s323 + $0x78] sm:$0xff] %vm1393, %v2723
      $region48: #{inter_graph_attention.7} parent=39 // pred_fallthru
        _
      %s2740 = smul.u32 16, %s20
      %p2741 = scmp.lt.s32.totalorder %s2740, 47
      %s2742 = scalar_select %p2741, %s2740, 47
      %s2743 = smul.addr %s2742, 8
      %s2744 = scalar_lea.vmem %s5, %s2743
      // Predicated region
      $region49: #{inter_graph_attention.7} parent=39 // pred_check
        %p2745 = pneg %p173
      $region50: #{inter_graph_attention.7} parent=39 // pred_check_branch
        %2747 = sbr.rel (%p2745) target = $region52
      $region51: #{inter_graph_attention.7} parent=39 // pred_region
        %s2748 = smul.u32 16, %s20
      $region52: #{inter_graph_attention.7} parent=39 // pred_fallthru
        _
    $region40: #{inter_graph_attention.7} parent=5 // pred_fallthru
      _
    %p2749 = scmp.le.s32.totalorder 2, %s11
    // Predicated region
    $region53: #{inter_graph_attention.7} parent=5 // pred_check
      %p2750 = pneg %p2749
    $region54: #{inter_graph_attention.7} parent=5 // pred_check_branch
      %2752 = sbr.rel (%p2750) target = $region56
    $region55: #{inter_graph_attention.7} parent=5 // pred_region
      %s2753 = ssub.s32 %s11, 2
      // Predicated region
      $region57: #{inter_graph_attention.7} parent=55 // pred_check
        %p2754 = pneg %p179
      $region58: #{inter_graph_attention.7} parent=55 // pred_check_branch
        %2756 = sbr.rel (%p2754) target = $region60
      $region59: #{inter_graph_attention.7} parent=55 // pred_region
        %s2757 = smul.u32 16, %s22
        %p2758 = scmp.lt.s32.totalorder %s2757, 47
        %s2759 = scalar_select %p2758, %s2757, 47
        %s2760 = smul.addr %s2759, 8
        %s2761 = scalar_lea.vmem %s5, %s2760
      $region60: #{inter_graph_attention.7} parent=55 // pred_fallthru
        _
    $region56: #{inter_graph_attention.7} parent=5 // pred_fallthru
      _
  $region6: #{inter_graph_attention.7} parent=0 // loop_footer
    %s15 = sadd.s32 1, %s11
  $region7: #{inter_graph_attention.7} parent=0 // loop_footer_branch
    %10 = sbr.rel target = $region3
  $region8: #{inter_graph_attention.7} parent=0 // loop_exit
    _

</llo_original>
